<compile_context>
chip_gen: v5e
topology: v5e:2x2
jax: 0.10.0
libtpu: 0.0.40
codegen_flags: <defaults>
</compile_context>

<pallas_src>
import functools

import jax
import jax.numpy as jnp
from jax.experimental import pallas as pl
from jax.experimental.pallas import tpu as pltpu


HIGHEST = jax.lax.Precision.HIGHEST
_WEIGHT_RESIDENT_BYTES = 8 * 1024 * 1024


def _round_up(x, m):
    return ((x + m - 1) // m) * m


def _default_vmem_limit():
    # 128 MiB physical on v5e/v6e, 64 MiB per TC on v7x; keep headroom.
    try:
        cap = int(pltpu.get_tpu_info().vmem_capacity_bytes)
    except Exception:
        cap = 64 * 1024 * 1024
    return max(32 * 1024 * 1024, min(cap * 3 // 4, 96 * 1024 * 1024))


_VMEM_LIMIT = _default_vmem_limit()


def _pick_row_tiles(M, tm, align):
    """Row tile + padded M.  Exposes >=2 grid steps when possible (v7x)."""
    if M <= tm:
        M_pad = _round_up(M, align)
        if M_pad >= 2 * align and M_pad % (2 * align) == 0:
            return M_pad // 2, M_pad
        return M_pad, M_pad
    M_pad = _round_up(M, tm)
    return tm, M_pad


def _pick_tile(S, t):
    """Largest tile <= t that divides S and is a multiple of 8 (else full S)."""
    if S <= t:
        return S
    for cand in range(t, 7, -1):
        if S % cand == 0 and cand % 8 == 0:
            return cand
    return S


def _erf_approx(x):
    # Abramowitz & Stegun 7.1.26, max abs error ~1.5e-7 in fp32.
    # TODO(synk): switch to lax.erf once Mosaic guarantees an erf lowering.
    a1, a2, a3, a4, a5 = (0.254829592, -0.284496736, 1.421413741,
                          -1.453152027, 1.061405429)
    p = 0.3275911
    s = jnp.where(x >= 0.0, 1.0, -1.0)
    ax = jnp.abs(x)
    t = 1.0 / (1.0 + p * ax)
    poly = ((((a5 * t + a4) * t + a3) * t + a2) * t + a1) * t
    return s * (1.0 - poly * jnp.exp(-ax * ax))


def _gelu_exact(x):
    return 0.5 * x * (1.0 + _erf_approx(x * 0.7071067811865476))


# ---------------------------------------------------------------------------
# Fused linear kernel: (a @ w + b) [-> GELU] [+ residual]
# ---------------------------------------------------------------------------

def _linear_kernel(*refs, activation, nk, has_residual):
    if nk > 1:
        acc_ref = refs[-1]
        refs = refs[:-1]
    else:
        acc_ref = None
    o_ref = refs[-1]
    ins = refs[:-1]
    if has_residual:
        a_ref, w_ref, b_ref, res_ref = ins
    else:
        a_ref, w_ref, b_ref = ins
        res_ref = None

    part = jnp.dot(a_ref[...], w_ref[...], preferred_element_type=jnp.float32)

    if nk > 1:
        k = pl.program_id(1)

        @pl.when(k == 0)
        def _():
            acc_ref[...] = jnp.zeros(acc_ref.shape, acc_ref.dtype)

        acc_ref[...] += part

    def _epilogue():
        acc = part if nk == 1 else acc_ref[...]
        y = acc + b_ref[...].astype(jnp.float32)
        if activation == "gelu":
            y = _gelu_exact(y)
        if res_ref is not None:
            y = y + res_ref[...].astype(jnp.float32)
        o_ref[...] = y.astype(o_ref.dtype)

    if nk == 1:
        _epilogue()
    else:
        pl.when(pl.program_id(1) == nk - 1)(_epilogue)


def pallas_linear(a, w, b, *, activation=None, residual=None,
                  compute_dtype=jnp.bfloat16, out_dtype=jnp.float32, tm=256):
    """a: [M, K], w: [K, N], b: [N] -> act(a @ w + b) (+ residual) as [M, N]."""
    M, K = a.shape
    K2, N = w.shape
    assert K == K2
    a = a.astype(compute_dtype)
    w = w.astype(compute_dtype)
    b2 = b.reshape(1, N).astype(jnp.float32)
    isz = jnp.dtype(compute_dtype).itemsize
    align = 16 if isz == 2 else 8

    tm_eff, M_pad = _pick_row_tiles(M, tm, align)
    if M_pad != M:
        a = jnp.pad(a, ((0, M_pad - M), (0, 0)))
    nM = M_pad // tm_eff

    has_res = residual is not None
    if has_res:
        assert residual.shape == (M, N)
        res = residual
        if M_pad != M:
            res = jnp.pad(res, ((0, M_pad - M), (0, 0)))

    # Weight-resident (grid-invariant weight block -> DMA elided) when it fits,
    # otherwise K-tiled reduction with an f32 accumulator.
    tk = K
    while tk * N * isz > _WEIGHT_RESIDENT_BYTES and tk % 256 == 0:
        tk //= 2
    nk = K // tk

    kernel = functools.partial(_linear_kernel, activation=activation,
                               nk=nk, has_residual=has_res)

    if nk == 1:
        grid = (nM,)
        in_specs = [pl.BlockSpec((tm_eff, K), lambda i: (i, 0)),
                    pl.BlockSpec((K, N), lambda i: (0, 0)),
                    pl.BlockSpec((1, N), lambda i: (0, 0))]
        if has_res:
            in_specs.append(pl.BlockSpec((tm_eff, N), lambda i: (i, 0)))
        out_spec = pl.BlockSpec((tm_eff, N), lambda i: (i, 0))
        scratch = []
        sem = ("parallel",)
    else:
        grid = (nM, nk)
        in_specs = [pl.BlockSpec((tm_eff, tk), lambda i, k: (i, k)),
                    pl.BlockSpec((tk, N), lambda i, k: (k, 0)),
                    pl.BlockSpec((1, N), lambda i, k: (0, 0))]
        if has_res:
            in_specs.append(pl.BlockSpec((tm_eff, N), lambda i, k: (i, 0)))
        out_spec = pl.BlockSpec((tm_eff, N), lambda i, k: (i, 0))
        scratch = [pltpu.VMEM((tm_eff, N), jnp.float32)]
        sem = ("parallel", "arbitrary")

    cost = pl.CostEstimate(
        flops=2 * M_pad * K * N,
        transcendentals=(M_pad * N if activation else 0),
        bytes_accessed=(M_pad * K + K * N) * isz + N * 4
        + M_pad * N * jnp.dtype(out_dtype).itemsize)

    args = (a, w, b2) + ((res,) if has_res else ())
    out = pl.pallas_call(
        kernel,
        out_shape=jax.ShapeDtypeStruct((M_pad, N), out_dtype),
        grid_spec=pltpu.PrefetchScalarGridSpec(
            num_scalar_prefetch=0, grid=grid, in_specs=in_specs,
            out_specs=out_spec, scratch_shapes=scratch),
        compiler_params=pltpu.CompilerParams(
            dimension_semantics=sem, vmem_limit_bytes=_VMEM_LIMIT),
        cost_estimate=cost,
    )(*args)
    return out[:M]


# ---------------------------------------------------------------------------
# Row LayerNorm kernel
# ---------------------------------------------------------------------------

def _layernorm_kernel(x_ref, g_ref, b_ref, o_ref, *, eps):
    x = x_ref[...].astype(jnp.float32)
    mean = jnp.mean(x, axis=-1, keepdims=True)
    xc = x - mean
    var = jnp.mean(xc * xc, axis=-1, keepdims=True)
    y = xc * jax.lax.rsqrt(var + eps)
    y = y * g_ref[...].astype(jnp.float32) + b_ref[...].astype(jnp.float32)
    o_ref[...] = y.astype(o_ref.dtype)


def pallas_layernorm(x, g, b, *, eps, out_dtype=None, tm=512):
    """LayerNorm over the last dim.  x: [M, D]; g, b: [D]."""
    M, D = x.shape
    out_dtype = out_dtype if out_dtype is not None else x.dtype
    tm_eff, M_pad = _pick_row_tiles(M, tm, 8)
    xp = jnp.pad(x, ((0, M_pad - M), (0, 0))) if M_pad != M else x
    out = pl.pallas_call(
        functools.partial(_layernorm_kernel, eps=eps),
        out_shape=jax.ShapeDtypeStruct((M_pad, D), out_dtype),
        grid_spec=pltpu.PrefetchScalarGridSpec(
            num_scalar_prefetch=0, grid=(M_pad // tm_eff,),
            in_specs=[pl.BlockSpec((tm_eff, D), lambda i: (i, 0)),
                      pl.BlockSpec((1, D), lambda i: (0, 0)),
                      pl.BlockSpec((1, D), lambda i: (0, 0))],
            out_specs=pl.BlockSpec((tm_eff, D), lambda i: (i, 0))),
        compiler_params=pltpu.CompilerParams(
            dimension_semantics=("parallel",), vmem_limit_bytes=_VMEM_LIMIT),
    )(xp, g.reshape(1, D), b.reshape(1, D))
    return out[:M]


# ---------------------------------------------------------------------------
# Flash-style attention kernel (online softmax, packed heads)
# ---------------------------------------------------------------------------

def _flash_attn_kernel(q_ref, k_ref, v_ref, o_ref, m_sc, l_sc, acc_sc, *,
                       scale, hpack, hd, nkv, approx_recip):
    kv = pl.program_id(3)

    @pl.when(kv == 0)
    def _():
        m_sc[...] = jnp.full(m_sc.shape, -jnp.inf, m_sc.dtype)
        l_sc[...] = jnp.zeros(l_sc.shape, l_sc.dtype)
        acc_sc[...] = jnp.zeros(acc_sc.shape, acc_sc.dtype)

    q_all = q_ref[...]        # (tq, hpack*hd)
    k_all = k_ref[...]        # (tkv, hpack*hd)
    v_all = v_ref[...]

    for hh in range(hpack):
        sl = slice(hh * hd, (hh + 1) * hd)
        q = q_all[:, sl] * scale
        k = k_all[:, sl]
        v = v_all[:, sl]
        s = jax.lax.dot_general(q, k, (((1,), (1,)), ((), ())),
                                preferred_element_type=jnp.float32)   # (tq, tkv)
        m_prev = m_sc[hh]
        m_new = jnp.maximum(m_prev, jnp.max(s, axis=-1, keepdims=True))
        alpha = jnp.exp(m_prev - m_new)
        p = jnp.exp(s - m_new)
        l_sc[hh] = alpha * l_sc[hh] + jnp.sum(p, axis=-1, keepdims=True)
        acc_sc[hh] = alpha * acc_sc[hh] + jnp.dot(
            p.astype(v.dtype), v, preferred_element_type=jnp.float32)
        m_sc[hh] = m_new

    @pl.when(kv == nkv - 1)
    def _():
        outs = []
        for hh in range(hpack):
            l = l_sc[hh]
            inv = pl.reciprocal(l, approx=True) if approx_recip else 1.0 / l
            outs.append(acc_sc[hh] * inv)
        o_ref[...] = jnp.concatenate(outs, axis=-1).astype(o_ref.dtype)


def pallas_flash_attention(qkv, *, num_heads, scale, compute_dtype, out_dtype,
                           tq_max=256, tkv_max=512):
    """qkv: [B, S, 3*D] -> softmax((q*scale) k^T) v as [B, S, D].

    Heads are read directly from the packed qkv slab (no relayout transposes)
    and packed so each tile is >= 128 lanes; KV is the innermost 'arbitrary'
    reduction axis with f32 m/l/acc scratch (flash-style online softmax).
    """
    B, S, threeD = qkv.shape
    D = threeD // 3
    hd = D // num_heads
    qkv = qkv.astype(compute_dtype)

    hpack = max(1, 128 // hd) if hd <= 128 else 1
    hpack = min(hpack, num_heads)
    while num_heads % hpack:
        hpack -= 1
    HG = hpack * hd
    nhg = num_heads // hpack

    tq = _pick_tile(S, tq_max)
    tkv = _pick_tile(S, tkv_max)
    nq = S // tq
    nkv = S // tkv

    kernel = functools.partial(
        _flash_attn_kernel, scale=scale, hpack=hpack, hd=hd, nkv=nkv,
        approx_recip=(jnp.dtype(compute_dtype).itemsize == 2))

    q_spec = pl.BlockSpec((None, tq, HG), lambda b, hg, qi, kv: (b, qi, hg))
    k_spec = pl.BlockSpec((None, tkv, HG),
                          lambda b, hg, qi, kv: (b, kv, nhg + hg))
    v_spec = pl.BlockSpec((None, tkv, HG),
                          lambda b, hg, qi, kv: (b, kv, 2 * nhg + hg))
    o_spec = pl.BlockSpec((None, tq, HG), lambda b, hg, qi, kv: (b, qi, hg))

    return pl.pallas_call(
        kernel,
        out_shape=jax.ShapeDtypeStruct((B, S, D), out_dtype),
        grid_spec=pltpu.PrefetchScalarGridSpec(
            num_scalar_prefetch=0, grid=(B, nhg, nq, nkv),
            in_specs=[q_spec, k_spec, v_spec],
            out_specs=o_spec,
            scratch_shapes=[pltpu.VMEM((hpack, tq, 1), jnp.float32),
                            pltpu.VMEM((hpack, tq, 1), jnp.float32),
                            pltpu.VMEM((hpack, tq, hd), jnp.float32)]),
        compiler_params=pltpu.CompilerParams(
            dimension_semantics=("parallel", "parallel", "parallel",
                                 "arbitrary"),
            vmem_limit_bytes=_VMEM_LIMIT),
    )(qkv, qkv, qkv)


# ---------------------------------------------------------------------------
# Neck 3x3 conv: 9 accumulated taps in one kernel (no im2col concat)
# ---------------------------------------------------------------------------

def _conv3x3_kernel(x_ref, w_ref, o_ref, *, Ho, Wo):
    cin = x_ref.shape[-1]
    acc = None
    for t in range(9):
        di, dj = divmod(t, 3)
        a = x_ref[di:di + Ho, dj:dj + Wo, :].reshape(Ho * Wo, cin)
        part = jnp.dot(a, w_ref[t], preferred_element_type=jnp.float32)
        acc = part if acc is None else acc + part
    o_ref[...] = acc.reshape(o_ref.shape).astype(o_ref.dtype)


def pallas_conv3x3(x, w, *, compute_dtype, out_dtype):
    """x: [B, Ho, Wo, Cin] (NHWC); w: [Cout, Cin, 3, 3] (OIHW); stride 1, pad 1."""
    B, Ho, Wo, Cin = x.shape
    Cout = w.shape[0]
    xp = jnp.pad(x.astype(compute_dtype), ((0, 0), (1, 1), (1, 1), (0, 0)))
    wt = jnp.transpose(w, (2, 3, 1, 0)).reshape(9, Cin, Cout).astype(compute_dtype)
    return pl.pallas_call(
        functools.partial(_conv3x3_kernel, Ho=Ho, Wo=Wo),
        out_shape=jax.ShapeDtypeStruct((B, Ho, Wo, Cout), out_dtype),
        grid_spec=pltpu.PrefetchScalarGridSpec(
            num_scalar_prefetch=0, grid=(B,),
            in_specs=[pl.BlockSpec((None, Ho + 2, Wo + 2, Cin),
                                   lambda b: (b, 0, 0, 0)),
                      pl.BlockSpec((9, Cin, Cout), lambda b: (0, 0, 0))],
            out_specs=pl.BlockSpec((None, Ho, Wo, Cout),
                                   lambda b: (b, 0, 0, 0))),
        compiler_params=pltpu.CompilerParams(
            dimension_semantics=("parallel",), vmem_limit_bytes=_VMEM_LIMIT),
    )(xp, wt)


# ---------------------------------------------------------------------------
# Layout glue (pure jnp, matches the PyTorch helpers)
# ---------------------------------------------------------------------------

def window_partition(x, window_size):
    B, H, W, C = x.shape
    pad_h = (window_size - H % window_size) % window_size
    pad_w = (window_size - W % window_size) % window_size
    if pad_h or pad_w:
        x = jnp.pad(x, ((0, 0), (0, pad_h), (0, pad_w), (0, 0)))
    Hp, Wp = H + pad_h, W + pad_w
    x = x.reshape(B, Hp // window_size, window_size, Wp // window_size,
                  window_size, C)
    windows = x.transpose(0, 1, 3, 2, 4, 5).reshape(-1, window_size,
                                                    window_size, C)
    return windows, (Hp, Wp)


def window_unpartition(windows, window_size, pad_hw, hw):
    Hp, Wp = pad_hw
    H, W = hw
    B = windows.shape[0] // (Hp * Wp // window_size // window_size)
    x = windows.reshape(B, Hp // window_size, Wp // window_size, window_size,
                        window_size, -1)
    x = x.transpose(0, 1, 3, 2, 4, 5).reshape(B, Hp, Wp, -1)
    if Hp > H or Wp > W:
        x = x[:, :H, :W, :]
    return x


# ---------------------------------------------------------------------------
# Pallas-backed forward pass
# ---------------------------------------------------------------------------

def patch_embed_forward(p, x_nchw, *, compute_dtype):
    w = p["w"]                                # [embed, C, kh, kw] (OIHW)
    embed_dim, C, kh, kw = w.shape
    B, _, H, W = x_nchw.shape
    Ho, Wo = H // kh, W // kw
    w2 = w.transpose(2, 3, 1, 0).reshape(kh * kw * C, embed_dim)
    x = jnp.transpose(x_nchw, (0, 2, 3, 1))   # NHWC once
    a = x.reshape(B, Ho, kh, Wo, kw, C).transpose(0, 1, 3, 2, 4, 5)
    a = a.reshape(B * Ho * Wo, kh * kw * C)
    out = pallas_linear(a, w2, p["b"], compute_dtype=compute_dtype,
                        out_dtype=jnp.float32)
    return out.reshape(B, Ho, Wo, embed_dim)  # == conv(x).permute(0,2,3,1)


def attention_forward(p, x, *, num_heads, compute_dtype, residual=None):
    # TODO(synk): use_rel_pos=True (decomposed rel-pos bias) not implemented;
    # the module default is use_rel_pos=False.
    B, H, W, D = x.shape
    S = H * W
    hd = D // num_heads
    qkv = pallas_linear(x.reshape(B * S, D), p["qkv_w"], p["qkv_b"],
                        compute_dtype=compute_dtype, out_dtype=compute_dtype)
    o = pallas_flash_attention(qkv.reshape(B, S, 3 * D), num_heads=num_heads,
                               scale=hd ** -0.5, compute_dtype=compute_dtype,
                               out_dtype=compute_dtype)
    o = pallas_linear(o.reshape(B * S, D), p["proj_w"], p["proj_b"],
                      residual=residual, compute_dtype=compute_dtype,
                      out_dtype=jnp.float32)
    return o.reshape(B, H, W, D)


def block_forward(p, x, *, num_heads, window_size, compute_dtype):
    B, H, W, D = x.shape
    shortcut = x.reshape(-1, D)
    xn = pallas_layernorm(shortcut, p["norm1_g"], p["norm1_b"], eps=1e-5,
                          out_dtype=compute_dtype).reshape(B, H, W, D)
    if window_size > 0:
        xw, pad_hw = window_partition(xn, window_size)
        a = attention_forward(p["attn"], xw, num_heads=num_heads,
                              compute_dtype=compute_dtype)
        a = window_unpartition(a, window_size, pad_hw, (H, W))
        x = x + a                              # layout change blocks fusion here
        x_flat = x.reshape(-1, D)
    else:
        # residual add fused into the attention-proj matmul epilogue
        x_flat = attention_forward(p["attn"], xn, num_heads=num_heads,
                                   compute_dtype=compute_dtype,
                                   residual=shortcut).reshape(-1, D)
    y = pallas_layernorm(x_flat, p["norm2_g"], p["norm2_b"], eps=1e-5,
                         out_dtype=compute_dtype)
    h = pallas_linear(y, p["mlp_w1"], p["mlp_b1"], activation="gelu",
                      compute_dtype=compute_dtype, out_dtype=compute_dtype)
    out = pallas_linear(h, p["mlp_w2"], p["mlp_b2"], residual=x_flat,
                        compute_dtype=compute_dtype, out_dtype=jnp.float32)
    return out.reshape(B, H, W, D)


def neck_forward(p, x, *, compute_dtype):
    B, Ho, Wo, D = x.shape
    O = p["conv1_w"].shape[0]
    w1 = p["conv1_w"].reshape(O, D).T                       # [D, O]
    zero_b = jnp.zeros((O,), jnp.float32)
    y = pallas_linear(x.reshape(-1, D), w1, zero_b,
                      compute_dtype=compute_dtype, out_dtype=compute_dtype)
    y = pallas_layernorm(y, p["ln1_g"], p["ln1_b"], eps=1e-6,
                         out_dtype=compute_dtype).reshape(B, Ho, Wo, O)
    z = pallas_conv3x3(y, p["conv2_w"], compute_dtype=compute_dtype,
                       out_dtype=jnp.float32)
    z = pallas_layernorm(z.reshape(-1, O), p["ln2_g"], p["ln2_b"], eps=1e-6,
                         out_dtype=jnp.float32).reshape(B, Ho, Wo, O)
    return jnp.transpose(z, (0, 3, 1, 2))                   # NCHW output


def image_encoder_forward(params, x, *, num_heads, window_sizes,
                          compute_dtype=jnp.bfloat16):
    x = patch_embed_forward(params["patch_embed"], x,
                            compute_dtype=compute_dtype)
    x = x + params["pos_embed"]
    for blk_p, ws in zip(params["blocks"], window_sizes):
        x = block_forward(blk_p, x, num_heads=num_heads, window_size=ws,
                          compute_dtype=compute_dtype)
    return neck_forward(params["neck"], x, compute_dtype=compute_dtype)


# ---------------------------------------------------------------------------
# Pure-JAX reference (high precision) for correctness checking
# ---------------------------------------------------------------------------

def _ref_layernorm(x, g, b, eps):
    mean = jnp.mean(x, axis=-1, keepdims=True)
    var = jnp.mean((x - mean) ** 2, axis=-1, keepdims=True)
    return (x - mean) / jnp.sqrt(var + eps) * g + b


def _ref_layernorm2d(x, g, b, eps):
    u = jnp.mean(x, axis=1, keepdims=True)
    s = jnp.mean((x - u) ** 2, axis=1, keepdims=True)
    x = (x - u) / jnp.sqrt(s + eps)
    return g[None, :, None, None] * x + b[None, :, None, None]


def _ref_attention(p, x, *, num_heads):
    B, H, W, D = x.shape
    S = H * W
    hd = D // num_heads
    qkv = jnp.einsum("md,dn->mn", x.reshape(B * S, D), p["qkv_w"],
                     precision=HIGHEST) + p["qkv_b"]
    qkv = qkv.reshape(B, S, 3, num_heads, hd).transpose(2, 0, 3, 1, 4)
    qkv = qkv.reshape(3, B * num_heads, S, hd)
    q, k, v = qkv[0], qkv[1], qkv[2]
    attn = jnp.einsum("bqd,bkd->bqk", q * (hd ** -0.5), k, precision=HIGHEST)
    attn = jax.nn.softmax(attn, axis=-1)
    o = jnp.einsum("bqk,bkd->bqd", attn, v, precision=HIGHEST)
    o = o.reshape(B, num_heads, H, W, hd).transpose(0, 2, 3, 1, 4)
    o = jnp.einsum("md,dn->mn", o.reshape(B * S, D), p["proj_w"],
                   precision=HIGHEST) + p["proj_b"]
    return o.reshape(B, H, W, D)


def _ref_block(p, x, *, num_heads, window_size):
    B, H, W, D = x.shape
    shortcut = x
    x = _ref_layernorm(x, p["norm1_g"], p["norm1_b"], 1e-5)
    pad_hw = (H, W)
    if window_size > 0:
        x, pad_hw = window_partition(x, window_size)
    x = _ref_attention(p["attn"], x, num_heads=num_heads)
    if window_size > 0:
        x = window_unpartition(x, window_size, pad_hw, (H, W))
    x = shortcut + x
    y = _ref_layernorm(x, p["norm2_g"], p["norm2_b"], 1e-5)
    h = jnp.einsum("bhwd,dn->bhwn", y, p["mlp_w1"], precision=HIGHEST) + p["mlp_b1"]
    h = jax.nn.gelu(h, approximate=False)
    h = jnp.einsum("bhwn,nd->bhwd", h, p["mlp_w2"], precision=HIGHEST) + p["mlp_b2"]
    return x + h


def reference_forward(params, x, *, patch_size, num_heads, window_sizes):
    pe = params["patch_embed"]
    y = jax.lax.conv_general_dilated(
        x, pe["w"], window_strides=(patch_size, patch_size), padding="VALID",
        dimension_numbers=("NCHW", "OIHW", "NCHW"), precision=HIGHEST)
    y = y + pe["b"].reshape(1, -1, 1, 1)
    y = jnp.transpose(y, (0, 2, 3, 1))
    y = y + params["pos_embed"]
    for bp, ws in zip(params["blocks"], window_sizes):
        y = _ref_block(bp, y, num_heads=num_heads, window_size=ws)
    n = params["neck"]
    y = jnp.transpose(y, (0, 3, 1, 2))
    y = jax.lax.conv_general_dilated(
        y, n["conv1_w"], (1, 1), "VALID",
        dimension_numbers=("NCHW", "OIHW", "NCHW"), precision=HIGHEST)
    y = _ref_layernorm2d(y, n["ln1_g"], n["ln1_b"], 1e-6)
    y = jax.lax.conv_general_dilated(
        y, n["conv2_w"], (1, 1), ((1, 1), (1, 1)),
        dimension_numbers=("NCHW", "OIHW", "NCHW"), precision=HIGHEST)
    y = _ref_layernorm2d(y, n["ln2_g"], n["ln2_b"], 1e-6)
    return y


# ---------------------------------------------------------------------------
# Parameter construction
# ---------------------------------------------------------------------------

def init_params(key, *, img_size, patch_size, in_chans, embed_dim, depth,
                num_heads, mlp_ratio, out_chans):
    keys = iter(jax.random.split(key, 64))

    def rnd(shape, scale=0.02):
        return jax.random.normal(next(keys), shape, jnp.float32) * scale

    mlp_dim = int(embed_dim * mlp_ratio)
    n_tok = img_size // patch_size
    params = {
        "patch_embed": {
            "w": rnd((embed_dim, in_chans, patch_size, patch_size)),
            "b": rnd((embed_dim,), 0.01),
        },
        "pos_embed": rnd((1, n_tok, n_tok, embed_dim)),
        "blocks": [],
        "neck": {
            "conv1_w": rnd((out_chans, embed_dim, 1, 1)),
            "ln1_g": 1.0 + rnd((out_chans,), 0.05),
            "ln1_b": rnd((out_chans,), 0.05),
            "conv2_w": rnd((out_chans, out_chans, 3, 3)),
            "ln2_g": 1.0 + rnd((out_chans,), 0.05),
            "ln2_b": rnd((out_chans,), 0.05),
        },
    }
    for _ in range(depth):
        params["blocks"].append({
            "norm1_g": 1.0 + rnd((embed_dim,), 0.05),
            "norm1_b": rnd((embed_dim,), 0.05),
            "norm2_g": 1.0 + rnd((embed_dim,), 0.05),
            "norm2_b": rnd((embed_dim,), 0.05),
            "attn": {
                "qkv_w": rnd((embed_dim, 3 * embed_dim)),   # [in, out] layout
                "qkv_b": rnd((3 * embed_dim,), 0.01),
                "proj_w": rnd((embed_dim, embed_dim)),
                "proj_b": rnd((embed_dim,), 0.01),
            },
            "mlp_w1": rnd((embed_dim, mlp_dim)),
            "mlp_b1": rnd((mlp_dim,), 0.01),
            "mlp_w2": rnd((mlp_dim, embed_dim)),
            "mlp_b2": rnd((embed_dim,), 0.01),
        })
    return params


# ---------------------------------------------------------------------------
# Demo / correctness check
# ---------------------------------------------------------------------------

if __name__ == "__main__":
    # Small config consistent with ImageEncoderViT: 32x32 image, patch 8 ->
    # 4x4 tokens, embed_dim=128, 2 blocks (block 0 windowed, block 1 global),
    # 4 heads, mlp_ratio 4, out_chans=128.
    B, in_chans, img_size, patch_size = 2, 3, 32, 8
    embed_dim, depth, num_heads, mlp_ratio, out_chans = 128, 2, 4, 4.0, 128
    window_sizes = (2, 0)     # window_size=2 except global_attn_indexes=(1,)

    key = jax.random.PRNGKey(0)
    kp, kx = jax.random.split(key)
    params = init_params(kp, img_size=img_size, patch_size=patch_size,
                         in_chans=in_chans, embed_dim=embed_dim, depth=depth,
                         num_heads=num_heads, mlp_ratio=mlp_ratio,
                         out_chans=out_chans)
    x = jax.random.normal(kx, (B, in_chans, img_size, img_size), jnp.float32)

    fwd = functools.partial(image_encoder_forward, num_heads=num_heads,
                            window_sizes=window_sizes)
    # Float32 MXU path: tight check against the high-precision JAX reference.
    out_f32 = jax.block_until_ready(
        jax.jit(functools.partial(fwd, compute_dtype=jnp.float32))(params, x))
    # bfloat16 MXU path (default performance config): looser check.
    out_bf16 = jax.block_until_ready(jax.jit(fwd)(params, x))

    ref = jax.block_until_ready(
        jax.jit(functools.partial(reference_forward, patch_size=patch_size,
                                  num_heads=num_heads,
                                  window_sizes=window_sizes))(params, x))

    n_tok = img_size // patch_size
    assert out_f32.shape == (B, out_chans, n_tok, n_tok), out_f32.shape
    assert out_bf16.shape == (B, out_chans, n_tok, n_tok), out_bf16.shape
    err_f32 = float(jnp.max(jnp.abs(out_f32 - ref)))
    err_bf16 = float(jnp.max(jnp.abs(out_bf16 - ref)))
    assert jnp.allclose(out_f32, ref, atol=2e-2, rtol=2e-2), f"f32 err={err_f32}"
    assert jnp.allclose(out_bf16, ref, atol=3e-1, rtol=3e-1), f"bf16 err={err_bf16}"
    print("KERNEL_OK")
</pallas_src>

<mosaic_0001>
module attributes {stable_mosaic.version = 11 : i64} {
  func.func @_linear_kernel(%arg0: i32, %arg1: memref<16x192xf32, #tpu.memory_space<vmem>>, %arg2: memref<192x128xf32, #tpu.memory_space<vmem>>, %arg3: memref<1x128xf32, #tpu.memory_space<vmem>>, %arg4: memref<16x128xf32, #tpu.memory_space<vmem>>) attributes {dimension_semantics = [#tpu.dimension_semantics<parallel>], iteration_bounds = array<i64: 2>, scalar_prefetch = 0 : i64, scratch_operands = 0 : i64, tpu.core_type = #tpu.core_type<tc>, window_params = [{transform_indices = @transform_0, window_bounds = array<i64: 16, 192>}, {pipeline_mode = #tpu.pipeline_mode<synchronous>, transform_indices = @transform_1, window_bounds = array<i64: 192, 128>}, {pipeline_mode = #tpu.pipeline_mode<synchronous>, transform_indices = @transform_2, window_bounds = array<i64: 1, 128>}, {transform_indices = @transform_3, window_bounds = array<i64: 16, 128>}]} {
    %c0 = arith.constant 0 : index
    %c0_0 = arith.constant 0 : index
    %0 = vector.load %arg1[%c0, %c0_0] : memref<16x192xf32, #tpu.memory_space<vmem>>, vector<16x192xf32>
    %c0_1 = arith.constant 0 : index
    %c0_2 = arith.constant 0 : index
    %1 = vector.load %arg2[%c0_1, %c0_2] : memref<192x128xf32, #tpu.memory_space<vmem>>, vector<192x128xf32>
    %cst = arith.constant dense<0.000000e+00> : vector<16x128xf32>
    %2 = tpu.matmul %0, %1, %cst {dimension_numbers = #tpu.dot_dimension_numbers<[1], [0], [0], [1], [0, 0, 1, 1], [], []>} : vector<16x192xf32>, vector<192x128xf32>, vector<16x128xf32> -> vector<16x128xf32>
    %c0_3 = arith.constant 0 : index
    %c0_4 = arith.constant 0 : index
    %3 = vector.load %arg3[%c0_3, %c0_4] : memref<1x128xf32, #tpu.memory_space<vmem>>, vector<1x128xf32>
    %4 = vector.broadcast %3 : vector<1x128xf32> to vector<16x128xf32>
    %5 = arith.addf %2, %4 : vector<16x128xf32>
    %c0_5 = arith.constant 0 : index
    %c0_6 = arith.constant 0 : index
    %6 = vector.load %arg4[%c0_5, %c0_6] : memref<16x128xf32, #tpu.memory_space<vmem>>, vector<16x128xf32>
    tpu.vector_store %arg4[%c0_5, %c0_6], %5 {strides = array<i32>} : memref<16x128xf32, #tpu.memory_space<vmem>>, vector<16x128xf32>,
    return
  }
  func.func @transform_0(%arg0: i32) -> (i32, i32) {
    %c0_i32 = arith.constant 0 : i32
    %c0_i32_0 = arith.constant 0 : i32
    return %arg0, %c0_i32 : i32, i32
  }
  func.func @transform_1(%arg0: i32) -> (i32, i32) {
    %c0_i32 = arith.constant 0 : i32
    %c0_i32_0 = arith.constant 0 : i32
    %c0_i32_1 = arith.constant 0 : i32
    return %c0_i32, %c0_i32_0 : i32, i32
  }
  func.func @transform_2(%arg0: i32) -> (i32, i32) {
    %c0_i32 = arith.constant 0 : i32
    %c0_i32_0 = arith.constant 0 : i32
    %c0_i32_1 = arith.constant 0 : i32
    return %c0_i32, %c0_i32_0 : i32, i32
  }
  func.func @transform_3(%arg0: i32) -> (i32, i32) {
    %c0_i32 = arith.constant 0 : i32
    %c0_i32_0 = arith.constant 0 : i32
    return %arg0, %c0_i32 : i32, i32
  }
}

module attributes {stable_mosaic.version = 11 : i64} {
  func.func @_layernorm_kernel(%arg0: i32, %arg1: memref<16x128xf32, #tpu.memory_space<vmem>>, %arg2: memref<1x128xf32, #tpu.memory_space<vmem>>, %arg3: memref<1x128xf32, #tpu.memory_space<vmem>>, %arg4: memref<16x128xf32, #tpu.memory_space<vmem>>) attributes {dimension_semantics = [#tpu.dimension_semantics<parallel>], iteration_bounds = array<i64: 2>, scalar_prefetch = 0 : i64, scratch_operands = 0 : i64, tpu.core_type = #tpu.core_type<tc>, window_params = [{transform_indices = @transform_0, window_bounds = array<i64: 16, 128>}, {pipeline_mode = #tpu.pipeline_mode<synchronous>, transform_indices = @transform_1, window_bounds = array<i64: 1, 128>}, {pipeline_mode = #tpu.pipeline_mode<synchronous>, transform_indices = @transform_2, window_bounds = array<i64: 1, 128>}, {transform_indices = @transform_3, window_bounds = array<i64: 16, 128>}]} {
    %c0 = arith.constant 0 : index
    %c0_0 = arith.constant 0 : index
    %0 = vector.load %arg1[%c0, %c0_0] : memref<16x128xf32, #tpu.memory_space<vmem>>, vector<16x128xf32>
    %cst = arith.constant dense<0.000000e+00> : vector<16xf32>
    %1 = vector.multi_reduction <add>, %0, %cst [1] : vector<16x128xf32> to vector<16xf32>
    %2 = vector.shape_cast %1 : vector<16xf32> to vector<16x1xf32>
    %cst_1 = arith.constant 1.280000e+02 : f32
    %3 = vector.broadcast %cst_1 : f32 to vector<16x1xf32>
    %4 = arith.divf %2, %3 : vector<16x1xf32>
    %5 = vector.broadcast %4 : vector<16x1xf32> to vector<16x128xf32>
    %6 = arith.subf %0, %5 : vector<16x128xf32>
    %7 = arith.mulf %6, %6 : vector<16x128xf32>
    %cst_2 = arith.constant dense<0.000000e+00> : vector<16xf32>
    %8 = vector.multi_reduction <add>, %7, %cst_2 [1] : vector<16x128xf32> to vector<16xf32>
    %9 = vector.shape_cast %8 : vector<16xf32> to vector<16x1xf32>
    %cst_3 = arith.constant 1.280000e+02 : f32
    %10 = vector.broadcast %cst_3 : f32 to vector<16x1xf32>
    %11 = arith.divf %9, %10 : vector<16x1xf32>
    %cst_4 = arith.constant 9.99999974E-6 : f32
    %12 = vector.broadcast %cst_4 : f32 to vector<16x1xf32>
    %13 = arith.addf %11, %12 : vector<16x1xf32>
    %14 = math.rsqrt %13 : vector<16x1xf32>
    %15 = vector.broadcast %14 : vector<16x1xf32> to vector<16x128xf32>
    %16 = arith.mulf %6, %15 : vector<16x128xf32>
    %c0_5 = arith.constant 0 : index
    %c0_6 = arith.constant 0 : index
    %17 = vector.load %arg2[%c0_5, %c0_6] : memref<1x128xf32, #tpu.memory_space<vmem>>, vector<1x128xf32>
    %18 = vector.broadcast %17 : vector<1x128xf32> to vector<16x128xf32>
    %19 = arith.mulf %16, %18 : vector<16x128xf32>
    %c0_7 = arith.constant 0 : index
    %c0_8 = arith.constant 0 : index
    %20 = vector.load %arg3[%c0_7, %c0_8] : memref<1x128xf32, #tpu.memory_space<vmem>>, vector<1x128xf32>
    %21 = vector.broadcast %20 : vector<1x128xf32> to vector<16x128xf32>
    %22 = arith.addf %19, %21 : vector<16x128xf32>
    %c0_9 = arith.constant 0 : index
    %c0_10 = arith.constant 0 : index
    %23 = vector.load %arg4[%c0_9, %c0_10] : memref<16x128xf32, #tpu.memory_space<vmem>>, vector<16x128xf32>
    tpu.vector_store %arg4[%c0_9, %c0_10], %22 {strides = array<i32>} : memref<16x128xf32, #tpu.memory_space<vmem>>, vector<16x128xf32>,
    return
  }
  func.func @transform_0(%arg0: i32) -> (i32, i32) {
    %c0_i32 = arith.constant 0 : i32
    %c0_i32_0 = arith.constant 0 : i32
    return %arg0, %c0_i32 : i32, i32
  }
  func.func @transform_1(%arg0: i32) -> (i32, i32) {
    %c0_i32 = arith.constant 0 : i32
    %c0_i32_0 = arith.constant 0 : i32
    %c0_i32_1 = arith.constant 0 : i32
    return %c0_i32, %c0_i32_0 : i32, i32
  }
  func.func @transform_2(%arg0: i32) -> (i32, i32) {
    %c0_i32 = arith.constant 0 : i32
    %c0_i32_0 = arith.constant 0 : i32
    %c0_i32_1 = arith.constant 0 : i32
    return %c0_i32, %c0_i32_0 : i32, i32
  }
  func.func @transform_3(%arg0: i32) -> (i32, i32) {
    %c0_i32 = arith.constant 0 : i32
    %c0_i32_0 = arith.constant 0 : i32
    return %arg0, %c0_i32 : i32, i32
  }
}

module attributes {stable_mosaic.version = 11 : i64} {
  func.func @_linear_kernel(%arg0: i32, %arg1: memref<16x128xf32, #tpu.memory_space<vmem>>, %arg2: memref<128x384xf32, #tpu.memory_space<vmem>>, %arg3: memref<1x384xf32, #tpu.memory_space<vmem>>, %arg4: memref<16x384xf32, #tpu.memory_space<vmem>>) attributes {dimension_semantics = [#tpu.dimension_semantics<parallel>], iteration_bounds = array<i64: 2>, scalar_prefetch = 0 : i64, scratch_operands = 0 : i64, tpu.core_type = #tpu.core_type<tc>, window_params = [{transform_indices = @transform_0, window_bounds = array<i64: 16, 128>}, {pipeline_mode = #tpu.pipeline_mode<synchronous>, transform_indices = @transform_1, window_bounds = array<i64: 128, 384>}, {pipeline_mode = #tpu.pipeline_mode<synchronous>, transform_indices = @transform_2, window_bounds = array<i64: 1, 384>}, {transform_indices = @transform_3, window_bounds = array<i64: 16, 384>}]} {
    %c0 = arith.constant 0 : index
    %c0_0 = arith.constant 0 : index
    %0 = vector.load %arg1[%c0, %c0_0] : memref<16x128xf32, #tpu.memory_space<vmem>>, vector<16x128xf32>
    %c0_1 = arith.constant 0 : index
    %c0_2 = arith.constant 0 : index
    %1 = vector.load %arg2[%c0_1, %c0_2] : memref<128x384xf32, #tpu.memory_space<vmem>>, vector<128x384xf32>
    %cst = arith.constant dense<0.000000e+00> : vector<16x384xf32>
    %2 = tpu.matmul %0, %1, %cst {dimension_numbers = #tpu.dot_dimension_numbers<[1], [0], [0], [1], [0, 0, 1, 1], [], []>} : vector<16x128xf32>, vector<128x384xf32>, vector<16x384xf32> -> vector<16x384xf32>
    %c0_3 = arith.constant 0 : index
    %c0_4 = arith.constant 0 : index
    %3 = vector.load %arg3[%c0_3, %c0_4] : memref<1x384xf32, #tpu.memory_space<vmem>>, vector<1x384xf32>
    %4 = vector.broadcast %3 : vector<1x384xf32> to vector<16x384xf32>
    %5 = arith.addf %2, %4 : vector<16x384xf32>
    %c0_5 = arith.constant 0 : index
    %c0_6 = arith.constant 0 : index
    %6 = vector.load %arg4[%c0_5, %c0_6] : memref<16x384xf32, #tpu.memory_space<vmem>>, vector<16x384xf32>
    tpu.vector_store %arg4[%c0_5, %c0_6], %5 {strides = array<i32>} : memref<16x384xf32, #tpu.memory_space<vmem>>, vector<16x384xf32>,
    return
  }
  func.func @transform_0(%arg0: i32) -> (i32, i32) {
    %c0_i32 = arith.constant 0 : i32
    %c0_i32_0 = arith.constant 0 : i32
    return %arg0, %c0_i32 : i32, i32
  }
  func.func @transform_1(%arg0: i32) -> (i32, i32) {
    %c0_i32 = arith.constant 0 : i32
    %c0_i32_0 = arith.constant 0 : i32
    %c0_i32_1 = arith.constant 0 : i32
    return %c0_i32, %c0_i32_0 : i32, i32
  }
  func.func @transform_2(%arg0: i32) -> (i32, i32) {
    %c0_i32 = arith.constant 0 : i32
    %c0_i32_0 = arith.constant 0 : i32
    %c0_i32_1 = arith.constant 0 : i32
    return %c0_i32, %c0_i32_0 : i32, i32
  }
  func.func @transform_3(%arg0: i32) -> (i32, i32) {
    %c0_i32 = arith.constant 0 : i32
    %c0_i32_0 = arith.constant 0 : i32
    return %arg0, %c0_i32 : i32, i32
  }
}

module attributes {stable_mosaic.version = 11 : i64} {
  func.func @_linear_kernel(%arg0: i32, %arg1: memref<16x128xf32, #tpu.memory_space<vmem>>, %arg2: memref<128x128xf32, #tpu.memory_space<vmem>>, %arg3: memref<1x128xf32, #tpu.memory_space<vmem>>, %arg4: memref<16x128xf32, #tpu.memory_space<vmem>>) attributes {dimension_semantics = [#tpu.dimension_semantics<parallel>], iteration_bounds = array<i64: 2>, scalar_prefetch = 0 : i64, scratch_operands = 0 : i64, tpu.core_type = #tpu.core_type<tc>, window_params = [{transform_indices = @transform_0, window_bounds = array<i64: 16, 128>}, {pipeline_mode = #tpu.pipeline_mode<synchronous>, transform_indices = @transform_1, window_bounds = array<i64: 128, 128>}, {pipeline_mode = #tpu.pipeline_mode<synchronous>, transform_indices = @transform_2, window_bounds = array<i64: 1, 128>}, {transform_indices = @transform_3, window_bounds = array<i64: 16, 128>}]} {
    %c0 = arith.constant 0 : index
    %c0_0 = arith.constant 0 : index
    %0 = vector.load %arg1[%c0, %c0_0] : memref<16x128xf32, #tpu.memory_space<vmem>>, vector<16x128xf32>
    %c0_1 = arith.constant 0 : index
    %c0_2 = arith.constant 0 : index
    %1 = vector.load %arg2[%c0_1, %c0_2] : memref<128x128xf32, #tpu.memory_space<vmem>>, vector<128x128xf32>
    %cst = arith.constant dense<0.000000e+00> : vector<16x128xf32>
    %2 = tpu.matmul %0, %1, %cst {dimension_numbers = #tpu.dot_dimension_numbers<[1], [0], [0], [1], [0, 0, 1, 1], [], []>} : vector<16x128xf32>, vector<128x128xf32>, vector<16x128xf32> -> vector<16x128xf32>
    %c0_3 = arith.constant 0 : index
    %c0_4 = arith.constant 0 : index
    %3 = vector.load %arg3[%c0_3, %c0_4] : memref<1x128xf32, #tpu.memory_space<vmem>>, vector<1x128xf32>
    %4 = vector.broadcast %3 : vector<1x128xf32> to vector<16x128xf32>
    %5 = arith.addf %2, %4 : vector<16x128xf32>
    %c0_5 = arith.constant 0 : index
    %c0_6 = arith.constant 0 : index
    %6 = vector.load %arg4[%c0_5, %c0_6] : memref<16x128xf32, #tpu.memory_space<vmem>>, vector<16x128xf32>
    tpu.vector_store %arg4[%c0_5, %c0_6], %5 {strides = array<i32>} : memref<16x128xf32, #tpu.memory_space<vmem>>, vector<16x128xf32>,
    return
  }
  func.func @transform_0(%arg0: i32) -> (i32, i32) {
    %c0_i32 = arith.constant 0 : i32
    %c0_i32_0 = arith.constant 0 : i32
    return %arg0, %c0_i32 : i32, i32
  }
  func.func @transform_1(%arg0: i32) -> (i32, i32) {
    %c0_i32 = arith.constant 0 : i32
    %c0_i32_0 = arith.constant 0 : i32
    %c0_i32_1 = arith.constant 0 : i32
    return %c0_i32, %c0_i32_0 : i32, i32
  }
  func.func @transform_2(%arg0: i32) -> (i32, i32) {
    %c0_i32 = arith.constant 0 : i32
    %c0_i32_0 = arith.constant 0 : i32
    %c0_i32_1 = arith.constant 0 : i32
    return %c0_i32, %c0_i32_0 : i32, i32
  }
  func.func @transform_3(%arg0: i32) -> (i32, i32) {
    %c0_i32 = arith.constant 0 : i32
    %c0_i32_0 = arith.constant 0 : i32
    return %arg0, %c0_i32 : i32, i32
  }
}

module attributes {stable_mosaic.version = 11 : i64} {
  func.func @_flash_attn_kernel(%arg0: i32, %arg1: i32, %arg2: i32, %arg3: i32, %arg4: memref<1x4x128xf32, #tpu.memory_space<vmem>>, %arg5: memref<1x4x128xf32, #tpu.memory_space<vmem>>, %arg6: memref<1x4x128xf32, #tpu.memory_space<vmem>>, %arg7: memref<1x4x128xf32, #tpu.memory_space<vmem>>, %arg8: memref<4x4x1xf32, #tpu.memory_space<vmem>>, %arg9: memref<4x4x1xf32, #tpu.memory_space<vmem>>, %arg10: memref<4x4x32xf32, #tpu.memory_space<vmem>>) attributes {dimension_semantics = [#tpu.dimension_semantics<parallel>, #tpu.dimension_semantics<parallel>, #tpu.dimension_semantics<parallel>, #tpu.dimension_semantics<arbitrary>], iteration_bounds = array<i64: 8, 1, 1, 1>, scalar_prefetch = 0 : i64, scratch_operands = 3 : i64, tpu.core_type = #tpu.core_type<tc>, window_params = [{transform_indices = @transform_0, window_bounds = array<i64: 1, 4, 128>}, {transform_indices = @transform_1, window_bounds = array<i64: 1, 4, 128>}, {transform_indices = @transform_2, window_bounds = array<i64: 1, 4, 128>}, {transform_indices = @transform_3, window_bounds = array<i64: 1, 4, 128>}]} {
    %c0_i32 = arith.constant 0 : i32
    %0 = arith.cmpi eq, %arg3, %c0_i32 : i32
    %1 = arith.extui %0 : i1 to i32
    %c0_i32_0 = arith.constant 0 : i32
    %2 = arith.cmpi ne, %1, %c0_i32_0 : i32
    scf.if %2 {
      %cst_99 = arith.constant 0xFF800000 : f32
      %160 = vector.broadcast %cst_99 : f32 to vector<4x4x1xf32>
      %c0_100 = arith.constant 0 : index
      %c0_101 = arith.constant 0 : index
      %c0_102 = arith.constant 0 : index
      %161 = vector.load %arg8[%c0_100, %c0_101, %c0_102] : memref<4x4x1xf32, #tpu.memory_space<vmem>>, vector<4x4x1xf32>
      tpu.vector_store %arg8[%c0_100, %c0_101, %c0_102], %160 {strides = array<i32>} : memref<4x4x1xf32, #tpu.memory_space<vmem>>, vector<4x4x1xf32>,
      %cst_103 = arith.constant 0.000000e+00 : f32
      %162 = vector.broadcast %cst_103 : f32 to vector<4x4x1xf32>
      %c0_104 = arith.constant 0 : index
      %c0_105 = arith.constant 0 : index
      %c0_106 = arith.constant 0 : index
      %163 = vector.load %arg9[%c0_104, %c0_105, %c0_106] : memref<4x4x1xf32, #tpu.memory_space<vmem>>, vector<4x4x1xf32>
      tpu.vector_store %arg9[%c0_104, %c0_105, %c0_106], %162 {strides = array<i32>} : memref<4x4x1xf32, #tpu.memory_space<vmem>>, vector<4x4x1xf32>,
      %cst_107 = arith.constant 0.000000e+00 : f32
      %164 = vector.broadcast %cst_107 : f32 to vector<4x4x32xf32>
      %c0_108 = arith.constant 0 : index
      %c0_109 = arith.constant 0 : index
      %c0_110 = arith.constant 0 : index
      %165 = vector.load %arg10[%c0_108, %c0_109, %c0_110] : memref<4x4x32xf32, #tpu.memory_space<vmem>>, vector<4x4x32xf32>
      tpu.vector_store %arg10[%c0_108, %c0_109, %c0_110], %164 {strides = array<i32>} : memref<4x4x32xf32, #tpu.memory_space<vmem>>, vector<4x4x32xf32>,
    } else {
    }
    %c0 = arith.constant 0 : index
    %c0_1 = arith.constant 0 : index
    %c0_2 = arith.constant 0 : index
    %3 = vector.load %arg4[%c0, %c0_1, %c0_2] : memref<1x4x128xf32, #tpu.memory_space<vmem>>, vector<1x4x128xf32>
    %4 = vector.shape_cast %3 : vector<1x4x128xf32> to vector<4x128xf32>
    %c0_3 = arith.constant 0 : index
    %c0_4 = arith.constant 0 : index
    %c0_5 = arith.constant 0 : index
    %5 = vector.load %arg5[%c0_3, %c0_4, %c0_5] : memref<1x4x128xf32, #tpu.memory_space<vmem>>, vector<1x4x128xf32>
    %6 = vector.shape_cast %5 : vector<1x4x128xf32> to vector<4x128xf32>
    %c0_6 = arith.constant 0 : index
    %c0_7 = arith.constant 0 : index
    %c0_8 = arith.constant 0 : index
    %7 = vector.load %arg6[%c0_6, %c0_7, %c0_8] : memref<1x4x128xf32, #tpu.memory_space<vmem>>, vector<1x4x128xf32>
    %8 = vector.shape_cast %7 : vector<1x4x128xf32> to vector<4x128xf32>
    %9 = vector.extract_strided_slice %4 {offsets = [0, 0], sizes = [4, 32], strides = [1, 1]} : vector<4x128xf32> to vector<4x32xf32>
    %cst = arith.constant 0.176776692 : f32
    %10 = vector.broadcast %cst : f32 to vector<4x32xf32>
    %11 = arith.mulf %9, %10 : vector<4x32xf32>
    %12 = vector.extract_strided_slice %6 {offsets = [0, 0], sizes = [4, 32], strides = [1, 1]} : vector<4x128xf32> to vector<4x32xf32>
    %13 = vector.extract_strided_slice %8 {offsets = [0, 0], sizes = [4, 32], strides = [1, 1]} : vector<4x128xf32> to vector<4x32xf32>
    %cst_9 = arith.constant dense<0.000000e+00> : vector<4x4xf32>
    %14 = tpu.matmul %11, %12, %cst_9 {dimension_numbers = #tpu.dot_dimension_numbers<[1], [1], [0], [0], [0, 0, 1, 0], [], []>} : vector<4x32xf32>, vector<4x32xf32>, vector<4x4xf32> -> vector<4x4xf32>
    %c0_10 = arith.constant 0 : index
    %c0_11 = arith.constant 0 : index
    %c0_12 = arith.constant 0 : index
    %15 = vector.load %arg8[%c0_10, %c0_11, %c0_12] : memref<4x4x1xf32, #tpu.memory_space<vmem>>, vector<1x4x1xf32>
    %16 = vector.shape_cast %15 : vector<1x4x1xf32> to vector<4x1xf32>
    %cst_13 = arith.constant dense<0xFF800000> : vector<4xf32>
    %17 = vector.multi_reduction <maximumf>, %14, %cst_13 [1] : vector<4x4xf32> to vector<4xf32>
    %18 = vector.shape_cast %17 : vector<4xf32> to vector<4x1xf32>
    %19 = arith.maximumf %16, %18 : vector<4x1xf32>
    %20 = arith.subf %16, %19 : vector<4x1xf32>
    %21 = math.exp %20 : vector<4x1xf32>
    %22 = vector.broadcast %19 : vector<4x1xf32> to vector<4x4xf32>
    %23 = arith.subf %14, %22 : vector<4x4xf32>
    %24 = math.exp %23 : vector<4x4xf32>
    %c0_14 = arith.constant 0 : index
    %c0_15 = arith.constant 0 : index
    %c0_16 = arith.constant 0 : index
    %25 = vector.load %arg9[%c0_14, %c0_15, %c0_16] : memref<4x4x1xf32, #tpu.memory_space<vmem>>, vector<1x4x1xf32>
    %26 = vector.shape_cast %25 : vector<1x4x1xf32> to vector<4x1xf32>
    %27 = arith.mulf %21, %26 : vector<4x1xf32>
    %cst_17 = arith.constant dense<0.000000e+00> : vector<4xf32>
    %28 = vector.multi_reduction <add>, %24, %cst_17 [1] : vector<4x4xf32> to vector<4xf32>
    %29 = vector.shape_cast %28 : vector<4xf32> to vector<4x1xf32>
    %30 = arith.addf %27, %29 : vector<4x1xf32>
    %c0_18 = arith.constant 0 : index
    %c0_19 = arith.constant 0 : index
    %c0_20 = arith.constant 0 : index
    %31 = vector.load %arg9[%c0_18, %c0_19, %c0_20] : memref<4x4x1xf32, #tpu.memory_space<vmem>>, vector<1x4x1xf32>
    %32 = vector.shape_cast %31 : vector<1x4x1xf32> to vector<4x1xf32>
    %33 = vector.shape_cast %30 : vector<4x1xf32> to vector<1x4x1xf32>
    tpu.vector_store %arg9[%c0_18, %c0_19, %c0_20], %33 {strides = array<i32>} : memref<4x4x1xf32, #tpu.memory_space<vmem>>, vector<1x4x1xf32>,
    %c0_21 = arith.constant 0 : index
    %c0_22 = arith.constant 0 : index
    %c0_23 = arith.constant 0 : index
    %34 = vector.load %arg10[%c0_21, %c0_22, %c0_23] : memref<4x4x32xf32, #tpu.memory_space<vmem>>, vector<1x4x32xf32>
    %35 = vector.shape_cast %34 : vector<1x4x32xf32> to vector<4x32xf32>
    %36 = vector.broadcast %21 : vector<4x1xf32> to vector<4x32xf32>
    %37 = arith.mulf %36, %35 : vector<4x32xf32>
    %cst_24 = arith.constant dense<0.000000e+00> : vector<4x32xf32>
    %38 = tpu.matmul %24, %13, %cst_24 {dimension_numbers = #tpu.dot_dimension_numbers<[1], [0], [0], [1], [0, 0, 1, 1], [], []>} : vector<4x4xf32>, vector<4x32xf32>, vector<4x32xf32> -> vector<4x32xf32>
    %39 = arith.addf %37, %38 : vector<4x32xf32>
    %c0_25 = arith.constant 0 : index
    %c0_26 = arith.constant 0 : index
    %c0_27 = arith.constant 0 : index
    %40 = vector.load %arg10[%c0_25, %c0_26, %c0_27] : memref<4x4x32xf32, #tpu.memory_space<vmem>>, vector<1x4x32xf32>
    %41 = vector.shape_cast %40 : vector<1x4x32xf32> to vector<4x32xf32>
    %42 = vector.shape_cast %39 : vector<4x32xf32> to vector<1x4x32xf32>
    tpu.vector_store %arg10[%c0_25, %c0_26, %c0_27], %42 {strides = array<i32>} : memref<4x4x32xf32, #tpu.memory_space<vmem>>, vector<1x4x32xf32>,
    %c0_28 = arith.constant 0 : index
    %c0_29 = arith.constant 0 : index
    %c0_30 = arith.constant 0 : index
    %43 = vector.load %arg8[%c0_28, %c0_29, %c0_30] : memref<4x4x1xf32, #tpu.memory_space<vmem>>, vector<1x4x1xf32>
    %44 = vector.shape_cast %43 : vector<1x4x1xf32> to vector<4x1xf32>
    %45 = vector.shape_cast %19 : vector<4x1xf32> to vector<1x4x1xf32>
    tpu.vector_store %arg8[%c0_28, %c0_29, %c0_30], %45 {strides = array<i32>} : memref<4x4x1xf32, #tpu.memory_space<vmem>>, vector<1x4x1xf32>,
    %46 = vector.extract_strided_slice %4 {offsets = [0, 32], sizes = [4, 32], strides = [1, 1]} : vector<4x128xf32> to vector<4x32xf32>
    %cst_31 = arith.constant 0.176776692 : f32
    %47 = vector.broadcast %cst_31 : f32 to vector<4x32xf32>
    %48 = arith.mulf %46, %47 : vector<4x32xf32>
    %49 = vector.extract_strided_slice %6 {offsets = [0, 32], sizes = [4, 32], strides = [1, 1]} : vector<4x128xf32> to vector<4x32xf32>
    %50 = vector.extract_strided_slice %8 {offsets = [0, 32], sizes = [4, 32], strides = [1, 1]} : vector<4x128xf32> to vector<4x32xf32>
    %cst_32 = arith.constant dense<0.000000e+00> : vector<4x4xf32>
    %51 = tpu.matmul %48, %49, %cst_32 {dimension_numbers = #tpu.dot_dimension_numbers<[1], [1], [0], [0], [0, 0, 1, 0], [], []>} : vector<4x32xf32>, vector<4x32xf32>, vector<4x4xf32> -> vector<4x4xf32>
    %c1 = arith.constant 1 : index
    %c0_33 = arith.constant 0 : index
    %c0_34 = arith.constant 0 : index
    %52 = vector.load %arg8[%c1, %c0_33, %c0_34] : memref<4x4x1xf32, #tpu.memory_space<vmem>>, vector<1x4x1xf32>
    %53 = vector.shape_cast %52 : vector<1x4x1xf32> to vector<4x1xf32>
    %cst_35 = arith.constant dense<0xFF800000> : vector<4xf32>
    %54 = vector.multi_reduction <maximumf>, %51, %cst_35 [1] : vector<4x4xf32> to vector<4xf32>
    %55 = vector.shape_cast %54 : vector<4xf32> to vector<4x1xf32>
    %56 = arith.maximumf %53, %55 : vector<4x1xf32>
    %57 = arith.subf %53, %56 : vector<4x1xf32>
    %58 = math.exp %57 : vector<4x1xf32>
    %59 = vector.broadcast %56 : vector<4x1xf32> to vector<4x4xf32>
    %60 = arith.subf %51, %59 : vector<4x4xf32>
    %61 = math.exp %60 : vector<4x4xf32>
    %c1_36 = arith.constant 1 : index
    %c0_37 = arith.constant 0 : index
    %c0_38 = arith.constant 0 : index
    %62 = vector.load %arg9[%c1_36, %c0_37, %c0_38] : memref<4x4x1xf32, #tpu.memory_space<vmem>>, vector<1x4x1xf32>
    %63 = vector.shape_cast %62 : vector<1x4x1xf32> to vector<4x1xf32>
    %64 = arith.mulf %58, %63 : vector<4x1xf32>
    %cst_39 = arith.constant dense<0.000000e+00> : vector<4xf32>
    %65 = vector.multi_reduction <add>, %61, %cst_39 [1] : vector<4x4xf32> to vector<4xf32>
    %66 = vector.shape_cast %65 : vector<4xf32> to vector<4x1xf32>
    %67 = arith.addf %64, %66 : vector<4x1xf32>
    %c1_40 = arith.constant 1 : index
    %c0_41 = arith.constant 0 : index
    %c0_42 = arith.constant 0 : index
    %68 = vector.load %arg9[%c1_40, %c0_41, %c0_42] : memref<4x4x1xf32, #tpu.memory_space<vmem>>, vector<1x4x1xf32>
    %69 = vector.shape_cast %68 : vector<1x4x1xf32> to vector<4x1xf32>
    %70 = vector.shape_cast %67 : vector<4x1xf32> to vector<1x4x1xf32>
    tpu.vector_store %arg9[%c1_40, %c0_41, %c0_42], %70 {strides = array<i32>} : memref<4x4x1xf32, #tpu.memory_space<vmem>>, vector<1x4x1xf32>,
    %c1_43 = arith.constant 1 : index
    %c0_44 = arith.constant 0 : index
    %c0_45 = arith.constant 0 : index
    %71 = vector.load %arg10[%c1_43, %c0_44, %c0_45] : memref<4x4x32xf32, #tpu.memory_space<vmem>>, vector<1x4x32xf32>
    %72 = vector.shape_cast %71 : vector<1x4x32xf32> to vector<4x32xf32>
    %73 = vector.broadcast %58 : vector<4x1xf32> to vector<4x32xf32>
    %74 = arith.mulf %73, %72 : vector<4x32xf32>
    %cst_46 = arith.constant dense<0.000000e+00> : vector<4x32xf32>
    %75 = tpu.matmul %61, %50, %cst_46 {dimension_numbers = #tpu.dot_dimension_numbers<[1], [0], [0], [1], [0, 0, 1, 1], [], []>} : vector<4x4xf32>, vector<4x32xf32>, vector<4x32xf32> -> vector<4x32xf32>
    %76 = arith.addf %74, %75 : vector<4x32xf32>
    %c1_47 = arith.constant 1 : index
    %c0_48 = arith.constant 0 : index
    %c0_49 = arith.constant 0 : index
    %77 = vector.load %arg10[%c1_47, %c0_48, %c0_49] : memref<4x4x32xf32, #tpu.memory_space<vmem>>, vector<1x4x32xf32>
    %78 = vector.shape_cast %77 : vector<1x4x32xf32> to vector<4x32xf32>
    %79 = vector.shape_cast %76 : vector<4x32xf32> to vector<1x4x32xf32>
    tpu.vector_store %arg10[%c1_47, %c0_48, %c0_49], %79 {strides = array<i32>} : memref<4x4x32xf32, #tpu.memory_space<vmem>>, vector<1x4x32xf32>,
    %c1_50 = arith.constant 1 : index
    %c0_51 = arith.constant 0 : index
    %c0_52 = arith.constant 0 : index
    %80 = vector.load %arg8[%c1_50, %c0_51, %c0_52] : memref<4x4x1xf32, #tpu.memory_space<vmem>>, vector<1x4x1xf32>
    %81 = vector.shape_cast %80 : vector<1x4x1xf32> to vector<4x1xf32>
    %82 = vector.shape_cast %56 : vector<4x1xf32> to vector<1x4x1xf32>
    tpu.vector_store %arg8[%c1_50, %c0_51, %c0_52], %82 {strides = array<i32>} : memref<4x4x1xf32, #tpu.memory_space<vmem>>, vector<1x4x1xf32>,
    %83 = vector.extract_strided_slice %4 {offsets = [0, 64], sizes = [4, 32], strides = [1, 1]} : vector<4x128xf32> to vector<4x32xf32>
    %cst_53 = arith.constant 0.176776692 : f32
    %84 = vector.broadcast %cst_53 : f32 to vector<4x32xf32>
    %85 = arith.mulf %83, %84 : vector<4x32xf32>
    %86 = vector.extract_strided_slice %6 {offsets = [0, 64], sizes = [4, 32], strides = [1, 1]} : vector<4x128xf32> to vector<4x32xf32>
    %87 = vector.extract_strided_slice %8 {offsets = [0, 64], sizes = [4, 32], strides = [1, 1]} : vector<4x128xf32> to vector<4x32xf32>
    %cst_54 = arith.constant dense<0.000000e+00> : vector<4x4xf32>
    %88 = tpu.matmul %85, %86, %cst_54 {dimension_numbers = #tpu.dot_dimension_numbers<[1], [1], [0], [0], [0, 0, 1, 0], [], []>} : vector<4x32xf32>, vector<4x32xf32>, vector<4x4xf32> -> vector<4x4xf32>
    %c2 = arith.constant 2 : index
    %c0_55 = arith.constant 0 : index
    %c0_56 = arith.constant 0 : index
    %89 = vector.load %arg8[%c2, %c0_55, %c0_56] : memref<4x4x1xf32, #tpu.memory_space<vmem>>, vector<1x4x1xf32>
    %90 = vector.shape_cast %89 : vector<1x4x1xf32> to vector<4x1xf32>
    %cst_57 = arith.constant dense<0xFF800000> : vector<4xf32>
    %91 = vector.multi_reduction <maximumf>, %88, %cst_57 [1] : vector<4x4xf32> to vector<4xf32>
    %92 = vector.shape_cast %91 : vector<4xf32> to vector<4x1xf32>
    %93 = arith.maximumf %90, %92 : vector<4x1xf32>
    %94 = arith.subf %90, %93 : vector<4x1xf32>
    %95 = math.exp %94 : vector<4x1xf32>
    %96 = vector.broadcast %93 : vector<4x1xf32> to vector<4x4xf32>
    %97 = arith.subf %88, %96 : vector<4x4xf32>
    %98 = math.exp %97 : vector<4x4xf32>
    %c2_58 = arith.constant 2 : index
    %c0_59 = arith.constant 0 : index
    %c0_60 = arith.constant 0 : index
    %99 = vector.load %arg9[%c2_58, %c0_59, %c0_60] : memref<4x4x1xf32, #tpu.memory_space<vmem>>, vector<1x4x1xf32>
    %100 = vector.shape_cast %99 : vector<1x4x1xf32> to vector<4x1xf32>
    %101 = arith.mulf %95, %100 : vector<4x1xf32>
    %cst_61 = arith.constant dense<0.000000e+00> : vector<4xf32>
    %102 = vector.multi_reduction <add>, %98, %cst_61 [1] : vector<4x4xf32> to vector<4xf32>
    %103 = vector.shape_cast %102 : vector<4xf32> to vector<4x1xf32>
    %104 = arith.addf %101, %103 : vector<4x1xf32>
    %c2_62 = arith.constant 2 : index
    %c0_63 = arith.constant 0 : index
    %c0_64 = arith.constant 0 : index
    %105 = vector.load %arg9[%c2_62, %c0_63, %c0_64] : memref<4x4x1xf32, #tpu.memory_space<vmem>>, vector<1x4x1xf32>
    %106 = vector.shape_cast %105 : vector<1x4x1xf32> to vector<4x1xf32>
    %107 = vector.shape_cast %104 : vector<4x1xf32> to vector<1x4x1xf32>
    tpu.vector_store %arg9[%c2_62, %c0_63, %c0_64], %107 {strides = array<i32>} : memref<4x4x1xf32, #tpu.memory_space<vmem>>, vector<1x4x1xf32>,
    %c2_65 = arith.constant 2 : index
    %c0_66 = arith.constant 0 : index
    %c0_67 = arith.constant 0 : index
    %108 = vector.load %arg10[%c2_65, %c0_66, %c0_67] : memref<4x4x32xf32, #tpu.memory_space<vmem>>, vector<1x4x32xf32>
    %109 = vector.shape_cast %108 : vector<1x4x32xf32> to vector<4x32xf32>
    %110 = vector.broadcast %95 : vector<4x1xf32> to vector<4x32xf32>
    %111 = arith.mulf %110, %109 : vector<4x32xf32>
    %cst_68 = arith.constant dense<0.000000e+00> : vector<4x32xf32>
    %112 = tpu.matmul %98, %87, %cst_68 {dimension_numbers = #tpu.dot_dimension_numbers<[1], [0], [0], [1], [0, 0, 1, 1], [], []>} : vector<4x4xf32>, vector<4x32xf32>, vector<4x32xf32> -> vector<4x32xf32>
    %113 = arith.addf %111, %112 : vector<4x32xf32>
    %c2_69 = arith.constant 2 : index
    %c0_70 = arith.constant 0 : index
    %c0_71 = arith.constant 0 : index
    %114 = vector.load %arg10[%c2_69, %c0_70, %c0_71] : memref<4x4x32xf32, #tpu.memory_space<vmem>>, vector<1x4x32xf32>
    %115 = vector.shape_cast %114 : vector<1x4x32xf32> to vector<4x32xf32>
    %116 = vector.shape_cast %113 : vector<4x32xf32> to vector<1x4x32xf32>
    tpu.vector_store %arg10[%c2_69, %c0_70, %c0_71], %116 {strides = array<i32>} : memref<4x4x32xf32, #tpu.memory_space<vmem>>, vector<1x4x32xf32>,
    %c2_72 = arith.constant 2 : index
    %c0_73 = arith.constant 0 : index
    %c0_74 = arith.constant 0 : index
    %117 = vector.load %arg8[%c2_72, %c0_73, %c0_74] : memref<4x4x1xf32, #tpu.memory_space<vmem>>, vector<1x4x1xf32>
    %118 = vector.shape_cast %117 : vector<1x4x1xf32> to vector<4x1xf32>
    %119 = vector.shape_cast %93 : vector<4x1xf32> to vector<1x4x1xf32>
    tpu.vector_store %arg8[%c2_72, %c0_73, %c0_74], %119 {strides = array<i32>} : memref<4x4x1xf32, #tpu.memory_space<vmem>>, vector<1x4x1xf32>,
    %120 = vector.extract_strided_slice %4 {offsets = [0, 96], sizes = [4, 32], strides = [1, 1]} : vector<4x128xf32> to vector<4x32xf32>
    %cst_75 = arith.constant 0.176776692 : f32
    %121 = vector.broadcast %cst_75 : f32 to vector<4x32xf32>
    %122 = arith.mulf %120, %121 : vector<4x32xf32>
    %123 = vector.extract_strided_slice %6 {offsets = [0, 96], sizes = [4, 32], strides = [1, 1]} : vector<4x128xf32> to vector<4x32xf32>
    %124 = vector.extract_strided_slice %8 {offsets = [0, 96], sizes = [4, 32], strides = [1, 1]} : vector<4x128xf32> to vector<4x32xf32>
    %cst_76 = arith.constant dense<0.000000e+00> : vector<4x4xf32>
    %125 = tpu.matmul %122, %123, %cst_76 {dimension_numbers = #tpu.dot_dimension_numbers<[1], [1], [0], [0], [0, 0, 1, 0], [], []>} : vector<4x32xf32>, vector<4x32xf32>, vector<4x4xf32> -> vector<4x4xf32>
    %c3 = arith.constant 3 : index
    %c0_77 = arith.constant 0 : index
    %c0_78 = arith.constant 0 : index
    %126 = vector.load %arg8[%c3, %c0_77, %c0_78] : memref<4x4x1xf32, #tpu.memory_space<vmem>>, vector<1x4x1xf32>
    %127 = vector.shape_cast %126 : vector<1x4x1xf32> to vector<4x1xf32>
    %cst_79 = arith.constant dense<0xFF800000> : vector<4xf32>
    %128 = vector.multi_reduction <maximumf>, %125, %cst_79 [1] : vector<4x4xf32> to vector<4xf32>
    %129 = vector.shape_cast %128 : vector<4xf32> to vector<4x1xf32>
    %130 = arith.maximumf %127, %129 : vector<4x1xf32>
    %131 = arith.subf %127, %130 : vector<4x1xf32>
    %132 = math.exp %131 : vector<4x1xf32>
    %133 = vector.broadcast %130 : vector<4x1xf32> to vector<4x4xf32>
    %134 = arith.subf %125, %133 : vector<4x4xf32>
    %135 = math.exp %134 : vector<4x4xf32>
    %c3_80 = arith.constant 3 : index
    %c0_81 = arith.constant 0 : index
    %c0_82 = arith.constant 0 : index
    %136 = vector.load %arg9[%c3_80, %c0_81, %c0_82] : memref<4x4x1xf32, #tpu.memory_space<vmem>>, vector<1x4x1xf32>
    %137 = vector.shape_cast %136 : vector<1x4x1xf32> to vector<4x1xf32>
    %138 = arith.mulf %132, %137 : vector<4x1xf32>
    %cst_83 = arith.constant dense<0.000000e+00> : vector<4xf32>
    %139 = vector.multi_reduction <add>, %135, %cst_83 [1] : vector<4x4xf32> to vector<4xf32>
    %140 = vector.shape_cast %139 : vector<4xf32> to vector<4x1xf32>
    %141 = arith.addf %138, %140 : vector<4x1xf32>
    %c3_84 = arith.constant 3 : index
    %c0_85 = arith.constant 0 : index
    %c0_86 = arith.constant 0 : index
    %142 = vector.load %arg9[%c3_84, %c0_85, %c0_86] : memref<4x4x1xf32, #tpu.memory_space<vmem>>, vector<1x4x1xf32>
    %143 = vector.shape_cast %142 : vector<1x4x1xf32> to vector<4x1xf32>
    %144 = vector.shape_cast %141 : vector<4x1xf32> to vector<1x4x1xf32>
    tpu.vector_store %arg9[%c3_84, %c0_85, %c0_86], %144 {strides = array<i32>} : memref<4x4x1xf32, #tpu.memory_space<vmem>>, vector<1x4x1xf32>,
    %c3_87 = arith.constant 3 : index
    %c0_88 = arith.constant 0 : index
    %c0_89 = arith.constant 0 : index
    %145 = vector.load %arg10[%c3_87, %c0_88, %c0_89] : memref<4x4x32xf32, #tpu.memory_space<vmem>>, vector<1x4x32xf32>
    %146 = vector.shape_cast %145 : vector<1x4x32xf32> to vector<4x32xf32>
    %147 = vector.broadcast %132 : vector<4x1xf32> to vector<4x32xf32>
    %148 = arith.mulf %147, %146 : vector<4x32xf32>
    %cst_90 = arith.constant dense<0.000000e+00> : vector<4x32xf32>
    %149 = tpu.matmul %135, %124, %cst_90 {dimension_numbers = #tpu.dot_dimension_numbers<[1], [0], [0], [1], [0, 0, 1, 1], [], []>} : vector<4x4xf32>, vector<4x32xf32>, vector<4x32xf32> -> vector<4x32xf32>
    %150 = arith.addf %148, %149 : vector<4x32xf32>
    %c3_91 = arith.constant 3 : index
    %c0_92 = arith.constant 0 : index
    %c0_93 = arith.constant 0 : index
    %151 = vector.load %arg10[%c3_91, %c0_92, %c0_93] : memref<4x4x32xf32, #tpu.memory_space<vmem>>, vector<1x4x32xf32>
    %152 = vector.shape_cast %151 : vector<1x4x32xf32> to vector<4x32xf32>
    %153 = vector.shape_cast %150 : vector<4x32xf32> to vector<1x4x32xf32>
    tpu.vector_store %arg10[%c3_91, %c0_92, %c0_93], %153 {strides = array<i32>} : memref<4x4x32xf32, #tpu.memory_space<vmem>>, vector<1x4x32xf32>,
    %c3_94 = arith.constant 3 : index
    %c0_95 = arith.constant 0 : index
    %c0_96 = arith.constant 0 : index
    %154 = vector.load %arg8[%c3_94, %c0_95, %c0_96] : memref<4x4x1xf32, #tpu.memory_space<vmem>>, vector<1x4x1xf32>
    %155 = vector.shape_cast %154 : vector<1x4x1xf32> to vector<4x1xf32>
    %156 = vector.shape_cast %130 : vector<4x1xf32> to vector<1x4x1xf32>
    tpu.vector_store %arg8[%c3_94, %c0_95, %c0_96], %156 {strides = array<i32>} : memref<4x4x1xf32, #tpu.memory_space<vmem>>, vector<1x4x1xf32>,
    %c0_i32_97 = arith.constant 0 : i32
    %157 = arith.cmpi eq, %arg3, %c0_i32_97 : i32
    %158 = arith.extui %157 : i1 to i32
    %c0_i32_98 = arith.constant 0 : i32
    %159 = arith.cmpi ne, %158, %c0_i32_98 : i32
    scf.if %159 {
      %c0_99 = arith.constant 0 : index
      %c0_100 = arith.constant 0 : index
      %c0_101 = arith.constant 0 : index
      %160 = vector.load %arg9[%c0_99, %c0_100, %c0_101] : memref<4x4x1xf32, #tpu.memory_space<vmem>>, vector<1x4x1xf32>
      %161 = vector.shape_cast %160 : vector<1x4x1xf32> to vector<4x1xf32>
      %cst_102 = arith.constant 1.000000e+00 : f32
      %162 = vector.broadcast %cst_102 : f32 to vector<4x1xf32>
      %163 = arith.divf %162, %161 : vector<4x1xf32>
      %c0_103 = arith.constant 0 : index
      %c0_104 = arith.constant 0 : index
      %c0_105 = arith.constant 0 : index
      %164 = vector.load %arg10[%c0_103, %c0_104, %c0_105] : memref<4x4x32xf32, #tpu.memory_space<vmem>>, vector<1x4x32xf32>
      %165 = vector.shape_cast %164 : vector<1x4x32xf32> to vector<4x32xf32>
      %166 = vector.broadcast %163 : vector<4x1xf32> to vector<4x32xf32>
      %167 = arith.mulf %165, %166 : vector<4x32xf32>
      %c1_106 = arith.constant 1 : index
      %c0_107 = arith.constant 0 : index
      %c0_108 = arith.constant 0 : index
      %168 = vector.load %arg9[%c1_106, %c0_107, %c0_108] : memref<4x4x1xf32, #tpu.memory_space<vmem>>, vector<1x4x1xf32>
      %169 = vector.shape_cast %168 : vector<1x4x1xf32> to vector<4x1xf32>
      %cst_109 = arith.constant 1.000000e+00 : f32
      %170 = vector.broadcast %cst_109 : f32 to vector<4x1xf32>
      %171 = arith.divf %170, %169 : vector<4x1xf32>
      %c1_110 = arith.constant 1 : index
      %c0_111 = arith.constant 0 : index
      %c0_112 = arith.constant 0 : index
      %172 = vector.load %arg10[%c1_110, %c0_111, %c0_112] : memref<4x4x32xf32, #tpu.memory_space<vmem>>, vector<1x4x32xf32>
      %173 = vector.shape_cast %172 : vector<1x4x32xf32> to vector<4x32xf32>
      %174 = vector.broadcast %171 : vector<4x1xf32> to vector<4x32xf32>
      %175 = arith.mulf %173, %174 : vector<4x32xf32>
      %c2_113 = arith.constant 2 : index
      %c0_114 = arith.constant 0 : index
      %c0_115 = arith.constant 0 : index
      %176 = vector.load %arg9[%c2_113, %c0_114, %c0_115] : memref<4x4x1xf32, #tpu.memory_space<vmem>>, vector<1x4x1xf32>
      %177 = vector.shape_cast %176 : vector<1x4x1xf32> to vector<4x1xf32>
      %cst_116 = arith.constant 1.000000e+00 : f32
      %178 = vector.broadcast %cst_116 : f32 to vector<4x1xf32>
      %179 = arith.divf %178, %177 : vector<4x1xf32>
      %c2_117 = arith.constant 2 : index
      %c0_118 = arith.constant 0 : index
      %c0_119 = arith.constant 0 : index
      %180 = vector.load %arg10[%c2_117, %c0_118, %c0_119] : memref<4x4x32xf32, #tpu.memory_space<vmem>>, vector<1x4x32xf32>
      %181 = vector.shape_cast %180 : vector<1x4x32xf32> to vector<4x32xf32>
      %182 = vector.broadcast %179 : vector<4x1xf32> to vector<4x32xf32>
      %183 = arith.mulf %181, %182 : vector<4x32xf32>
      %c3_120 = arith.constant 3 : index
      %c0_121 = arith.constant 0 : index
      %c0_122 = arith.constant 0 : index
      %184 = vector.load %arg9[%c3_120, %c0_121, %c0_122] : memref<4x4x1xf32, #tpu.memory_space<vmem>>, vector<1x4x1xf32>
      %185 = vector.shape_cast %184 : vector<1x4x1xf32> to vector<4x1xf32>
      %cst_123 = arith.constant 1.000000e+00 : f32
      %186 = vector.broadcast %cst_123 : f32 to vector<4x1xf32>
      %187 = arith.divf %186, %185 : vector<4x1xf32>
      %c3_124 = arith.constant 3 : index
      %c0_125 = arith.constant 0 : index
      %c0_126 = arith.constant 0 : index
      %188 = vector.load %arg10[%c3_124, %c0_125, %c0_126] : memref<4x4x32xf32, #tpu.memory_space<vmem>>, vector<1x4x32xf32>
      %189 = vector.shape_cast %188 : vector<1x4x32xf32> to vector<4x32xf32>
      %190 = vector.broadcast %187 : vector<4x1xf32> to vector<4x32xf32>
      %191 = arith.mulf %189, %190 : vector<4x32xf32>
      %192 = tpu.concatenate %167, %175, %183, %191 in 1 : vector<4x32xf32>, vector<4x32xf32>, vector<4x32xf32>, vector<4x32xf32> -> vector<4x128xf32>
      %c0_127 = arith.constant 0 : index
      %c0_128 = arith.constant 0 : index
      %c0_129 = arith.constant 0 : index
      %193 = vector.load %arg7[%c0_127, %c0_128, %c0_129] : memref<1x4x128xf32, #tpu.memory_space<vmem>>, vector<1x4x128xf32>
      %194 = vector.shape_cast %193 : vector<1x4x128xf32> to vector<4x128xf32>
      %195 = vector.shape_cast %192 : vector<4x128xf32> to vector<1x4x128xf32>
      tpu.vector_store %arg7[%c0_127, %c0_128, %c0_129], %195 {strides = array<i32>} : memref<1x4x128xf32, #tpu.memory_space<vmem>>, vector<1x4x128xf32>,
    } else {
    }
    return
  }
  func.func @transform_0(%arg0: i32, %arg1: i32, %arg2: i32, %arg3: i32) -> (i32, i32, i32) {
    %c0_i32 = arith.constant 0 : i32
    return %arg0, %arg2, %arg1 : i32, i32, i32
  }
  func.func @transform_1(%arg0: i32, %arg1: i32, %arg2: i32, %arg3: i32) -> (i32, i32, i32) {
    %c1_i32 = arith.constant 1 : i32
    %0 = arith.addi %c1_i32, %arg1 : i32
    %c0_i32 = arith.constant 0 : i32
    return %arg0, %arg3, %0 : i32, i32, i32
  }
  func.func @transform_2(%arg0: i32, %arg1: i32, %arg2: i32, %arg3: i32) -> (i32, i32, i32) {
    %c2_i32 = arith.constant 2 : i32
    %0 = arith.addi %c2_i32, %arg1 : i32
    %c0_i32 = arith.constant 0 : i32
    return %arg0, %arg3, %0 : i32, i32, i32
  }
  func.func @transform_3(%arg0: i32, %arg1: i32, %arg2: i32, %arg3: i32) -> (i32, i32, i32) {
    %c0_i32 = arith.constant 0 : i32
    return %arg0, %arg2, %arg1 : i32, i32, i32
  }
}

module attributes {stable_mosaic.version = 11 : i64} {
  func.func @_linear_kernel(%arg0: i32, %arg1: memref<16x128xf32, #tpu.memory_space<vmem>>, %arg2: memref<128x512xf32, #tpu.memory_space<vmem>>, %arg3: memref<1x512xf32, #tpu.memory_space<vmem>>, %arg4: memref<16x512xf32, #tpu.memory_space<vmem>>) attributes {dimension_semantics = [#tpu.dimension_semantics<parallel>], iteration_bounds = array<i64: 2>, scalar_prefetch = 0 : i64, scratch_operands = 0 : i64, tpu.core_type = #tpu.core_type<tc>, window_params = [{transform_indices = @transform_0, window_bounds = array<i64: 16, 128>}, {pipeline_mode = #tpu.pipeline_mode<synchronous>, transform_indices = @transform_1, window_bounds = array<i64: 128, 512>}, {pipeline_mode = #tpu.pipeline_mode<synchronous>, transform_indices = @transform_2, window_bounds = array<i64: 1, 512>}, {transform_indices = @transform_3, window_bounds = array<i64: 16, 512>}]} {
    %c0 = arith.constant 0 : index
    %c0_0 = arith.constant 0 : index
    %0 = vector.load %arg1[%c0, %c0_0] : memref<16x128xf32, #tpu.memory_space<vmem>>, vector<16x128xf32>
    %c0_1 = arith.constant 0 : index
    %c0_2 = arith.constant 0 : index
    %1 = vector.load %arg2[%c0_1, %c0_2] : memref<128x512xf32, #tpu.memory_space<vmem>>, vector<128x512xf32>
    %cst = arith.constant dense<0.000000e+00> : vector<16x512xf32>
    %2 = tpu.matmul %0, %1, %cst {dimension_numbers = #tpu.dot_dimension_numbers<[1], [0], [0], [1], [0, 0, 1, 1], [], []>} : vector<16x128xf32>, vector<128x512xf32>, vector<16x512xf32> -> vector<16x512xf32>
    %c0_3 = arith.constant 0 : index
    %c0_4 = arith.constant 0 : index
    %3 = vector.load %arg3[%c0_3, %c0_4] : memref<1x512xf32, #tpu.memory_space<vmem>>, vector<1x512xf32>
    %4 = vector.broadcast %3 : vector<1x512xf32> to vector<16x512xf32>
    %5 = arith.addf %2, %4 : vector<16x512xf32>
    %cst_5 = arith.constant 5.000000e-01 : f32
    %6 = vector.broadcast %cst_5 : f32 to vector<16x512xf32>
    %7 = arith.mulf %6, %5 : vector<16x512xf32>
    %cst_6 = arith.constant 0.707106769 : f32
    %8 = vector.broadcast %cst_6 : f32 to vector<16x512xf32>
    %9 = arith.mulf %5, %8 : vector<16x512xf32>
    %cst_7 = arith.constant 0.000000e+00 : f32
    %10 = vector.broadcast %cst_7 : f32 to vector<16x512xf32>
    %11 = arith.cmpf oge, %9, %10 : vector<16x512xf32>
    %cst_8 = arith.constant 1.000000e+00 : f32
    %cst_9 = arith.constant -1.000000e+00 : f32
    %12 = vector.broadcast %cst_8 : f32 to vector<16x512xf32>
    %13 = vector.broadcast %cst_9 : f32 to vector<16x512xf32>
    %14 = arith.select %11, %12, %13 : vector<16x512xi1>, vector<16x512xf32>
    %15 = math.absf %9 : vector<16x512xf32>
    %cst_10 = arith.constant 0.327591091 : f32
    %16 = vector.broadcast %cst_10 : f32 to vector<16x512xf32>
    %17 = arith.mulf %16, %15 : vector<16x512xf32>
    %cst_11 = arith.constant 1.000000e+00 : f32
    %18 = vector.broadcast %cst_11 : f32 to vector<16x512xf32>
    %19 = arith.addf %18, %17 : vector<16x512xf32>
    %cst_12 = arith.constant 1.000000e+00 : f32
    %20 = vector.broadcast %cst_12 : f32 to vector<16x512xf32>
    %21 = arith.divf %20, %19 : vector<16x512xf32>
    %cst_13 = arith.constant 1.06140542 : f32
    %22 = vector.broadcast %cst_13 : f32 to vector<16x512xf32>
    %23 = arith.mulf %22, %21 : vector<16x512xf32>
    %cst_14 = arith.constant -1.45315206 : f32
    %24 = vector.broadcast %cst_14 : f32 to vector<16x512xf32>
    %25 = arith.addf %23, %24 : vector<16x512xf32>
    %26 = arith.mulf %25, %21 : vector<16x512xf32>
    %cst_15 = arith.constant 1.42141378 : f32
    %27 = vector.broadcast %cst_15 : f32 to vector<16x512xf32>
    %28 = arith.addf %26, %27 : vector<16x512xf32>
    %29 = arith.mulf %28, %21 : vector<16x512xf32>
    %cst_16 = arith.constant -0.284496725 : f32
    %30 = vector.broadcast %cst_16 : f32 to vector<16x512xf32>
    %31 = arith.addf %29, %30 : vector<16x512xf32>
    %32 = arith.mulf %31, %21 : vector<16x512xf32>
    %cst_17 = arith.constant 0.254829586 : f32
    %33 = vector.broadcast %cst_17 : f32 to vector<16x512xf32>
    %34 = arith.addf %32, %33 : vector<16x512xf32>
    %35 = arith.mulf %34, %21 : vector<16x512xf32>
    %cst_18 = arith.constant 0.000000e+00 : f32
    %36 = vector.broadcast %cst_18 : f32 to vector<16x512xf32>
    %37 = arith.subf %36, %15 : vector<16x512xf32>
    %38 = arith.mulf %37, %15 : vector<16x512xf32>
    %39 = math.exp %38 : vector<16x512xf32>
    %40 = arith.mulf %35, %39 : vector<16x512xf32>
    %cst_19 = arith.constant 1.000000e+00 : f32
    %41 = vector.broadcast %cst_19 : f32 to vector<16x512xf32>
    %42 = arith.subf %41, %40 : vector<16x512xf32>
    %43 = arith.mulf %14, %42 : vector<16x512xf32>
    %cst_20 = arith.constant 1.000000e+00 : f32
    %44 = vector.broadcast %cst_20 : f32 to vector<16x512xf32>
    %45 = arith.addf %44, %43 : vector<16x512xf32>
    %46 = arith.mulf %7, %45 : vector<16x512xf32>
    %c0_21 = arith.constant 0 : index
    %c0_22 = arith.constant 0 : index
    %47 = vector.load %arg4[%c0_21, %c0_22] : memref<16x512xf32, #tpu.memory_space<vmem>>, vector<16x512xf32>
    tpu.vector_store %arg4[%c0_21, %c0_22], %46 {strides = array<i32>} : memref<16x512xf32, #tpu.memory_space<vmem>>, vector<16x512xf32>,
    return
  }
  func.func @transform_0(%arg0: i32) -> (i32, i32) {
    %c0_i32 = arith.constant 0 : i32
    %c0_i32_0 = arith.constant 0 : i32
    return %arg0, %c0_i32 : i32, i32
  }
  func.func @transform_1(%arg0: i32) -> (i32, i32) {
    %c0_i32 = arith.constant 0 : i32
    %c0_i32_0 = arith.constant 0 : i32
    %c0_i32_1 = arith.constant 0 : i32
    return %c0_i32, %c0_i32_0 : i32, i32
  }
  func.func @transform_2(%arg0: i32) -> (i32, i32) {
    %c0_i32 = arith.constant 0 : i32
    %c0_i32_0 = arith.constant 0 : i32
    %c0_i32_1 = arith.constant 0 : i32
    return %c0_i32, %c0_i32_0 : i32, i32
  }
  func.func @transform_3(%arg0: i32) -> (i32, i32) {
    %c0_i32 = arith.constant 0 : i32
    %c0_i32_0 = arith.constant 0 : i32
    return %arg0, %c0_i32 : i32, i32
  }
}

module attributes {stable_mosaic.version = 11 : i64} {
  func.func @_linear_kernel(%arg0: i32, %arg1: memref<16x512xf32, #tpu.memory_space<vmem>>, %arg2: memref<512x128xf32, #tpu.memory_space<vmem>>, %arg3: memref<1x128xf32, #tpu.memory_space<vmem>>, %arg4: memref<16x128xf32, #tpu.memory_space<vmem>>, %arg5: memref<16x128xf32, #tpu.memory_space<vmem>>) attributes {dimension_semantics = [#tpu.dimension_semantics<parallel>], iteration_bounds = array<i64: 2>, scalar_prefetch = 0 : i64, scratch_operands = 0 : i64, tpu.core_type = #tpu.core_type<tc>, window_params = [{transform_indices = @transform_0, window_bounds = array<i64: 16, 512>}, {pipeline_mode = #tpu.pipeline_mode<synchronous>, transform_indices = @transform_1, window_bounds = array<i64: 512, 128>}, {pipeline_mode = #tpu.pipeline_mode<synchronous>, transform_indices = @transform_2, window_bounds = array<i64: 1, 128>}, {transform_indices = @transform_3, window_bounds = array<i64: 16, 128>}, {transform_indices = @transform_4, window_bounds = array<i64: 16, 128>}]} {
    %c0 = arith.constant 0 : index
    %c0_0 = arith.constant 0 : index
    %0 = vector.load %arg1[%c0, %c0_0] : memref<16x512xf32, #tpu.memory_space<vmem>>, vector<16x512xf32>
    %c0_1 = arith.constant 0 : index
    %c0_2 = arith.constant 0 : index
    %1 = vector.load %arg2[%c0_1, %c0_2] : memref<512x128xf32, #tpu.memory_space<vmem>>, vector<512x128xf32>
    %cst = arith.constant dense<0.000000e+00> : vector<16x128xf32>
    %2 = tpu.matmul %0, %1, %cst {dimension_numbers = #tpu.dot_dimension_numbers<[1], [0], [0], [1], [0, 0, 1, 1], [], []>} : vector<16x512xf32>, vector<512x128xf32>, vector<16x128xf32> -> vector<16x128xf32>
    %c0_3 = arith.constant 0 : index
    %c0_4 = arith.constant 0 : index
    %3 = vector.load %arg3[%c0_3, %c0_4] : memref<1x128xf32, #tpu.memory_space<vmem>>, vector<1x128xf32>
    %4 = vector.broadcast %3 : vector<1x128xf32> to vector<16x128xf32>
    %5 = arith.addf %2, %4 : vector<16x128xf32>
    %c0_5 = arith.constant 0 : index
    %c0_6 = arith.constant 0 : index
    %6 = vector.load %arg4[%c0_5, %c0_6] : memref<16x128xf32, #tpu.memory_space<vmem>>, vector<16x128xf32>
    %7 = arith.addf %5, %6 : vector<16x128xf32>
    %c0_7 = arith.constant 0 : index
    %c0_8 = arith.constant 0 : index
    %8 = vector.load %arg5[%c0_7, %c0_8] : memref<16x128xf32, #tpu.memory_space<vmem>>, vector<16x128xf32>
    tpu.vector_store %arg5[%c0_7, %c0_8], %7 {strides = array<i32>} : memref<16x128xf32, #tpu.memory_space<vmem>>, vector<16x128xf32>,
    return
  }
  func.func @transform_0(%arg0: i32) -> (i32, i32) {
    %c0_i32 = arith.constant 0 : i32
    %c0_i32_0 = arith.constant 0 : i32
    return %arg0, %c0_i32 : i32, i32
  }
  func.func @transform_1(%arg0: i32) -> (i32, i32) {
    %c0_i32 = arith.constant 0 : i32
    %c0_i32_0 = arith.constant 0 : i32
    %c0_i32_1 = arith.constant 0 : i32
    return %c0_i32, %c0_i32_0 : i32, i32
  }
  func.func @transform_2(%arg0: i32) -> (i32, i32) {
    %c0_i32 = arith.constant 0 : i32
    %c0_i32_0 = arith.constant 0 : i32
    %c0_i32_1 = arith.constant 0 : i32
    return %c0_i32, %c0_i32_0 : i32, i32
  }
  func.func @transform_3(%arg0: i32) -> (i32, i32) {
    %c0_i32 = arith.constant 0 : i32
    %c0_i32_0 = arith.constant 0 : i32
    return %arg0, %c0_i32 : i32, i32
  }
  func.func @transform_4(%arg0: i32) -> (i32, i32) {
    %c0_i32 = arith.constant 0 : i32
    %c0_i32_0 = arith.constant 0 : i32
    return %arg0, %c0_i32 : i32, i32
  }
}

module attributes {stable_mosaic.version = 11 : i64} {
  func.func @_flash_attn_kernel(%arg0: i32, %arg1: i32, %arg2: i32, %arg3: i32, %arg4: memref<1x16x128xf32, #tpu.memory_space<vmem>>, %arg5: memref<1x16x128xf32, #tpu.memory_space<vmem>>, %arg6: memref<1x16x128xf32, #tpu.memory_space<vmem>>, %arg7: memref<1x16x128xf32, #tpu.memory_space<vmem>>, %arg8: memref<4x16x1xf32, #tpu.memory_space<vmem>>, %arg9: memref<4x16x1xf32, #tpu.memory_space<vmem>>, %arg10: memref<4x16x32xf32, #tpu.memory_space<vmem>>) attributes {dimension_semantics = [#tpu.dimension_semantics<parallel>, #tpu.dimension_semantics<parallel>, #tpu.dimension_semantics<parallel>, #tpu.dimension_semantics<arbitrary>], iteration_bounds = array<i64: 2, 1, 1, 1>, scalar_prefetch = 0 : i64, scratch_operands = 3 : i64, tpu.core_type = #tpu.core_type<tc>, window_params = [{transform_indices = @transform_0, window_bounds = array<i64: 1, 16, 128>}, {transform_indices = @transform_1, window_bounds = array<i64: 1, 16, 128>}, {transform_indices = @transform_2, window_bounds = array<i64: 1, 16, 128>}, {transform_indices = @transform_3, window_bounds = array<i64: 1, 16, 128>}]} {
    %c0_i32 = arith.constant 0 : i32
    %0 = arith.cmpi eq, %arg3, %c0_i32 : i32
    %1 = arith.extui %0 : i1 to i32
    %c0_i32_0 = arith.constant 0 : i32
    %2 = arith.cmpi ne, %1, %c0_i32_0 : i32
    scf.if %2 {
      %cst_99 = arith.constant 0xFF800000 : f32
      %160 = vector.broadcast %cst_99 : f32 to vector<4x16x1xf32>
      %c0_100 = arith.constant 0 : index
      %c0_101 = arith.constant 0 : index
      %c0_102 = arith.constant 0 : index
      %161 = vector.load %arg8[%c0_100, %c0_101, %c0_102] : memref<4x16x1xf32, #tpu.memory_space<vmem>>, vector<4x16x1xf32>
      tpu.vector_store %arg8[%c0_100, %c0_101, %c0_102], %160 {strides = array<i32>} : memref<4x16x1xf32, #tpu.memory_space<vmem>>, vector<4x16x1xf32>,
      %cst_103 = arith.constant 0.000000e+00 : f32
      %162 = vector.broadcast %cst_103 : f32 to vector<4x16x1xf32>
      %c0_104 = arith.constant 0 : index
      %c0_105 = arith.constant 0 : index
      %c0_106 = arith.constant 0 : index
      %163 = vector.load %arg9[%c0_104, %c0_105, %c0_106] : memref<4x16x1xf32, #tpu.memory_space<vmem>>, vector<4x16x1xf32>
      tpu.vector_store %arg9[%c0_104, %c0_105, %c0_106], %162 {strides = array<i32>} : memref<4x16x1xf32, #tpu.memory_space<vmem>>, vector<4x16x1xf32>,
      %cst_107 = arith.constant 0.000000e+00 : f32
      %164 = vector.broadcast %cst_107 : f32 to vector<4x16x32xf32>
      %c0_108 = arith.constant 0 : index
      %c0_109 = arith.constant 0 : index
      %c0_110 = arith.constant 0 : index
      %165 = vector.load %arg10[%c0_108, %c0_109, %c0_110] : memref<4x16x32xf32, #tpu.memory_space<vmem>>, vector<4x16x32xf32>
      tpu.vector_store %arg10[%c0_108, %c0_109, %c0_110], %164 {strides = array<i32>} : memref<4x16x32xf32, #tpu.memory_space<vmem>>, vector<4x16x32xf32>,
    } else {
    }
    %c0 = arith.constant 0 : index
    %c0_1 = arith.constant 0 : index
    %c0_2 = arith.constant 0 : index
    %3 = vector.load %arg4[%c0, %c0_1, %c0_2] : memref<1x16x128xf32, #tpu.memory_space<vmem>>, vector<1x16x128xf32>
    %4 = vector.shape_cast %3 : vector<1x16x128xf32> to vector<16x128xf32>
    %c0_3 = arith.constant 0 : index
    %c0_4 = arith.constant 0 : index
    %c0_5 = arith.constant 0 : index
    %5 = vector.load %arg5[%c0_3, %c0_4, %c0_5] : memref<1x16x128xf32, #tpu.memory_space<vmem>>, vector<1x16x128xf32>
    %6 = vector.shape_cast %5 : vector<1x16x128xf32> to vector<16x128xf32>
    %c0_6 = arith.constant 0 : index
    %c0_7 = arith.constant 0 : index
    %c0_8 = arith.constant 0 : index
    %7 = vector.load %arg6[%c0_6, %c0_7, %c0_8] : memref<1x16x128xf32, #tpu.memory_space<vmem>>, vector<1x16x128xf32>
    %8 = vector.shape_cast %7 : vector<1x16x128xf32> to vector<16x128xf32>
    %9 = vector.extract_strided_slice %4 {offsets = [0, 0], sizes = [16, 32], strides = [1, 1]} : vector<16x128xf32> to vector<16x32xf32>
    %cst = arith.constant 0.176776692 : f32
    %10 = vector.broadcast %cst : f32 to vector<16x32xf32>
    %11 = arith.mulf %9, %10 : vector<16x32xf32>
    %12 = vector.extract_strided_slice %6 {offsets = [0, 0], sizes = [16, 32], strides = [1, 1]} : vector<16x128xf32> to vector<16x32xf32>
    %13 = vector.extract_strided_slice %8 {offsets = [0, 0], sizes = [16, 32], strides = [1, 1]} : vector<16x128xf32> to vector<16x32xf32>
    %cst_9 = arith.constant dense<0.000000e+00> : vector<16x16xf32>
    %14 = tpu.matmul %11, %12, %cst_9 {dimension_numbers = #tpu.dot_dimension_numbers<[1], [1], [0], [0], [0, 0, 1, 0], [], []>} : vector<16x32xf32>, vector<16x32xf32>, vector<16x16xf32> -> vector<16x16xf32>
    %c0_10 = arith.constant 0 : index
    %c0_11 = arith.constant 0 : index
    %c0_12 = arith.constant 0 : index
    %15 = vector.load %arg8[%c0_10, %c0_11, %c0_12] : memref<4x16x1xf32, #tpu.memory_space<vmem>>, vector<1x16x1xf32>
    %16 = vector.shape_cast %15 : vector<1x16x1xf32> to vector<16x1xf32>
    %cst_13 = arith.constant dense<0xFF800000> : vector<16xf32>
    %17 = vector.multi_reduction <maximumf>, %14, %cst_13 [1] : vector<16x16xf32> to vector<16xf32>
    %18 = vector.shape_cast %17 : vector<16xf32> to vector<16x1xf32>
    %19 = arith.maximumf %16, %18 : vector<16x1xf32>
    %20 = arith.subf %16, %19 : vector<16x1xf32>
    %21 = math.exp %20 : vector<16x1xf32>
    %22 = vector.broadcast %19 : vector<16x1xf32> to vector<16x16xf32>
    %23 = arith.subf %14, %22 : vector<16x16xf32>
    %24 = math.exp %23 : vector<16x16xf32>
    %c0_14 = arith.constant 0 : index
    %c0_15 = arith.constant 0 : index
    %c0_16 = arith.constant 0 : index
    %25 = vector.load %arg9[%c0_14, %c0_15, %c0_16] : memref<4x16x1xf32, #tpu.memory_space<vmem>>, vector<1x16x1xf32>
    %26 = vector.shape_cast %25 : vector<1x16x1xf32> to vector<16x1xf32>
    %27 = arith.mulf %21, %26 : vector<16x1xf32>
    %cst_17 = arith.constant dense<0.000000e+00> : vector<16xf32>
    %28 = vector.multi_reduction <add>, %24, %cst_17 [1] : vector<16x16xf32> to vector<16xf32>
    %29 = vector.shape_cast %28 : vector<16xf32> to vector<16x1xf32>
    %30 = arith.addf %27, %29 : vector<16x1xf32>
    %c0_18 = arith.constant 0 : index
    %c0_19 = arith.constant 0 : index
    %c0_20 = arith.constant 0 : index
    %31 = vector.load %arg9[%c0_18, %c0_19, %c0_20] : memref<4x16x1xf32, #tpu.memory_space<vmem>>, vector<1x16x1xf32>
    %32 = vector.shape_cast %31 : vector<1x16x1xf32> to vector<16x1xf32>
    %33 = vector.shape_cast %30 : vector<16x1xf32> to vector<1x16x1xf32>
    tpu.vector_store %arg9[%c0_18, %c0_19, %c0_20], %33 {strides = array<i32>} : memref<4x16x1xf32, #tpu.memory_space<vmem>>, vector<1x16x1xf32>,
    %c0_21 = arith.constant 0 : index
    %c0_22 = arith.constant 0 : index
    %c0_23 = arith.constant 0 : index
    %34 = vector.load %arg10[%c0_21, %c0_22, %c0_23] : memref<4x16x32xf32, #tpu.memory_space<vmem>>, vector<1x16x32xf32>
    %35 = vector.shape_cast %34 : vector<1x16x32xf32> to vector<16x32xf32>
    %36 = vector.broadcast %21 : vector<16x1xf32> to vector<16x32xf32>
    %37 = arith.mulf %36, %35 : vector<16x32xf32>
    %cst_24 = arith.constant dense<0.000000e+00> : vector<16x32xf32>
    %38 = tpu.matmul %24, %13, %cst_24 {dimension_numbers = #tpu.dot_dimension_numbers<[1], [0], [0], [1], [0, 0, 1, 1], [], []>} : vector<16x16xf32>, vector<16x32xf32>, vector<16x32xf32> -> vector<16x32xf32>
    %39 = arith.addf %37, %38 : vector<16x32xf32>
    %c0_25 = arith.constant 0 : index
    %c0_26 = arith.constant 0 : index
    %c0_27 = arith.constant 0 : index
    %40 = vector.load %arg10[%c0_25, %c0_26, %c0_27] : memref<4x16x32xf32, #tpu.memory_space<vmem>>, vector<1x16x32xf32>
    %41 = vector.shape_cast %40 : vector<1x16x32xf32> to vector<16x32xf32>
    %42 = vector.shape_cast %39 : vector<16x32xf32> to vector<1x16x32xf32>
    tpu.vector_store %arg10[%c0_25, %c0_26, %c0_27], %42 {strides = array<i32>} : memref<4x16x32xf32, #tpu.memory_space<vmem>>, vector<1x16x32xf32>,
    %c0_28 = arith.constant 0 : index
    %c0_29 = arith.constant 0 : index
    %c0_30 = arith.constant 0 : index
    %43 = vector.load %arg8[%c0_28, %c0_29, %c0_30] : memref<4x16x1xf32, #tpu.memory_space<vmem>>, vector<1x16x1xf32>
    %44 = vector.shape_cast %43 : vector<1x16x1xf32> to vector<16x1xf32>
    %45 = vector.shape_cast %19 : vector<16x1xf32> to vector<1x16x1xf32>
    tpu.vector_store %arg8[%c0_28, %c0_29, %c0_30], %45 {strides = array<i32>} : memref<4x16x1xf32, #tpu.memory_space<vmem>>, vector<1x16x1xf32>,
    %46 = vector.extract_strided_slice %4 {offsets = [0, 32], sizes = [16, 32], strides = [1, 1]} : vector<16x128xf32> to vector<16x32xf32>
    %cst_31 = arith.constant 0.176776692 : f32
    %47 = vector.broadcast %cst_31 : f32 to vector<16x32xf32>
    %48 = arith.mulf %46, %47 : vector<16x32xf32>
    %49 = vector.extract_strided_slice %6 {offsets = [0, 32], sizes = [16, 32], strides = [1, 1]} : vector<16x128xf32> to vector<16x32xf32>
    %50 = vector.extract_strided_slice %8 {offsets = [0, 32], sizes = [16, 32], strides = [1, 1]} : vector<16x128xf32> to vector<16x32xf32>
    %cst_32 = arith.constant dense<0.000000e+00> : vector<16x16xf32>
    %51 = tpu.matmul %48, %49, %cst_32 {dimension_numbers = #tpu.dot_dimension_numbers<[1], [1], [0], [0], [0, 0, 1, 0], [], []>} : vector<16x32xf32>, vector<16x32xf32>, vector<16x16xf32> -> vector<16x16xf32>
    %c1 = arith.constant 1 : index
    %c0_33 = arith.constant 0 : index
    %c0_34 = arith.constant 0 : index
    %52 = vector.load %arg8[%c1, %c0_33, %c0_34] : memref<4x16x1xf32, #tpu.memory_space<vmem>>, vector<1x16x1xf32>
    %53 = vector.shape_cast %52 : vector<1x16x1xf32> to vector<16x1xf32>
    %cst_35 = arith.constant dense<0xFF800000> : vector<16xf32>
    %54 = vector.multi_reduction <maximumf>, %51, %cst_35 [1] : vector<16x16xf32> to vector<16xf32>
    %55 = vector.shape_cast %54 : vector<16xf32> to vector<16x1xf32>
    %56 = arith.maximumf %53, %55 : vector<16x1xf32>
    %57 = arith.subf %53, %56 : vector<16x1xf32>
    %58 = math.exp %57 : vector<16x1xf32>
    %59 = vector.broadcast %56 : vector<16x1xf32> to vector<16x16xf32>
    %60 = arith.subf %51, %59 : vector<16x16xf32>
    %61 = math.exp %60 : vector<16x16xf32>
    %c1_36 = arith.constant 1 : index
    %c0_37 = arith.constant 0 : index
    %c0_38 = arith.constant 0 : index
    %62 = vector.load %arg9[%c1_36, %c0_37, %c0_38] : memref<4x16x1xf32, #tpu.memory_space<vmem>>, vector<1x16x1xf32>
    %63 = vector.shape_cast %62 : vector<1x16x1xf32> to vector<16x1xf32>
    %64 = arith.mulf %58, %63 : vector<16x1xf32>
    %cst_39 = arith.constant dense<0.000000e+00> : vector<16xf32>
    %65 = vector.multi_reduction <add>, %61, %cst_39 [1] : vector<16x16xf32> to vector<16xf32>
    %66 = vector.shape_cast %65 : vector<16xf32> to vector<16x1xf32>
    %67 = arith.addf %64, %66 : vector<16x1xf32>
    %c1_40 = arith.constant 1 : index
    %c0_41 = arith.constant 0 : index
    %c0_42 = arith.constant 0 : index
    %68 = vector.load %arg9[%c1_40, %c0_41, %c0_42] : memref<4x16x1xf32, #tpu.memory_space<vmem>>, vector<1x16x1xf32>
    %69 = vector.shape_cast %68 : vector<1x16x1xf32> to vector<16x1xf32>
    %70 = vector.shape_cast %67 : vector<16x1xf32> to vector<1x16x1xf32>
    tpu.vector_store %arg9[%c1_40, %c0_41, %c0_42], %70 {strides = array<i32>} : memref<4x16x1xf32, #tpu.memory_space<vmem>>, vector<1x16x1xf32>,
    %c1_43 = arith.constant 1 : index
    %c0_44 = arith.constant 0 : index
    %c0_45 = arith.constant 0 : index
    %71 = vector.load %arg10[%c1_43, %c0_44, %c0_45] : memref<4x16x32xf32, #tpu.memory_space<vmem>>, vector<1x16x32xf32>
    %72 = vector.shape_cast %71 : vector<1x16x32xf32> to vector<16x32xf32>
    %73 = vector.broadcast %58 : vector<16x1xf32> to vector<16x32xf32>
    %74 = arith.mulf %73, %72 : vector<16x32xf32>
    %cst_46 = arith.constant dense<0.000000e+00> : vector<16x32xf32>
    %75 = tpu.matmul %61, %50, %cst_46 {dimension_numbers = #tpu.dot_dimension_numbers<[1], [0], [0], [1], [0, 0, 1, 1], [], []>} : vector<16x16xf32>, vector<16x32xf32>, vector<16x32xf32> -> vector<16x32xf32>
    %76 = arith.addf %74, %75 : vector<16x32xf32>
    %c1_47 = arith.constant 1 : index
    %c0_48 = arith.constant 0 : index
    %c0_49 = arith.constant 0 : index
    %77 = vector.load %arg10[%c1_47, %c0_48, %c0_49] : memref<4x16x32xf32, #tpu.memory_space<vmem>>, vector<1x16x32xf32>
    %78 = vector.shape_cast %77 : vector<1x16x32xf32> to vector<16x32xf32>
    %79 = vector.shape_cast %76 : vector<16x32xf32> to vector<1x16x32xf32>
    tpu.vector_store %arg10[%c1_47, %c0_48, %c0_49], %79 {strides = array<i32>} : memref<4x16x32xf32, #tpu.memory_space<vmem>>, vector<1x16x32xf32>,
    %c1_50 = arith.constant 1 : index
    %c0_51 = arith.constant 0 : index
    %c0_52 = arith.constant 0 : index
    %80 = vector.load %arg8[%c1_50, %c0_51, %c0_52] : memref<4x16x1xf32, #tpu.memory_space<vmem>>, vector<1x16x1xf32>
    %81 = vector.shape_cast %80 : vector<1x16x1xf32> to vector<16x1xf32>
    %82 = vector.shape_cast %56 : vector<16x1xf32> to vector<1x16x1xf32>
    tpu.vector_store %arg8[%c1_50, %c0_51, %c0_52], %82 {strides = array<i32>} : memref<4x16x1xf32, #tpu.memory_space<vmem>>, vector<1x16x1xf32>,
    %83 = vector.extract_strided_slice %4 {offsets = [0, 64], sizes = [16, 32], strides = [1, 1]} : vector<16x128xf32> to vector<16x32xf32>
    %cst_53 = arith.constant 0.176776692 : f32
    %84 = vector.broadcast %cst_53 : f32 to vector<16x32xf32>
    %85 = arith.mulf %83, %84 : vector<16x32xf32>
    %86 = vector.extract_strided_slice %6 {offsets = [0, 64], sizes = [16, 32], strides = [1, 1]} : vector<16x128xf32> to vector<16x32xf32>
    %87 = vector.extract_strided_slice %8 {offsets = [0, 64], sizes = [16, 32], strides = [1, 1]} : vector<16x128xf32> to vector<16x32xf32>
    %cst_54 = arith.constant dense<0.000000e+00> : vector<16x16xf32>
    %88 = tpu.matmul %85, %86, %cst_54 {dimension_numbers = #tpu.dot_dimension_numbers<[1], [1], [0], [0], [0, 0, 1, 0], [], []>} : vector<16x32xf32>, vector<16x32xf32>, vector<16x16xf32> -> vector<16x16xf32>
    %c2 = arith.constant 2 : index
    %c0_55 = arith.constant 0 : index
    %c0_56 = arith.constant 0 : index
    %89 = vector.load %arg8[%c2, %c0_55, %c0_56] : memref<4x16x1xf32, #tpu.memory_space<vmem>>, vector<1x16x1xf32>
    %90 = vector.shape_cast %89 : vector<1x16x1xf32> to vector<16x1xf32>
    %cst_57 = arith.constant dense<0xFF800000> : vector<16xf32>
    %91 = vector.multi_reduction <maximumf>, %88, %cst_57 [1] : vector<16x16xf32> to vector<16xf32>
    %92 = vector.shape_cast %91 : vector<16xf32> to vector<16x1xf32>
    %93 = arith.maximumf %90, %92 : vector<16x1xf32>
    %94 = arith.subf %90, %93 : vector<16x1xf32>
    %95 = math.exp %94 : vector<16x1xf32>
    %96 = vector.broadcast %93 : vector<16x1xf32> to vector<16x16xf32>
    %97 = arith.subf %88, %96 : vector<16x16xf32>
    %98 = math.exp %97 : vector<16x16xf32>
    %c2_58 = arith.constant 2 : index
    %c0_59 = arith.constant 0 : index
    %c0_60 = arith.constant 0 : index
    %99 = vector.load %arg9[%c2_58, %c0_59, %c0_60] : memref<4x16x1xf32, #tpu.memory_space<vmem>>, vector<1x16x1xf32>
    %100 = vector.shape_cast %99 : vector<1x16x1xf32> to vector<16x1xf32>
    %101 = arith.mulf %95, %100 : vector<16x1xf32>
    %cst_61 = arith.constant dense<0.000000e+00> : vector<16xf32>
    %102 = vector.multi_reduction <add>, %98, %cst_61 [1] : vector<16x16xf32> to vector<16xf32>
    %103 = vector.shape_cast %102 : vector<16xf32> to vector<16x1xf32>
    %104 = arith.addf %101, %103 : vector<16x1xf32>
    %c2_62 = arith.constant 2 : index
    %c0_63 = arith.constant 0 : index
    %c0_64 = arith.constant 0 : index
    %105 = vector.load %arg9[%c2_62, %c0_63, %c0_64] : memref<4x16x1xf32, #tpu.memory_space<vmem>>, vector<1x16x1xf32>
    %106 = vector.shape_cast %105 : vector<1x16x1xf32> to vector<16x1xf32>
    %107 = vector.shape_cast %104 : vector<16x1xf32> to vector<1x16x1xf32>
    tpu.vector_store %arg9[%c2_62, %c0_63, %c0_64], %107 {strides = array<i32>} : memref<4x16x1xf32, #tpu.memory_space<vmem>>, vector<1x16x1xf32>,
    %c2_65 = arith.constant 2 : index
    %c0_66 = arith.constant 0 : index
    %c0_67 = arith.constant 0 : index
    %108 = vector.load %arg10[%c2_65, %c0_66, %c0_67] : memref<4x16x32xf32, #tpu.memory_space<vmem>>, vector<1x16x32xf32>
    %109 = vector.shape_cast %108 : vector<1x16x32xf32> to vector<16x32xf32>
    %110 = vector.broadcast %95 : vector<16x1xf32> to vector<16x32xf32>
    %111 = arith.mulf %110, %109 : vector<16x32xf32>
    %cst_68 = arith.constant dense<0.000000e+00> : vector<16x32xf32>
    %112 = tpu.matmul %98, %87, %cst_68 {dimension_numbers = #tpu.dot_dimension_numbers<[1], [0], [0], [1], [0, 0, 1, 1], [], []>} : vector<16x16xf32>, vector<16x32xf32>, vector<16x32xf32> -> vector<16x32xf32>
    %113 = arith.addf %111, %112 : vector<16x32xf32>
    %c2_69 = arith.constant 2 : index
    %c0_70 = arith.constant 0 : index
    %c0_71 = arith.constant 0 : index
    %114 = vector.load %arg10[%c2_69, %c0_70, %c0_71] : memref<4x16x32xf32, #tpu.memory_space<vmem>>, vector<1x16x32xf32>
    %115 = vector.shape_cast %114 : vector<1x16x32xf32> to vector<16x32xf32>
    %116 = vector.shape_cast %113 : vector<16x32xf32> to vector<1x16x32xf32>
    tpu.vector_store %arg10[%c2_69, %c0_70, %c0_71], %116 {strides = array<i32>} : memref<4x16x32xf32, #tpu.memory_space<vmem>>, vector<1x16x32xf32>,
    %c2_72 = arith.constant 2 : index
    %c0_73 = arith.constant 0 : index
    %c0_74 = arith.constant 0 : index
    %117 = vector.load %arg8[%c2_72, %c0_73, %c0_74] : memref<4x16x1xf32, #tpu.memory_space<vmem>>, vector<1x16x1xf32>
    %118 = vector.shape_cast %117 : vector<1x16x1xf32> to vector<16x1xf32>
    %119 = vector.shape_cast %93 : vector<16x1xf32> to vector<1x16x1xf32>
    tpu.vector_store %arg8[%c2_72, %c0_73, %c0_74], %119 {strides = array<i32>} : memref<4x16x1xf32, #tpu.memory_space<vmem>>, vector<1x16x1xf32>,
    %120 = vector.extract_strided_slice %4 {offsets = [0, 96], sizes = [16, 32], strides = [1, 1]} : vector<16x128xf32> to vector<16x32xf32>
    %cst_75 = arith.constant 0.176776692 : f32
    %121 = vector.broadcast %cst_75 : f32 to vector<16x32xf32>
    %122 = arith.mulf %120, %121 : vector<16x32xf32>
    %123 = vector.extract_strided_slice %6 {offsets = [0, 96], sizes = [16, 32], strides = [1, 1]} : vector<16x128xf32> to vector<16x32xf32>
    %124 = vector.extract_strided_slice %8 {offsets = [0, 96], sizes = [16, 32], strides = [1, 1]} : vector<16x128xf32> to vector<16x32xf32>
    %cst_76 = arith.constant dense<0.000000e+00> : vector<16x16xf32>
    %125 = tpu.matmul %122, %123, %cst_76 {dimension_numbers = #tpu.dot_dimension_numbers<[1], [1], [0], [0], [0, 0, 1, 0], [], []>} : vector<16x32xf32>, vector<16x32xf32>, vector<16x16xf32> -> vector<16x16xf32>
    %c3 = arith.constant 3 : index
    %c0_77 = arith.constant 0 : index
    %c0_78 = arith.constant 0 : index
    %126 = vector.load %arg8[%c3, %c0_77, %c0_78] : memref<4x16x1xf32, #tpu.memory_space<vmem>>, vector<1x16x1xf32>
    %127 = vector.shape_cast %126 : vector<1x16x1xf32> to vector<16x1xf32>
    %cst_79 = arith.constant dense<0xFF800000> : vector<16xf32>
    %128 = vector.multi_reduction <maximumf>, %125, %cst_79 [1] : vector<16x16xf32> to vector<16xf32>
    %129 = vector.shape_cast %128 : vector<16xf32> to vector<16x1xf32>
    %130 = arith.maximumf %127, %129 : vector<16x1xf32>
    %131 = arith.subf %127, %130 : vector<16x1xf32>
    %132 = math.exp %131 : vector<16x1xf32>
    %133 = vector.broadcast %130 : vector<16x1xf32> to vector<16x16xf32>
    %134 = arith.subf %125, %133 : vector<16x16xf32>
    %135 = math.exp %134 : vector<16x16xf32>
    %c3_80 = arith.constant 3 : index
    %c0_81 = arith.constant 0 : index
    %c0_82 = arith.constant 0 : index
    %136 = vector.load %arg9[%c3_80, %c0_81, %c0_82] : memref<4x16x1xf32, #tpu.memory_space<vmem>>, vector<1x16x1xf32>
    %137 = vector.shape_cast %136 : vector<1x16x1xf32> to vector<16x1xf32>
    %138 = arith.mulf %132, %137 : vector<16x1xf32>
    %cst_83 = arith.constant dense<0.000000e+00> : vector<16xf32>
    %139 = vector.multi_reduction <add>, %135, %cst_83 [1] : vector<16x16xf32> to vector<16xf32>
    %140 = vector.shape_cast %139 : vector<16xf32> to vector<16x1xf32>
    %141 = arith.addf %138, %140 : vector<16x1xf32>
    %c3_84 = arith.constant 3 : index
    %c0_85 = arith.constant 0 : index
    %c0_86 = arith.constant 0 : index
    %142 = vector.load %arg9[%c3_84, %c0_85, %c0_86] : memref<4x16x1xf32, #tpu.memory_space<vmem>>, vector<1x16x1xf32>
    %143 = vector.shape_cast %142 : vector<1x16x1xf32> to vector<16x1xf32>
    %144 = vector.shape_cast %141 : vector<16x1xf32> to vector<1x16x1xf32>
    tpu.vector_store %arg9[%c3_84, %c0_85, %c0_86], %144 {strides = array<i32>} : memref<4x16x1xf32, #tpu.memory_space<vmem>>, vector<1x16x1xf32>,
    %c3_87 = arith.constant 3 : index
    %c0_88 = arith.constant 0 : index
    %c0_89 = arith.constant 0 : index
    %145 = vector.load %arg10[%c3_87, %c0_88, %c0_89] : memref<4x16x32xf32, #tpu.memory_space<vmem>>, vector<1x16x32xf32>
    %146 = vector.shape_cast %145 : vector<1x16x32xf32> to vector<16x32xf32>
    %147 = vector.broadcast %132 : vector<16x1xf32> to vector<16x32xf32>
    %148 = arith.mulf %147, %146 : vector<16x32xf32>
    %cst_90 = arith.constant dense<0.000000e+00> : vector<16x32xf32>
    %149 = tpu.matmul %135, %124, %cst_90 {dimension_numbers = #tpu.dot_dimension_numbers<[1], [0], [0], [1], [0, 0, 1, 1], [], []>} : vector<16x16xf32>, vector<16x32xf32>, vector<16x32xf32> -> vector<16x32xf32>
    %150 = arith.addf %148, %149 : vector<16x32xf32>
    %c3_91 = arith.constant 3 : index
    %c0_92 = arith.constant 0 : index
    %c0_93 = arith.constant 0 : index
    %151 = vector.load %arg10[%c3_91, %c0_92, %c0_93] : memref<4x16x32xf32, #tpu.memory_space<vmem>>, vector<1x16x32xf32>
    %152 = vector.shape_cast %151 : vector<1x16x32xf32> to vector<16x32xf32>
    %153 = vector.shape_cast %150 : vector<16x32xf32> to vector<1x16x32xf32>
    tpu.vector_store %arg10[%c3_91, %c0_92, %c0_93], %153 {strides = array<i32>} : memref<4x16x32xf32, #tpu.memory_space<vmem>>, vector<1x16x32xf32>,
    %c3_94 = arith.constant 3 : index
    %c0_95 = arith.constant 0 : index
    %c0_96 = arith.constant 0 : index
    %154 = vector.load %arg8[%c3_94, %c0_95, %c0_96] : memref<4x16x1xf32, #tpu.memory_space<vmem>>, vector<1x16x1xf32>
    %155 = vector.shape_cast %154 : vector<1x16x1xf32> to vector<16x1xf32>
    %156 = vector.shape_cast %130 : vector<16x1xf32> to vector<1x16x1xf32>
    tpu.vector_store %arg8[%c3_94, %c0_95, %c0_96], %156 {strides = array<i32>} : memref<4x16x1xf32, #tpu.memory_space<vmem>>, vector<1x16x1xf32>,
    %c0_i32_97 = arith.constant 0 : i32
    %157 = arith.cmpi eq, %arg3, %c0_i32_97 : i32
    %158 = arith.extui %157 : i1 to i32
    %c0_i32_98 = arith.constant 0 : i32
    %159 = arith.cmpi ne, %158, %c0_i32_98 : i32
    scf.if %159 {
      %c0_99 = arith.constant 0 : index
      %c0_100 = arith.constant 0 : index
      %c0_101 = arith.constant 0 : index
      %160 = vector.load %arg9[%c0_99, %c0_100, %c0_101] : memref<4x16x1xf32, #tpu.memory_space<vmem>>, vector<1x16x1xf32>
      %161 = vector.shape_cast %160 : vector<1x16x1xf32> to vector<16x1xf32>
      %cst_102 = arith.constant 1.000000e+00 : f32
      %162 = vector.broadcast %cst_102 : f32 to vector<16x1xf32>
      %163 = arith.divf %162, %161 : vector<16x1xf32>
      %c0_103 = arith.constant 0 : index
      %c0_104 = arith.constant 0 : index
      %c0_105 = arith.constant 0 : index
      %164 = vector.load %arg10[%c0_103, %c0_104, %c0_105] : memref<4x16x32xf32, #tpu.memory_space<vmem>>, vector<1x16x32xf32>
      %165 = vector.shape_cast %164 : vector<1x16x32xf32> to vector<16x32xf32>
      %166 = vector.broadcast %163 : vector<16x1xf32> to vector<16x32xf32>
      %167 = arith.mulf %165, %166 : vector<16x32xf32>
      %c1_106 = arith.constant 1 : index
      %c0_107 = arith.constant 0 : index
      %c0_108 = arith.constant 0 : index
      %168 = vector.load %arg9[%c1_106, %c0_107, %c0_108] : memref<4x16x1xf32, #tpu.memory_space<vmem>>, vector<1x16x1xf32>
      %169 = vector.shape_cast %168 : vector<1x16x1xf32> to vector<16x1xf32>
      %cst_109 = arith.constant 1.000000e+00 : f32
      %170 = vector.broadcast %cst_109 : f32 to vector<16x1xf32>
      %171 = arith.divf %170, %169 : vector<16x1xf32>
      %c1_110 = arith.constant 1 : index
      %c0_111 = arith.constant 0 : index
      %c0_112 = arith.constant 0 : index
      %172 = vector.load %arg10[%c1_110, %c0_111, %c0_112] : memref<4x16x32xf32, #tpu.memory_space<vmem>>, vector<1x16x32xf32>
      %173 = vector.shape_cast %172 : vector<1x16x32xf32> to vector<16x32xf32>
      %174 = vector.broadcast %171 : vector<16x1xf32> to vector<16x32xf32>
      %175 = arith.mulf %173, %174 : vector<16x32xf32>
      %c2_113 = arith.constant 2 : index
      %c0_114 = arith.constant 0 : index
      %c0_115 = arith.constant 0 : index
      %176 = vector.load %arg9[%c2_113, %c0_114, %c0_115] : memref<4x16x1xf32, #tpu.memory_space<vmem>>, vector<1x16x1xf32>
      %177 = vector.shape_cast %176 : vector<1x16x1xf32> to vector<16x1xf32>
      %cst_116 = arith.constant 1.000000e+00 : f32
      %178 = vector.broadcast %cst_116 : f32 to vector<16x1xf32>
      %179 = arith.divf %178, %177 : vector<16x1xf32>
      %c2_117 = arith.constant 2 : index
      %c0_118 = arith.constant 0 : index
      %c0_119 = arith.constant 0 : index
      %180 = vector.load %arg10[%c2_117, %c0_118, %c0_119] : memref<4x16x32xf32, #tpu.memory_space<vmem>>, vector<1x16x32xf32>
      %181 = vector.shape_cast %180 : vector<1x16x32xf32> to vector<16x32xf32>
      %182 = vector.broadcast %179 : vector<16x1xf32> to vector<16x32xf32>
      %183 = arith.mulf %181, %182 : vector<16x32xf32>
      %c3_120 = arith.constant 3 : index
      %c0_121 = arith.constant 0 : index
      %c0_122 = arith.constant 0 : index
      %184 = vector.load %arg9[%c3_120, %c0_121, %c0_122] : memref<4x16x1xf32, #tpu.memory_space<vmem>>, vector<1x16x1xf32>
      %185 = vector.shape_cast %184 : vector<1x16x1xf32> to vector<16x1xf32>
      %cst_123 = arith.constant 1.000000e+00 : f32
      %186 = vector.broadcast %cst_123 : f32 to vector<16x1xf32>
      %187 = arith.divf %186, %185 : vector<16x1xf32>
      %c3_124 = arith.constant 3 : index
      %c0_125 = arith.constant 0 : index
      %c0_126 = arith.constant 0 : index
      %188 = vector.load %arg10[%c3_124, %c0_125, %c0_126] : memref<4x16x32xf32, #tpu.memory_space<vmem>>, vector<1x16x32xf32>
      %189 = vector.shape_cast %188 : vector<1x16x32xf32> to vector<16x32xf32>
      %190 = vector.broadcast %187 : vector<16x1xf32> to vector<16x32xf32>
      %191 = arith.mulf %189, %190 : vector<16x32xf32>
      %192 = tpu.concatenate %167, %175, %183, %191 in 1 : vector<16x32xf32>, vector<16x32xf32>, vector<16x32xf32>, vector<16x32xf32> -> vector<16x128xf32>
      %c0_127 = arith.constant 0 : index
      %c0_128 = arith.constant 0 : index
      %c0_129 = arith.constant 0 : index
      %193 = vector.load %arg7[%c0_127, %c0_128, %c0_129] : memref<1x16x128xf32, #tpu.memory_space<vmem>>, vector<1x16x128xf32>
      %194 = vector.shape_cast %193 : vector<1x16x128xf32> to vector<16x128xf32>
      %195 = vector.shape_cast %192 : vector<16x128xf32> to vector<1x16x128xf32>
      tpu.vector_store %arg7[%c0_127, %c0_128, %c0_129], %195 {strides = array<i32>} : memref<1x16x128xf32, #tpu.memory_space<vmem>>, vector<1x16x128xf32>,
    } else {
    }
    return
  }
  func.func @transform_0(%arg0: i32, %arg1: i32, %arg2: i32, %arg3: i32) -> (i32, i32, i32) {
    %c0_i32 = arith.constant 0 : i32
    return %arg0, %arg2, %arg1 : i32, i32, i32
  }
  func.func @transform_1(%arg0: i32, %arg1: i32, %arg2: i32, %arg3: i32) -> (i32, i32, i32) {
    %c1_i32 = arith.constant 1 : i32
    %0 = arith.addi %c1_i32, %arg1 : i32
    %c0_i32 = arith.constant 0 : i32
    return %arg0, %arg3, %0 : i32, i32, i32
  }
  func.func @transform_2(%arg0: i32, %arg1: i32, %arg2: i32, %arg3: i32) -> (i32, i32, i32) {
    %c2_i32 = arith.constant 2 : i32
    %0 = arith.addi %c2_i32, %arg1 : i32
    %c0_i32 = arith.constant 0 : i32
    return %arg0, %arg3, %0 : i32, i32, i32
  }
  func.func @transform_3(%arg0: i32, %arg1: i32, %arg2: i32, %arg3: i32) -> (i32, i32, i32) {
    %c0_i32 = arith.constant 0 : i32
    return %arg0, %arg2, %arg1 : i32, i32, i32
  }
}

module attributes {stable_mosaic.version = 11 : i64} {
  func.func @_linear_kernel(%arg0: i32, %arg1: memref<16x128xf32, #tpu.memory_space<vmem>>, %arg2: memref<128x128xf32, #tpu.memory_space<vmem>>, %arg3: memref<1x128xf32, #tpu.memory_space<vmem>>, %arg4: memref<16x128xf32, #tpu.memory_space<vmem>>, %arg5: memref<16x128xf32, #tpu.memory_space<vmem>>) attributes {dimension_semantics = [#tpu.dimension_semantics<parallel>], iteration_bounds = array<i64: 2>, scalar_prefetch = 0 : i64, scratch_operands = 0 : i64, tpu.core_type = #tpu.core_type<tc>, window_params = [{transform_indices = @transform_0, window_bounds = array<i64: 16, 128>}, {pipeline_mode = #tpu.pipeline_mode<synchronous>, transform_indices = @transform_1, window_bounds = array<i64: 128, 128>}, {pipeline_mode = #tpu.pipeline_mode<synchronous>, transform_indices = @transform_2, window_bounds = array<i64: 1, 128>}, {transform_indices = @transform_3, window_bounds = array<i64: 16, 128>}, {transform_indices = @transform_4, window_bounds = array<i64: 16, 128>}]} {
    %c0 = arith.constant 0 : index
    %c0_0 = arith.constant 0 : index
    %0 = vector.load %arg1[%c0, %c0_0] : memref<16x128xf32, #tpu.memory_space<vmem>>, vector<16x128xf32>
    %c0_1 = arith.constant 0 : index
    %c0_2 = arith.constant 0 : index
    %1 = vector.load %arg2[%c0_1, %c0_2] : memref<128x128xf32, #tpu.memory_space<vmem>>, vector<128x128xf32>
    %cst = arith.constant dense<0.000000e+00> : vector<16x128xf32>
    %2 = tpu.matmul %0, %1, %cst {dimension_numbers = #tpu.dot_dimension_numbers<[1], [0], [0], [1], [0, 0, 1, 1], [], []>} : vector<16x128xf32>, vector<128x128xf32>, vector<16x128xf32> -> vector<16x128xf32>
    %c0_3 = arith.constant 0 : index
    %c0_4 = arith.constant 0 : index
    %3 = vector.load %arg3[%c0_3, %c0_4] : memref<1x128xf32, #tpu.memory_space<vmem>>, vector<1x128xf32>
    %4 = vector.broadcast %3 : vector<1x128xf32> to vector<16x128xf32>
    %5 = arith.addf %2, %4 : vector<16x128xf32>
    %c0_5 = arith.constant 0 : index
    %c0_6 = arith.constant 0 : index
    %6 = vector.load %arg4[%c0_5, %c0_6] : memref<16x128xf32, #tpu.memory_space<vmem>>, vector<16x128xf32>
    %7 = arith.addf %5, %6 : vector<16x128xf32>
    %c0_7 = arith.constant 0 : index
    %c0_8 = arith.constant 0 : index
    %8 = vector.load %arg5[%c0_7, %c0_8] : memref<16x128xf32, #tpu.memory_space<vmem>>, vector<16x128xf32>
    tpu.vector_store %arg5[%c0_7, %c0_8], %7 {strides = array<i32>} : memref<16x128xf32, #tpu.memory_space<vmem>>, vector<16x128xf32>,
    return
  }
  func.func @transform_0(%arg0: i32) -> (i32, i32) {
    %c0_i32 = arith.constant 0 : i32
    %c0_i32_0 = arith.constant 0 : i32
    return %arg0, %c0_i32 : i32, i32
  }
  func.func @transform_1(%arg0: i32) -> (i32, i32) {
    %c0_i32 = arith.constant 0 : i32
    %c0_i32_0 = arith.constant 0 : i32
    %c0_i32_1 = arith.constant 0 : i32
    return %c0_i32, %c0_i32_0 : i32, i32
  }
  func.func @transform_2(%arg0: i32) -> (i32, i32) {
    %c0_i32 = arith.constant 0 : i32
    %c0_i32_0 = arith.constant 0 : i32
    %c0_i32_1 = arith.constant 0 : i32
    return %c0_i32, %c0_i32_0 : i32, i32
  }
  func.func @transform_3(%arg0: i32) -> (i32, i32) {
    %c0_i32 = arith.constant 0 : i32
    %c0_i32_0 = arith.constant 0 : i32
    return %arg0, %c0_i32 : i32, i32
  }
  func.func @transform_4(%arg0: i32) -> (i32, i32) {
    %c0_i32 = arith.constant 0 : i32
    %c0_i32_0 = arith.constant 0 : i32
    return %arg0, %c0_i32 : i32, i32
  }
}

module attributes {stable_mosaic.version = 11 : i64} {
  func.func @_layernorm_kernel(%arg0: i32, %arg1: memref<16x128xf32, #tpu.memory_space<vmem>>, %arg2: memref<1x128xf32, #tpu.memory_space<vmem>>, %arg3: memref<1x128xf32, #tpu.memory_space<vmem>>, %arg4: memref<16x128xf32, #tpu.memory_space<vmem>>) attributes {dimension_semantics = [#tpu.dimension_semantics<parallel>], iteration_bounds = array<i64: 2>, scalar_prefetch = 0 : i64, scratch_operands = 0 : i64, tpu.core_type = #tpu.core_type<tc>, window_params = [{transform_indices = @transform_0, window_bounds = array<i64: 16, 128>}, {pipeline_mode = #tpu.pipeline_mode<synchronous>, transform_indices = @transform_1, window_bounds = array<i64: 1, 128>}, {pipeline_mode = #tpu.pipeline_mode<synchronous>, transform_indices = @transform_2, window_bounds = array<i64: 1, 128>}, {transform_indices = @transform_3, window_bounds = array<i64: 16, 128>}]} {
    %c0 = arith.constant 0 : index
    %c0_0 = arith.constant 0 : index
    %0 = vector.load %arg1[%c0, %c0_0] : memref<16x128xf32, #tpu.memory_space<vmem>>, vector<16x128xf32>
    %cst = arith.constant dense<0.000000e+00> : vector<16xf32>
    %1 = vector.multi_reduction <add>, %0, %cst [1] : vector<16x128xf32> to vector<16xf32>
    %2 = vector.shape_cast %1 : vector<16xf32> to vector<16x1xf32>
    %cst_1 = arith.constant 1.280000e+02 : f32
    %3 = vector.broadcast %cst_1 : f32 to vector<16x1xf32>
    %4 = arith.divf %2, %3 : vector<16x1xf32>
    %5 = vector.broadcast %4 : vector<16x1xf32> to vector<16x128xf32>
    %6 = arith.subf %0, %5 : vector<16x128xf32>
    %7 = arith.mulf %6, %6 : vector<16x128xf32>
    %cst_2 = arith.constant dense<0.000000e+00> : vector<16xf32>
    %8 = vector.multi_reduction <add>, %7, %cst_2 [1] : vector<16x128xf32> to vector<16xf32>
    %9 = vector.shape_cast %8 : vector<16xf32> to vector<16x1xf32>
    %cst_3 = arith.constant 1.280000e+02 : f32
    %10 = vector.broadcast %cst_3 : f32 to vector<16x1xf32>
    %11 = arith.divf %9, %10 : vector<16x1xf32>
    %cst_4 = arith.constant 9.99999997E-7 : f32
    %12 = vector.broadcast %cst_4 : f32 to vector<16x1xf32>
    %13 = arith.addf %11, %12 : vector<16x1xf32>
    %14 = math.rsqrt %13 : vector<16x1xf32>
    %15 = vector.broadcast %14 : vector<16x1xf32> to vector<16x128xf32>
    %16 = arith.mulf %6, %15 : vector<16x128xf32>
    %c0_5 = arith.constant 0 : index
    %c0_6 = arith.constant 0 : index
    %17 = vector.load %arg2[%c0_5, %c0_6] : memref<1x128xf32, #tpu.memory_space<vmem>>, vector<1x128xf32>
    %18 = vector.broadcast %17 : vector<1x128xf32> to vector<16x128xf32>
    %19 = arith.mulf %16, %18 : vector<16x128xf32>
    %c0_7 = arith.constant 0 : index
    %c0_8 = arith.constant 0 : index
    %20 = vector.load %arg3[%c0_7, %c0_8] : memref<1x128xf32, #tpu.memory_space<vmem>>, vector<1x128xf32>
    %21 = vector.broadcast %20 : vector<1x128xf32> to vector<16x128xf32>
    %22 = arith.addf %19, %21 : vector<16x128xf32>
    %c0_9 = arith.constant 0 : index
    %c0_10 = arith.constant 0 : index
    %23 = vector.load %arg4[%c0_9, %c0_10] : memref<16x128xf32, #tpu.memory_space<vmem>>, vector<16x128xf32>
    tpu.vector_store %arg4[%c0_9, %c0_10], %22 {strides = array<i32>} : memref<16x128xf32, #tpu.memory_space<vmem>>, vector<16x128xf32>,
    return
  }
  func.func @transform_0(%arg0: i32) -> (i32, i32) {
    %c0_i32 = arith.constant 0 : i32
    %c0_i32_0 = arith.constant 0 : i32
    return %arg0, %c0_i32 : i32, i32
  }
  func.func @transform_1(%arg0: i32) -> (i32, i32) {
    %c0_i32 = arith.constant 0 : i32
    %c0_i32_0 = arith.constant 0 : i32
    %c0_i32_1 = arith.constant 0 : i32
    return %c0_i32, %c0_i32_0 : i32, i32
  }
  func.func @transform_2(%arg0: i32) -> (i32, i32) {
    %c0_i32 = arith.constant 0 : i32
    %c0_i32_0 = arith.constant 0 : i32
    %c0_i32_1 = arith.constant 0 : i32
    return %c0_i32, %c0_i32_0 : i32, i32
  }
  func.func @transform_3(%arg0: i32) -> (i32, i32) {
    %c0_i32 = arith.constant 0 : i32
    %c0_i32_0 = arith.constant 0 : i32
    return %arg0, %c0_i32 : i32, i32
  }
}

module attributes {stable_mosaic.version = 11 : i64} {
  func.func @_conv3x3_kernel(%arg0: i32, %arg1: memref<1x6x6x128xf32, #tpu.memory_space<vmem>>, %arg2: memref<9x128x128xf32, #tpu.memory_space<vmem>>, %arg3: memref<1x4x4x128xf32, #tpu.memory_space<vmem>>) attributes {dimension_semantics = [#tpu.dimension_semantics<parallel>], iteration_bounds = array<i64: 2>, scalar_prefetch = 0 : i64, scratch_operands = 0 : i64, tpu.core_type = #tpu.core_type<tc>, window_params = [{transform_indices = @transform_0, window_bounds = array<i64: 1, 6, 6, 128>}, {pipeline_mode = #tpu.pipeline_mode<synchronous>, transform_indices = @transform_1, window_bounds = array<i64: 9, 128, 128>}, {transform_indices = @transform_2, window_bounds = array<i64: 1, 4, 4, 128>}]} {
    %c0 = arith.constant 0 : index
    %c0_0 = arith.constant 0 : index
    %c0_1 = arith.constant 0 : index
    %c0_2 = arith.constant 0 : index
    %0 = vector.load %arg1[%c0, %c0_0, %c0_1, %c0_2] : memref<1x6x6x128xf32, #tpu.memory_space<vmem>>, vector<1x4x4x128xf32>
    %1 = vector.shape_cast %0 : vector<1x4x4x128xf32> to vector<4x4x128xf32>
    %2 = vector.shape_cast %1 : vector<4x4x128xf32> to vector<16x128xf32>
    %c0_3 = arith.constant 0 : index
    %c0_4 = arith.constant 0 : index
    %c0_5 = arith.constant 0 : index
    %3 = vector.load %arg2[%c0_3, %c0_4, %c0_5] : memref<9x128x128xf32, #tpu.memory_space<vmem>>, vector<1x128x128xf32>
    %4 = vector.shape_cast %3 : vector<1x128x128xf32> to vector<128x128xf32>
    %cst = arith.constant dense<0.000000e+00> : vector<16x128xf32>
    %5 = tpu.matmul %2, %4, %cst {dimension_numbers = #tpu.dot_dimension_numbers<[1], [0], [0], [1], [0, 0, 1, 1], [], []>} : vector<16x128xf32>, vector<128x128xf32>, vector<16x128xf32> -> vector<16x128xf32>
    %c0_6 = arith.constant 0 : index
    %c0_7 = arith.constant 0 : index
    %c1 = arith.constant 1 : index
    %c0_8 = arith.constant 0 : index
    %6 = vector.load %arg1[%c0_6, %c0_7, %c1, %c0_8] : memref<1x6x6x128xf32, #tpu.memory_space<vmem>>, vector<1x4x4x128xf32>
    %7 = vector.shape_cast %6 : vector<1x4x4x128xf32> to vector<4x4x128xf32>
    %8 = vector.shape_cast %7 : vector<4x4x128xf32> to vector<16x128xf32>
    %c1_9 = arith.constant 1 : index
    %c0_10 = arith.constant 0 : index
    %c0_11 = arith.constant 0 : index
    %9 = vector.load %arg2[%c1_9, %c0_10, %c0_11] : memref<9x128x128xf32, #tpu.memory_space<vmem>>, vector<1x128x128xf32>
    %10 = vector.shape_cast %9 : vector<1x128x128xf32> to vector<128x128xf32>
    %cst_12 = arith.constant dense<0.000000e+00> : vector<16x128xf32>
    %11 = tpu.matmul %8, %10, %cst_12 {dimension_numbers = #tpu.dot_dimension_numbers<[1], [0], [0], [1], [0, 0, 1, 1], [], []>} : vector<16x128xf32>, vector<128x128xf32>, vector<16x128xf32> -> vector<16x128xf32>
    %12 = arith.addf %5, %11 : vector<16x128xf32>
    %c0_13 = arith.constant 0 : index
    %c0_14 = arith.constant 0 : index
    %c2 = arith.constant 2 : index
    %c0_15 = arith.constant 0 : index
    %13 = vector.load %arg1[%c0_13, %c0_14, %c2, %c0_15] : memref<1x6x6x128xf32, #tpu.memory_space<vmem>>, vector<1x4x4x128xf32>
    %14 = vector.shape_cast %13 : vector<1x4x4x128xf32> to vector<4x4x128xf32>
    %15 = vector.shape_cast %14 : vector<4x4x128xf32> to vector<16x128xf32>
    %c2_16 = arith.constant 2 : index
    %c0_17 = arith.constant 0 : index
    %c0_18 = arith.constant 0 : index
    %16 = vector.load %arg2[%c2_16, %c0_17, %c0_18] : memref<9x128x128xf32, #tpu.memory_space<vmem>>, vector<1x128x128xf32>
    %17 = vector.shape_cast %16 : vector<1x128x128xf32> to vector<128x128xf32>
    %cst_19 = arith.constant dense<0.000000e+00> : vector<16x128xf32>
    %18 = tpu.matmul %15, %17, %cst_19 {dimension_numbers = #tpu.dot_dimension_numbers<[1], [0], [0], [1], [0, 0, 1, 1], [], []>} : vector<16x128xf32>, vector<128x128xf32>, vector<16x128xf32> -> vector<16x128xf32>
    %19 = arith.addf %12, %18 : vector<16x128xf32>
    %c0_20 = arith.constant 0 : index
    %c1_21 = arith.constant 1 : index
    %c0_22 = arith.constant 0 : index
    %c0_23 = arith.constant 0 : index
    %20 = vector.load %arg1[%c0_20, %c1_21, %c0_22, %c0_23] : memref<1x6x6x128xf32, #tpu.memory_space<vmem>>, vector<1x4x4x128xf32>
    %21 = vector.shape_cast %20 : vector<1x4x4x128xf32> to vector<4x4x128xf32>
    %22 = vector.shape_cast %21 : vector<4x4x128xf32> to vector<16x128xf32>
    %c3 = arith.constant 3 : index
    %c0_24 = arith.constant 0 : index
    %c0_25 = arith.constant 0 : index
    %23 = vector.load %arg2[%c3, %c0_24, %c0_25] : memref<9x128x128xf32, #tpu.memory_space<vmem>>, vector<1x128x128xf32>
    %24 = vector.shape_cast %23 : vector<1x128x128xf32> to vector<128x128xf32>
    %cst_26 = arith.constant dense<0.000000e+00> : vector<16x128xf32>
    %25 = tpu.matmul %22, %24, %cst_26 {dimension_numbers = #tpu.dot_dimension_numbers<[1], [0], [0], [1], [0, 0, 1, 1], [], []>} : vector<16x128xf32>, vector<128x128xf32>, vector<16x128xf32> -> vector<16x128xf32>
    %26 = arith.addf %19, %25 : vector<16x128xf32>
    %c0_27 = arith.constant 0 : index
    %c1_28 = arith.constant 1 : index
    %c1_29 = arith.constant 1 : index
    %c0_30 = arith.constant 0 : index
    %27 = vector.load %arg1[%c0_27, %c1_28, %c1_29, %c0_30] : memref<1x6x6x128xf32, #tpu.memory_space<vmem>>, vector<1x4x4x128xf32>
    %28 = vector.shape_cast %27 : vector<1x4x4x128xf32> to vector<4x4x128xf32>
    %29 = vector.shape_cast %28 : vector<4x4x128xf32> to vector<16x128xf32>
    %c4 = arith.constant 4 : index
    %c0_31 = arith.constant 0 : index
    %c0_32 = arith.constant 0 : index
    %30 = vector.load %arg2[%c4, %c0_31, %c0_32] : memref<9x128x128xf32, #tpu.memory_space<vmem>>, vector<1x128x128xf32>
    %31 = vector.shape_cast %30 : vector<1x128x128xf32> to vector<128x128xf32>
    %cst_33 = arith.constant dense<0.000000e+00> : vector<16x128xf32>
    %32 = tpu.matmul %29, %31, %cst_33 {dimension_numbers = #tpu.dot_dimension_numbers<[1], [0], [0], [1], [0, 0, 1, 1], [], []>} : vector<16x128xf32>, vector<128x128xf32>, vector<16x128xf32> -> vector<16x128xf32>
    %33 = arith.addf %26, %32 : vector<16x128xf32>
    %c0_34 = arith.constant 0 : index
    %c1_35 = arith.constant 1 : index
    %c2_36 = arith.constant 2 : index
    %c0_37 = arith.constant 0 : index
    %34 = vector.load %arg1[%c0_34, %c1_35, %c2_36, %c0_37] : memref<1x6x6x128xf32, #tpu.memory_space<vmem>>, vector<1x4x4x128xf32>
    %35 = vector.shape_cast %34 : vector<1x4x4x128xf32> to vector<4x4x128xf32>
    %36 = vector.shape_cast %35 : vector<4x4x128xf32> to vector<16x128xf32>
    %c5 = arith.constant 5 : index
    %c0_38 = arith.constant 0 : index
    %c0_39 = arith.constant 0 : index
    %37 = vector.load %arg2[%c5, %c0_38, %c0_39] : memref<9x128x128xf32, #tpu.memory_space<vmem>>, vector<1x128x128xf32>
    %38 = vector.shape_cast %37 : vector<1x128x128xf32> to vector<128x128xf32>
    %cst_40 = arith.constant dense<0.000000e+00> : vector<16x128xf32>
    %39 = tpu.matmul %36, %38, %cst_40 {dimension_numbers = #tpu.dot_dimension_numbers<[1], [0], [0], [1], [0, 0, 1, 1], [], []>} : vector<16x128xf32>, vector<128x128xf32>, vector<16x128xf32> -> vector<16x128xf32>
    %40 = arith.addf %33, %39 : vector<16x128xf32>
    %c0_41 = arith.constant 0 : index
    %c2_42 = arith.constant 2 : index
    %c0_43 = arith.constant 0 : index
    %c0_44 = arith.constant 0 : index
    %41 = vector.load %arg1[%c0_41, %c2_42, %c0_43, %c0_44] : memref<1x6x6x128xf32, #tpu.memory_space<vmem>>, vector<1x4x4x128xf32>
    %42 = vector.shape_cast %41 : vector<1x4x4x128xf32> to vector<4x4x128xf32>
    %43 = vector.shape_cast %42 : vector<4x4x128xf32> to vector<16x128xf32>
    %c6 = arith.constant 6 : index
    %c0_45 = arith.constant 0 : index
    %c0_46 = arith.constant 0 : index
    %44 = vector.load %arg2[%c6, %c0_45, %c0_46] : memref<9x128x128xf32, #tpu.memory_space<vmem>>, vector<1x128x128xf32>
    %45 = vector.shape_cast %44 : vector<1x128x128xf32> to vector<128x128xf32>
    %cst_47 = arith.constant dense<0.000000e+00> : vector<16x128xf32>
    %46 = tpu.matmul %43, %45, %cst_47 {dimension_numbers = #tpu.dot_dimension_numbers<[1], [0], [0], [1], [0, 0, 1, 1], [], []>} : vector<16x128xf32>, vector<128x128xf32>, vector<16x128xf32> -> vector<16x128xf32>
    %47 = arith.addf %40, %46 : vector<16x128xf32>
    %c0_48 = arith.constant 0 : index
    %c2_49 = arith.constant 2 : index
    %c1_50 = arith.constant 1 : index
    %c0_51 = arith.constant 0 : index
    %48 = vector.load %arg1[%c0_48, %c2_49, %c1_50, %c0_51] : memref<1x6x6x128xf32, #tpu.memory_space<vmem>>, vector<1x4x4x128xf32>
    %49 = vector.shape_cast %48 : vector<1x4x4x128xf32> to vector<4x4x128xf32>
    %50 = vector.shape_cast %49 : vector<4x4x128xf32> to vector<16x128xf32>
    %c7 = arith.constant 7 : index
    %c0_52 = arith.constant 0 : index
    %c0_53 = arith.constant 0 : index
    %51 = vector.load %arg2[%c7, %c0_52, %c0_53] : memref<9x128x128xf32, #tpu.memory_space<vmem>>, vector<1x128x128xf32>
    %52 = vector.shape_cast %51 : vector<1x128x128xf32> to vector<128x128xf32>
    %cst_54 = arith.constant dense<0.000000e+00> : vector<16x128xf32>
    %53 = tpu.matmul %50, %52, %cst_54 {dimension_numbers = #tpu.dot_dimension_numbers<[1], [0], [0], [1], [0, 0, 1, 1], [], []>} : vector<16x128xf32>, vector<128x128xf32>, vector<16x128xf32> -> vector<16x128xf32>
    %54 = arith.addf %47, %53 : vector<16x128xf32>
    %c0_55 = arith.constant 0 : index
    %c2_56 = arith.constant 2 : index
    %c2_57 = arith.constant 2 : index
    %c0_58 = arith.constant 0 : index
    %55 = vector.load %arg1[%c0_55, %c2_56, %c2_57, %c0_58] : memref<1x6x6x128xf32, #tpu.memory_space<vmem>>, vector<1x4x4x128xf32>
    %56 = vector.shape_cast %55 : vector<1x4x4x128xf32> to vector<4x4x128xf32>
    %57 = vector.shape_cast %56 : vector<4x4x128xf32> to vector<16x128xf32>
    %c8 = arith.constant 8 : index
    %c0_59 = arith.constant 0 : index
    %c0_60 = arith.constant 0 : index
    %58 = vector.load %arg2[%c8, %c0_59, %c0_60] : memref<9x128x128xf32, #tpu.memory_space<vmem>>, vector<1x128x128xf32>
    %59 = vector.shape_cast %58 : vector<1x128x128xf32> to vector<128x128xf32>
    %cst_61 = arith.constant dense<0.000000e+00> : vector<16x128xf32>
    %60 = tpu.matmul %57, %59, %cst_61 {dimension_numbers = #tpu.dot_dimension_numbers<[1], [0], [0], [1], [0, 0, 1, 1], [], []>} : vector<16x128xf32>, vector<128x128xf32>, vector<16x128xf32> -> vector<16x128xf32>
    %61 = arith.addf %54, %60 : vector<16x128xf32>
    %62 = vector.shape_cast %61 : vector<16x128xf32> to vector<4x4x128xf32>
    %c0_62 = arith.constant 0 : index
    %c0_63 = arith.constant 0 : index
    %c0_64 = arith.constant 0 : index
    %c0_65 = arith.constant 0 : index
    %63 = vector.load %arg3[%c0_62, %c0_63, %c0_64, %c0_65] : memref<1x4x4x128xf32, #tpu.memory_space<vmem>>, vector<1x4x4x128xf32>
    %64 = vector.shape_cast %63 : vector<1x4x4x128xf32> to vector<4x4x128xf32>
    %65 = vector.shape_cast %62 : vector<4x4x128xf32> to vector<1x4x4x128xf32>
    tpu.vector_store %arg3[%c0_62, %c0_63, %c0_64, %c0_65], %65 {strides = array<i32>} : memref<1x4x4x128xf32, #tpu.memory_space<vmem>>, vector<1x4x4x128xf32>,
    return
  }
  func.func @transform_0(%arg0: i32) -> (i32, i32, i32, i32) {
    %c0_i32 = arith.constant 0 : i32
    %c0_i32_0 = arith.constant 0 : i32
    %c0_i32_1 = arith.constant 0 : i32
    %c0_i32_2 = arith.constant 0 : i32
    return %arg0, %c0_i32, %c0_i32_0, %c0_i32_1 : i32, i32, i32, i32
  }
  func.func @transform_1(%arg0: i32) -> (i32, i32, i32) {
    %c0_i32 = arith.constant 0 : i32
    %c0_i32_0 = arith.constant 0 : i32
    %c0_i32_1 = arith.constant 0 : i32
    %c0_i32_2 = arith.constant 0 : i32
    return %c0_i32, %c0_i32_0, %c0_i32_1 : i32, i32, i32
  }
  func.func @transform_2(%arg0: i32) -> (i32, i32, i32, i32) {
    %c0_i32 = arith.constant 0 : i32
    %c0_i32_0 = arith.constant 0 : i32
    %c0_i32_1 = arith.constant 0 : i32
    %c0_i32_2 = arith.constant 0 : i32
    return %arg0, %c0_i32, %c0_i32_0, %c0_i32_1 : i32, i32, i32, i32
  }
}

module attributes {stable_mosaic.version = 11 : i64} {
  func.func @_layernorm_kernel(%arg0: i32, %arg1: memref<16x128xf32, #tpu.memory_space<vmem>>, %arg2: memref<1x128xf32, #tpu.memory_space<vmem>>, %arg3: memref<1x128xf32, #tpu.memory_space<vmem>>, %arg4: memref<16x128xf32, #tpu.memory_space<vmem>>) attributes {dimension_semantics = [#tpu.dimension_semantics<parallel>], iteration_bounds = array<i64: 2>, scalar_prefetch = 0 : i64, scratch_operands = 0 : i64, tpu.core_type = #tpu.core_type<tc>, window_params = [{transform_indices = @transform_0, window_bounds = array<i64: 16, 128>}, {pipeline_mode = #tpu.pipeline_mode<synchronous>, transform_indices = @transform_1, window_bounds = array<i64: 1, 128>}, {pipeline_mode = #tpu.pipeline_mode<synchronous>, transform_indices = @transform_2, window_bounds = array<i64: 1, 128>}, {transform_indices = @transform_3, window_bounds = array<i64: 16, 128>}]} {
    %c0 = arith.constant 0 : index
    %c0_0 = arith.constant 0 : index
    %0 = vector.load %arg1[%c0, %c0_0] : memref<16x128xf32, #tpu.memory_space<vmem>>, vector<16x128xf32>
    %cst = arith.constant dense<0.000000e+00> : vector<16xf32>
    %1 = vector.multi_reduction <add>, %0, %cst [1] : vector<16x128xf32> to vector<16xf32>
    %2 = vector.shape_cast %1 : vector<16xf32> to vector<16x1xf32>
    %cst_1 = arith.constant 1.280000e+02 : f32
    %3 = vector.broadcast %cst_1 : f32 to vector<16x1xf32>
    %4 = arith.divf %2, %3 : vector<16x1xf32>
    %5 = vector.broadcast %4 : vector<16x1xf32> to vector<16x128xf32>
    %6 = arith.subf %0, %5 : vector<16x128xf32>
    %7 = arith.mulf %6, %6 : vector<16x128xf32>
    %cst_2 = arith.constant dense<0.000000e+00> : vector<16xf32>
    %8 = vector.multi_reduction <add>, %7, %cst_2 [1] : vector<16x128xf32> to vector<16xf32>
    %9 = vector.shape_cast %8 : vector<16xf32> to vector<16x1xf32>
    %cst_3 = arith.constant 1.280000e+02 : f32
    %10 = vector.broadcast %cst_3 : f32 to vector<16x1xf32>
    %11 = arith.divf %9, %10 : vector<16x1xf32>
    %cst_4 = arith.constant 9.99999997E-7 : f32
    %12 = vector.broadcast %cst_4 : f32 to vector<16x1xf32>
    %13 = arith.addf %11, %12 : vector<16x1xf32>
    %14 = math.rsqrt %13 : vector<16x1xf32>
    %15 = vector.broadcast %14 : vector<16x1xf32> to vector<16x128xf32>
    %16 = arith.mulf %6, %15 : vector<16x128xf32>
    %c0_5 = arith.constant 0 : index
    %c0_6 = arith.constant 0 : index
    %17 = vector.load %arg2[%c0_5, %c0_6] : memref<1x128xf32, #tpu.memory_space<vmem>>, vector<1x128xf32>
    %18 = vector.broadcast %17 : vector<1x128xf32> to vector<16x128xf32>
    %19 = arith.mulf %16, %18 : vector<16x128xf32>
    %c0_7 = arith.constant 0 : index
    %c0_8 = arith.constant 0 : index
    %20 = vector.load %arg3[%c0_7, %c0_8] : memref<1x128xf32, #tpu.memory_space<vmem>>, vector<1x128xf32>
    %21 = vector.broadcast %20 : vector<1x128xf32> to vector<16x128xf32>
    %22 = arith.addf %19, %21 : vector<16x128xf32>
    %c0_9 = arith.constant 0 : index
    %c0_10 = arith.constant 0 : index
    %23 = vector.load %arg4[%c0_9, %c0_10] : memref<16x128xf32, #tpu.memory_space<vmem>>, vector<16x128xf32>
    tpu.vector_store %arg4[%c0_9, %c0_10], %22 {strides = array<i32>} : memref<16x128xf32, #tpu.memory_space<vmem>>, vector<16x128xf32>,
    return
  }
  func.func @transform_0(%arg0: i32) -> (i32, i32) {
    %c0_i32 = arith.constant 0 : i32
    %c0_i32_0 = arith.constant 0 : i32
    return %arg0, %c0_i32 : i32, i32
  }
  func.func @transform_1(%arg0: i32) -> (i32, i32) {
    %c0_i32 = arith.constant 0 : i32
    %c0_i32_0 = arith.constant 0 : i32
    %c0_i32_1 = arith.constant 0 : i32
    return %c0_i32, %c0_i32_0 : i32, i32
  }
  func.func @transform_2(%arg0: i32) -> (i32, i32) {
    %c0_i32 = arith.constant 0 : i32
    %c0_i32_0 = arith.constant 0 : i32
    %c0_i32_1 = arith.constant 0 : i32
    return %c0_i32, %c0_i32_0 : i32, i32
  }
  func.func @transform_3(%arg0: i32) -> (i32, i32) {
    %c0_i32 = arith.constant 0 : i32
    %c0_i32_0 = arith.constant 0 : i32
    return %arg0, %c0_i32 : i32, i32
  }
}

</mosaic_0001>

<llo_original>
// kernel: image_encoder_forward.20
$region0: #{image_encoder_forward.20}
  #allocation0 [shape = 'u32[]', space=smem, size = 0x4, offset = 0x4, fixed_abs, tag = 'smem constant byte address 0x4 - core index']
  #allocation1 [shape = 'u32[72,128]{1,0:T(1,128)}', space=vmem, size = 0x9000, scoped, tag = 'internal scratch']
  %s0 = inlined_call_operand.vmem [shape: f32[32,128], index: 0, kind: input, shape index: {}]
  %s1 = inlined_call_operand.vmem [shape: f32[1,128], index: 1, kind: input, shape index: {}]
  %s2 = inlined_call_operand.vmem [shape: f32[1,128], index: 2, kind: input, shape index: {}]
  %s3 = inlined_call_operand.vmem [shape: f32[32,128], index: 3, kind: output, shape index: {}]
  %s4 = sld [smem:[#allocation0]]
  $region45: #{image_encoder_forward.20} parent=0
    _
  %s6 = ssub.s32 1, %s4
  %s7 = scalar_select 0, %s6, %s4
  loop: start=0, step=1, limit=4
  $region2: #{image_encoder_forward.20} parent=0 // loop_pre_header
    _
  $region3: #{image_encoder_forward.20} parent=0 // loop_header
    %s9 = sphi 0, %s13
    %p10 = scmp.ge.s32.totalorder %s9, 4
    %s19 = sphi 0, %s21
    %s22 = sphi 0, %s19
    %s23 = sphi 0, %s22
    %s39 = sphi 0, %s23
    %s43 = sphi 0, %s43
    %s45 = sphi 0, %s43
    %s46 = sphi 0, %s45
    %s60 = sphi 0, %s46
    %s64 = sphi 0, %s64
    %s66 = sphi 0, %s64
    %s67 = sphi 0, %s66
    %s81 = sphi 0, %s67
    %s87 = sphi 0, %s89
    %s90 = sphi 0, %s87
    %s91 = sphi 0, %s90
    %s107 = sphi 0, %s91
  $region4: #{image_encoder_forward.20} parent=0 // loop_header_branch
    %12 = sbr.rel (%p10) target = $region8
  $region5: #{image_encoder_forward.20} parent=0 // loop_body
    %s14 = ssub.s32 %s9, 1
    %s15 = ssub.s32 %s9, 2
    %s16 = sadd.s32 %s9, 1
    %s17 = ssub.s32 %s9, %s16
    %p18 = scmp.eq.s32.totalorder %s17, 0
    %s20 = sadd.s32 %s19, 1
    %s21 = scalar_select %p18, %s19, %s20
    %p24 = pneg %p18
    %p25 = scmp.eq.s32.totalorder %s9, 1
    %p26 = por %p24, %p25
    %p27 = scmp.ne.s32.totalorder %s19, %s22
    %p28 = scmp.eq.s32.totalorder %s9, 0
    %p29 = por %p27, %p28
    %p30 = scmp.ne.s32.totalorder %s19, %s22
    %p31 = scmp.eq.s32.totalorder %s14, 1
    %p32 = por %p30, %p31
    %p33 = scmp.ne.s32.totalorder %s22, %s23
    %p34 = scmp.eq.s32.totalorder %s14, 0
    %p35 = por %p33, %p34
    %p36 = scmp.ne.s32.totalorder %s22, %s23
    %p37 = scmp.eq.s32.totalorder %s15, 1
    %p38 = por %p36, %p37
    %p40 = scmp.ne.s32.totalorder %s23, %s39
    %p41 = scmp.eq.s32.totalorder %s15, 0
    %p42 = por %p40, %p41
    %s44 = sadd.s32 %s43, 1
    %p47 = scmp.eq.s32.totalorder %s9, 1
    %p48 = scmp.ne.s32.totalorder %s43, %s45
    %p49 = scmp.eq.s32.totalorder %s9, 0
    %p50 = por %p48, %p49
    %p51 = scmp.ne.s32.totalorder %s43, %s45
    %p52 = scmp.eq.s32.totalorder %s14, 1
    %p53 = por %p51, %p52
    %p54 = scmp.ne.s32.totalorder %s45, %s46
    %p55 = scmp.eq.s32.totalorder %s14, 0
    %p56 = por %p54, %p55
    %p57 = scmp.ne.s32.totalorder %s45, %s46
    %p58 = scmp.eq.s32.totalorder %s15, 1
    %p59 = por %p57, %p58
    %p61 = scmp.ne.s32.totalorder %s46, %s60
    %p62 = scmp.eq.s32.totalorder %s15, 0
    %p63 = por %p61, %p62
    %s65 = sadd.s32 %s64, 1
    %p68 = scmp.eq.s32.totalorder %s9, 1
    %p69 = scmp.ne.s32.totalorder %s64, %s66
    %p70 = scmp.eq.s32.totalorder %s9, 0
    %p71 = por %p69, %p70
    %p72 = scmp.ne.s32.totalorder %s64, %s66
    %p73 = scmp.eq.s32.totalorder %s14, 1
    %p74 = por %p72, %p73
    %p75 = scmp.ne.s32.totalorder %s66, %s67
    %p76 = scmp.eq.s32.totalorder %s14, 0
    %p77 = por %p75, %p76
    %p78 = scmp.ne.s32.totalorder %s66, %s67
    %p79 = scmp.eq.s32.totalorder %s15, 1
    %p80 = por %p78, %p79
    %p82 = scmp.ne.s32.totalorder %s67, %s81
    %p83 = scmp.eq.s32.totalorder %s15, 0
    %p84 = por %p82, %p83
    %s85 = ssub.s32 %s9, %s16
    %p86 = scmp.eq.s32.totalorder %s85, 0
    %s88 = sadd.s32 %s87, 1
    %s89 = scalar_select %p86, %s87, %s88
    %p92 = pneg %p86
    %p93 = scmp.eq.s32.totalorder %s9, 1
    %p94 = por %p92, %p93
    %p95 = scmp.ne.s32.totalorder %s87, %s90
    %p96 = scmp.eq.s32.totalorder %s9, 0
    %p97 = por %p95, %p96
    %p98 = scmp.ne.s32.totalorder %s87, %s90
    %p99 = scmp.eq.s32.totalorder %s14, 1
    %p100 = por %p98, %p99
    %p101 = scmp.ne.s32.totalorder %s90, %s91
    %p102 = scmp.eq.s32.totalorder %s14, 0
    %p103 = por %p101, %p102
    %p104 = scmp.ne.s32.totalorder %s90, %s91
    %p105 = scmp.eq.s32.totalorder %s15, 1
    %p106 = por %p104, %p105
    %p108 = scmp.ne.s32.totalorder %s91, %s107
    %p109 = scmp.eq.s32.totalorder %s15, 0
    %p110 = por %p108, %p109
    %p111 = scmp.le.s32.totalorder 1, %s9
    %p112 = scmp.lt.s32.totalorder %s9, 3
    %p113 = pnand %p111, %p112
    %p114 = pneg %p113
    // Predicated region
    $region9: #{image_encoder_forward.20} parent=5 // pred_check
      _
    $region10: #{image_encoder_forward.20} parent=5 // pred_check_branch
      %116 = sbr.rel (%p113) target = $region12
    $region11: #{image_encoder_forward.20} parent=5 // pred_region
      %s117 = ssub.s32 %s9, 1
      // Predicated region
      $region13: #{image_encoder_forward.20} parent=11 // pred_check
        %p118 = pneg %p56
      $region14: #{image_encoder_forward.20} parent=11 // pred_check_branch
        %120 = sbr.rel (%p118) target = $region16
      $region15: #{image_encoder_forward.20} parent=11 // pred_region
        _
      $region16: #{image_encoder_forward.20} parent=11 // pred_fallthru
        _
      // Predicated region
      $region17: #{image_encoder_forward.20} parent=11 // pred_check
        %p121 = pneg %p77
      $region18: #{image_encoder_forward.20} parent=11 // pred_check_branch
        %123 = sbr.rel (%p121) target = $region20
      $region19: #{image_encoder_forward.20} parent=11 // pred_region
        _
      $region20: #{image_encoder_forward.20} parent=11 // pred_fallthru
        _
    $region12: #{image_encoder_forward.20} parent=5 // pred_fallthru
      _
    %p124 = scmp.lt.s32.totalorder %s9, 2
    // Predicated region
    $region21: #{image_encoder_forward.20} parent=5 // pred_check
      %p125 = pneg %p124
    $region22: #{image_encoder_forward.20} parent=5 // pred_check_branch
      %127 = sbr.rel (%p125) target = $region24
    $region23: #{image_encoder_forward.20} parent=5 // pred_region
      // Predicated region
      $region25: #{image_encoder_forward.20} parent=23 // pred_check
        %p128 = pneg %p29
      $region26: #{image_encoder_forward.20} parent=23 // pred_check_branch
        %130 = sbr.rel (%p128) target = $region28
      $region27: #{image_encoder_forward.20} parent=23 // pred_region
        %s131 = smul.u32 2, %s9
        %p132 = scmp.lt.s32.totalorder %s131, 3
        %s133 = scalar_select %p132, %s131, 3
        %s134 = smul.addr %s133, 8
        %s135 = scalar_lea.vmem %s0, %s134
        %s136 = smul.u32 2, %s9
      $region28: #{image_encoder_forward.20} parent=23 // pred_fallthru
        _
    $region24: #{image_encoder_forward.20} parent=5 // pred_fallthru
      _
    %p137 = scmp.le.s32.totalorder 1, %s9
    %p138 = scmp.lt.s32.totalorder %s9, 3
    %p139 = pnand %p137, %p138
    %p140 = pneg %p139
    // Predicated region
    $region29: #{image_encoder_forward.20} parent=5 // pred_check
      _
    $region30: #{image_encoder_forward.20} parent=5 // pred_check_branch
      %142 = sbr.rel (%p139) target = $region32
    $region31: #{image_encoder_forward.20} parent=5 // pred_region
      %s143 = ssub.s32 %s9, 1
      %s144 = smul.u32 2, %s14
      %p145 = scmp.lt.s32.totalorder %s144, 3
      %s146 = scalar_select %p145, %s144, 3
      %s147 = smul.addr %s146, 8
      %s148 = scalar_lea.vmem %s0, %s147
      %p149 = pneg %p35
      %p150 = pneg %p32
      %p151 = pneg %p56
      %p152 = pneg %p53
      %p153 = pneg %p77
      %p154 = pneg %p74
      %p155 = pneg %p103
      %p156 = pneg %p100
      %s157 = smul.u32 2, %s14
      %p158 = scmp.lt.s32.totalorder %s157, 3
      %s159 = scalar_select %p158, %s157, 3
      %s160 = smul.addr %s159, 8
      %s161 = scalar_lea.vmem %s3, %s160
      %s162 = smul.u32 2, %s14
      %p163 = scmp.lt.s32.totalorder %s162, 3
      %s164 = scalar_select %p163, %s162, 3
      %s165 = smul.addr %s164, 8
      %s166 = scalar_lea.vmem %s0, %s165
      %s167 = smul.u32 2, %s14
      %s168 = smul.u32 2, %s14
      %p169 = scmp.lt.s32.totalorder %s168, 3
      %s170 = scalar_select %p169, %s168, 3
      %s171 = smul.addr %s170, 8
      %s172 = scalar_lea.vmem %s3, %s171
      %s173 = smul.u32 2, %s14
      %v174 = vld [vmem:[%s166] sm:$0xff]
      %v175 = vld [vmem:[%s166 + $0x8] sm:$0xff]
      %176 = vadd.xlane.f32.xlu0 %v174
      %v177 = vpop.xlane.xlu0 %176
      %178 = vadd.xlane.f32.xlu0 %v175
      %v179 = vpop.xlane.xlu0 %178
      %v180 = vrcp.pop 128.0
      %v181 = vmul.f32 128.0, %v180
      %v182 = vsub.f32 1.0, %v181
      %v183 = vmul.f32 %v180, %v182
      %v184 = vadd.f32 %v180, %v183
      %vm185 = vweird.f32 %v180
      %v186 = vsel %vm185, %v180, %v184
      %v187 = vmul.f32 %v177, %v186
      %v188 = vmul.f32 %v179, %v186
      %v189 = vsub.f32 %v174, %v187
      %v190 = vsub.f32 %v175, %v188
      %v191 = vmul.f32 %v189, %v189
      %v192 = vmul.f32 %v190, %v190
      %193 = vadd.xlane.f32.xlu0 %v191
      %v194 = vpop.xlane.xlu0 %193
      %195 = vadd.xlane.f32.xlu0 %v192
      %v196 = vpop.xlane.xlu0 %195
      %v197 = vmul.f32 %v194, %v186
      %v198 = vmul.f32 %v196, %v186
      %v199 = vadd.f32 %v197, 1e-05
      %v200 = vadd.f32 %v198, 1e-05
      %v201 = vrsqrt.pop %v199
      %v202 = vmul.f32 %v201, %v199
      %v203 = vmul.f32 %v202, %v201
      %v204 = vmul.f32 0.5, %v203
      %v205 = vsub.f32 1.5, %v204
      %v206 = vmul.f32 %v201, %v205
      %vm207 = vweird.f32 %v199
      %vm208 = vweird.f32 %v201
      %vm209 = vmor %vm207, %vm208
      %v210 = vsel %vm209, %v201, %v206
      %v211 = vrsqrt.pop %v200
      %v212 = vmul.f32 %v211, %v200
      %v213 = vmul.f32 %v212, %v211
      %v214 = vmul.f32 0.5, %v213
      %v215 = vsub.f32 1.5, %v214
      %v216 = vmul.f32 %v211, %v215
      %vm217 = vweird.f32 %v200
      %vm218 = vweird.f32 %v211
      %vm219 = vmor %vm217, %vm218
      %v220 = vsel %vm219, %v211, %v216
      %v221 = vmul.f32 %v189, %v210
      %v222 = vmul.f32 %v190, %v220
      %v223 = vld [vmem:[%s1] sm:$0x1]
      %v225 = vperm.slane %v223, 0
      %v227 = vmul.f32 %v221, %v225
      %v228 = vmul.f32 %v222, %v225
      %v229 = vld [vmem:[%s2] sm:$0x1]
      %v231 = vperm.slane %v229, 0
      %v233 = vadd.f32 %v227, %v231
      %v234 = vadd.f32 %v228, %v231
      %235 = vst [vmem:[%s172] sm:$0xff] %v233
      %236 = vst [vmem:[%s172 + $0x8] sm:$0xff] %v234
      %s237 = smul.u32 2, %s14
      %p238 = scmp.lt.s32.totalorder %s237, 3
      %s239 = scalar_select %p238, %s237, 3
      %s240 = smul.addr %s239, 8
      %s241 = scalar_lea.vmem %s3, %s240
      // Predicated region
      $region33: #{image_encoder_forward.20} parent=31 // pred_check
        %p242 = pneg %p100
      $region34: #{image_encoder_forward.20} parent=31 // pred_check_branch
        %244 = sbr.rel (%p242) target = $region36
      $region35: #{image_encoder_forward.20} parent=31 // pred_region
        %s245 = smul.u32 2, %s14
      $region36: #{image_encoder_forward.20} parent=31 // pred_fallthru
        _
    $region32: #{image_encoder_forward.20} parent=5 // pred_fallthru
      _
    %p246 = scmp.le.s32.totalorder 2, %s9
    // Predicated region
    $region37: #{image_encoder_forward.20} parent=5 // pred_check
      %p247 = pneg %p246
    $region38: #{image_encoder_forward.20} parent=5 // pred_check_branch
      %249 = sbr.rel (%p247) target = $region40
    $region39: #{image_encoder_forward.20} parent=5 // pred_region
      %s250 = ssub.s32 %s9, 2
      // Predicated region
      $region41: #{image_encoder_forward.20} parent=39 // pred_check
        %p251 = pneg %p106
      $region42: #{image_encoder_forward.20} parent=39 // pred_check_branch
        %253 = sbr.rel (%p251) target = $region44
      $region43: #{image_encoder_forward.20} parent=39 // pred_region
        %s254 = smul.u32 2, %s15
        %p255 = scmp.lt.s32.totalorder %s254, 3
        %s256 = scalar_select %p255, %s254, 3
        %s257 = smul.addr %s256, 8
        %s258 = scalar_lea.vmem %s3, %s257
      $region44: #{image_encoder_forward.20} parent=39 // pred_fallthru
        _
    $region40: #{image_encoder_forward.20} parent=5 // pred_fallthru
      _
  $region6: #{image_encoder_forward.20} parent=0 // loop_footer
    %s13 = sadd.s32 1, %s9
  $region7: #{image_encoder_forward.20} parent=0 // loop_footer_branch
    %8 = sbr.rel target = $region3
  $region8: #{image_encoder_forward.20} parent=0 // loop_exit
    _

// kernel: image_encoder_forward.19
$region0: #{image_encoder_forward.19}
  #allocation0 [shape = 'u32[]', space=smem, size = 0x4, offset = 0x4, fixed_abs, tag = 'smem constant byte address 0x4 - core index']
  #allocation1 [shape = 'u32[72,128]{1,0:T(1,128)}', space=vmem, size = 0x9000, scoped, tag = 'internal scratch']
  %s0 = inlined_call_operand.vmem [shape: f32[32,192], index: 0, kind: input, shape index: {}]
  %s1 = inlined_call_operand.vmem [shape: f32[192,128], index: 1, kind: input, shape index: {}]
  %s2 = inlined_call_operand.vmem [shape: f32[1,128], index: 2, kind: input, shape index: {}]
  %s3 = inlined_call_operand.vmem [shape: f32[32,128], index: 3, kind: output, shape index: {}]
  %s4 = sld [smem:[#allocation0]]
  $region45: #{image_encoder_forward.19} parent=0
    _
  %s6 = ssub.s32 1, %s4
  %s7 = scalar_select 0, %s6, %s4
  loop: start=0, step=1, limit=4
  $region2: #{image_encoder_forward.19} parent=0 // loop_pre_header
    _
  $region3: #{image_encoder_forward.19} parent=0 // loop_header
    %s9 = sphi 0, %s13
    %p10 = scmp.ge.s32.totalorder %s9, 4
    %s19 = sphi 0, %s21
    %s22 = sphi 0, %s19
    %s23 = sphi 0, %s22
    %s39 = sphi 0, %s23
    %s43 = sphi 0, %s43
    %s45 = sphi 0, %s43
    %s46 = sphi 0, %s45
    %s60 = sphi 0, %s46
    %s64 = sphi 0, %s64
    %s66 = sphi 0, %s64
    %s67 = sphi 0, %s66
    %s81 = sphi 0, %s67
    %s87 = sphi 0, %s89
    %s90 = sphi 0, %s87
    %s91 = sphi 0, %s90
    %s107 = sphi 0, %s91
  $region4: #{image_encoder_forward.19} parent=0 // loop_header_branch
    %12 = sbr.rel (%p10) target = $region8
  $region5: #{image_encoder_forward.19} parent=0 // loop_body
    %s14 = ssub.s32 %s9, 1
    %s15 = ssub.s32 %s9, 2
    %s16 = sadd.s32 %s9, 1
    %s17 = ssub.s32 %s9, %s16
    %p18 = scmp.eq.s32.totalorder %s17, 0
    %s20 = sadd.s32 %s19, 1
    %s21 = scalar_select %p18, %s19, %s20
    %p24 = pneg %p18
    %p25 = scmp.eq.s32.totalorder %s9, 1
    %p26 = por %p24, %p25
    %p27 = scmp.ne.s32.totalorder %s19, %s22
    %p28 = scmp.eq.s32.totalorder %s9, 0
    %p29 = por %p27, %p28
    %p30 = scmp.ne.s32.totalorder %s19, %s22
    %p31 = scmp.eq.s32.totalorder %s14, 1
    %p32 = por %p30, %p31
    %p33 = scmp.ne.s32.totalorder %s22, %s23
    %p34 = scmp.eq.s32.totalorder %s14, 0
    %p35 = por %p33, %p34
    %p36 = scmp.ne.s32.totalorder %s22, %s23
    %p37 = scmp.eq.s32.totalorder %s15, 1
    %p38 = por %p36, %p37
    %p40 = scmp.ne.s32.totalorder %s23, %s39
    %p41 = scmp.eq.s32.totalorder %s15, 0
    %p42 = por %p40, %p41
    %s44 = sadd.s32 %s43, 1
    %p47 = scmp.eq.s32.totalorder %s9, 1
    %p48 = scmp.ne.s32.totalorder %s43, %s45
    %p49 = scmp.eq.s32.totalorder %s9, 0
    %p50 = por %p48, %p49
    %p51 = scmp.ne.s32.totalorder %s43, %s45
    %p52 = scmp.eq.s32.totalorder %s14, 1
    %p53 = por %p51, %p52
    %p54 = scmp.ne.s32.totalorder %s45, %s46
    %p55 = scmp.eq.s32.totalorder %s14, 0
    %p56 = por %p54, %p55
    %p57 = scmp.ne.s32.totalorder %s45, %s46
    %p58 = scmp.eq.s32.totalorder %s15, 1
    %p59 = por %p57, %p58
    %p61 = scmp.ne.s32.totalorder %s46, %s60
    %p62 = scmp.eq.s32.totalorder %s15, 0
    %p63 = por %p61, %p62
    %s65 = sadd.s32 %s64, 1
    %p68 = scmp.eq.s32.totalorder %s9, 1
    %p69 = scmp.ne.s32.totalorder %s64, %s66
    %p70 = scmp.eq.s32.totalorder %s9, 0
    %p71 = por %p69, %p70
    %p72 = scmp.ne.s32.totalorder %s64, %s66
    %p73 = scmp.eq.s32.totalorder %s14, 1
    %p74 = por %p72, %p73
    %p75 = scmp.ne.s32.totalorder %s66, %s67
    %p76 = scmp.eq.s32.totalorder %s14, 0
    %p77 = por %p75, %p76
    %p78 = scmp.ne.s32.totalorder %s66, %s67
    %p79 = scmp.eq.s32.totalorder %s15, 1
    %p80 = por %p78, %p79
    %p82 = scmp.ne.s32.totalorder %s67, %s81
    %p83 = scmp.eq.s32.totalorder %s15, 0
    %p84 = por %p82, %p83
    %s85 = ssub.s32 %s9, %s16
    %p86 = scmp.eq.s32.totalorder %s85, 0
    %s88 = sadd.s32 %s87, 1
    %s89 = scalar_select %p86, %s87, %s88
    %p92 = pneg %p86
    %p93 = scmp.eq.s32.totalorder %s9, 1
    %p94 = por %p92, %p93
    %p95 = scmp.ne.s32.totalorder %s87, %s90
    %p96 = scmp.eq.s32.totalorder %s9, 0
    %p97 = por %p95, %p96
    %p98 = scmp.ne.s32.totalorder %s87, %s90
    %p99 = scmp.eq.s32.totalorder %s14, 1
    %p100 = por %p98, %p99
    %p101 = scmp.ne.s32.totalorder %s90, %s91
    %p102 = scmp.eq.s32.totalorder %s14, 0
    %p103 = por %p101, %p102
    %p104 = scmp.ne.s32.totalorder %s90, %s91
    %p105 = scmp.eq.s32.totalorder %s15, 1
    %p106 = por %p104, %p105
    %p108 = scmp.ne.s32.totalorder %s91, %s107
    %p109 = scmp.eq.s32.totalorder %s15, 0
    %p110 = por %p108, %p109
    %p111 = scmp.le.s32.totalorder 1, %s9
    %p112 = scmp.lt.s32.totalorder %s9, 3
    %p113 = pnand %p111, %p112
    %p114 = pneg %p113
    // Predicated region
    $region9: #{image_encoder_forward.19} parent=5 // pred_check
      _
    $region10: #{image_encoder_forward.19} parent=5 // pred_check_branch
      %116 = sbr.rel (%p113) target = $region12
    $region11: #{image_encoder_forward.19} parent=5 // pred_region
      %s117 = ssub.s32 %s9, 1
      // Predicated region
      $region13: #{image_encoder_forward.19} parent=11 // pred_check
        %p118 = pneg %p56
      $region14: #{image_encoder_forward.19} parent=11 // pred_check_branch
        %120 = sbr.rel (%p118) target = $region16
      $region15: #{image_encoder_forward.19} parent=11 // pred_region
        _
      $region16: #{image_encoder_forward.19} parent=11 // pred_fallthru
        _
      // Predicated region
      $region17: #{image_encoder_forward.19} parent=11 // pred_check
        %p121 = pneg %p77
      $region18: #{image_encoder_forward.19} parent=11 // pred_check_branch
        %123 = sbr.rel (%p121) target = $region20
      $region19: #{image_encoder_forward.19} parent=11 // pred_region
        _
      $region20: #{image_encoder_forward.19} parent=11 // pred_fallthru
        _
    $region12: #{image_encoder_forward.19} parent=5 // pred_fallthru
      _
    %p124 = scmp.lt.s32.totalorder %s9, 2
    // Predicated region
    $region21: #{image_encoder_forward.19} parent=5 // pred_check
      %p125 = pneg %p124
    $region22: #{image_encoder_forward.19} parent=5 // pred_check_branch
      %127 = sbr.rel (%p125) target = $region24
    $region23: #{image_encoder_forward.19} parent=5 // pred_region
      // Predicated region
      $region25: #{image_encoder_forward.19} parent=23 // pred_check
        %p128 = pneg %p29
      $region26: #{image_encoder_forward.19} parent=23 // pred_check_branch
        %130 = sbr.rel (%p128) target = $region28
      $region27: #{image_encoder_forward.19} parent=23 // pred_region
        %s131 = smul.u32 2, %s9
        %p132 = scmp.lt.s32.totalorder %s131, 3
        %s133 = scalar_select %p132, %s131, 3
        %s134 = smul.addr %s133, 2
        %s135 = smul.addr %s134, 8
        %s136 = scalar_lea.vmem %s0, %s135
        %s137 = smul.u32 2, %s9
      $region28: #{image_encoder_forward.19} parent=23 // pred_fallthru
        _
    $region24: #{image_encoder_forward.19} parent=5 // pred_fallthru
      _
    %p138 = scmp.le.s32.totalorder 1, %s9
    %p139 = scmp.lt.s32.totalorder %s9, 3
    %p140 = pnand %p138, %p139
    %p141 = pneg %p140
    // Predicated region
    $region29: #{image_encoder_forward.19} parent=5 // pred_check
      _
    $region30: #{image_encoder_forward.19} parent=5 // pred_check_branch
      %143 = sbr.rel (%p140) target = $region32
    $region31: #{image_encoder_forward.19} parent=5 // pred_region
      %s144 = ssub.s32 %s9, 1
      %s145 = smul.u32 2, %s14
      %p146 = scmp.lt.s32.totalorder %s145, 3
      %s147 = scalar_select %p146, %s145, 3
      %s148 = smul.addr %s147, 2
      %s149 = smul.addr %s148, 8
      %s150 = scalar_lea.vmem %s0, %s149
      %p151 = pneg %p35
      %p152 = pneg %p32
      %p153 = pneg %p56
      %p154 = pneg %p53
      %p155 = pneg %p77
      %p156 = pneg %p74
      %p157 = pneg %p103
      %p158 = pneg %p100
      %s159 = smul.u32 2, %s14
      %p160 = scmp.lt.s32.totalorder %s159, 3
      %s161 = scalar_select %p160, %s159, 3
      %s162 = smul.addr %s161, 8
      %s163 = scalar_lea.vmem %s3, %s162
      %s164 = smul.u32 2, %s14
      %p165 = scmp.lt.s32.totalorder %s164, 3
      %s166 = scalar_select %p165, %s164, 3
      %s167 = smul.addr %s166, 2
      %s168 = smul.addr %s167, 8
      %s169 = scalar_lea.vmem %s0, %s168
      %s170 = smul.u32 2, %s14
      %s171 = smul.u32 2, %s14
      %p172 = scmp.lt.s32.totalorder %s171, 3
      %s173 = scalar_select %p172, %s171, 3
      %s174 = smul.addr %s173, 8
      %s175 = scalar_lea.vmem %s3, %s174
      %s176 = smul.u32 2, %s14
      %v177 = vld [vmem:[%s169] sm:$0xff]
      %v178 = vld [vmem:[%s169 + $0x8] sm:$0xff]
      %v179 = vld [vmem:[%s169 + $0x10] sm:$0xff]
      %v180 = vld [vmem:[%s169 + $0x18] sm:$0xff]
      %v181 = vld [vmem:[%s1] sm:$0xff]
      %v182 = vld [vmem:[%s1 + $0x8] sm:$0xff]
      %v183 = vld [vmem:[%s1 + $0x10] sm:$0xff]
      %v184 = vld [vmem:[%s1 + $0x18] sm:$0xff]
      %v185 = vld [vmem:[%s1 + $0x20] sm:$0xff]
      %v186 = vld [vmem:[%s1 + $0x28] sm:$0xff]
      %v187 = vld [vmem:[%s1 + $0x30] sm:$0xff]
      %v188 = vld [vmem:[%s1 + $0x38] sm:$0xff]
      %v189 = vld [vmem:[%s1 + $0x40] sm:$0xff]
      %v190 = vld [vmem:[%s1 + $0x48] sm:$0xff]
      %v191 = vld [vmem:[%s1 + $0x50] sm:$0xff]
      %v192 = vld [vmem:[%s1 + $0x58] sm:$0xff]
      %v193 = vld [vmem:[%s1 + $0x60] sm:$0xff]
      %v194 = vld [vmem:[%s1 + $0x68] sm:$0xff]
      %v195 = vld [vmem:[%s1 + $0x70] sm:$0xff]
      %v196 = vld [vmem:[%s1 + $0x78] sm:$0xff]
      %v197 = vld [vmem:[%s1 + $0x80] sm:$0xff]
      %v198 = vld [vmem:[%s1 + $0x88] sm:$0xff]
      %v199 = vld [vmem:[%s1 + $0x90] sm:$0xff]
      %v200 = vld [vmem:[%s1 + $0x98] sm:$0xff]
      %v201 = vld [vmem:[%s1 + $0xa0] sm:$0xff]
      %v202 = vld [vmem:[%s1 + $0xa8] sm:$0xff]
      %v203 = vld [vmem:[%s1 + $0xb0] sm:$0xff]
      %v204 = vld [vmem:[%s1 + $0xb8] sm:$0xff]
      %v205 = vld [vmem:[%s2] sm:$0x1]
      %v207 = vperm.slane %v205, 0
      %vm209 = vcmask 523264
      %v211 = vsel %vm209, %v178, 0
      %v214 = vsel %vm209, %v180, 0
      %216 = vmatpush.msra.mxu0 %v196
      %217 = vmatpush.msra.mxu0 %v195
      %218 = vmatpush.msra.mxu0 %v194
      %219 = vmatpush.msra.mxu0 %v193
      %220 = vmatpush.msra.mxu0 %v192
      %221 = vmatpush.msra.mxu0 %v191
      %222 = vmatpush.msra.mxu0 %v190
      %223 = vmatpush.msra.mxu0 %v189
      %224 = vmatpush.msra.mxu0 %v188
      %225 = vmatpush.msra.mxu0 %v187
      %226 = vmatpush.msra.mxu0 %v186
      %227 = vmatpush.msra.mxu0 %v185
      %228 = vmatpush.msra.mxu0 %v184
      %229 = vmatpush.msra.mxu0 %v183
      %230 = vmatpush.msra.mxu0 %v182
      %231 = vmatpush.msra.mxu0 %v181
      %232 = vmatmul.f32.gmra.mxu0 %v177
      %v233 = vpop.f32.mrf.mxu0
      %v234 = vadd.f32 %v207, %v233
      %235 = vmatmul.f32.gmra.mxu0 %v179
      %v236 = vpop.f32.mrf.mxu0
      %v237 = vadd.f32 %v207, %v236
      %238 = vdwg.mxu0
      %239 = vmatpush.msra.mxu0 0.0
      %240 = vmatpush.msra.mxu0 0.0
      %241 = vmatpush.msra.mxu0 0.0
      %242 = vmatpush.msra.mxu0 0.0
      %243 = vmatpush.msra.mxu0 0.0
      %244 = vmatpush.msra.mxu0 0.0
      %245 = vmatpush.msra.mxu0 0.0
      %246 = vmatpush.msra.mxu0 0.0
      %247 = vmatpush.msra.mxu0 %v204
      %248 = vmatpush.msra.mxu0 %v203
      %249 = vmatpush.msra.mxu0 %v202
      %250 = vmatpush.msra.mxu0 %v201
      %251 = vmatpush.msra.mxu0 %v200
      %252 = vmatpush.msra.mxu0 %v199
      %253 = vmatpush.msra.mxu0 %v198
      %254 = vmatpush.msra.mxu0 %v197
      %255 = vmatmul.f32.gmra.mxu0 %v211
      %v256 = vpop.f32.mrf.mxu0
      %v257 = vadd.f32 %v234, %v256
      %258 = vmatmul.f32.gmra.mxu0 %v214
      %v259 = vpop.f32.mrf.mxu0
      %v260 = vadd.f32 %v237, %v259
      %261 = vdwg.mxu0
      %262 = vst [vmem:[%s175] sm:$0xff] %v257
      %263 = vst [vmem:[%s175 + $0x8] sm:$0xff] %v260
      %s264 = smul.u32 2, %s14
      %p265 = scmp.lt.s32.totalorder %s264, 3
      %s266 = scalar_select %p265, %s264, 3
      %s267 = smul.addr %s266, 8
      %s268 = scalar_lea.vmem %s3, %s267
      // Predicated region
      $region33: #{image_encoder_forward.19} parent=31 // pred_check
        %p269 = pneg %p100
      $region34: #{image_encoder_forward.19} parent=31 // pred_check_branch
        %271 = sbr.rel (%p269) target = $region36
      $region35: #{image_encoder_forward.19} parent=31 // pred_region
        %s272 = smul.u32 2, %s14
      $region36: #{image_encoder_forward.19} parent=31 // pred_fallthru
        _
    $region32: #{image_encoder_forward.19} parent=5 // pred_fallthru
      _
    %p273 = scmp.le.s32.totalorder 2, %s9
    // Predicated region
    $region37: #{image_encoder_forward.19} parent=5 // pred_check
      %p274 = pneg %p273
    $region38: #{image_encoder_forward.19} parent=5 // pred_check_branch
      %276 = sbr.rel (%p274) target = $region40
    $region39: #{image_encoder_forward.19} parent=5 // pred_region
      %s277 = ssub.s32 %s9, 2
      // Predicated region
      $region41: #{image_encoder_forward.19} parent=39 // pred_check
        %p278 = pneg %p106
      $region42: #{image_encoder_forward.19} parent=39 // pred_check_branch
        %280 = sbr.rel (%p278) target = $region44
      $region43: #{image_encoder_forward.19} parent=39 // pred_region
        %s281 = smul.u32 2, %s15
        %p282 = scmp.lt.s32.totalorder %s281, 3
        %s283 = scalar_select %p282, %s281, 3
        %s284 = smul.addr %s283, 8
        %s285 = scalar_lea.vmem %s3, %s284
      $region44: #{image_encoder_forward.19} parent=39 // pred_fallthru
        _
    $region40: #{image_encoder_forward.19} parent=5 // pred_fallthru
      _
  $region6: #{image_encoder_forward.19} parent=0 // loop_footer
    %s13 = sadd.s32 1, %s9
  $region7: #{image_encoder_forward.19} parent=0 // loop_footer_branch
    %8 = sbr.rel target = $region3
  $region8: #{image_encoder_forward.19} parent=0 // loop_exit
    _

// kernel: image_encoder_forward.21
$region0: #{image_encoder_forward.21}
  #allocation0 [shape = 'u32[]', space=smem, size = 0x4, offset = 0x4, fixed_abs, tag = 'smem constant byte address 0x4 - core index']
  #allocation1 [shape = 'u32[72,128]{1,0:T(1,128)}', space=vmem, size = 0x9000, scoped, tag = 'internal scratch']
  %s0 = inlined_call_operand.vmem [shape: f32[32,128], index: 0, kind: input, shape index: {}]
  %s1 = inlined_call_operand.vmem [shape: f32[128,384], index: 1, kind: input, shape index: {}]
  %s2 = inlined_call_operand.vmem [shape: f32[1,384], index: 2, kind: input, shape index: {}]
  %s3 = inlined_call_operand.vmem [shape: f32[32,384], index: 3, kind: output, shape index: {}]
  %s4 = sld [smem:[#allocation0]]
  $region45: #{image_encoder_forward.21} parent=0
    _
  %s6 = ssub.s32 1, %s4
  %s7 = scalar_select 0, %s6, %s4
  loop: start=0, step=1, limit=4
  $region2: #{image_encoder_forward.21} parent=0 // loop_pre_header
    _
  $region3: #{image_encoder_forward.21} parent=0 // loop_header
    %s9 = sphi 0, %s13
    %p10 = scmp.ge.s32.totalorder %s9, 4
    %s19 = sphi 0, %s21
    %s22 = sphi 0, %s19
    %s23 = sphi 0, %s22
    %s39 = sphi 0, %s23
    %s43 = sphi 0, %s43
    %s45 = sphi 0, %s43
    %s46 = sphi 0, %s45
    %s60 = sphi 0, %s46
    %s64 = sphi 0, %s64
    %s66 = sphi 0, %s64
    %s67 = sphi 0, %s66
    %s81 = sphi 0, %s67
    %s87 = sphi 0, %s89
    %s90 = sphi 0, %s87
    %s91 = sphi 0, %s90
    %s107 = sphi 0, %s91
  $region4: #{image_encoder_forward.21} parent=0 // loop_header_branch
    %12 = sbr.rel (%p10) target = $region8
  $region5: #{image_encoder_forward.21} parent=0 // loop_body
    %s14 = ssub.s32 %s9, 1
    %s15 = ssub.s32 %s9, 2
    %s16 = sadd.s32 %s9, 1
    %s17 = ssub.s32 %s9, %s16
    %p18 = scmp.eq.s32.totalorder %s17, 0
    %s20 = sadd.s32 %s19, 1
    %s21 = scalar_select %p18, %s19, %s20
    %p24 = pneg %p18
    %p25 = scmp.eq.s32.totalorder %s9, 1
    %p26 = por %p24, %p25
    %p27 = scmp.ne.s32.totalorder %s19, %s22
    %p28 = scmp.eq.s32.totalorder %s9, 0
    %p29 = por %p27, %p28
    %p30 = scmp.ne.s32.totalorder %s19, %s22
    %p31 = scmp.eq.s32.totalorder %s14, 1
    %p32 = por %p30, %p31
    %p33 = scmp.ne.s32.totalorder %s22, %s23
    %p34 = scmp.eq.s32.totalorder %s14, 0
    %p35 = por %p33, %p34
    %p36 = scmp.ne.s32.totalorder %s22, %s23
    %p37 = scmp.eq.s32.totalorder %s15, 1
    %p38 = por %p36, %p37
    %p40 = scmp.ne.s32.totalorder %s23, %s39
    %p41 = scmp.eq.s32.totalorder %s15, 0
    %p42 = por %p40, %p41
    %s44 = sadd.s32 %s43, 1
    %p47 = scmp.eq.s32.totalorder %s9, 1
    %p48 = scmp.ne.s32.totalorder %s43, %s45
    %p49 = scmp.eq.s32.totalorder %s9, 0
    %p50 = por %p48, %p49
    %p51 = scmp.ne.s32.totalorder %s43, %s45
    %p52 = scmp.eq.s32.totalorder %s14, 1
    %p53 = por %p51, %p52
    %p54 = scmp.ne.s32.totalorder %s45, %s46
    %p55 = scmp.eq.s32.totalorder %s14, 0
    %p56 = por %p54, %p55
    %p57 = scmp.ne.s32.totalorder %s45, %s46
    %p58 = scmp.eq.s32.totalorder %s15, 1
    %p59 = por %p57, %p58
    %p61 = scmp.ne.s32.totalorder %s46, %s60
    %p62 = scmp.eq.s32.totalorder %s15, 0
    %p63 = por %p61, %p62
    %s65 = sadd.s32 %s64, 1
    %p68 = scmp.eq.s32.totalorder %s9, 1
    %p69 = scmp.ne.s32.totalorder %s64, %s66
    %p70 = scmp.eq.s32.totalorder %s9, 0
    %p71 = por %p69, %p70
    %p72 = scmp.ne.s32.totalorder %s64, %s66
    %p73 = scmp.eq.s32.totalorder %s14, 1
    %p74 = por %p72, %p73
    %p75 = scmp.ne.s32.totalorder %s66, %s67
    %p76 = scmp.eq.s32.totalorder %s14, 0
    %p77 = por %p75, %p76
    %p78 = scmp.ne.s32.totalorder %s66, %s67
    %p79 = scmp.eq.s32.totalorder %s15, 1
    %p80 = por %p78, %p79
    %p82 = scmp.ne.s32.totalorder %s67, %s81
    %p83 = scmp.eq.s32.totalorder %s15, 0
    %p84 = por %p82, %p83
    %s85 = ssub.s32 %s9, %s16
    %p86 = scmp.eq.s32.totalorder %s85, 0
    %s88 = sadd.s32 %s87, 1
    %s89 = scalar_select %p86, %s87, %s88
    %p92 = pneg %p86
    %p93 = scmp.eq.s32.totalorder %s9, 1
    %p94 = por %p92, %p93
    %p95 = scmp.ne.s32.totalorder %s87, %s90
    %p96 = scmp.eq.s32.totalorder %s9, 0
    %p97 = por %p95, %p96
    %p98 = scmp.ne.s32.totalorder %s87, %s90
    %p99 = scmp.eq.s32.totalorder %s14, 1
    %p100 = por %p98, %p99
    %p101 = scmp.ne.s32.totalorder %s90, %s91
    %p102 = scmp.eq.s32.totalorder %s14, 0
    %p103 = por %p101, %p102
    %p104 = scmp.ne.s32.totalorder %s90, %s91
    %p105 = scmp.eq.s32.totalorder %s15, 1
    %p106 = por %p104, %p105
    %p108 = scmp.ne.s32.totalorder %s91, %s107
    %p109 = scmp.eq.s32.totalorder %s15, 0
    %p110 = por %p108, %p109
    %p111 = scmp.le.s32.totalorder 1, %s9
    %p112 = scmp.lt.s32.totalorder %s9, 3
    %p113 = pnand %p111, %p112
    %p114 = pneg %p113
    // Predicated region
    $region9: #{image_encoder_forward.21} parent=5 // pred_check
      _
    $region10: #{image_encoder_forward.21} parent=5 // pred_check_branch
      %116 = sbr.rel (%p113) target = $region12
    $region11: #{image_encoder_forward.21} parent=5 // pred_region
      %s117 = ssub.s32 %s9, 1
      // Predicated region
      $region13: #{image_encoder_forward.21} parent=11 // pred_check
        %p118 = pneg %p56
      $region14: #{image_encoder_forward.21} parent=11 // pred_check_branch
        %120 = sbr.rel (%p118) target = $region16
      $region15: #{image_encoder_forward.21} parent=11 // pred_region
        _
      $region16: #{image_encoder_forward.21} parent=11 // pred_fallthru
        _
      // Predicated region
      $region17: #{image_encoder_forward.21} parent=11 // pred_check
        %p121 = pneg %p77
      $region18: #{image_encoder_forward.21} parent=11 // pred_check_branch
        %123 = sbr.rel (%p121) target = $region20
      $region19: #{image_encoder_forward.21} parent=11 // pred_region
        _
      $region20: #{image_encoder_forward.21} parent=11 // pred_fallthru
        _
    $region12: #{image_encoder_forward.21} parent=5 // pred_fallthru
      _
    %p124 = scmp.lt.s32.totalorder %s9, 2
    // Predicated region
    $region21: #{image_encoder_forward.21} parent=5 // pred_check
      %p125 = pneg %p124
    $region22: #{image_encoder_forward.21} parent=5 // pred_check_branch
      %127 = sbr.rel (%p125) target = $region24
    $region23: #{image_encoder_forward.21} parent=5 // pred_region
      // Predicated region
      $region25: #{image_encoder_forward.21} parent=23 // pred_check
        %p128 = pneg %p29
      $region26: #{image_encoder_forward.21} parent=23 // pred_check_branch
        %130 = sbr.rel (%p128) target = $region28
      $region27: #{image_encoder_forward.21} parent=23 // pred_region
        %s131 = smul.u32 2, %s9
        %p132 = scmp.lt.s32.totalorder %s131, 3
        %s133 = scalar_select %p132, %s131, 3
        %s134 = smul.addr %s133, 8
        %s135 = scalar_lea.vmem %s0, %s134
        %s136 = smul.u32 2, %s9
      $region28: #{image_encoder_forward.21} parent=23 // pred_fallthru
        _
    $region24: #{image_encoder_forward.21} parent=5 // pred_fallthru
      _
    %p137 = scmp.le.s32.totalorder 1, %s9
    %p138 = scmp.lt.s32.totalorder %s9, 3
    %p139 = pnand %p137, %p138
    %p140 = pneg %p139
    // Predicated region
    $region29: #{image_encoder_forward.21} parent=5 // pred_check
      _
    $region30: #{image_encoder_forward.21} parent=5 // pred_check_branch
      %142 = sbr.rel (%p139) target = $region32
    $region31: #{image_encoder_forward.21} parent=5 // pred_region
      %s143 = ssub.s32 %s9, 1
      %s144 = smul.u32 2, %s14
      %p145 = scmp.lt.s32.totalorder %s144, 3
      %s146 = scalar_select %p145, %s144, 3
      %s147 = smul.addr %s146, 8
      %s148 = scalar_lea.vmem %s0, %s147
      %p149 = pneg %p35
      %p150 = pneg %p32
      %p151 = pneg %p56
      %p152 = pneg %p53
      %p153 = pneg %p77
      %p154 = pneg %p74
      %p155 = pneg %p103
      %p156 = pneg %p100
      %s157 = smul.u32 2, %s14
      %p158 = scmp.lt.s32.totalorder %s157, 3
      %s159 = scalar_select %p158, %s157, 3
      %s160 = smul.addr %s159, 3
      %s161 = smul.addr %s160, 8
      %s162 = scalar_lea.vmem %s3, %s161
      %s163 = smul.u32 2, %s14
      %p164 = scmp.lt.s32.totalorder %s163, 3
      %s165 = scalar_select %p164, %s163, 3
      %s166 = smul.addr %s165, 8
      %s167 = scalar_lea.vmem %s0, %s166
      %s168 = smul.u32 2, %s14
      %s169 = smul.u32 2, %s14
      %p170 = scmp.lt.s32.totalorder %s169, 3
      %s171 = scalar_select %p170, %s169, 3
      %s172 = smul.addr %s171, 3
      %s173 = smul.addr %s172, 8
      %s174 = scalar_lea.vmem %s3, %s173
      %s175 = smul.u32 2, %s14
      %v176 = vld [vmem:[%s167] sm:$0xff]
      %v177 = vld [vmem:[%s167 + $0x8] sm:$0xff]
      %v178 = vld [vmem:[%s1] sm:$0xff]
      %v179 = vld [vmem:[%s1 + $0x8] sm:$0xff]
      %v180 = vld [vmem:[%s1 + $0x10] sm:$0xff]
      %v181 = vld [vmem:[%s1 + $0x18] sm:$0xff]
      %v182 = vld [vmem:[%s1 + $0x20] sm:$0xff]
      %v183 = vld [vmem:[%s1 + $0x28] sm:$0xff]
      %v184 = vld [vmem:[%s1 + $0x30] sm:$0xff]
      %v185 = vld [vmem:[%s1 + $0x38] sm:$0xff]
      %v186 = vld [vmem:[%s1 + $0x40] sm:$0xff]
      %v187 = vld [vmem:[%s1 + $0x48] sm:$0xff]
      %v188 = vld [vmem:[%s1 + $0x50] sm:$0xff]
      %v189 = vld [vmem:[%s1 + $0x58] sm:$0xff]
      %v190 = vld [vmem:[%s1 + $0x60] sm:$0xff]
      %v191 = vld [vmem:[%s1 + $0x68] sm:$0xff]
      %v192 = vld [vmem:[%s1 + $0x70] sm:$0xff]
      %v193 = vld [vmem:[%s1 + $0x78] sm:$0xff]
      %v194 = vld [vmem:[%s1 + $0x80] sm:$0xff]
      %v195 = vld [vmem:[%s1 + $0x88] sm:$0xff]
      %v196 = vld [vmem:[%s1 + $0x90] sm:$0xff]
      %v197 = vld [vmem:[%s1 + $0x98] sm:$0xff]
      %v198 = vld [vmem:[%s1 + $0xa0] sm:$0xff]
      %v199 = vld [vmem:[%s1 + $0xa8] sm:$0xff]
      %v200 = vld [vmem:[%s1 + $0xb0] sm:$0xff]
      %v201 = vld [vmem:[%s1 + $0xb8] sm:$0xff]
      %v202 = vld [vmem:[%s1 + $0xc0] sm:$0xff]
      %v203 = vld [vmem:[%s1 + $0xc8] sm:$0xff]
      %v204 = vld [vmem:[%s1 + $0xd0] sm:$0xff]
      %v205 = vld [vmem:[%s1 + $0xd8] sm:$0xff]
      %v206 = vld [vmem:[%s1 + $0xe0] sm:$0xff]
      %v207 = vld [vmem:[%s1 + $0xe8] sm:$0xff]
      %v208 = vld [vmem:[%s1 + $0xf0] sm:$0xff]
      %v209 = vld [vmem:[%s1 + $0xf8] sm:$0xff]
      %v210 = vld [vmem:[%s1 + $0x100] sm:$0xff]
      %v211 = vld [vmem:[%s1 + $0x108] sm:$0xff]
      %v212 = vld [vmem:[%s1 + $0x110] sm:$0xff]
      %v213 = vld [vmem:[%s1 + $0x118] sm:$0xff]
      %v214 = vld [vmem:[%s1 + $0x120] sm:$0xff]
      %v215 = vld [vmem:[%s1 + $0x128] sm:$0xff]
      %v216 = vld [vmem:[%s1 + $0x130] sm:$0xff]
      %v217 = vld [vmem:[%s1 + $0x138] sm:$0xff]
      %v218 = vld [vmem:[%s1 + $0x140] sm:$0xff]
      %v219 = vld [vmem:[%s1 + $0x148] sm:$0xff]
      %v220 = vld [vmem:[%s1 + $0x150] sm:$0xff]
      %v221 = vld [vmem:[%s1 + $0x158] sm:$0xff]
      %v222 = vld [vmem:[%s1 + $0x160] sm:$0xff]
      %v223 = vld [vmem:[%s1 + $0x168] sm:$0xff]
      %v224 = vld [vmem:[%s1 + $0x170] sm:$0xff]
      %v225 = vld [vmem:[%s1 + $0x178] sm:$0xff]
      %v226 = vld [vmem:[%s2] sm:$0x7]
      %v228 = vperm.slane %v226, 0
      %v229 = vperm.slane %v226, 1
      %v230 = vperm.slane %v226, 2
      %234 = vmatpush.msra.mxu0 %v223
      %235 = vmatpush.msra.mxu0 %v220
      %236 = vmatpush.msra.mxu0 %v217
      %237 = vmatpush.msra.mxu0 %v214
      %238 = vmatpush.msra.mxu0 %v211
      %239 = vmatpush.msra.mxu0 %v208
      %240 = vmatpush.msra.mxu0 %v205
      %241 = vmatpush.msra.mxu0 %v202
      %242 = vmatpush.msra.mxu0 %v199
      %243 = vmatpush.msra.mxu0 %v196
      %244 = vmatpush.msra.mxu0 %v193
      %245 = vmatpush.msra.mxu0 %v190
      %246 = vmatpush.msra.mxu0 %v187
      %247 = vmatpush.msra.mxu0 %v184
      %248 = vmatpush.msra.mxu0 %v181
      %249 = vmatpush.msra.mxu0 %v178
      %250 = vmatmul.f32.gmra.mxu0 %v176
      %v251 = vpop.f32.mrf.mxu0
      %v252 = vadd.f32 %v228, %v251
      %253 = vmatmul.f32.gmra.mxu0 %v177
      %v254 = vpop.f32.mrf.mxu0
      %v255 = vadd.f32 %v228, %v254
      %256 = vdwg.mxu0
      %257 = vmatpush.msra.mxu0 %v224
      %258 = vmatpush.msra.mxu0 %v221
      %259 = vmatpush.msra.mxu0 %v218
      %260 = vmatpush.msra.mxu0 %v215
      %261 = vmatpush.msra.mxu0 %v212
      %262 = vmatpush.msra.mxu0 %v209
      %263 = vmatpush.msra.mxu0 %v206
      %264 = vmatpush.msra.mxu0 %v203
      %265 = vmatpush.msra.mxu0 %v200
      %266 = vmatpush.msra.mxu0 %v197
      %267 = vmatpush.msra.mxu0 %v194
      %268 = vmatpush.msra.mxu0 %v191
      %269 = vmatpush.msra.mxu0 %v188
      %270 = vmatpush.msra.mxu0 %v185
      %271 = vmatpush.msra.mxu0 %v182
      %272 = vmatpush.msra.mxu0 %v179
      %273 = vmatmul.f32.gmra.mxu0 %v176
      %v274 = vpop.f32.mrf.mxu0
      %v275 = vadd.f32 %v229, %v274
      %276 = vmatmul.f32.gmra.mxu0 %v177
      %v277 = vpop.f32.mrf.mxu0
      %v278 = vadd.f32 %v229, %v277
      %279 = vdwg.mxu0
      %280 = vmatpush.msra.mxu0 %v225
      %281 = vmatpush.msra.mxu0 %v222
      %282 = vmatpush.msra.mxu0 %v219
      %283 = vmatpush.msra.mxu0 %v216
      %284 = vmatpush.msra.mxu0 %v213
      %285 = vmatpush.msra.mxu0 %v210
      %286 = vmatpush.msra.mxu0 %v207
      %287 = vmatpush.msra.mxu0 %v204
      %288 = vmatpush.msra.mxu0 %v201
      %289 = vmatpush.msra.mxu0 %v198
      %290 = vmatpush.msra.mxu0 %v195
      %291 = vmatpush.msra.mxu0 %v192
      %292 = vmatpush.msra.mxu0 %v189
      %293 = vmatpush.msra.mxu0 %v186
      %294 = vmatpush.msra.mxu0 %v183
      %295 = vmatpush.msra.mxu0 %v180
      %296 = vmatmul.f32.gmra.mxu0 %v176
      %v297 = vpop.f32.mrf.mxu0
      %v298 = vadd.f32 %v230, %v297
      %299 = vmatmul.f32.gmra.mxu0 %v177
      %v300 = vpop.f32.mrf.mxu0
      %v301 = vadd.f32 %v230, %v300
      %302 = vdwg.mxu0
      %303 = vst [vmem:[%s174] sm:$0xff] %v252
      %304 = vst [vmem:[%s174 + $0x8] sm:$0xff] %v275
      %305 = vst [vmem:[%s174 + $0x10] sm:$0xff] %v298
      %306 = vst [vmem:[%s174 + $0x18] sm:$0xff] %v255
      %307 = vst [vmem:[%s174 + $0x20] sm:$0xff] %v278
      %308 = vst [vmem:[%s174 + $0x28] sm:$0xff] %v301
      %s309 = smul.u32 2, %s14
      %p310 = scmp.lt.s32.totalorder %s309, 3
      %s311 = scalar_select %p310, %s309, 3
      %s312 = smul.addr %s311, 3
      %s313 = smul.addr %s312, 8
      %s314 = scalar_lea.vmem %s3, %s313
      // Predicated region
      $region33: #{image_encoder_forward.21} parent=31 // pred_check
        %p315 = pneg %p100
      $region34: #{image_encoder_forward.21} parent=31 // pred_check_branch
        %317 = sbr.rel (%p315) target = $region36
      $region35: #{image_encoder_forward.21} parent=31 // pred_region
        %s318 = smul.u32 2, %s14
      $region36: #{image_encoder_forward.21} parent=31 // pred_fallthru
        _
    $region32: #{image_encoder_forward.21} parent=5 // pred_fallthru
      _
    %p319 = scmp.le.s32.totalorder 2, %s9
    // Predicated region
    $region37: #{image_encoder_forward.21} parent=5 // pred_check
      %p320 = pneg %p319
    $region38: #{image_encoder_forward.21} parent=5 // pred_check_branch
      %322 = sbr.rel (%p320) target = $region40
    $region39: #{image_encoder_forward.21} parent=5 // pred_region
      %s323 = ssub.s32 %s9, 2
      // Predicated region
      $region41: #{image_encoder_forward.21} parent=39 // pred_check
        %p324 = pneg %p106
      $region42: #{image_encoder_forward.21} parent=39 // pred_check_branch
        %326 = sbr.rel (%p324) target = $region44
      $region43: #{image_encoder_forward.21} parent=39 // pred_region
        %s327 = smul.u32 2, %s15
        %p328 = scmp.lt.s32.totalorder %s327, 3
        %s329 = scalar_select %p328, %s327, 3
        %s330 = smul.addr %s329, 3
        %s331 = smul.addr %s330, 8
        %s332 = scalar_lea.vmem %s3, %s331
      $region44: #{image_encoder_forward.21} parent=39 // pred_fallthru
        _
    $region40: #{image_encoder_forward.21} parent=5 // pred_fallthru
      _
  $region6: #{image_encoder_forward.21} parent=0 // loop_footer
    %s13 = sadd.s32 1, %s9
  $region7: #{image_encoder_forward.21} parent=0 // loop_footer_branch
    %8 = sbr.rel target = $region3
  $region8: #{image_encoder_forward.21} parent=0 // loop_exit
    _

// kernel: image_encoder_forward.23
$region0: #{image_encoder_forward.23}
  #allocation0 [shape = 'u32[]', space=smem, size = 0x4, offset = 0x4, fixed_abs, tag = 'smem constant byte address 0x4 - core index']
  #allocation1 [shape = 'u32[72,128]{1,0:T(1,128)}', space=vmem, size = 0x9000, scoped, tag = 'internal scratch']
  %s0 = inlined_call_operand.vmem [shape: f32[32,128], index: 0, kind: input, shape index: {}]
  %s1 = inlined_call_operand.vmem [shape: f32[128,128], index: 1, kind: input, shape index: {}]
  %s2 = inlined_call_operand.vmem [shape: f32[1,128], index: 2, kind: input, shape index: {}]
  %s3 = inlined_call_operand.vmem [shape: f32[32,128], index: 3, kind: output, shape index: {}]
  %s4 = sld [smem:[#allocation0]]
  $region45: #{image_encoder_forward.23} parent=0
    _
  %s6 = ssub.s32 1, %s4
  %s7 = scalar_select 0, %s6, %s4
  loop: start=0, step=1, limit=4
  $region2: #{image_encoder_forward.23} parent=0 // loop_pre_header
    _
  $region3: #{image_encoder_forward.23} parent=0 // loop_header
    %s9 = sphi 0, %s13
    %p10 = scmp.ge.s32.totalorder %s9, 4
    %s19 = sphi 0, %s21
    %s22 = sphi 0, %s19
    %s23 = sphi 0, %s22
    %s39 = sphi 0, %s23
    %s43 = sphi 0, %s43
    %s45 = sphi 0, %s43
    %s46 = sphi 0, %s45
    %s60 = sphi 0, %s46
    %s64 = sphi 0, %s64
    %s66 = sphi 0, %s64
    %s67 = sphi 0, %s66
    %s81 = sphi 0, %s67
    %s87 = sphi 0, %s89
    %s90 = sphi 0, %s87
    %s91 = sphi 0, %s90
    %s107 = sphi 0, %s91
  $region4: #{image_encoder_forward.23} parent=0 // loop_header_branch
    %12 = sbr.rel (%p10) target = $region8
  $region5: #{image_encoder_forward.23} parent=0 // loop_body
    %s14 = ssub.s32 %s9, 1
    %s15 = ssub.s32 %s9, 2
    %s16 = sadd.s32 %s9, 1
    %s17 = ssub.s32 %s9, %s16
    %p18 = scmp.eq.s32.totalorder %s17, 0
    %s20 = sadd.s32 %s19, 1
    %s21 = scalar_select %p18, %s19, %s20
    %p24 = pneg %p18
    %p25 = scmp.eq.s32.totalorder %s9, 1
    %p26 = por %p24, %p25
    %p27 = scmp.ne.s32.totalorder %s19, %s22
    %p28 = scmp.eq.s32.totalorder %s9, 0
    %p29 = por %p27, %p28
    %p30 = scmp.ne.s32.totalorder %s19, %s22
    %p31 = scmp.eq.s32.totalorder %s14, 1
    %p32 = por %p30, %p31
    %p33 = scmp.ne.s32.totalorder %s22, %s23
    %p34 = scmp.eq.s32.totalorder %s14, 0
    %p35 = por %p33, %p34
    %p36 = scmp.ne.s32.totalorder %s22, %s23
    %p37 = scmp.eq.s32.totalorder %s15, 1
    %p38 = por %p36, %p37
    %p40 = scmp.ne.s32.totalorder %s23, %s39
    %p41 = scmp.eq.s32.totalorder %s15, 0
    %p42 = por %p40, %p41
    %s44 = sadd.s32 %s43, 1
    %p47 = scmp.eq.s32.totalorder %s9, 1
    %p48 = scmp.ne.s32.totalorder %s43, %s45
    %p49 = scmp.eq.s32.totalorder %s9, 0
    %p50 = por %p48, %p49
    %p51 = scmp.ne.s32.totalorder %s43, %s45
    %p52 = scmp.eq.s32.totalorder %s14, 1
    %p53 = por %p51, %p52
    %p54 = scmp.ne.s32.totalorder %s45, %s46
    %p55 = scmp.eq.s32.totalorder %s14, 0
    %p56 = por %p54, %p55
    %p57 = scmp.ne.s32.totalorder %s45, %s46
    %p58 = scmp.eq.s32.totalorder %s15, 1
    %p59 = por %p57, %p58
    %p61 = scmp.ne.s32.totalorder %s46, %s60
    %p62 = scmp.eq.s32.totalorder %s15, 0
    %p63 = por %p61, %p62
    %s65 = sadd.s32 %s64, 1
    %p68 = scmp.eq.s32.totalorder %s9, 1
    %p69 = scmp.ne.s32.totalorder %s64, %s66
    %p70 = scmp.eq.s32.totalorder %s9, 0
    %p71 = por %p69, %p70
    %p72 = scmp.ne.s32.totalorder %s64, %s66
    %p73 = scmp.eq.s32.totalorder %s14, 1
    %p74 = por %p72, %p73
    %p75 = scmp.ne.s32.totalorder %s66, %s67
    %p76 = scmp.eq.s32.totalorder %s14, 0
    %p77 = por %p75, %p76
    %p78 = scmp.ne.s32.totalorder %s66, %s67
    %p79 = scmp.eq.s32.totalorder %s15, 1
    %p80 = por %p78, %p79
    %p82 = scmp.ne.s32.totalorder %s67, %s81
    %p83 = scmp.eq.s32.totalorder %s15, 0
    %p84 = por %p82, %p83
    %s85 = ssub.s32 %s9, %s16
    %p86 = scmp.eq.s32.totalorder %s85, 0
    %s88 = sadd.s32 %s87, 1
    %s89 = scalar_select %p86, %s87, %s88
    %p92 = pneg %p86
    %p93 = scmp.eq.s32.totalorder %s9, 1
    %p94 = por %p92, %p93
    %p95 = scmp.ne.s32.totalorder %s87, %s90
    %p96 = scmp.eq.s32.totalorder %s9, 0
    %p97 = por %p95, %p96
    %p98 = scmp.ne.s32.totalorder %s87, %s90
    %p99 = scmp.eq.s32.totalorder %s14, 1
    %p100 = por %p98, %p99
    %p101 = scmp.ne.s32.totalorder %s90, %s91
    %p102 = scmp.eq.s32.totalorder %s14, 0
    %p103 = por %p101, %p102
    %p104 = scmp.ne.s32.totalorder %s90, %s91
    %p105 = scmp.eq.s32.totalorder %s15, 1
    %p106 = por %p104, %p105
    %p108 = scmp.ne.s32.totalorder %s91, %s107
    %p109 = scmp.eq.s32.totalorder %s15, 0
    %p110 = por %p108, %p109
    %p111 = scmp.le.s32.totalorder 1, %s9
    %p112 = scmp.lt.s32.totalorder %s9, 3
    %p113 = pnand %p111, %p112
    %p114 = pneg %p113
    // Predicated region
    $region9: #{image_encoder_forward.23} parent=5 // pred_check
      _
    $region10: #{image_encoder_forward.23} parent=5 // pred_check_branch
      %116 = sbr.rel (%p113) target = $region12
    $region11: #{image_encoder_forward.23} parent=5 // pred_region
      %s117 = ssub.s32 %s9, 1
      // Predicated region
      $region13: #{image_encoder_forward.23} parent=11 // pred_check
        %p118 = pneg %p56
      $region14: #{image_encoder_forward.23} parent=11 // pred_check_branch
        %120 = sbr.rel (%p118) target = $region16
      $region15: #{image_encoder_forward.23} parent=11 // pred_region
        _
      $region16: #{image_encoder_forward.23} parent=11 // pred_fallthru
        _
      // Predicated region
      $region17: #{image_encoder_forward.23} parent=11 // pred_check
        %p121 = pneg %p77
      $region18: #{image_encoder_forward.23} parent=11 // pred_check_branch
        %123 = sbr.rel (%p121) target = $region20
      $region19: #{image_encoder_forward.23} parent=11 // pred_region
        _
      $region20: #{image_encoder_forward.23} parent=11 // pred_fallthru
        _
    $region12: #{image_encoder_forward.23} parent=5 // pred_fallthru
      _
    %p124 = scmp.lt.s32.totalorder %s9, 2
    // Predicated region
    $region21: #{image_encoder_forward.23} parent=5 // pred_check
      %p125 = pneg %p124
    $region22: #{image_encoder_forward.23} parent=5 // pred_check_branch
      %127 = sbr.rel (%p125) target = $region24
    $region23: #{image_encoder_forward.23} parent=5 // pred_region
      // Predicated region
      $region25: #{image_encoder_forward.23} parent=23 // pred_check
        %p128 = pneg %p29
      $region26: #{image_encoder_forward.23} parent=23 // pred_check_branch
        %130 = sbr.rel (%p128) target = $region28
      $region27: #{image_encoder_forward.23} parent=23 // pred_region
        %s131 = smul.u32 2, %s9
        %p132 = scmp.lt.s32.totalorder %s131, 3
        %s133 = scalar_select %p132, %s131, 3
        %s134 = smul.addr %s133, 8
        %s135 = scalar_lea.vmem %s0, %s134
        %s136 = smul.u32 2, %s9
      $region28: #{image_encoder_forward.23} parent=23 // pred_fallthru
        _
    $region24: #{image_encoder_forward.23} parent=5 // pred_fallthru
      _
    %p137 = scmp.le.s32.totalorder 1, %s9
    %p138 = scmp.lt.s32.totalorder %s9, 3
    %p139 = pnand %p137, %p138
    %p140 = pneg %p139
    // Predicated region
    $region29: #{image_encoder_forward.23} parent=5 // pred_check
      _
    $region30: #{image_encoder_forward.23} parent=5 // pred_check_branch
      %142 = sbr.rel (%p139) target = $region32
    $region31: #{image_encoder_forward.23} parent=5 // pred_region
      %s143 = ssub.s32 %s9, 1
      %s144 = smul.u32 2, %s14
      %p145 = scmp.lt.s32.totalorder %s144, 3
      %s146 = scalar_select %p145, %s144, 3
      %s147 = smul.addr %s146, 8
      %s148 = scalar_lea.vmem %s0, %s147
      %p149 = pneg %p35
      %p150 = pneg %p32
      %p151 = pneg %p56
      %p152 = pneg %p53
      %p153 = pneg %p77
      %p154 = pneg %p74
      %p155 = pneg %p103
      %p156 = pneg %p100
      %s157 = smul.u32 2, %s14
      %p158 = scmp.lt.s32.totalorder %s157, 3
      %s159 = scalar_select %p158, %s157, 3
      %s160 = smul.addr %s159, 8
      %s161 = scalar_lea.vmem %s3, %s160
      %s162 = smul.u32 2, %s14
      %p163 = scmp.lt.s32.totalorder %s162, 3
      %s164 = scalar_select %p163, %s162, 3
      %s165 = smul.addr %s164, 8
      %s166 = scalar_lea.vmem %s0, %s165
      %s167 = smul.u32 2, %s14
      %s168 = smul.u32 2, %s14
      %p169 = scmp.lt.s32.totalorder %s168, 3
      %s170 = scalar_select %p169, %s168, 3
      %s171 = smul.addr %s170, 8
      %s172 = scalar_lea.vmem %s3, %s171
      %s173 = smul.u32 2, %s14
      %v174 = vld [vmem:[%s166] sm:$0xff]
      %v175 = vld [vmem:[%s166 + $0x8] sm:$0xff]
      %v176 = vld [vmem:[%s1] sm:$0xff]
      %v177 = vld [vmem:[%s1 + $0x8] sm:$0xff]
      %v178 = vld [vmem:[%s1 + $0x10] sm:$0xff]
      %v179 = vld [vmem:[%s1 + $0x18] sm:$0xff]
      %v180 = vld [vmem:[%s1 + $0x20] sm:$0xff]
      %v181 = vld [vmem:[%s1 + $0x28] sm:$0xff]
      %v182 = vld [vmem:[%s1 + $0x30] sm:$0xff]
      %v183 = vld [vmem:[%s1 + $0x38] sm:$0xff]
      %v184 = vld [vmem:[%s1 + $0x40] sm:$0xff]
      %v185 = vld [vmem:[%s1 + $0x48] sm:$0xff]
      %v186 = vld [vmem:[%s1 + $0x50] sm:$0xff]
      %v187 = vld [vmem:[%s1 + $0x58] sm:$0xff]
      %v188 = vld [vmem:[%s1 + $0x60] sm:$0xff]
      %v189 = vld [vmem:[%s1 + $0x68] sm:$0xff]
      %v190 = vld [vmem:[%s1 + $0x70] sm:$0xff]
      %v191 = vld [vmem:[%s1 + $0x78] sm:$0xff]
      %v192 = vld [vmem:[%s2] sm:$0x1]
      %v194 = vperm.slane %v192, 0
      %196 = vmatpush.msra.mxu0 %v191
      %197 = vmatpush.msra.mxu0 %v190
      %198 = vmatpush.msra.mxu0 %v189
      %199 = vmatpush.msra.mxu0 %v188
      %200 = vmatpush.msra.mxu0 %v187
      %201 = vmatpush.msra.mxu0 %v186
      %202 = vmatpush.msra.mxu0 %v185
      %203 = vmatpush.msra.mxu0 %v184
      %204 = vmatpush.msra.mxu0 %v183
      %205 = vmatpush.msra.mxu0 %v182
      %206 = vmatpush.msra.mxu0 %v181
      %207 = vmatpush.msra.mxu0 %v180
      %208 = vmatpush.msra.mxu0 %v179
      %209 = vmatpush.msra.mxu0 %v178
      %210 = vmatpush.msra.mxu0 %v177
      %211 = vmatpush.msra.mxu0 %v176
      %212 = vmatmul.f32.gmra.mxu0 %v174
      %v213 = vpop.f32.mrf.mxu0
      %v214 = vadd.f32 %v194, %v213
      %215 = vmatmul.f32.gmra.mxu0 %v175
      %v216 = vpop.f32.mrf.mxu0
      %v217 = vadd.f32 %v194, %v216
      %218 = vdwg.mxu0
      %219 = vst [vmem:[%s172] sm:$0xff] %v214
      %220 = vst [vmem:[%s172 + $0x8] sm:$0xff] %v217
      %s221 = smul.u32 2, %s14
      %p222 = scmp.lt.s32.totalorder %s221, 3
      %s223 = scalar_select %p222, %s221, 3
      %s224 = smul.addr %s223, 8
      %s225 = scalar_lea.vmem %s3, %s224
      // Predicated region
      $region33: #{image_encoder_forward.23} parent=31 // pred_check
        %p226 = pneg %p100
      $region34: #{image_encoder_forward.23} parent=31 // pred_check_branch
        %228 = sbr.rel (%p226) target = $region36
      $region35: #{image_encoder_forward.23} parent=31 // pred_region
        %s229 = smul.u32 2, %s14
      $region36: #{image_encoder_forward.23} parent=31 // pred_fallthru
        _
    $region32: #{image_encoder_forward.23} parent=5 // pred_fallthru
      _
    %p230 = scmp.le.s32.totalorder 2, %s9
    // Predicated region
    $region37: #{image_encoder_forward.23} parent=5 // pred_check
      %p231 = pneg %p230
    $region38: #{image_encoder_forward.23} parent=5 // pred_check_branch
      %233 = sbr.rel (%p231) target = $region40
    $region39: #{image_encoder_forward.23} parent=5 // pred_region
      %s234 = ssub.s32 %s9, 2
      // Predicated region
      $region41: #{image_encoder_forward.23} parent=39 // pred_check
        %p235 = pneg %p106
      $region42: #{image_encoder_forward.23} parent=39 // pred_check_branch
        %237 = sbr.rel (%p235) target = $region44
      $region43: #{image_encoder_forward.23} parent=39 // pred_region
        %s238 = smul.u32 2, %s15
        %p239 = scmp.lt.s32.totalorder %s238, 3
        %s240 = scalar_select %p239, %s238, 3
        %s241 = smul.addr %s240, 8
        %s242 = scalar_lea.vmem %s3, %s241
      $region44: #{image_encoder_forward.23} parent=39 // pred_fallthru
        _
    $region40: #{image_encoder_forward.23} parent=5 // pred_fallthru
      _
  $region6: #{image_encoder_forward.23} parent=0 // loop_footer
    %s13 = sadd.s32 1, %s9
  $region7: #{image_encoder_forward.23} parent=0 // loop_footer_branch
    %8 = sbr.rel target = $region3
  $region8: #{image_encoder_forward.23} parent=0 // loop_exit
    _

// kernel: image_encoder_forward.26
$region0: #{image_encoder_forward.26}
  #allocation0 [shape = 'u32[]', space=smem, size = 0x4, offset = 0x4, fixed_abs, tag = 'smem constant byte address 0x4 - core index']
  #allocation1 [shape = 'u32[72,128]{1,0:T(1,128)}', space=vmem, size = 0x9000, scoped, tag = 'internal scratch']
  %s0 = inlined_call_operand.vmem [shape: f32[32,512], index: 0, kind: input, shape index: {}]
  %s1 = inlined_call_operand.vmem [shape: f32[512,128], index: 1, kind: input, shape index: {}]
  %s2 = inlined_call_operand.vmem [shape: f32[1,128], index: 2, kind: input, shape index: {}]
  %s3 = inlined_call_operand.vmem [shape: f32[32,128], index: 3, kind: input, shape index: {}]
  %s4 = inlined_call_operand.vmem [shape: f32[32,128], index: 4, kind: output, shape index: {}]
  %s5 = sld [smem:[#allocation0]]
  $region49: #{image_encoder_forward.26} parent=0
    _
  %s7 = ssub.s32 1, %s5
  %s8 = scalar_select 0, %s7, %s5
  loop: start=0, step=1, limit=4
  $region2: #{image_encoder_forward.26} parent=0 // loop_pre_header
    _
  $region3: #{image_encoder_forward.26} parent=0 // loop_header
    %s10 = sphi 0, %s14
    %p11 = scmp.ge.s32.totalorder %s10, 4
    %s20 = sphi 0, %s22
    %s23 = sphi 0, %s20
    %s24 = sphi 0, %s23
    %s40 = sphi 0, %s24
    %s44 = sphi 0, %s44
    %s46 = sphi 0, %s44
    %s47 = sphi 0, %s46
    %s61 = sphi 0, %s47
    %s65 = sphi 0, %s65
    %s67 = sphi 0, %s65
    %s68 = sphi 0, %s67
    %s82 = sphi 0, %s68
    %s88 = sphi 0, %s90
    %s91 = sphi 0, %s88
    %s92 = sphi 0, %s91
    %s108 = sphi 0, %s92
    %s114 = sphi 0, %s116
    %s117 = sphi 0, %s114
    %s118 = sphi 0, %s117
    %s134 = sphi 0, %s118
  $region4: #{image_encoder_forward.26} parent=0 // loop_header_branch
    %13 = sbr.rel (%p11) target = $region8
  $region5: #{image_encoder_forward.26} parent=0 // loop_body
    %s15 = ssub.s32 %s10, 1
    %s16 = ssub.s32 %s10, 2
    %s17 = sadd.s32 %s10, 1
    %s18 = ssub.s32 %s10, %s17
    %p19 = scmp.eq.s32.totalorder %s18, 0
    %s21 = sadd.s32 %s20, 1
    %s22 = scalar_select %p19, %s20, %s21
    %p25 = pneg %p19
    %p26 = scmp.eq.s32.totalorder %s10, 1
    %p27 = por %p25, %p26
    %p28 = scmp.ne.s32.totalorder %s20, %s23
    %p29 = scmp.eq.s32.totalorder %s10, 0
    %p30 = por %p28, %p29
    %p31 = scmp.ne.s32.totalorder %s20, %s23
    %p32 = scmp.eq.s32.totalorder %s15, 1
    %p33 = por %p31, %p32
    %p34 = scmp.ne.s32.totalorder %s23, %s24
    %p35 = scmp.eq.s32.totalorder %s15, 0
    %p36 = por %p34, %p35
    %p37 = scmp.ne.s32.totalorder %s23, %s24
    %p38 = scmp.eq.s32.totalorder %s16, 1
    %p39 = por %p37, %p38
    %p41 = scmp.ne.s32.totalorder %s24, %s40
    %p42 = scmp.eq.s32.totalorder %s16, 0
    %p43 = por %p41, %p42
    %s45 = sadd.s32 %s44, 1
    %p48 = scmp.eq.s32.totalorder %s10, 1
    %p49 = scmp.ne.s32.totalorder %s44, %s46
    %p50 = scmp.eq.s32.totalorder %s10, 0
    %p51 = por %p49, %p50
    %p52 = scmp.ne.s32.totalorder %s44, %s46
    %p53 = scmp.eq.s32.totalorder %s15, 1
    %p54 = por %p52, %p53
    %p55 = scmp.ne.s32.totalorder %s46, %s47
    %p56 = scmp.eq.s32.totalorder %s15, 0
    %p57 = por %p55, %p56
    %p58 = scmp.ne.s32.totalorder %s46, %s47
    %p59 = scmp.eq.s32.totalorder %s16, 1
    %p60 = por %p58, %p59
    %p62 = scmp.ne.s32.totalorder %s47, %s61
    %p63 = scmp.eq.s32.totalorder %s16, 0
    %p64 = por %p62, %p63
    %s66 = sadd.s32 %s65, 1
    %p69 = scmp.eq.s32.totalorder %s10, 1
    %p70 = scmp.ne.s32.totalorder %s65, %s67
    %p71 = scmp.eq.s32.totalorder %s10, 0
    %p72 = por %p70, %p71
    %p73 = scmp.ne.s32.totalorder %s65, %s67
    %p74 = scmp.eq.s32.totalorder %s15, 1
    %p75 = por %p73, %p74
    %p76 = scmp.ne.s32.totalorder %s67, %s68
    %p77 = scmp.eq.s32.totalorder %s15, 0
    %p78 = por %p76, %p77
    %p79 = scmp.ne.s32.totalorder %s67, %s68
    %p80 = scmp.eq.s32.totalorder %s16, 1
    %p81 = por %p79, %p80
    %p83 = scmp.ne.s32.totalorder %s68, %s82
    %p84 = scmp.eq.s32.totalorder %s16, 0
    %p85 = por %p83, %p84
    %s86 = ssub.s32 %s10, %s17
    %p87 = scmp.eq.s32.totalorder %s86, 0
    %s89 = sadd.s32 %s88, 1
    %s90 = scalar_select %p87, %s88, %s89
    %p93 = pneg %p87
    %p94 = scmp.eq.s32.totalorder %s10, 1
    %p95 = por %p93, %p94
    %p96 = scmp.ne.s32.totalorder %s88, %s91
    %p97 = scmp.eq.s32.totalorder %s10, 0
    %p98 = por %p96, %p97
    %p99 = scmp.ne.s32.totalorder %s88, %s91
    %p100 = scmp.eq.s32.totalorder %s15, 1
    %p101 = por %p99, %p100
    %p102 = scmp.ne.s32.totalorder %s91, %s92
    %p103 = scmp.eq.s32.totalorder %s15, 0
    %p104 = por %p102, %p103
    %p105 = scmp.ne.s32.totalorder %s91, %s92
    %p106 = scmp.eq.s32.totalorder %s16, 1
    %p107 = por %p105, %p106
    %p109 = scmp.ne.s32.totalorder %s92, %s108
    %p110 = scmp.eq.s32.totalorder %s16, 0
    %p111 = por %p109, %p110
    %s112 = ssub.s32 %s10, %s17
    %p113 = scmp.eq.s32.totalorder %s112, 0
    %s115 = sadd.s32 %s114, 1
    %s116 = scalar_select %p113, %s114, %s115
    %p119 = pneg %p113
    %p120 = scmp.eq.s32.totalorder %s10, 1
    %p121 = por %p119, %p120
    %p122 = scmp.ne.s32.totalorder %s114, %s117
    %p123 = scmp.eq.s32.totalorder %s10, 0
    %p124 = por %p122, %p123
    %p125 = scmp.ne.s32.totalorder %s114, %s117
    %p126 = scmp.eq.s32.totalorder %s15, 1
    %p127 = por %p125, %p126
    %p128 = scmp.ne.s32.totalorder %s117, %s118
    %p129 = scmp.eq.s32.totalorder %s15, 0
    %p130 = por %p128, %p129
    %p131 = scmp.ne.s32.totalorder %s117, %s118
    %p132 = scmp.eq.s32.totalorder %s16, 1
    %p133 = por %p131, %p132
    %p135 = scmp.ne.s32.totalorder %s118, %s134
    %p136 = scmp.eq.s32.totalorder %s16, 0
    %p137 = por %p135, %p136
    %p138 = scmp.le.s32.totalorder 1, %s10
    %p139 = scmp.lt.s32.totalorder %s10, 3
    %p140 = pnand %p138, %p139
    %p141 = pneg %p140
    // Predicated region
    $region9: #{image_encoder_forward.26} parent=5 // pred_check
      _
    $region10: #{image_encoder_forward.26} parent=5 // pred_check_branch
      %143 = sbr.rel (%p140) target = $region12
    $region11: #{image_encoder_forward.26} parent=5 // pred_region
      %s144 = ssub.s32 %s10, 1
      // Predicated region
      $region13: #{image_encoder_forward.26} parent=11 // pred_check
        %p145 = pneg %p57
      $region14: #{image_encoder_forward.26} parent=11 // pred_check_branch
        %147 = sbr.rel (%p145) target = $region16
      $region15: #{image_encoder_forward.26} parent=11 // pred_region
        _
      $region16: #{image_encoder_forward.26} parent=11 // pred_fallthru
        _
      // Predicated region
      $region17: #{image_encoder_forward.26} parent=11 // pred_check
        %p148 = pneg %p78
      $region18: #{image_encoder_forward.26} parent=11 // pred_check_branch
        %150 = sbr.rel (%p148) target = $region20
      $region19: #{image_encoder_forward.26} parent=11 // pred_region
        _
      $region20: #{image_encoder_forward.26} parent=11 // pred_fallthru
        _
    $region12: #{image_encoder_forward.26} parent=5 // pred_fallthru
      _
    %p151 = scmp.lt.s32.totalorder %s10, 2
    // Predicated region
    $region21: #{image_encoder_forward.26} parent=5 // pred_check
      %p152 = pneg %p151
    $region22: #{image_encoder_forward.26} parent=5 // pred_check_branch
      %154 = sbr.rel (%p152) target = $region24
    $region23: #{image_encoder_forward.26} parent=5 // pred_region
      // Predicated region
      $region25: #{image_encoder_forward.26} parent=23 // pred_check
        %p155 = pneg %p30
      $region26: #{image_encoder_forward.26} parent=23 // pred_check_branch
        %157 = sbr.rel (%p155) target = $region28
      $region27: #{image_encoder_forward.26} parent=23 // pred_region
        %s158 = smul.u32 2, %s10
        %p159 = scmp.lt.s32.totalorder %s158, 3
        %s160 = scalar_select %p159, %s158, 3
        %s161 = smul.addr %s160, 4
        %s162 = smul.addr %s161, 8
        %s163 = scalar_lea.vmem %s0, %s162
        %s164 = smul.u32 2, %s10
      $region28: #{image_encoder_forward.26} parent=23 // pred_fallthru
        _
      // Predicated region
      $region29: #{image_encoder_forward.26} parent=23 // pred_check
        %p165 = pneg %p98
      $region30: #{image_encoder_forward.26} parent=23 // pred_check_branch
        %167 = sbr.rel (%p165) target = $region32
      $region31: #{image_encoder_forward.26} parent=23 // pred_region
        %s168 = smul.u32 2, %s10
        %p169 = scmp.lt.s32.totalorder %s168, 3
        %s170 = scalar_select %p169, %s168, 3
        %s171 = smul.addr %s170, 8
        %s172 = scalar_lea.vmem %s3, %s171
        %s173 = smul.u32 2, %s10
      $region32: #{image_encoder_forward.26} parent=23 // pred_fallthru
        _
    $region24: #{image_encoder_forward.26} parent=5 // pred_fallthru
      _
    %p174 = scmp.le.s32.totalorder 1, %s10
    %p175 = scmp.lt.s32.totalorder %s10, 3
    %p176 = pnand %p174, %p175
    %p177 = pneg %p176
    // Predicated region
    $region33: #{image_encoder_forward.26} parent=5 // pred_check
      _
    $region34: #{image_encoder_forward.26} parent=5 // pred_check_branch
      %179 = sbr.rel (%p176) target = $region36
    $region35: #{image_encoder_forward.26} parent=5 // pred_region
      %s180 = ssub.s32 %s10, 1
      %s181 = smul.u32 2, %s15
      %p182 = scmp.lt.s32.totalorder %s181, 3
      %s183 = scalar_select %p182, %s181, 3
      %s184 = smul.addr %s183, 4
      %s185 = smul.addr %s184, 8
      %s186 = scalar_lea.vmem %s0, %s185
      %p187 = pneg %p36
      %p188 = pneg %p33
      %p189 = pneg %p57
      %p190 = pneg %p54
      %p191 = pneg %p78
      %p192 = pneg %p75
      %s193 = smul.u32 2, %s15
      %p194 = scmp.lt.s32.totalorder %s193, 3
      %s195 = scalar_select %p194, %s193, 3
      %s196 = smul.addr %s195, 8
      %s197 = scalar_lea.vmem %s3, %s196
      %p198 = pneg %p104
      %p199 = pneg %p101
      %p200 = pneg %p130
      %p201 = pneg %p127
      %s202 = smul.u32 2, %s15
      %p203 = scmp.lt.s32.totalorder %s202, 3
      %s204 = scalar_select %p203, %s202, 3
      %s205 = smul.addr %s204, 8
      %s206 = scalar_lea.vmem %s4, %s205
      %s207 = smul.u32 2, %s15
      %p208 = scmp.lt.s32.totalorder %s207, 3
      %s209 = scalar_select %p208, %s207, 3
      %s210 = smul.addr %s209, 4
      %s211 = smul.addr %s210, 8
      %s212 = scalar_lea.vmem %s0, %s211
      %s213 = smul.u32 2, %s15
      %s214 = smul.u32 2, %s15
      %p215 = scmp.lt.s32.totalorder %s214, 3
      %s216 = scalar_select %p215, %s214, 3
      %s217 = smul.addr %s216, 8
      %s218 = scalar_lea.vmem %s3, %s217
      %s219 = smul.u32 2, %s15
      %s220 = smul.u32 2, %s15
      %p221 = scmp.lt.s32.totalorder %s220, 3
      %s222 = scalar_select %p221, %s220, 3
      %s223 = smul.addr %s222, 8
      %s224 = scalar_lea.vmem %s4, %s223
      %s225 = smul.u32 2, %s15
      %v226 = vld [vmem:[%s212] sm:$0xff]
      %v227 = vld [vmem:[%s212 + $0x8] sm:$0xff]
      %v228 = vld [vmem:[%s212 + $0x10] sm:$0xff]
      %v229 = vld [vmem:[%s212 + $0x18] sm:$0xff]
      %v230 = vld [vmem:[%s212 + $0x20] sm:$0xff]
      %v231 = vld [vmem:[%s212 + $0x28] sm:$0xff]
      %v232 = vld [vmem:[%s212 + $0x30] sm:$0xff]
      %v233 = vld [vmem:[%s212 + $0x38] sm:$0xff]
      %v234 = vld [vmem:[%s1] sm:$0xff]
      %v235 = vld [vmem:[%s1 + $0x8] sm:$0xff]
      %v236 = vld [vmem:[%s1 + $0x10] sm:$0xff]
      %v237 = vld [vmem:[%s1 + $0x18] sm:$0xff]
      %v238 = vld [vmem:[%s1 + $0x20] sm:$0xff]
      %v239 = vld [vmem:[%s1 + $0x28] sm:$0xff]
      %v240 = vld [vmem:[%s1 + $0x30] sm:$0xff]
      %v241 = vld [vmem:[%s1 + $0x38] sm:$0xff]
      %v242 = vld [vmem:[%s1 + $0x40] sm:$0xff]
      %v243 = vld [vmem:[%s1 + $0x48] sm:$0xff]
      %v244 = vld [vmem:[%s1 + $0x50] sm:$0xff]
      %v245 = vld [vmem:[%s1 + $0x58] sm:$0xff]
      %v246 = vld [vmem:[%s1 + $0x60] sm:$0xff]
      %v247 = vld [vmem:[%s1 + $0x68] sm:$0xff]
      %v248 = vld [vmem:[%s1 + $0x70] sm:$0xff]
      %v249 = vld [vmem:[%s1 + $0x78] sm:$0xff]
      %v250 = vld [vmem:[%s1 + $0x80] sm:$0xff]
      %v251 = vld [vmem:[%s1 + $0x88] sm:$0xff]
      %v252 = vld [vmem:[%s1 + $0x90] sm:$0xff]
      %v253 = vld [vmem:[%s1 + $0x98] sm:$0xff]
      %v254 = vld [vmem:[%s1 + $0xa0] sm:$0xff]
      %v255 = vld [vmem:[%s1 + $0xa8] sm:$0xff]
      %v256 = vld [vmem:[%s1 + $0xb0] sm:$0xff]
      %v257 = vld [vmem:[%s1 + $0xb8] sm:$0xff]
      %v258 = vld [vmem:[%s1 + $0xc0] sm:$0xff]
      %v259 = vld [vmem:[%s1 + $0xc8] sm:$0xff]
      %v260 = vld [vmem:[%s1 + $0xd0] sm:$0xff]
      %v261 = vld [vmem:[%s1 + $0xd8] sm:$0xff]
      %v262 = vld [vmem:[%s1 + $0xe0] sm:$0xff]
      %v263 = vld [vmem:[%s1 + $0xe8] sm:$0xff]
      %v264 = vld [vmem:[%s1 + $0xf0] sm:$0xff]
      %v265 = vld [vmem:[%s1 + $0xf8] sm:$0xff]
      %v266 = vld [vmem:[%s1 + $0x100] sm:$0xff]
      %v267 = vld [vmem:[%s1 + $0x108] sm:$0xff]
      %v268 = vld [vmem:[%s1 + $0x110] sm:$0xff]
      %v269 = vld [vmem:[%s1 + $0x118] sm:$0xff]
      %v270 = vld [vmem:[%s1 + $0x120] sm:$0xff]
      %v271 = vld [vmem:[%s1 + $0x128] sm:$0xff]
      %v272 = vld [vmem:[%s1 + $0x130] sm:$0xff]
      %v273 = vld [vmem:[%s1 + $0x138] sm:$0xff]
      %v274 = vld [vmem:[%s1 + $0x140] sm:$0xff]
      %v275 = vld [vmem:[%s1 + $0x148] sm:$0xff]
      %v276 = vld [vmem:[%s1 + $0x150] sm:$0xff]
      %v277 = vld [vmem:[%s1 + $0x158] sm:$0xff]
      %v278 = vld [vmem:[%s1 + $0x160] sm:$0xff]
      %v279 = vld [vmem:[%s1 + $0x168] sm:$0xff]
      %v280 = vld [vmem:[%s1 + $0x170] sm:$0xff]
      %v281 = vld [vmem:[%s1 + $0x178] sm:$0xff]
      %v282 = vld [vmem:[%s1 + $0x180] sm:$0xff]
      %v283 = vld [vmem:[%s1 + $0x188] sm:$0xff]
      %v284 = vld [vmem:[%s1 + $0x190] sm:$0xff]
      %v285 = vld [vmem:[%s1 + $0x198] sm:$0xff]
      %v286 = vld [vmem:[%s1 + $0x1a0] sm:$0xff]
      %v287 = vld [vmem:[%s1 + $0x1a8] sm:$0xff]
      %v288 = vld [vmem:[%s1 + $0x1b0] sm:$0xff]
      %v289 = vld [vmem:[%s1 + $0x1b8] sm:$0xff]
      %v290 = vld [vmem:[%s1 + $0x1c0] sm:$0xff]
      %v291 = vld [vmem:[%s1 + $0x1c8] sm:$0xff]
      %v292 = vld [vmem:[%s1 + $0x1d0] sm:$0xff]
      %v293 = vld [vmem:[%s1 + $0x1d8] sm:$0xff]
      %v294 = vld [vmem:[%s1 + $0x1e0] sm:$0xff]
      %v295 = vld [vmem:[%s1 + $0x1e8] sm:$0xff]
      %v296 = vld [vmem:[%s1 + $0x1f0] sm:$0xff]
      %v297 = vld [vmem:[%s1 + $0x1f8] sm:$0xff]
      %v298 = vld [vmem:[%s2] sm:$0x1]
      %v300 = vperm.slane %v298, 0
      %302 = vmatpush.msra.mxu0 %v249
      %303 = vmatpush.msra.mxu0 %v248
      %304 = vmatpush.msra.mxu0 %v247
      %305 = vmatpush.msra.mxu0 %v246
      %306 = vmatpush.msra.mxu0 %v245
      %307 = vmatpush.msra.mxu0 %v244
      %308 = vmatpush.msra.mxu0 %v243
      %309 = vmatpush.msra.mxu0 %v242
      %310 = vmatpush.msra.mxu0 %v241
      %311 = vmatpush.msra.mxu0 %v240
      %312 = vmatpush.msra.mxu0 %v239
      %313 = vmatpush.msra.mxu0 %v238
      %314 = vmatpush.msra.mxu0 %v237
      %315 = vmatpush.msra.mxu0 %v236
      %316 = vmatpush.msra.mxu0 %v235
      %317 = vmatpush.msra.mxu0 %v234
      %318 = vmatmul.f32.gmra.mxu0 %v226
      %v319 = vpop.f32.mrf.mxu0
      %v320 = vadd.f32 %v300, %v319
      %321 = vmatmul.f32.gmra.mxu0 %v230
      %v322 = vpop.f32.mrf.mxu0
      %v323 = vadd.f32 %v300, %v322
      %324 = vdwg.mxu0
      %325 = vmatpush.msra.mxu0 %v265
      %326 = vmatpush.msra.mxu0 %v264
      %327 = vmatpush.msra.mxu0 %v263
      %328 = vmatpush.msra.mxu0 %v262
      %329 = vmatpush.msra.mxu0 %v261
      %330 = vmatpush.msra.mxu0 %v260
      %331 = vmatpush.msra.mxu0 %v259
      %332 = vmatpush.msra.mxu0 %v258
      %333 = vmatpush.msra.mxu0 %v257
      %334 = vmatpush.msra.mxu0 %v256
      %335 = vmatpush.msra.mxu0 %v255
      %336 = vmatpush.msra.mxu0 %v254
      %337 = vmatpush.msra.mxu0 %v253
      %338 = vmatpush.msra.mxu0 %v252
      %339 = vmatpush.msra.mxu0 %v251
      %340 = vmatpush.msra.mxu0 %v250
      %341 = vmatmul.f32.gmra.mxu0 %v227
      %v342 = vpop.f32.mrf.mxu0
      %v343 = vadd.f32 %v320, %v342
      %344 = vmatmul.f32.gmra.mxu0 %v231
      %v345 = vpop.f32.mrf.mxu0
      %v346 = vadd.f32 %v323, %v345
      %347 = vdwg.mxu0
      %348 = vmatpush.msra.mxu0 %v281
      %349 = vmatpush.msra.mxu0 %v280
      %350 = vmatpush.msra.mxu0 %v279
      %351 = vmatpush.msra.mxu0 %v278
      %352 = vmatpush.msra.mxu0 %v277
      %353 = vmatpush.msra.mxu0 %v276
      %354 = vmatpush.msra.mxu0 %v275
      %355 = vmatpush.msra.mxu0 %v274
      %356 = vmatpush.msra.mxu0 %v273
      %357 = vmatpush.msra.mxu0 %v272
      %358 = vmatpush.msra.mxu0 %v271
      %359 = vmatpush.msra.mxu0 %v270
      %360 = vmatpush.msra.mxu0 %v269
      %361 = vmatpush.msra.mxu0 %v268
      %362 = vmatpush.msra.mxu0 %v267
      %363 = vmatpush.msra.mxu0 %v266
      %364 = vmatmul.f32.gmra.mxu0 %v228
      %v365 = vpop.f32.mrf.mxu0
      %v366 = vadd.f32 %v343, %v365
      %367 = vmatmul.f32.gmra.mxu0 %v232
      %v368 = vpop.f32.mrf.mxu0
      %v369 = vadd.f32 %v346, %v368
      %370 = vdwg.mxu0
      %371 = vmatpush.msra.mxu0 %v297
      %372 = vmatpush.msra.mxu0 %v296
      %373 = vmatpush.msra.mxu0 %v295
      %374 = vmatpush.msra.mxu0 %v294
      %375 = vmatpush.msra.mxu0 %v293
      %376 = vmatpush.msra.mxu0 %v292
      %377 = vmatpush.msra.mxu0 %v291
      %378 = vmatpush.msra.mxu0 %v290
      %379 = vmatpush.msra.mxu0 %v289
      %380 = vmatpush.msra.mxu0 %v288
      %381 = vmatpush.msra.mxu0 %v287
      %382 = vmatpush.msra.mxu0 %v286
      %383 = vmatpush.msra.mxu0 %v285
      %384 = vmatpush.msra.mxu0 %v284
      %385 = vmatpush.msra.mxu0 %v283
      %386 = vmatpush.msra.mxu0 %v282
      %387 = vmatmul.f32.gmra.mxu0 %v229
      %v388 = vpop.f32.mrf.mxu0
      %v389 = vadd.f32 %v366, %v388
      %390 = vmatmul.f32.gmra.mxu0 %v233
      %v391 = vpop.f32.mrf.mxu0
      %v392 = vadd.f32 %v369, %v391
      %393 = vdwg.mxu0
      %v394 = vld [vmem:[%s218] sm:$0xff]
      %v395 = vld [vmem:[%s218 + $0x8] sm:$0xff]
      %v396 = vadd.f32 %v389, %v394
      %v397 = vadd.f32 %v392, %v395
      %398 = vst [vmem:[%s224] sm:$0xff] %v396
      %399 = vst [vmem:[%s224 + $0x8] sm:$0xff] %v397
      %s400 = smul.u32 2, %s15
      %p401 = scmp.lt.s32.totalorder %s400, 3
      %s402 = scalar_select %p401, %s400, 3
      %s403 = smul.addr %s402, 8
      %s404 = scalar_lea.vmem %s4, %s403
      // Predicated region
      $region37: #{image_encoder_forward.26} parent=35 // pred_check
        %p405 = pneg %p127
      $region38: #{image_encoder_forward.26} parent=35 // pred_check_branch
        %407 = sbr.rel (%p405) target = $region40
      $region39: #{image_encoder_forward.26} parent=35 // pred_region
        %s408 = smul.u32 2, %s15
      $region40: #{image_encoder_forward.26} parent=35 // pred_fallthru
        _
    $region36: #{image_encoder_forward.26} parent=5 // pred_fallthru
      _
    %p409 = scmp.le.s32.totalorder 2, %s10
    // Predicated region
    $region41: #{image_encoder_forward.26} parent=5 // pred_check
      %p410 = pneg %p409
    $region42: #{image_encoder_forward.26} parent=5 // pred_check_branch
      %412 = sbr.rel (%p410) target = $region44
    $region43: #{image_encoder_forward.26} parent=5 // pred_region
      %s413 = ssub.s32 %s10, 2
      // Predicated region
      $region45: #{image_encoder_forward.26} parent=43 // pred_check
        %p414 = pneg %p133
      $region46: #{image_encoder_forward.26} parent=43 // pred_check_branch
        %416 = sbr.rel (%p414) target = $region48
      $region47: #{image_encoder_forward.26} parent=43 // pred_region
        %s417 = smul.u32 2, %s16
        %p418 = scmp.lt.s32.totalorder %s417, 3
        %s419 = scalar_select %p418, %s417, 3
        %s420 = smul.addr %s419, 8
        %s421 = scalar_lea.vmem %s4, %s420
      $region48: #{image_encoder_forward.26} parent=43 // pred_fallthru
        _
    $region44: #{image_encoder_forward.26} parent=5 // pred_fallthru
      _
  $region6: #{image_encoder_forward.26} parent=0 // loop_footer
    %s14 = sadd.s32 1, %s10
  $region7: #{image_encoder_forward.26} parent=0 // loop_footer_branch
    %9 = sbr.rel target = $region3
  $region8: #{image_encoder_forward.26} parent=0 // loop_exit
    _

// kernel: image_encoder_forward.22
$region0: #{image_encoder_forward.22}
  #allocation0 [shape = 'u32[]', space=smem, size = 0x4, offset = 0x4, fixed_abs, tag = 'smem constant byte address 0x4 - core index']
  #allocation1 [shape = 'u32[72,128]{1,0:T(1,128)}', space=vmem, size = 0x9000, scoped, tag = 'internal scratch']
  #allocation2 [shape = 'f32[4,4,1]{2,1,0:T(4,128)}', space=vmem, size = 0x2000, scoped, tag = 'scratch operand']
  #allocation3 [shape = 'f32[4,4,1]{2,1,0:T(4,128)}', space=vmem, size = 0x2000, scoped, tag = 'scratch operand']
  #allocation4 [shape = 'f32[4,4,32]{2,1,0:T(4,128)}', space=vmem, size = 0x2000, scoped, tag = 'scratch operand']
  %s0 = inlined_call_operand.vmem [shape: f32[8,4,384], index: 0, kind: input, shape index: {}, may-alias: {0,1,2}]
  %s1 = inlined_call_operand.vmem [shape: f32[8,4,384], index: 1, kind: input, shape index: {}, may-alias: {0,1,2}]
  %s2 = inlined_call_operand.vmem [shape: f32[8,4,384], index: 2, kind: input, shape index: {}, may-alias: {0,1,2}]
  %s3 = inlined_call_operand.vmem [shape: f32[8,4,128], index: 3, kind: output, shape index: {}]
  %s4 = sld [smem:[#allocation0]]
  $region53: #{image_encoder_forward.22} parent=0
    _
  %s6 = ssub.s32 1, %s4
  %s7 = scalar_select 0, %s6, %s4
  loop: start=0, step=1, limit=10
  $region2: #{image_encoder_forward.22} parent=0 // loop_pre_header
    _
  $region3: #{image_encoder_forward.22} parent=0 // loop_header
    %s9 = sphi 0, %s13
    %p10 = scmp.ge.s32.totalorder %s9, 10
    %s16 = sphi 0, %s42
    %s17 = sphi 0, %s38
    %s18 = sphi 0, %s34
    %s19 = sphi 0, %s30
    %s20 = sphi 0, %s16
    %s21 = sphi 0, %s17
    %s22 = sphi 0, %s18
    %s23 = sphi 0, %s19
    %s24 = sphi 0, %s20
    %s25 = sphi 0, %s21
    %s26 = sphi 0, %s22
    %s27 = sphi 0, %s23
    %s49 = sphi 0, %s51
    %s52 = sphi 0, %s49
    %s53 = sphi 0, %s52
    %s69 = sphi 0, %s53
    %s81 = sphi 0, %s83
    %s84 = sphi 0, %s81
    %s85 = sphi 0, %s84
    %s101 = sphi 0, %s85
    %s113 = sphi 0, %s115
    %s116 = sphi 0, %s113
    %s117 = sphi 0, %s116
    %s133 = sphi 0, %s117
    %s143 = sphi 0, %s145
    %s146 = sphi 0, %s143
    %s147 = sphi 0, %s146
    %s163 = sphi 0, %s147
  $region4: #{image_encoder_forward.22} parent=0 // loop_header_branch
    %12 = sbr.rel (%p10) target = $region8
  $region5: #{image_encoder_forward.22} parent=0 // loop_body
    %s14 = ssub.s32 %s9, 1
    %s15 = ssub.s32 %s9, 2
    %s28 = sadd.s32 1, %s19
    %p29 = scmp.ge.s32.totalorder %s28, 1
    %s30 = scalar_select %p29, 0, %s28
    %s31 = sadd.s32 1, %s18
    %s32 = scalar_select %p29, %s31, %s18
    %p33 = scmp.ge.s32.totalorder %s32, 1
    %s34 = scalar_select %p33, 0, %s32
    %s35 = sadd.s32 1, %s17
    %s36 = scalar_select %p33, %s35, %s17
    %p37 = scmp.ge.s32.totalorder %s36, 1
    %s38 = scalar_select %p37, 0, %s36
    %s39 = sadd.s32 1, %s16
    %s40 = scalar_select %p37, %s39, %s16
    %p41 = scmp.ge.s32.totalorder %s40, 8
    %s42 = scalar_select %p41, 0, %s40
    %s43 = ssub.s32 %s16, %s42
    %s44 = ssub.s32 %s18, %s34
    %s45 = sor.u32 %s43, %s44
    %s46 = ssub.s32 %s17, %s38
    %s47 = sor.u32 %s45, %s46
    %p48 = scmp.eq.s32.totalorder %s47, 0
    %s50 = sadd.s32 %s49, 1
    %s51 = scalar_select %p48, %s49, %s50
    %p54 = pneg %p48
    %p55 = scmp.eq.s32.totalorder %s9, 7
    %p56 = por %p54, %p55
    %p57 = scmp.ne.s32.totalorder %s49, %s52
    %p58 = scmp.eq.s32.totalorder %s9, 0
    %p59 = por %p57, %p58
    %p60 = scmp.ne.s32.totalorder %s49, %s52
    %p61 = scmp.eq.s32.totalorder %s14, 7
    %p62 = por %p60, %p61
    %p63 = scmp.ne.s32.totalorder %s52, %s53
    %p64 = scmp.eq.s32.totalorder %s14, 0
    %p65 = por %p63, %p64
    %p66 = scmp.ne.s32.totalorder %s52, %s53
    %p67 = scmp.eq.s32.totalorder %s15, 7
    %p68 = por %p66, %p67
    %p70 = scmp.ne.s32.totalorder %s53, %s69
    %p71 = scmp.eq.s32.totalorder %s15, 0
    %p72 = por %p70, %p71
    %s73 = sadd.s32 %s17, 1
    %s74 = sadd.s32 %s38, 1
    %s75 = ssub.s32 %s16, %s42
    %s76 = ssub.s32 %s19, %s30
    %s77 = sor.u32 %s75, %s76
    %s78 = ssub.s32 %s73, %s74
    %s79 = sor.u32 %s77, %s78
    %p80 = scmp.eq.s32.totalorder %s79, 0
    %s82 = sadd.s32 %s81, 1
    %s83 = scalar_select %p80, %s81, %s82
    %p86 = pneg %p80
    %p87 = scmp.eq.s32.totalorder %s9, 7
    %p88 = por %p86, %p87
    %p89 = scmp.ne.s32.totalorder %s81, %s84
    %p90 = scmp.eq.s32.totalorder %s9, 0
    %p91 = por %p89, %p90
    %p92 = scmp.ne.s32.totalorder %s81, %s84
    %p93 = scmp.eq.s32.totalorder %s14, 7
    %p94 = por %p92, %p93
    %p95 = scmp.ne.s32.totalorder %s84, %s85
    %p96 = scmp.eq.s32.totalorder %s14, 0
    %p97 = por %p95, %p96
    %p98 = scmp.ne.s32.totalorder %s84, %s85
    %p99 = scmp.eq.s32.totalorder %s15, 7
    %p100 = por %p98, %p99
    %p102 = scmp.ne.s32.totalorder %s85, %s101
    %p103 = scmp.eq.s32.totalorder %s15, 0
    %p104 = por %p102, %p103
    %s105 = sadd.s32 %s17, 2
    %s106 = sadd.s32 %s38, 2
    %s107 = ssub.s32 %s16, %s42
    %s108 = ssub.s32 %s19, %s30
    %s109 = sor.u32 %s107, %s108
    %s110 = ssub.s32 %s105, %s106
    %s111 = sor.u32 %s109, %s110
    %p112 = scmp.eq.s32.totalorder %s111, 0
    %s114 = sadd.s32 %s113, 1
    %s115 = scalar_select %p112, %s113, %s114
    %p118 = pneg %p112
    %p119 = scmp.eq.s32.totalorder %s9, 7
    %p120 = por %p118, %p119
    %p121 = scmp.ne.s32.totalorder %s113, %s116
    %p122 = scmp.eq.s32.totalorder %s9, 0
    %p123 = por %p121, %p122
    %p124 = scmp.ne.s32.totalorder %s113, %s116
    %p125 = scmp.eq.s32.totalorder %s14, 7
    %p126 = por %p124, %p125
    %p127 = scmp.ne.s32.totalorder %s116, %s117
    %p128 = scmp.eq.s32.totalorder %s14, 0
    %p129 = por %p127, %p128
    %p130 = scmp.ne.s32.totalorder %s116, %s117
    %p131 = scmp.eq.s32.totalorder %s15, 7
    %p132 = por %p130, %p131
    %p134 = scmp.ne.s32.totalorder %s117, %s133
    %p135 = scmp.eq.s32.totalorder %s15, 0
    %p136 = por %p134, %p135
    %s137 = ssub.s32 %s16, %s42
    %s138 = ssub.s32 %s18, %s34
    %s139 = sor.u32 %s137, %s138
    %s140 = ssub.s32 %s17, %s38
    %s141 = sor.u32 %s139, %s140
    %p142 = scmp.eq.s32.totalorder %s141, 0
    %s144 = sadd.s32 %s143, 1
    %s145 = scalar_select %p142, %s143, %s144
    %p148 = pneg %p142
    %p149 = scmp.eq.s32.totalorder %s9, 7
    %p150 = por %p148, %p149
    %p151 = scmp.ne.s32.totalorder %s143, %s146
    %p152 = scmp.eq.s32.totalorder %s9, 0
    %p153 = por %p151, %p152
    %p154 = scmp.ne.s32.totalorder %s143, %s146
    %p155 = scmp.eq.s32.totalorder %s14, 7
    %p156 = por %p154, %p155
    %p157 = scmp.ne.s32.totalorder %s146, %s147
    %p158 = scmp.eq.s32.totalorder %s14, 0
    %p159 = por %p157, %p158
    %p160 = scmp.ne.s32.totalorder %s146, %s147
    %p161 = scmp.eq.s32.totalorder %s15, 7
    %p162 = por %p160, %p161
    %p164 = scmp.ne.s32.totalorder %s147, %s163
    %p165 = scmp.eq.s32.totalorder %s15, 0
    %p166 = por %p164, %p165
    %p167 = scmp.le.s32.totalorder 1, %s9
    %p168 = scmp.lt.s32.totalorder %s9, 9
    %p169 = pnand %p167, %p168
    %p170 = pneg %p169
    // Predicated region
    $region9: #{image_encoder_forward.22} parent=5 // pred_check
      _
    $region10: #{image_encoder_forward.22} parent=5 // pred_check_branch
      %172 = sbr.rel (%p169) target = $region12
    $region11: #{image_encoder_forward.22} parent=5 // pred_region
      %s173 = ssub.s32 %s9, 1
    $region12: #{image_encoder_forward.22} parent=5 // pred_fallthru
      _
    %p174 = scmp.lt.s32.totalorder %s9, 8
    // Predicated region
    $region13: #{image_encoder_forward.22} parent=5 // pred_check
      %p175 = pneg %p174
    $region14: #{image_encoder_forward.22} parent=5 // pred_check_branch
      %177 = sbr.rel (%p175) target = $region16
    $region15: #{image_encoder_forward.22} parent=5 // pred_region
      // Predicated region
      $region17: #{image_encoder_forward.22} parent=15 // pred_check
        %p178 = pneg %p59
      $region18: #{image_encoder_forward.22} parent=15 // pred_check_branch
        %180 = sbr.rel (%p178) target = $region20
      $region19: #{image_encoder_forward.22} parent=15 // pred_region
        %p181 = scmp.lt.s32.totalorder %s16, 7
        %s182 = scalar_select %p181, %s16, 7
        %p183 = scmp.lt.s32.totalorder %s18, 0
        %s184 = scalar_select %p183, %s18, 0
        %p185 = scmp.lt.s32.totalorder %s17, 2
        %s186 = scalar_select %p185, %s17, 2
        %s187 = smul.addr %s184, 3
        %s188 = sadd.s32 %s186, %s187
        %s189 = smul.addr %s182, 3
        %s190 = sadd.s32 %s188, %s189
        %s191 = smul.addr %s190, 4
        %s192 = scalar_lea.vmem %s0, %s191
      $region20: #{image_encoder_forward.22} parent=15 // pred_fallthru
        _
      // Predicated region
      $region21: #{image_encoder_forward.22} parent=15 // pred_check
        %p193 = pneg %p91
      $region22: #{image_encoder_forward.22} parent=15 // pred_check_branch
        %195 = sbr.rel (%p193) target = $region24
      $region23: #{image_encoder_forward.22} parent=15 // pred_region
        %s196 = sadd.s32 %s17, 1
        %p197 = scmp.lt.s32.totalorder %s16, 7
        %s198 = scalar_select %p197, %s16, 7
        %p199 = scmp.lt.s32.totalorder %s19, 0
        %s200 = scalar_select %p199, %s19, 0
        %p201 = scmp.lt.s32.totalorder %s196, 2
        %s202 = scalar_select %p201, %s196, 2
        %s203 = smul.addr %s200, 3
        %s204 = sadd.s32 %s202, %s203
        %s205 = smul.addr %s198, 3
        %s206 = sadd.s32 %s204, %s205
        %s207 = smul.addr %s206, 4
        %s208 = scalar_lea.vmem %s1, %s207
        %s209 = sadd.s32 %s17, 1
      $region24: #{image_encoder_forward.22} parent=15 // pred_fallthru
        _
      // Predicated region
      $region25: #{image_encoder_forward.22} parent=15 // pred_check
        %p210 = pneg %p123
      $region26: #{image_encoder_forward.22} parent=15 // pred_check_branch
        %212 = sbr.rel (%p210) target = $region28
      $region27: #{image_encoder_forward.22} parent=15 // pred_region
        %s213 = sadd.s32 %s17, 2
        %p214 = scmp.lt.s32.totalorder %s16, 7
        %s215 = scalar_select %p214, %s16, 7
        %p216 = scmp.lt.s32.totalorder %s19, 0
        %s217 = scalar_select %p216, %s19, 0
        %p218 = scmp.lt.s32.totalorder %s213, 2
        %s219 = scalar_select %p218, %s213, 2
        %s220 = smul.addr %s217, 3
        %s221 = sadd.s32 %s219, %s220
        %s222 = smul.addr %s215, 3
        %s223 = sadd.s32 %s221, %s222
        %s224 = smul.addr %s223, 4
        %s225 = scalar_lea.vmem %s2, %s224
        %s226 = sadd.s32 %s17, 2
      $region28: #{image_encoder_forward.22} parent=15 // pred_fallthru
        _
    $region16: #{image_encoder_forward.22} parent=5 // pred_fallthru
      _
    %p227 = scmp.le.s32.totalorder 1, %s9
    %p228 = scmp.lt.s32.totalorder %s9, 9
    %p229 = pnand %p227, %p228
    %p230 = pneg %p229
    // Predicated region
    $region29: #{image_encoder_forward.22} parent=5 // pred_check
      _
    $region30: #{image_encoder_forward.22} parent=5 // pred_check_branch
      %232 = sbr.rel (%p229) target = $region32
    $region31: #{image_encoder_forward.22} parent=5 // pred_region
      %s233 = ssub.s32 %s9, 1
      %p234 = scmp.lt.s32.totalorder %s20, 7
      %s235 = scalar_select %p234, %s20, 7
      %p236 = scmp.lt.s32.totalorder %s22, 0
      %s237 = scalar_select %p236, %s22, 0
      %p238 = scmp.lt.s32.totalorder %s21, 2
      %s239 = scalar_select %p238, %s21, 2
      %s240 = smul.addr %s237, 3
      %s241 = sadd.s32 %s239, %s240
      %s242 = smul.addr %s235, 3
      %s243 = sadd.s32 %s241, %s242
      %s244 = smul.addr %s243, 4
      %s245 = scalar_lea.vmem %s0, %s244
      %p246 = pneg %p65
      %p247 = pneg %p62
      %s248 = sadd.s32 %s21, 1
      %p249 = scmp.lt.s32.totalorder %s20, 7
      %s250 = scalar_select %p249, %s20, 7
      %p251 = scmp.lt.s32.totalorder %s23, 0
      %s252 = scalar_select %p251, %s23, 0
      %p253 = scmp.lt.s32.totalorder %s248, 2
      %s254 = scalar_select %p253, %s248, 2
      %s255 = smul.addr %s252, 3
      %s256 = sadd.s32 %s254, %s255
      %s257 = smul.addr %s250, 3
      %s258 = sadd.s32 %s256, %s257
      %s259 = smul.addr %s258, 4
      %s260 = scalar_lea.vmem %s1, %s259
      %p261 = pneg %p97
      %p262 = pneg %p94
      %s263 = sadd.s32 %s21, 2
      %p264 = scmp.lt.s32.totalorder %s20, 7
      %s265 = scalar_select %p264, %s20, 7
      %p266 = scmp.lt.s32.totalorder %s23, 0
      %s267 = scalar_select %p266, %s23, 0
      %p268 = scmp.lt.s32.totalorder %s263, 2
      %s269 = scalar_select %p268, %s263, 2
      %s270 = smul.addr %s267, 3
      %s271 = sadd.s32 %s269, %s270
      %s272 = smul.addr %s265, 3
      %s273 = sadd.s32 %s271, %s272
      %s274 = smul.addr %s273, 4
      %s275 = scalar_lea.vmem %s2, %s274
      %p276 = pneg %p129
      %p277 = pneg %p126
      %p278 = pneg %p159
      %p279 = pneg %p156
      %p280 = scmp.lt.s32.totalorder %s20, 7
      %s281 = scalar_select %p280, %s20, 7
      %p282 = scmp.lt.s32.totalorder %s22, 0
      %s283 = scalar_select %p282, %s22, 0
      %p284 = scmp.lt.s32.totalorder %s21, 0
      %s285 = scalar_select %p284, %s21, 0
      %s286 = sadd.s32 %s285, %s283
      %s287 = sadd.s32 %s286, %s281
      %s288 = smul.addr %s287, 4
      %s289 = scalar_lea.vmem %s3, %s288
      %p290 = scmp.lt.s32.totalorder %s20, 7
      %s291 = scalar_select %p290, %s20, 7
      %p292 = scmp.lt.s32.totalorder %s22, 0
      %s293 = scalar_select %p292, %s22, 0
      %p294 = scmp.lt.s32.totalorder %s21, 2
      %s295 = scalar_select %p294, %s21, 2
      %s296 = smul.addr %s293, 3
      %s297 = sadd.s32 %s295, %s296
      %s298 = smul.addr %s291, 3
      %s299 = sadd.s32 %s297, %s298
      %s300 = smul.addr %s299, 4
      %s301 = scalar_lea.vmem %s0, %s300
      %s302 = sadd.s32 %s21, 1
      %p303 = scmp.lt.s32.totalorder %s20, 7
      %s304 = scalar_select %p303, %s20, 7
      %p305 = scmp.lt.s32.totalorder %s23, 0
      %s306 = scalar_select %p305, %s23, 0
      %p307 = scmp.lt.s32.totalorder %s302, 2
      %s308 = scalar_select %p307, %s302, 2
      %s309 = smul.addr %s306, 3
      %s310 = sadd.s32 %s308, %s309
      %s311 = smul.addr %s304, 3
      %s312 = sadd.s32 %s310, %s311
      %s313 = smul.addr %s312, 4
      %s314 = scalar_lea.vmem %s1, %s313
      %s315 = sadd.s32 %s21, 1
      %s316 = sadd.s32 %s21, 2
      %p317 = scmp.lt.s32.totalorder %s20, 7
      %s318 = scalar_select %p317, %s20, 7
      %p319 = scmp.lt.s32.totalorder %s23, 0
      %s320 = scalar_select %p319, %s23, 0
      %p321 = scmp.lt.s32.totalorder %s316, 2
      %s322 = scalar_select %p321, %s316, 2
      %s323 = smul.addr %s320, 3
      %s324 = sadd.s32 %s322, %s323
      %s325 = smul.addr %s318, 3
      %s326 = sadd.s32 %s324, %s325
      %s327 = smul.addr %s326, 4
      %s328 = scalar_lea.vmem %s2, %s327
      %s329 = sadd.s32 %s21, 2
      %p330 = scmp.lt.s32.totalorder %s20, 7
      %s331 = scalar_select %p330, %s20, 7
      %p332 = scmp.lt.s32.totalorder %s22, 0
      %s333 = scalar_select %p332, %s22, 0
      %p334 = scmp.lt.s32.totalorder %s21, 0
      %s335 = scalar_select %p334, %s21, 0
      %s336 = sadd.s32 %s335, %s333
      %s337 = sadd.s32 %s336, %s331
      %s338 = smul.addr %s337, 4
      %s339 = scalar_lea.vmem %s3, %s338
      %p340 = scmp.eq.s32.totalorder %s23, 0
      // Predicated region
      $region33: #{image_encoder_forward.22} parent=31 // pred_check
        %p341 = pneg %p340
      $region34: #{image_encoder_forward.22} parent=31 // pred_check_branch
        %343 = sbr.rel (%p341) target = $region36
      $region35: #{image_encoder_forward.22} parent=31 // pred_region
        %vm344 = vcmask 3072
        %345 = vst.msk [vmem:[#allocation2] sm:$0xf] %vm344, -inf
        %346 = vst.msk [vmem:[#allocation2 + $0x4] sm:$0xf] %vm344, -inf
        %347 = vst.msk [vmem:[#allocation2 + $0x8] sm:$0xf] %vm344, -inf
        %348 = vst.msk [vmem:[#allocation2 + $0xc] sm:$0xf] %vm344, -inf
        %349 = vst.msk [vmem:[#allocation3] sm:$0xf] %vm344, 0.0
        %350 = vst.msk [vmem:[#allocation3 + $0x4] sm:$0xf] %vm344, 0.0
        %351 = vst.msk [vmem:[#allocation3 + $0x8] sm:$0xf] %vm344, 0.0
        %352 = vst.msk [vmem:[#allocation3 + $0xc] sm:$0xf] %vm344, 0.0
        %vm353 = vcmask 257024
        %354 = vst.msk [vmem:[#allocation4] sm:$0xf] %vm353, 0.0
        %355 = vst.msk [vmem:[#allocation4 + $0x4] sm:$0xf] %vm353, 0.0
        %356 = vst.msk [vmem:[#allocation4 + $0x8] sm:$0xf] %vm353, 0.0
        %357 = vst.msk [vmem:[#allocation4 + $0xc] sm:$0xf] %vm353, 0.0
      $region36: #{image_encoder_forward.22} parent=31 // pred_fallthru
        _
      %v358 = vld [vmem:[%s301] sm:$0xf]
      %v359 = vld [vmem:[%s314] sm:$0xf]
      %v360 = vld [vmem:[%s328] sm:$0xf]
      %v361 = vmul.f32 %v358, 0.17677669
      %vm362 = vcmask 261120
      %v364 = vsel %vm362, %v361, 0
      %v367 = vsel %vm362, %v359, 0
      %369 = vmatpush.xpose.msra.mxu0 0.0
      %370 = vmatpush.xpose.msra.mxu0 0.0
      %371 = vmatpush.xpose.msra.mxu0 0.0
      %372 = vmatpush.xpose.msra.mxu0 0.0
      %373 = vmatpush.xpose.msra.mxu0 0.0
      %374 = vmatpush.xpose.msra.mxu0 0.0
      %375 = vmatpush.xpose.msra.mxu0 0.0
      %376 = vmatpush.xpose.msra.mxu0 0.0
      %377 = vmatpush.xpose.msra.mxu0 0.0
      %378 = vmatpush.xpose.msra.mxu0 0.0
      %379 = vmatpush.xpose.msra.mxu0 0.0
      %380 = vmatpush.xpose.msra.mxu0 0.0
      %381 = vmatpush.xpose.msra.mxu0 0.0
      %382 = vmatpush.xpose.msra.mxu0 0.0
      %383 = vmatpush.xpose.msra.mxu0 0.0
      %384 = vmatpush.xpose.msra.mxu0 %v367
      %385 = vmatmul.f32.gmra.mxu0 %v364
      %v386 = vpop.f32.mrf.mxu0
      %v387 = vadd.f32 0.0, %v386
      %388 = vdwg.mxu0
      %v389 = vld [vmem:[#allocation2] sm:$0xf]
      %vm390 = vcmask 27648
      %v391 = vsel %vm390, %v387, -inf
      %392 = vmax.xlane.f32.xlu0 %v391
      %v393 = vpop.xlane.xlu0 %392
      %v394 = vmax.f32 %v389, %v393
      %v395 = vsub.f32 %v389, %v394
      %v396 = vmul.f32 %v395, 1.442695
      %v397 = vpow.pop %v396
      %399 = vset.pattern.permute.xlu0 0
      %400 = vperm.xlu0 %399, %v394
      %v401 = vpop.permute.xlu0 %400
      %v403 = vsub.f32 %v387, %v401
      %v404 = vmul.f32 %v403, 1.442695
      %v405 = vpow.pop %v404
      %v406 = vld [vmem:[#allocation3] sm:$0xf]
      %v407 = vmul.f32 %v397, %v406
      %v408 = vsel %vm390, %v405, 0.0
      %409 = vadd.xlane.f32.xlu0 %v408
      %v410 = vpop.xlane.xlu0 %409
      %v411 = vadd.f32 %v407, %v410
      %vm412 = vcmask 3072
      %413 = vst.msk [vmem:[#allocation3] sm:$0xf] %vm412, %v411
      %v414 = vld [vmem:[#allocation4] sm:$0xf]
      %416 = vset.pattern.permute.xlu0 0
      %417 = vperm.xlu0 %416, %v397
      %v418 = vpop.permute.xlu0 %417
      %v420 = vmul.f32 %v418, %v414
      %vm421 = vcmask 31744
      %v423 = vsel %vm421, %v405, 0
      %vm425 = vcmask 1043456
      %v427 = vsel %vm425, %v360, 0
      %429 = vmatpush.msra.mxu0 0.0
      %430 = vmatpush.msra.mxu0 0.0
      %431 = vmatpush.msra.mxu0 0.0
      %432 = vmatpush.msra.mxu0 0.0
      %433 = vmatpush.msra.mxu0 0.0
      %434 = vmatpush.msra.mxu0 0.0
      %435 = vmatpush.msra.mxu0 0.0
      %436 = vmatpush.msra.mxu0 0.0
      %437 = vmatpush.msra.mxu0 0.0
      %438 = vmatpush.msra.mxu0 0.0
      %439 = vmatpush.msra.mxu0 0.0
      %440 = vmatpush.msra.mxu0 0.0
      %441 = vmatpush.msra.mxu0 0.0
      %442 = vmatpush.msra.mxu0 0.0
      %443 = vmatpush.msra.mxu0 0.0
      %444 = vmatpush.msra.mxu0 %v427
      %445 = vmatmul.f32.gmra.mxu0 %v423
      %v446 = vpop.f32.mrf.mxu0
      %v447 = vadd.f32 0.0, %v446
      %448 = vdwg.mxu0
      %v449 = vadd.f32 %v420, %v447
      %vm450 = vcmask 257024
      %451 = vst.msk [vmem:[#allocation4] sm:$0xf] %vm450, %v449
      %452 = vst.msk [vmem:[#allocation2] sm:$0xf] %vm412, %v394
      %453 = vrot.lane.b32.xlu0 %v361, 96
      %v454 = vpop.permute.xlu0 %453
      %455 = vrot.lane.b32.xlu0 %v359, 96
      %v456 = vpop.permute.xlu0 %455
      %v457 = vsel %vm362, %v454, 0
      %v459 = vsel %vm362, %v456, 0
      %461 = vmatpush.xpose.msra.mxu0 0.0
      %462 = vmatpush.xpose.msra.mxu0 0.0
      %463 = vmatpush.xpose.msra.mxu0 0.0
      %464 = vmatpush.xpose.msra.mxu0 0.0
      %465 = vmatpush.xpose.msra.mxu0 0.0
      %466 = vmatpush.xpose.msra.mxu0 0.0
      %467 = vmatpush.xpose.msra.mxu0 0.0
      %468 = vmatpush.xpose.msra.mxu0 0.0
      %469 = vmatpush.xpose.msra.mxu0 0.0
      %470 = vmatpush.xpose.msra.mxu0 0.0
      %471 = vmatpush.xpose.msra.mxu0 0.0
      %472 = vmatpush.xpose.msra.mxu0 0.0
      %473 = vmatpush.xpose.msra.mxu0 0.0
      %474 = vmatpush.xpose.msra.mxu0 0.0
      %475 = vmatpush.xpose.msra.mxu0 0.0
      %476 = vmatpush.xpose.msra.mxu0 %v459
      %477 = vmatmul.f32.gmra.mxu0 %v457
      %v478 = vpop.f32.mrf.mxu0
      %v479 = vadd.f32 0.0, %v478
      %480 = vdwg.mxu0
      %s481 = scalar_lea.vmem [#allocation2], 4
      %v482 = vld [vmem:[%s481] sm:$0xf]
      %v483 = vsel %vm390, %v479, -inf
      %484 = vmax.xlane.f32.xlu0 %v483
      %v485 = vpop.xlane.xlu0 %484
      %v486 = vmax.f32 %v482, %v485
      %v487 = vsub.f32 %v482, %v486
      %v488 = vmul.f32 %v487, 1.442695
      %v489 = vpow.pop %v488
      %491 = vset.pattern.permute.xlu0 0
      %492 = vperm.xlu0 %491, %v486
      %v493 = vpop.permute.xlu0 %492
      %v495 = vsub.f32 %v479, %v493
      %v496 = vmul.f32 %v495, 1.442695
      %v497 = vpow.pop %v496
      %s498 = scalar_lea.vmem [#allocation3], 4
      %v499 = vld [vmem:[%s498] sm:$0xf]
      %v500 = vmul.f32 %v489, %v499
      %v501 = vsel %vm390, %v497, 0.0
      %502 = vadd.xlane.f32.xlu0 %v501
      %v503 = vpop.xlane.xlu0 %502
      %v504 = vadd.f32 %v500, %v503
      %505 = vst.msk [vmem:[%s498] sm:$0xf] %vm412, %v504
      %s506 = scalar_lea.vmem [#allocation4], 4
      %v507 = vld [vmem:[%s506] sm:$0xf]
      %509 = vset.pattern.permute.xlu0 0
      %510 = vperm.xlu0 %509, %v489
      %v511 = vpop.permute.xlu0 %510
      %v513 = vmul.f32 %v511, %v507
      %514 = vrot.lane.b32.xlu0 %v360, 96
      %v515 = vpop.permute.xlu0 %514
      %v517 = vsel %vm421, %v497, 0
      %v519 = vsel %vm425, %v515, 0
      %521 = vmatpush.msra.mxu0 0.0
      %522 = vmatpush.msra.mxu0 0.0
      %523 = vmatpush.msra.mxu0 0.0
      %524 = vmatpush.msra.mxu0 0.0
      %525 = vmatpush.msra.mxu0 0.0
      %526 = vmatpush.msra.mxu0 0.0
      %527 = vmatpush.msra.mxu0 0.0
      %528 = vmatpush.msra.mxu0 0.0
      %529 = vmatpush.msra.mxu0 0.0
      %530 = vmatpush.msra.mxu0 0.0
      %531 = vmatpush.msra.mxu0 0.0
      %532 = vmatpush.msra.mxu0 0.0
      %533 = vmatpush.msra.mxu0 0.0
      %534 = vmatpush.msra.mxu0 0.0
      %535 = vmatpush.msra.mxu0 0.0
      %536 = vmatpush.msra.mxu0 %v519
      %537 = vmatmul.f32.gmra.mxu0 %v517
      %v538 = vpop.f32.mrf.mxu0
      %v539 = vadd.f32 0.0, %v538
      %540 = vdwg.mxu0
      %v541 = vadd.f32 %v513, %v539
      %542 = vst.msk [vmem:[%s506] sm:$0xf] %vm450, %v541
      %543 = vst.msk [vmem:[%s481] sm:$0xf] %vm412, %v486
      %544 = vrot.lane.b32.xlu0 %v361, 64
      %v545 = vpop.permute.xlu0 %544
      %546 = vrot.lane.b32.xlu0 %v359, 64
      %v547 = vpop.permute.xlu0 %546
      %v548 = vsel %vm362, %v545, 0
      %v550 = vsel %vm362, %v547, 0
      %552 = vmatpush.xpose.msra.mxu0 0.0
      %553 = vmatpush.xpose.msra.mxu0 0.0
      %554 = vmatpush.xpose.msra.mxu0 0.0
      %555 = vmatpush.xpose.msra.mxu0 0.0
      %556 = vmatpush.xpose.msra.mxu0 0.0
      %557 = vmatpush.xpose.msra.mxu0 0.0
      %558 = vmatpush.xpose.msra.mxu0 0.0
      %559 = vmatpush.xpose.msra.mxu0 0.0
      %560 = vmatpush.xpose.msra.mxu0 0.0
      %561 = vmatpush.xpose.msra.mxu0 0.0
      %562 = vmatpush.xpose.msra.mxu0 0.0
      %563 = vmatpush.xpose.msra.mxu0 0.0
      %564 = vmatpush.xpose.msra.mxu0 0.0
      %565 = vmatpush.xpose.msra.mxu0 0.0
      %566 = vmatpush.xpose.msra.mxu0 0.0
      %567 = vmatpush.xpose.msra.mxu0 %v550
      %568 = vmatmul.f32.gmra.mxu0 %v548
      %v569 = vpop.f32.mrf.mxu0
      %v570 = vadd.f32 0.0, %v569
      %571 = vdwg.mxu0
      %s572 = scalar_lea.vmem [#allocation2], 8
      %v573 = vld [vmem:[%s572] sm:$0xf]
      %v574 = vsel %vm390, %v570, -inf
      %575 = vmax.xlane.f32.xlu0 %v574
      %v576 = vpop.xlane.xlu0 %575
      %v577 = vmax.f32 %v573, %v576
      %v578 = vsub.f32 %v573, %v577
      %v579 = vmul.f32 %v578, 1.442695
      %v580 = vpow.pop %v579
      %582 = vset.pattern.permute.xlu0 0
      %583 = vperm.xlu0 %582, %v577
      %v584 = vpop.permute.xlu0 %583
      %v586 = vsub.f32 %v570, %v584
      %v587 = vmul.f32 %v586, 1.442695
      %v588 = vpow.pop %v587
      %s589 = scalar_lea.vmem [#allocation3], 8
      %v590 = vld [vmem:[%s589] sm:$0xf]
      %v591 = vmul.f32 %v580, %v590
      %v592 = vsel %vm390, %v588, 0.0
      %593 = vadd.xlane.f32.xlu0 %v592
      %v594 = vpop.xlane.xlu0 %593
      %v595 = vadd.f32 %v591, %v594
      %596 = vst.msk [vmem:[%s589] sm:$0xf] %vm412, %v595
      %s597 = scalar_lea.vmem [#allocation4], 8
      %v598 = vld [vmem:[%s597] sm:$0xf]
      %600 = vset.pattern.permute.xlu0 0
      %601 = vperm.xlu0 %600, %v580
      %v602 = vpop.permute.xlu0 %601
      %v604 = vmul.f32 %v602, %v598
      %605 = vrot.lane.b32.xlu0 %v360, 64
      %v606 = vpop.permute.xlu0 %605
      %v608 = vsel %vm421, %v588, 0
      %v610 = vsel %vm425, %v606, 0
      %612 = vmatpush.msra.mxu0 0.0
      %613 = vmatpush.msra.mxu0 0.0
      %614 = vmatpush.msra.mxu0 0.0
      %615 = vmatpush.msra.mxu0 0.0
      %616 = vmatpush.msra.mxu0 0.0
      %617 = vmatpush.msra.mxu0 0.0
      %618 = vmatpush.msra.mxu0 0.0
      %619 = vmatpush.msra.mxu0 0.0
      %620 = vmatpush.msra.mxu0 0.0
      %621 = vmatpush.msra.mxu0 0.0
      %622 = vmatpush.msra.mxu0 0.0
      %623 = vmatpush.msra.mxu0 0.0
      %624 = vmatpush.msra.mxu0 0.0
      %625 = vmatpush.msra.mxu0 0.0
      %626 = vmatpush.msra.mxu0 0.0
      %627 = vmatpush.msra.mxu0 %v610
      %628 = vmatmul.f32.gmra.mxu0 %v608
      %v629 = vpop.f32.mrf.mxu0
      %v630 = vadd.f32 0.0, %v629
      %631 = vdwg.mxu0
      %v632 = vadd.f32 %v604, %v630
      %633 = vst.msk [vmem:[%s597] sm:$0xf] %vm450, %v632
      %634 = vst.msk [vmem:[%s572] sm:$0xf] %vm412, %v577
      %635 = vrot.lane.b32.xlu0 %v361, 32
      %v636 = vpop.permute.xlu0 %635
      %637 = vrot.lane.b32.xlu0 %v359, 32
      %v638 = vpop.permute.xlu0 %637
      %v639 = vsel %vm362, %v636, 0
      %v641 = vsel %vm362, %v638, 0
      %643 = vmatpush.xpose.msra.mxu0 0.0
      %644 = vmatpush.xpose.msra.mxu0 0.0
      %645 = vmatpush.xpose.msra.mxu0 0.0
      %646 = vmatpush.xpose.msra.mxu0 0.0
      %647 = vmatpush.xpose.msra.mxu0 0.0
      %648 = vmatpush.xpose.msra.mxu0 0.0
      %649 = vmatpush.xpose.msra.mxu0 0.0
      %650 = vmatpush.xpose.msra.mxu0 0.0
      %651 = vmatpush.xpose.msra.mxu0 0.0
      %652 = vmatpush.xpose.msra.mxu0 0.0
      %653 = vmatpush.xpose.msra.mxu0 0.0
      %654 = vmatpush.xpose.msra.mxu0 0.0
      %655 = vmatpush.xpose.msra.mxu0 0.0
      %656 = vmatpush.xpose.msra.mxu0 0.0
      %657 = vmatpush.xpose.msra.mxu0 0.0
      %658 = vmatpush.xpose.msra.mxu0 %v641
      %659 = vmatmul.f32.gmra.mxu0 %v639
      %v660 = vpop.f32.mrf.mxu0
      %v661 = vadd.f32 0.0, %v660
      %662 = vdwg.mxu0
      %s663 = scalar_lea.vmem [#allocation2], 12
      %v664 = vld [vmem:[%s663] sm:$0xf]
      %v665 = vsel %vm390, %v661, -inf
      %666 = vmax.xlane.f32.xlu0 %v665
      %v667 = vpop.xlane.xlu0 %666
      %v668 = vmax.f32 %v664, %v667
      %v669 = vsub.f32 %v664, %v668
      %v670 = vmul.f32 %v669, 1.442695
      %v671 = vpow.pop %v670
      %673 = vset.pattern.permute.xlu0 0
      %674 = vperm.xlu0 %673, %v668
      %v675 = vpop.permute.xlu0 %674
      %v677 = vsub.f32 %v661, %v675
      %v678 = vmul.f32 %v677, 1.442695
      %v679 = vpow.pop %v678
      %s680 = scalar_lea.vmem [#allocation3], 12
      %v681 = vld [vmem:[%s680] sm:$0xf]
      %v682 = vmul.f32 %v671, %v681
      %v683 = vsel %vm390, %v679, 0.0
      %684 = vadd.xlane.f32.xlu0 %v683
      %v685 = vpop.xlane.xlu0 %684
      %v686 = vadd.f32 %v682, %v685
      %687 = vst.msk [vmem:[%s680] sm:$0xf] %vm412, %v686
      %s688 = scalar_lea.vmem [#allocation4], 12
      %v689 = vld [vmem:[%s688] sm:$0xf]
      %691 = vset.pattern.permute.xlu0 0
      %692 = vperm.xlu0 %691, %v671
      %v693 = vpop.permute.xlu0 %692
      %v695 = vmul.f32 %v693, %v689
      %696 = vrot.lane.b32.xlu0 %v360, 32
      %v697 = vpop.permute.xlu0 %696
      %v699 = vsel %vm421, %v679, 0
      %v701 = vsel %vm425, %v697, 0
      %703 = vmatpush.msra.mxu0 0.0
      %704 = vmatpush.msra.mxu0 0.0
      %705 = vmatpush.msra.mxu0 0.0
      %706 = vmatpush.msra.mxu0 0.0
      %707 = vmatpush.msra.mxu0 0.0
      %708 = vmatpush.msra.mxu0 0.0
      %709 = vmatpush.msra.mxu0 0.0
      %710 = vmatpush.msra.mxu0 0.0
      %711 = vmatpush.msra.mxu0 0.0
      %712 = vmatpush.msra.mxu0 0.0
      %713 = vmatpush.msra.mxu0 0.0
      %714 = vmatpush.msra.mxu0 0.0
      %715 = vmatpush.msra.mxu0 0.0
      %716 = vmatpush.msra.mxu0 0.0
      %717 = vmatpush.msra.mxu0 0.0
      %718 = vmatpush.msra.mxu0 %v701
      %719 = vmatmul.f32.gmra.mxu0 %v699
      %v720 = vpop.f32.mrf.mxu0
      %v721 = vadd.f32 0.0, %v720
      %722 = vdwg.mxu0
      %v723 = vadd.f32 %v695, %v721
      %724 = vst.msk [vmem:[%s688] sm:$0xf] %vm450, %v723
      %725 = vst.msk [vmem:[%s663] sm:$0xf] %vm412, %v668
      // Predicated region
      $region37: #{image_encoder_forward.22} parent=31 // pred_check
        %p726 = pneg %p340
      $region38: #{image_encoder_forward.22} parent=31 // pred_check_branch
        %728 = sbr.rel (%p726) target = $region40
      $region39: #{image_encoder_forward.22} parent=31 // pred_region
        %v729 = vld [vmem:[#allocation3] sm:$0xf]
        %v730 = vrcp.pop %v729
        %v731 = vmul.f32 %v729, %v730
        %v732 = vsub.f32 1.0, %v731
        %v733 = vmul.f32 %v730, %v732
        %v734 = vadd.f32 %v730, %v733
        %vm735 = vweird.f32 %v729
        %vm736 = vweird.f32 %v730
        %vm737 = vmor %vm735, %vm736
        %v738 = vsel %vm737, %v730, %v734
        %v739 = vand.u32 2147483647, %v729
        %vm740 = vcmp.eq.f32.partialorder %v739, 8.507059e+37
        %v741 = vand.u32 %v729, 2147483648
        %v742 = vor.u32 1.1754944e-38, %v741
        %v743 = vsel %vm740, %v742, %v738
        %v744 = vmul.f32 1.0, %v743
        %v745 = vld [vmem:[#allocation4] sm:$0xf]
        %747 = vset.pattern.permute.xlu0 0
        %748 = vperm.xlu0 %747, %v744
        %v749 = vpop.permute.xlu0 %748
        %v751 = vmul.f32 %v745, %v749
        %v752 = vld [vmem:[%s498] sm:$0xf]
        %v753 = vrcp.pop %v752
        %v754 = vmul.f32 %v752, %v753
        %v755 = vsub.f32 1.0, %v754
        %v756 = vmul.f32 %v753, %v755
        %v757 = vadd.f32 %v753, %v756
        %vm758 = vweird.f32 %v752
        %vm759 = vweird.f32 %v753
        %vm760 = vmor %vm758, %vm759
        %v761 = vsel %vm760, %v753, %v757
        %v762 = vand.u32 2147483647, %v752
        %vm763 = vcmp.eq.f32.partialorder %v762, 8.507059e+37
        %v764 = vand.u32 %v752, 2147483648
        %v765 = vor.u32 1.1754944e-38, %v764
        %v766 = vsel %vm763, %v765, %v761
        %v767 = vmul.f32 1.0, %v766
        %v768 = vld [vmem:[%s506] sm:$0xf]
        %770 = vset.pattern.permute.xlu0 0
        %771 = vperm.xlu0 %770, %v767
        %v772 = vpop.permute.xlu0 %771
        %v774 = vmul.f32 %v768, %v772
        %v775 = vld [vmem:[%s589] sm:$0xf]
        %v776 = vrcp.pop %v775
        %v777 = vmul.f32 %v775, %v776
        %v778 = vsub.f32 1.0, %v777
        %v779 = vmul.f32 %v776, %v778
        %v780 = vadd.f32 %v776, %v779
        %vm781 = vweird.f32 %v775
        %vm782 = vweird.f32 %v776
        %vm783 = vmor %vm781, %vm782
        %v784 = vsel %vm783, %v776, %v780
        %v785 = vand.u32 2147483647, %v775
        %vm786 = vcmp.eq.f32.partialorder %v785, 8.507059e+37
        %v787 = vand.u32 %v775, 2147483648
        %v788 = vor.u32 1.1754944e-38, %v787
        %v789 = vsel %vm786, %v788, %v784
        %v790 = vmul.f32 1.0, %v789
        %v791 = vld [vmem:[%s597] sm:$0xf]
        %793 = vset.pattern.permute.xlu0 0
        %794 = vperm.xlu0 %793, %v790
        %v795 = vpop.permute.xlu0 %794
        %v797 = vmul.f32 %v791, %v795
        %v798 = vld [vmem:[%s680] sm:$0xf]
        %v799 = vrcp.pop %v798
        %v800 = vmul.f32 %v798, %v799
        %v801 = vsub.f32 1.0, %v800
        %v802 = vmul.f32 %v799, %v801
        %v803 = vadd.f32 %v799, %v802
        %vm804 = vweird.f32 %v798
        %vm805 = vweird.f32 %v799
        %vm806 = vmor %vm804, %vm805
        %v807 = vsel %vm806, %v799, %v803
        %v808 = vand.u32 2147483647, %v798
        %vm809 = vcmp.eq.f32.partialorder %v808, 8.507059e+37
        %v810 = vand.u32 %v798, 2147483648
        %v811 = vor.u32 1.1754944e-38, %v810
        %v812 = vsel %vm809, %v811, %v807
        %v813 = vmul.f32 1.0, %v812
        %v814 = vld [vmem:[%s688] sm:$0xf]
        %816 = vset.pattern.permute.xlu0 0
        %817 = vperm.xlu0 %816, %v813
        %v818 = vpop.permute.xlu0 %817
        %v820 = vmul.f32 %v814, %v818
        %822 = vrot.lane.b32.xlu0 %v774, 32
        %v823 = vpop.permute.xlu0 %822
        %826 = vrot.lane.b32.xlu0 %v797, 64
        %v827 = vpop.permute.xlu0 %826
        %830 = vrot.lane.b32.xlu0 %v820, 96
        %v831 = vpop.permute.xlu0 %830
        %v833 = vsel %vm362, %v751, %v823
        %vm834 = vcmask 523264
        %v835 = vsel %vm834, %v833, %v827
        %vm836 = vcmask 785408
        %v837 = vsel %vm836, %v835, %v831
        %838 = vst [vmem:[%s339] sm:$0xf] %v837
      $region40: #{image_encoder_forward.22} parent=31 // pred_fallthru
        _
      %p839 = scmp.lt.s32.totalorder %s20, 7
      %s840 = scalar_select %p839, %s20, 7
      %p841 = scmp.lt.s32.totalorder %s22, 0
      %s842 = scalar_select %p841, %s22, 0
      %p843 = scmp.lt.s32.totalorder %s21, 0
      %s844 = scalar_select %p843, %s21, 0
      %s845 = sadd.s32 %s844, %s842
      %s846 = sadd.s32 %s845, %s840
      %s847 = smul.addr %s846, 4
      %s848 = scalar_lea.vmem %s3, %s847
      // Predicated region
      $region41: #{image_encoder_forward.22} parent=31 // pred_check
        %p849 = pneg %p156
      $region42: #{image_encoder_forward.22} parent=31 // pred_check_branch
        %851 = sbr.rel (%p849) target = $region44
      $region43: #{image_encoder_forward.22} parent=31 // pred_region
        _
      $region44: #{image_encoder_forward.22} parent=31 // pred_fallthru
        _
    $region32: #{image_encoder_forward.22} parent=5 // pred_fallthru
      _
    %p852 = scmp.le.s32.totalorder 2, %s9
    // Predicated region
    $region45: #{image_encoder_forward.22} parent=5 // pred_check
      %p853 = pneg %p852
    $region46: #{image_encoder_forward.22} parent=5 // pred_check_branch
      %855 = sbr.rel (%p853) target = $region48
    $region47: #{image_encoder_forward.22} parent=5 // pred_region
      %s856 = ssub.s32 %s9, 2
      // Predicated region
      $region49: #{image_encoder_forward.22} parent=47 // pred_check
        %p857 = pneg %p162
      $region50: #{image_encoder_forward.22} parent=47 // pred_check_branch
        %859 = sbr.rel (%p857) target = $region52
      $region51: #{image_encoder_forward.22} parent=47 // pred_region
        %p860 = scmp.lt.s32.totalorder %s24, 7
        %s861 = scalar_select %p860, %s24, 7
        %p862 = scmp.lt.s32.totalorder %s26, 0
        %s863 = scalar_select %p862, %s26, 0
        %p864 = scmp.lt.s32.totalorder %s25, 0
        %s865 = scalar_select %p864, %s25, 0
        %s866 = sadd.s32 %s865, %s863
        %s867 = sadd.s32 %s866, %s861
        %s868 = smul.addr %s867, 4
        %s869 = scalar_lea.vmem %s3, %s868
      $region52: #{image_encoder_forward.22} parent=47 // pred_fallthru
        _
    $region48: #{image_encoder_forward.22} parent=5 // pred_fallthru
      _
  $region6: #{image_encoder_forward.22} parent=0 // loop_footer
    %s13 = sadd.s32 1, %s9
  $region7: #{image_encoder_forward.22} parent=0 // loop_footer_branch
    %8 = sbr.rel target = $region3
  $region8: #{image_encoder_forward.22} parent=0 // loop_exit
    _

// kernel: image_encoder_forward.25
$region0: #{image_encoder_forward.25}
  #allocation0 [shape = 'u32[]', space=smem, size = 0x4, offset = 0x4, fixed_abs, tag = 'smem constant byte address 0x4 - core index']
  #allocation1 [shape = 'u32[72,128]{1,0:T(1,128)}', space=vmem, size = 0x9000, scoped, tag = 'internal scratch']
  %s0 = inlined_call_operand.vmem [shape: f32[32,128], index: 0, kind: input, shape index: {}]
  %s1 = inlined_call_operand.vmem [shape: f32[128,512], index: 1, kind: input, shape index: {}]
  %s2 = inlined_call_operand.vmem [shape: f32[1,512], index: 2, kind: input, shape index: {}]
  %s3 = inlined_call_operand.vmem [shape: f32[32,512], index: 3, kind: output, shape index: {}]
  %s4 = sld [smem:[#allocation0]]
  $region45: #{image_encoder_forward.25} parent=0
    _
  %s6 = ssub.s32 1, %s4
  %s7 = scalar_select 0, %s6, %s4
  loop: start=0, step=1, limit=4
  $region2: #{image_encoder_forward.25} parent=0 // loop_pre_header
    _
  $region3: #{image_encoder_forward.25} parent=0 // loop_header
    %s9 = sphi 0, %s13
    %p10 = scmp.ge.s32.totalorder %s9, 4
    %s19 = sphi 0, %s21
    %s22 = sphi 0, %s19
    %s23 = sphi 0, %s22
    %s39 = sphi 0, %s23
    %s43 = sphi 0, %s43
    %s45 = sphi 0, %s43
    %s46 = sphi 0, %s45
    %s60 = sphi 0, %s46
    %s64 = sphi 0, %s64
    %s66 = sphi 0, %s64
    %s67 = sphi 0, %s66
    %s81 = sphi 0, %s67
    %s87 = sphi 0, %s89
    %s90 = sphi 0, %s87
    %s91 = sphi 0, %s90
    %s107 = sphi 0, %s91
  $region4: #{image_encoder_forward.25} parent=0 // loop_header_branch
    %12 = sbr.rel (%p10) target = $region8
  $region5: #{image_encoder_forward.25} parent=0 // loop_body
    %s14 = ssub.s32 %s9, 1
    %s15 = ssub.s32 %s9, 2
    %s16 = sadd.s32 %s9, 1
    %s17 = ssub.s32 %s9, %s16
    %p18 = scmp.eq.s32.totalorder %s17, 0
    %s20 = sadd.s32 %s19, 1
    %s21 = scalar_select %p18, %s19, %s20
    %p24 = pneg %p18
    %p25 = scmp.eq.s32.totalorder %s9, 1
    %p26 = por %p24, %p25
    %p27 = scmp.ne.s32.totalorder %s19, %s22
    %p28 = scmp.eq.s32.totalorder %s9, 0
    %p29 = por %p27, %p28
    %p30 = scmp.ne.s32.totalorder %s19, %s22
    %p31 = scmp.eq.s32.totalorder %s14, 1
    %p32 = por %p30, %p31
    %p33 = scmp.ne.s32.totalorder %s22, %s23
    %p34 = scmp.eq.s32.totalorder %s14, 0
    %p35 = por %p33, %p34
    %p36 = scmp.ne.s32.totalorder %s22, %s23
    %p37 = scmp.eq.s32.totalorder %s15, 1
    %p38 = por %p36, %p37
    %p40 = scmp.ne.s32.totalorder %s23, %s39
    %p41 = scmp.eq.s32.totalorder %s15, 0
    %p42 = por %p40, %p41
    %s44 = sadd.s32 %s43, 1
    %p47 = scmp.eq.s32.totalorder %s9, 1
    %p48 = scmp.ne.s32.totalorder %s43, %s45
    %p49 = scmp.eq.s32.totalorder %s9, 0
    %p50 = por %p48, %p49
    %p51 = scmp.ne.s32.totalorder %s43, %s45
    %p52 = scmp.eq.s32.totalorder %s14, 1
    %p53 = por %p51, %p52
    %p54 = scmp.ne.s32.totalorder %s45, %s46
    %p55 = scmp.eq.s32.totalorder %s14, 0
    %p56 = por %p54, %p55
    %p57 = scmp.ne.s32.totalorder %s45, %s46
    %p58 = scmp.eq.s32.totalorder %s15, 1
    %p59 = por %p57, %p58
    %p61 = scmp.ne.s32.totalorder %s46, %s60
    %p62 = scmp.eq.s32.totalorder %s15, 0
    %p63 = por %p61, %p62
    %s65 = sadd.s32 %s64, 1
    %p68 = scmp.eq.s32.totalorder %s9, 1
    %p69 = scmp.ne.s32.totalorder %s64, %s66
    %p70 = scmp.eq.s32.totalorder %s9, 0
    %p71 = por %p69, %p70
    %p72 = scmp.ne.s32.totalorder %s64, %s66
    %p73 = scmp.eq.s32.totalorder %s14, 1
    %p74 = por %p72, %p73
    %p75 = scmp.ne.s32.totalorder %s66, %s67
    %p76 = scmp.eq.s32.totalorder %s14, 0
    %p77 = por %p75, %p76
    %p78 = scmp.ne.s32.totalorder %s66, %s67
    %p79 = scmp.eq.s32.totalorder %s15, 1
    %p80 = por %p78, %p79
    %p82 = scmp.ne.s32.totalorder %s67, %s81
    %p83 = scmp.eq.s32.totalorder %s15, 0
    %p84 = por %p82, %p83
    %s85 = ssub.s32 %s9, %s16
    %p86 = scmp.eq.s32.totalorder %s85, 0
    %s88 = sadd.s32 %s87, 1
    %s89 = scalar_select %p86, %s87, %s88
    %p92 = pneg %p86
    %p93 = scmp.eq.s32.totalorder %s9, 1
    %p94 = por %p92, %p93
    %p95 = scmp.ne.s32.totalorder %s87, %s90
    %p96 = scmp.eq.s32.totalorder %s9, 0
    %p97 = por %p95, %p96
    %p98 = scmp.ne.s32.totalorder %s87, %s90
    %p99 = scmp.eq.s32.totalorder %s14, 1
    %p100 = por %p98, %p99
    %p101 = scmp.ne.s32.totalorder %s90, %s91
    %p102 = scmp.eq.s32.totalorder %s14, 0
    %p103 = por %p101, %p102
    %p104 = scmp.ne.s32.totalorder %s90, %s91
    %p105 = scmp.eq.s32.totalorder %s15, 1
    %p106 = por %p104, %p105
    %p108 = scmp.ne.s32.totalorder %s91, %s107
    %p109 = scmp.eq.s32.totalorder %s15, 0
    %p110 = por %p108, %p109
    %p111 = scmp.le.s32.totalorder 1, %s9
    %p112 = scmp.lt.s32.totalorder %s9, 3
    %p113 = pnand %p111, %p112
    %p114 = pneg %p113
    // Predicated region
    $region9: #{image_encoder_forward.25} parent=5 // pred_check
      _
    $region10: #{image_encoder_forward.25} parent=5 // pred_check_branch
      %116 = sbr.rel (%p113) target = $region12
    $region11: #{image_encoder_forward.25} parent=5 // pred_region
      %s117 = ssub.s32 %s9, 1
      // Predicated region
      $region13: #{image_encoder_forward.25} parent=11 // pred_check
        %p118 = pneg %p56
      $region14: #{image_encoder_forward.25} parent=11 // pred_check_branch
        %120 = sbr.rel (%p118) target = $region16
      $region15: #{image_encoder_forward.25} parent=11 // pred_region
        _
      $region16: #{image_encoder_forward.25} parent=11 // pred_fallthru
        _
      // Predicated region
      $region17: #{image_encoder_forward.25} parent=11 // pred_check
        %p121 = pneg %p77
      $region18: #{image_encoder_forward.25} parent=11 // pred_check_branch
        %123 = sbr.rel (%p121) target = $region20
      $region19: #{image_encoder_forward.25} parent=11 // pred_region
        _
      $region20: #{image_encoder_forward.25} parent=11 // pred_fallthru
        _
    $region12: #{image_encoder_forward.25} parent=5 // pred_fallthru
      _
    %p124 = scmp.lt.s32.totalorder %s9, 2
    // Predicated region
    $region21: #{image_encoder_forward.25} parent=5 // pred_check
      %p125 = pneg %p124
    $region22: #{image_encoder_forward.25} parent=5 // pred_check_branch
      %127 = sbr.rel (%p125) target = $region24
    $region23: #{image_encoder_forward.25} parent=5 // pred_region
      // Predicated region
      $region25: #{image_encoder_forward.25} parent=23 // pred_check
        %p128 = pneg %p29
      $region26: #{image_encoder_forward.25} parent=23 // pred_check_branch
        %130 = sbr.rel (%p128) target = $region28
      $region27: #{image_encoder_forward.25} parent=23 // pred_region
        %s131 = smul.u32 2, %s9
        %p132 = scmp.lt.s32.totalorder %s131, 3
        %s133 = scalar_select %p132, %s131, 3
        %s134 = smul.addr %s133, 8
        %s135 = scalar_lea.vmem %s0, %s134
        %s136 = smul.u32 2, %s9
      $region28: #{image_encoder_forward.25} parent=23 // pred_fallthru
        _
    $region24: #{image_encoder_forward.25} parent=5 // pred_fallthru
      _
    %p137 = scmp.le.s32.totalorder 1, %s9
    %p138 = scmp.lt.s32.totalorder %s9, 3
    %p139 = pnand %p137, %p138
    %p140 = pneg %p139
    // Predicated region
    $region29: #{image_encoder_forward.25} parent=5 // pred_check
      _
    $region30: #{image_encoder_forward.25} parent=5 // pred_check_branch
      %142 = sbr.rel (%p139) target = $region32
    $region31: #{image_encoder_forward.25} parent=5 // pred_region
      %s143 = ssub.s32 %s9, 1
      %s144 = smul.u32 2, %s14
      %p145 = scmp.lt.s32.totalorder %s144, 3
      %s146 = scalar_select %p145, %s144, 3
      %s147 = smul.addr %s146, 8
      %s148 = scalar_lea.vmem %s0, %s147
      %p149 = pneg %p35
      %p150 = pneg %p32
      %p151 = pneg %p56
      %p152 = pneg %p53
      %p153 = pneg %p77
      %p154 = pneg %p74
      %p155 = pneg %p103
      %p156 = pneg %p100
      %s157 = smul.u32 2, %s14
      %p158 = scmp.lt.s32.totalorder %s157, 3
      %s159 = scalar_select %p158, %s157, 3
      %s160 = smul.addr %s159, 4
      %s161 = smul.addr %s160, 8
      %s162 = scalar_lea.vmem %s3, %s161
      %s163 = smul.u32 2, %s14
      %p164 = scmp.lt.s32.totalorder %s163, 3
      %s165 = scalar_select %p164, %s163, 3
      %s166 = smul.addr %s165, 8
      %s167 = scalar_lea.vmem %s0, %s166
      %s168 = smul.u32 2, %s14
      %s169 = smul.u32 2, %s14
      %p170 = scmp.lt.s32.totalorder %s169, 3
      %s171 = scalar_select %p170, %s169, 3
      %s172 = smul.addr %s171, 4
      %s173 = smul.addr %s172, 8
      %s174 = scalar_lea.vmem %s3, %s173
      %s175 = smul.u32 2, %s14
      %v176 = vld [vmem:[%s167] sm:$0xff]
      %v177 = vld [vmem:[%s167 + $0x8] sm:$0xff]
      %v178 = vld [vmem:[%s1] sm:$0xff]
      %v179 = vld [vmem:[%s1 + $0x8] sm:$0xff]
      %v180 = vld [vmem:[%s1 + $0x10] sm:$0xff]
      %v181 = vld [vmem:[%s1 + $0x18] sm:$0xff]
      %v182 = vld [vmem:[%s1 + $0x20] sm:$0xff]
      %v183 = vld [vmem:[%s1 + $0x28] sm:$0xff]
      %v184 = vld [vmem:[%s1 + $0x30] sm:$0xff]
      %v185 = vld [vmem:[%s1 + $0x38] sm:$0xff]
      %v186 = vld [vmem:[%s1 + $0x40] sm:$0xff]
      %v187 = vld [vmem:[%s1 + $0x48] sm:$0xff]
      %v188 = vld [vmem:[%s1 + $0x50] sm:$0xff]
      %v189 = vld [vmem:[%s1 + $0x58] sm:$0xff]
      %v190 = vld [vmem:[%s1 + $0x60] sm:$0xff]
      %v191 = vld [vmem:[%s1 + $0x68] sm:$0xff]
      %v192 = vld [vmem:[%s1 + $0x70] sm:$0xff]
      %v193 = vld [vmem:[%s1 + $0x78] sm:$0xff]
      %v194 = vld [vmem:[%s1 + $0x80] sm:$0xff]
      %v195 = vld [vmem:[%s1 + $0x88] sm:$0xff]
      %v196 = vld [vmem:[%s1 + $0x90] sm:$0xff]
      %v197 = vld [vmem:[%s1 + $0x98] sm:$0xff]
      %v198 = vld [vmem:[%s1 + $0xa0] sm:$0xff]
      %v199 = vld [vmem:[%s1 + $0xa8] sm:$0xff]
      %v200 = vld [vmem:[%s1 + $0xb0] sm:$0xff]
      %v201 = vld [vmem:[%s1 + $0xb8] sm:$0xff]
      %v202 = vld [vmem:[%s1 + $0xc0] sm:$0xff]
      %v203 = vld [vmem:[%s1 + $0xc8] sm:$0xff]
      %v204 = vld [vmem:[%s1 + $0xd0] sm:$0xff]
      %v205 = vld [vmem:[%s1 + $0xd8] sm:$0xff]
      %v206 = vld [vmem:[%s1 + $0xe0] sm:$0xff]
      %v207 = vld [vmem:[%s1 + $0xe8] sm:$0xff]
      %v208 = vld [vmem:[%s1 + $0xf0] sm:$0xff]
      %v209 = vld [vmem:[%s1 + $0xf8] sm:$0xff]
      %v210 = vld [vmem:[%s1 + $0x100] sm:$0xff]
      %v211 = vld [vmem:[%s1 + $0x108] sm:$0xff]
      %v212 = vld [vmem:[%s1 + $0x110] sm:$0xff]
      %v213 = vld [vmem:[%s1 + $0x118] sm:$0xff]
      %v214 = vld [vmem:[%s1 + $0x120] sm:$0xff]
      %v215 = vld [vmem:[%s1 + $0x128] sm:$0xff]
      %v216 = vld [vmem:[%s1 + $0x130] sm:$0xff]
      %v217 = vld [vmem:[%s1 + $0x138] sm:$0xff]
      %v218 = vld [vmem:[%s1 + $0x140] sm:$0xff]
      %v219 = vld [vmem:[%s1 + $0x148] sm:$0xff]
      %v220 = vld [vmem:[%s1 + $0x150] sm:$0xff]
      %v221 = vld [vmem:[%s1 + $0x158] sm:$0xff]
      %v222 = vld [vmem:[%s1 + $0x160] sm:$0xff]
      %v223 = vld [vmem:[%s1 + $0x168] sm:$0xff]
      %v224 = vld [vmem:[%s1 + $0x170] sm:$0xff]
      %v225 = vld [vmem:[%s1 + $0x178] sm:$0xff]
      %v226 = vld [vmem:[%s1 + $0x180] sm:$0xff]
      %v227 = vld [vmem:[%s1 + $0x188] sm:$0xff]
      %v228 = vld [vmem:[%s1 + $0x190] sm:$0xff]
      %v229 = vld [vmem:[%s1 + $0x198] sm:$0xff]
      %v230 = vld [vmem:[%s1 + $0x1a0] sm:$0xff]
      %v231 = vld [vmem:[%s1 + $0x1a8] sm:$0xff]
      %v232 = vld [vmem:[%s1 + $0x1b0] sm:$0xff]
      %v233 = vld [vmem:[%s1 + $0x1b8] sm:$0xff]
      %v234 = vld [vmem:[%s1 + $0x1c0] sm:$0xff]
      %v235 = vld [vmem:[%s1 + $0x1c8] sm:$0xff]
      %v236 = vld [vmem:[%s1 + $0x1d0] sm:$0xff]
      %v237 = vld [vmem:[%s1 + $0x1d8] sm:$0xff]
      %v238 = vld [vmem:[%s1 + $0x1e0] sm:$0xff]
      %v239 = vld [vmem:[%s1 + $0x1e8] sm:$0xff]
      %v240 = vld [vmem:[%s1 + $0x1f0] sm:$0xff]
      %v241 = vld [vmem:[%s1 + $0x1f8] sm:$0xff]
      %v242 = vld [vmem:[%s2] sm:$0xf]
      %v244 = vperm.slane %v242, 0
      %v245 = vperm.slane %v242, 1
      %v246 = vperm.slane %v242, 2
      %v247 = vperm.slane %v242, 3
      %252 = vmatpush.msra.mxu0 %v238
      %253 = vmatpush.msra.mxu0 %v234
      %254 = vmatpush.msra.mxu0 %v230
      %255 = vmatpush.msra.mxu0 %v226
      %256 = vmatpush.msra.mxu0 %v222
      %257 = vmatpush.msra.mxu0 %v218
      %258 = vmatpush.msra.mxu0 %v214
      %259 = vmatpush.msra.mxu0 %v210
      %260 = vmatpush.msra.mxu0 %v206
      %261 = vmatpush.msra.mxu0 %v202
      %262 = vmatpush.msra.mxu0 %v198
      %263 = vmatpush.msra.mxu0 %v194
      %264 = vmatpush.msra.mxu0 %v190
      %265 = vmatpush.msra.mxu0 %v186
      %266 = vmatpush.msra.mxu0 %v182
      %267 = vmatpush.msra.mxu0 %v178
      %268 = vmatmul.f32.gmra.mxu0 %v176
      %v269 = vpop.f32.mrf.mxu0
      %v270 = vadd.f32 %v244, %v269
      %271 = vmatmul.f32.gmra.mxu0 %v177
      %v272 = vpop.f32.mrf.mxu0
      %v273 = vadd.f32 %v244, %v272
      %274 = vdwg.mxu0
      %275 = vmatpush.msra.mxu0 %v239
      %276 = vmatpush.msra.mxu0 %v235
      %277 = vmatpush.msra.mxu0 %v231
      %278 = vmatpush.msra.mxu0 %v227
      %279 = vmatpush.msra.mxu0 %v223
      %280 = vmatpush.msra.mxu0 %v219
      %281 = vmatpush.msra.mxu0 %v215
      %282 = vmatpush.msra.mxu0 %v211
      %283 = vmatpush.msra.mxu0 %v207
      %284 = vmatpush.msra.mxu0 %v203
      %285 = vmatpush.msra.mxu0 %v199
      %286 = vmatpush.msra.mxu0 %v195
      %287 = vmatpush.msra.mxu0 %v191
      %288 = vmatpush.msra.mxu0 %v187
      %289 = vmatpush.msra.mxu0 %v183
      %290 = vmatpush.msra.mxu0 %v179
      %291 = vmatmul.f32.gmra.mxu0 %v176
      %v292 = vpop.f32.mrf.mxu0
      %v293 = vadd.f32 %v245, %v292
      %294 = vmatmul.f32.gmra.mxu0 %v177
      %v295 = vpop.f32.mrf.mxu0
      %v296 = vadd.f32 %v245, %v295
      %297 = vdwg.mxu0
      %298 = vmatpush.msra.mxu0 %v240
      %299 = vmatpush.msra.mxu0 %v236
      %300 = vmatpush.msra.mxu0 %v232
      %301 = vmatpush.msra.mxu0 %v228
      %302 = vmatpush.msra.mxu0 %v224
      %303 = vmatpush.msra.mxu0 %v220
      %304 = vmatpush.msra.mxu0 %v216
      %305 = vmatpush.msra.mxu0 %v212
      %306 = vmatpush.msra.mxu0 %v208
      %307 = vmatpush.msra.mxu0 %v204
      %308 = vmatpush.msra.mxu0 %v200
      %309 = vmatpush.msra.mxu0 %v196
      %310 = vmatpush.msra.mxu0 %v192
      %311 = vmatpush.msra.mxu0 %v188
      %312 = vmatpush.msra.mxu0 %v184
      %313 = vmatpush.msra.mxu0 %v180
      %314 = vmatmul.f32.gmra.mxu0 %v176
      %v315 = vpop.f32.mrf.mxu0
      %v316 = vadd.f32 %v246, %v315
      %317 = vmatmul.f32.gmra.mxu0 %v177
      %v318 = vpop.f32.mrf.mxu0
      %v319 = vadd.f32 %v246, %v318
      %320 = vdwg.mxu0
      %321 = vmatpush.msra.mxu0 %v241
      %322 = vmatpush.msra.mxu0 %v237
      %323 = vmatpush.msra.mxu0 %v233
      %324 = vmatpush.msra.mxu0 %v229
      %325 = vmatpush.msra.mxu0 %v225
      %326 = vmatpush.msra.mxu0 %v221
      %327 = vmatpush.msra.mxu0 %v217
      %328 = vmatpush.msra.mxu0 %v213
      %329 = vmatpush.msra.mxu0 %v209
      %330 = vmatpush.msra.mxu0 %v205
      %331 = vmatpush.msra.mxu0 %v201
      %332 = vmatpush.msra.mxu0 %v197
      %333 = vmatpush.msra.mxu0 %v193
      %334 = vmatpush.msra.mxu0 %v189
      %335 = vmatpush.msra.mxu0 %v185
      %336 = vmatpush.msra.mxu0 %v181
      %337 = vmatmul.f32.gmra.mxu0 %v176
      %v338 = vpop.f32.mrf.mxu0
      %v339 = vadd.f32 %v247, %v338
      %340 = vmatmul.f32.gmra.mxu0 %v177
      %v341 = vpop.f32.mrf.mxu0
      %v342 = vadd.f32 %v247, %v341
      %343 = vdwg.mxu0
      %v344 = vmul.f32 %v270, 0.5
      %v345 = vmul.f32 %v293, 0.5
      %v346 = vmul.f32 %v316, 0.5
      %v347 = vmul.f32 %v339, 0.5
      %v348 = vmul.f32 %v273, 0.5
      %v349 = vmul.f32 %v296, 0.5
      %v350 = vmul.f32 %v319, 0.5
      %v351 = vmul.f32 %v342, 0.5
      %v352 = vmul.f32 %v270, 0.70710677
      %v353 = vmul.f32 %v293, 0.70710677
      %v354 = vmul.f32 %v316, 0.70710677
      %v355 = vmul.f32 %v339, 0.70710677
      %v356 = vmul.f32 %v273, 0.70710677
      %v357 = vmul.f32 %v296, 0.70710677
      %v358 = vmul.f32 %v319, 0.70710677
      %v359 = vmul.f32 %v342, 0.70710677
      %vm360 = vcmp.ge.f32.partialorder %v352, 0.0
      %vm361 = vcmp.ge.f32.partialorder %v353, 0.0
      %vm362 = vcmp.ge.f32.partialorder %v354, 0.0
      %vm363 = vcmp.ge.f32.partialorder %v355, 0.0
      %vm364 = vcmp.ge.f32.partialorder %v356, 0.0
      %vm365 = vcmp.ge.f32.partialorder %v357, 0.0
      %vm366 = vcmp.ge.f32.partialorder %v358, 0.0
      %vm367 = vcmp.ge.f32.partialorder %v359, 0.0
      %v368 = vsel %vm360, 1.0, -1.0
      %v369 = vsel %vm361, 1.0, -1.0
      %v370 = vsel %vm362, 1.0, -1.0
      %v371 = vsel %vm363, 1.0, -1.0
      %v372 = vsel %vm364, 1.0, -1.0
      %v373 = vsel %vm365, 1.0, -1.0
      %v374 = vsel %vm366, 1.0, -1.0
      %v375 = vsel %vm367, 1.0, -1.0
      %v376 = vand.u32 2147483647, %v352
      %v377 = vand.u32 2147483647, %v353
      %v378 = vand.u32 2147483647, %v354
      %v379 = vand.u32 2147483647, %v355
      %v380 = vand.u32 2147483647, %v356
      %v381 = vand.u32 2147483647, %v357
      %v382 = vand.u32 2147483647, %v358
      %v383 = vand.u32 2147483647, %v359
      %v384 = vmul.f32 %v376, 0.3275911
      %v385 = vmul.f32 %v377, 0.3275911
      %v386 = vmul.f32 %v378, 0.3275911
      %v387 = vmul.f32 %v379, 0.3275911
      %v388 = vmul.f32 %v380, 0.3275911
      %v389 = vmul.f32 %v381, 0.3275911
      %v390 = vmul.f32 %v382, 0.3275911
      %v391 = vmul.f32 %v383, 0.3275911
      %v392 = vadd.f32 %v384, 1.0
      %v393 = vadd.f32 %v385, 1.0
      %v394 = vadd.f32 %v386, 1.0
      %v395 = vadd.f32 %v387, 1.0
      %v396 = vadd.f32 %v388, 1.0
      %v397 = vadd.f32 %v389, 1.0
      %v398 = vadd.f32 %v390, 1.0
      %v399 = vadd.f32 %v391, 1.0
      %v400 = vrcp.pop %v392
      %v401 = vmul.f32 %v392, %v400
      %v402 = vsub.f32 1.0, %v401
      %v403 = vmul.f32 %v400, %v402
      %v404 = vadd.f32 %v400, %v403
      %vm405 = vweird.f32 %v392
      %vm406 = vweird.f32 %v400
      %vm407 = vmor %vm405, %vm406
      %v408 = vsel %vm407, %v400, %v404
      %v409 = vand.u32 2147483647, %v392
      %vm410 = vcmp.eq.f32.partialorder %v409, 8.507059e+37
      %v411 = vand.u32 %v392, 2147483648
      %v412 = vor.u32 1.1754944e-38, %v411
      %v413 = vsel %vm410, %v412, %v408
      %v414 = vmul.f32 1.0, %v413
      %v415 = vrcp.pop %v393
      %v416 = vmul.f32 %v393, %v415
      %v417 = vsub.f32 1.0, %v416
      %v418 = vmul.f32 %v415, %v417
      %v419 = vadd.f32 %v415, %v418
      %vm420 = vweird.f32 %v393
      %vm421 = vweird.f32 %v415
      %vm422 = vmor %vm420, %vm421
      %v423 = vsel %vm422, %v415, %v419
      %v424 = vand.u32 2147483647, %v393
      %vm425 = vcmp.eq.f32.partialorder %v424, 8.507059e+37
      %v426 = vand.u32 %v393, 2147483648
      %v427 = vor.u32 1.1754944e-38, %v426
      %v428 = vsel %vm425, %v427, %v423
      %v429 = vmul.f32 1.0, %v428
      %v430 = vrcp.pop %v394
      %v431 = vmul.f32 %v394, %v430
      %v432 = vsub.f32 1.0, %v431
      %v433 = vmul.f32 %v430, %v432
      %v434 = vadd.f32 %v430, %v433
      %vm435 = vweird.f32 %v394
      %vm436 = vweird.f32 %v430
      %vm437 = vmor %vm435, %vm436
      %v438 = vsel %vm437, %v430, %v434
      %v439 = vand.u32 2147483647, %v394
      %vm440 = vcmp.eq.f32.partialorder %v439, 8.507059e+37
      %v441 = vand.u32 %v394, 2147483648
      %v442 = vor.u32 1.1754944e-38, %v441
      %v443 = vsel %vm440, %v442, %v438
      %v444 = vmul.f32 1.0, %v443
      %v445 = vrcp.pop %v395
      %v446 = vmul.f32 %v395, %v445
      %v447 = vsub.f32 1.0, %v446
      %v448 = vmul.f32 %v445, %v447
      %v449 = vadd.f32 %v445, %v448
      %vm450 = vweird.f32 %v395
      %vm451 = vweird.f32 %v445
      %vm452 = vmor %vm450, %vm451
      %v453 = vsel %vm452, %v445, %v449
      %v454 = vand.u32 2147483647, %v395
      %vm455 = vcmp.eq.f32.partialorder %v454, 8.507059e+37
      %v456 = vand.u32 %v395, 2147483648
      %v457 = vor.u32 1.1754944e-38, %v456
      %v458 = vsel %vm455, %v457, %v453
      %v459 = vmul.f32 1.0, %v458
      %v460 = vrcp.pop %v396
      %v461 = vmul.f32 %v396, %v460
      %v462 = vsub.f32 1.0, %v461
      %v463 = vmul.f32 %v460, %v462
      %v464 = vadd.f32 %v460, %v463
      %vm465 = vweird.f32 %v396
      %vm466 = vweird.f32 %v460
      %vm467 = vmor %vm465, %vm466
      %v468 = vsel %vm467, %v460, %v464
      %v469 = vand.u32 2147483647, %v396
      %vm470 = vcmp.eq.f32.partialorder %v469, 8.507059e+37
      %v471 = vand.u32 %v396, 2147483648
      %v472 = vor.u32 1.1754944e-38, %v471
      %v473 = vsel %vm470, %v472, %v468
      %v474 = vmul.f32 1.0, %v473
      %v475 = vrcp.pop %v397
      %v476 = vmul.f32 %v397, %v475
      %v477 = vsub.f32 1.0, %v476
      %v478 = vmul.f32 %v475, %v477
      %v479 = vadd.f32 %v475, %v478
      %vm480 = vweird.f32 %v397
      %vm481 = vweird.f32 %v475
      %vm482 = vmor %vm480, %vm481
      %v483 = vsel %vm482, %v475, %v479
      %v484 = vand.u32 2147483647, %v397
      %vm485 = vcmp.eq.f32.partialorder %v484, 8.507059e+37
      %v486 = vand.u32 %v397, 2147483648
      %v487 = vor.u32 1.1754944e-38, %v486
      %v488 = vsel %vm485, %v487, %v483
      %v489 = vmul.f32 1.0, %v488
      %v490 = vrcp.pop %v398
      %v491 = vmul.f32 %v398, %v490
      %v492 = vsub.f32 1.0, %v491
      %v493 = vmul.f32 %v490, %v492
      %v494 = vadd.f32 %v490, %v493
      %vm495 = vweird.f32 %v398
      %vm496 = vweird.f32 %v490
      %vm497 = vmor %vm495, %vm496
      %v498 = vsel %vm497, %v490, %v494
      %v499 = vand.u32 2147483647, %v398
      %vm500 = vcmp.eq.f32.partialorder %v499, 8.507059e+37
      %v501 = vand.u32 %v398, 2147483648
      %v502 = vor.u32 1.1754944e-38, %v501
      %v503 = vsel %vm500, %v502, %v498
      %v504 = vmul.f32 1.0, %v503
      %v505 = vrcp.pop %v399
      %v506 = vmul.f32 %v399, %v505
      %v507 = vsub.f32 1.0, %v506
      %v508 = vmul.f32 %v505, %v507
      %v509 = vadd.f32 %v505, %v508
      %vm510 = vweird.f32 %v399
      %vm511 = vweird.f32 %v505
      %vm512 = vmor %vm510, %vm511
      %v513 = vsel %vm512, %v505, %v509
      %v514 = vand.u32 2147483647, %v399
      %vm515 = vcmp.eq.f32.partialorder %v514, 8.507059e+37
      %v516 = vand.u32 %v399, 2147483648
      %v517 = vor.u32 1.1754944e-38, %v516
      %v518 = vsel %vm515, %v517, %v513
      %v519 = vmul.f32 1.0, %v518
      %v520 = vmul.f32 %v414, 1.0614054
      %v521 = vmul.f32 %v429, 1.0614054
      %v522 = vmul.f32 %v444, 1.0614054
      %v523 = vmul.f32 %v459, 1.0614054
      %v524 = vmul.f32 %v474, 1.0614054
      %v525 = vmul.f32 %v489, 1.0614054
      %v526 = vmul.f32 %v504, 1.0614054
      %v527 = vmul.f32 %v519, 1.0614054
      %v528 = vadd.f32 %v520, -1.4531521
      %v529 = vadd.f32 %v521, -1.4531521
      %v530 = vadd.f32 %v522, -1.4531521
      %v531 = vadd.f32 %v523, -1.4531521
      %v532 = vadd.f32 %v524, -1.4531521
      %v533 = vadd.f32 %v525, -1.4531521
      %v534 = vadd.f32 %v526, -1.4531521
      %v535 = vadd.f32 %v527, -1.4531521
      %v536 = vmul.f32 %v528, %v414
      %v537 = vmul.f32 %v529, %v429
      %v538 = vmul.f32 %v530, %v444
      %v539 = vmul.f32 %v531, %v459
      %v540 = vmul.f32 %v532, %v474
      %v541 = vmul.f32 %v533, %v489
      %v542 = vmul.f32 %v534, %v504
      %v543 = vmul.f32 %v535, %v519
      %v544 = vadd.f32 %v536, 1.4214138
      %v545 = vadd.f32 %v537, 1.4214138
      %v546 = vadd.f32 %v538, 1.4214138
      %v547 = vadd.f32 %v539, 1.4214138
      %v548 = vadd.f32 %v540, 1.4214138
      %v549 = vadd.f32 %v541, 1.4214138
      %v550 = vadd.f32 %v542, 1.4214138
      %v551 = vadd.f32 %v543, 1.4214138
      %v552 = vmul.f32 %v544, %v414
      %v553 = vmul.f32 %v545, %v429
      %v554 = vmul.f32 %v546, %v444
      %v555 = vmul.f32 %v547, %v459
      %v556 = vmul.f32 %v548, %v474
      %v557 = vmul.f32 %v549, %v489
      %v558 = vmul.f32 %v550, %v504
      %v559 = vmul.f32 %v551, %v519
      %v560 = vadd.f32 %v552, -0.28449672
      %v561 = vadd.f32 %v553, -0.28449672
      %v562 = vadd.f32 %v554, -0.28449672
      %v563 = vadd.f32 %v555, -0.28449672
      %v564 = vadd.f32 %v556, -0.28449672
      %v565 = vadd.f32 %v557, -0.28449672
      %v566 = vadd.f32 %v558, -0.28449672
      %v567 = vadd.f32 %v559, -0.28449672
      %v568 = vmul.f32 %v560, %v414
      %v569 = vmul.f32 %v561, %v429
      %v570 = vmul.f32 %v562, %v444
      %v571 = vmul.f32 %v563, %v459
      %v572 = vmul.f32 %v564, %v474
      %v573 = vmul.f32 %v565, %v489
      %v574 = vmul.f32 %v566, %v504
      %v575 = vmul.f32 %v567, %v519
      %v576 = vadd.f32 %v568, 0.2548296
      %v577 = vadd.f32 %v569, 0.2548296
      %v578 = vadd.f32 %v570, 0.2548296
      %v579 = vadd.f32 %v571, 0.2548296
      %v580 = vadd.f32 %v572, 0.2548296
      %v581 = vadd.f32 %v573, 0.2548296
      %v582 = vadd.f32 %v574, 0.2548296
      %v583 = vadd.f32 %v575, 0.2548296
      %v584 = vmul.f32 %v576, %v414
      %v585 = vmul.f32 %v577, %v429
      %v586 = vmul.f32 %v578, %v444
      %v587 = vmul.f32 %v579, %v459
      %v588 = vmul.f32 %v580, %v474
      %v589 = vmul.f32 %v581, %v489
      %v590 = vmul.f32 %v582, %v504
      %v591 = vmul.f32 %v583, %v519
      %v592 = vsub.f32 0.0, %v376
      %v593 = vsub.f32 0.0, %v377
      %v594 = vsub.f32 0.0, %v378
      %v595 = vsub.f32 0.0, %v379
      %v596 = vsub.f32 0.0, %v380
      %v597 = vsub.f32 0.0, %v381
      %v598 = vsub.f32 0.0, %v382
      %v599 = vsub.f32 0.0, %v383
      %v600 = vmul.f32 %v592, %v376
      %v601 = vmul.f32 %v593, %v377
      %v602 = vmul.f32 %v594, %v378
      %v603 = vmul.f32 %v595, %v379
      %v604 = vmul.f32 %v596, %v380
      %v605 = vmul.f32 %v597, %v381
      %v606 = vmul.f32 %v598, %v382
      %v607 = vmul.f32 %v599, %v383
      %v608 = vmul.f32 %v600, 1.442695
      %v609 = vpow.pop %v608
      %v610 = vmul.f32 %v601, 1.442695
      %v611 = vpow.pop %v610
      %v612 = vmul.f32 %v602, 1.442695
      %v613 = vpow.pop %v612
      %v614 = vmul.f32 %v603, 1.442695
      %v615 = vpow.pop %v614
      %v616 = vmul.f32 %v604, 1.442695
      %v617 = vpow.pop %v616
      %v618 = vmul.f32 %v605, 1.442695
      %v619 = vpow.pop %v618
      %v620 = vmul.f32 %v606, 1.442695
      %v621 = vpow.pop %v620
      %v622 = vmul.f32 %v607, 1.442695
      %v623 = vpow.pop %v622
      %v624 = vmul.f32 %v584, %v609
      %v625 = vmul.f32 %v585, %v611
      %v626 = vmul.f32 %v586, %v613
      %v627 = vmul.f32 %v587, %v615
      %v628 = vmul.f32 %v588, %v617
      %v629 = vmul.f32 %v589, %v619
      %v630 = vmul.f32 %v590, %v621
      %v631 = vmul.f32 %v591, %v623
      %v632 = vsub.f32 1.0, %v624
      %v633 = vsub.f32 1.0, %v625
      %v634 = vsub.f32 1.0, %v626
      %v635 = vsub.f32 1.0, %v627
      %v636 = vsub.f32 1.0, %v628
      %v637 = vsub.f32 1.0, %v629
      %v638 = vsub.f32 1.0, %v630
      %v639 = vsub.f32 1.0, %v631
      %v640 = vmul.f32 %v368, %v632
      %v641 = vmul.f32 %v369, %v633
      %v642 = vmul.f32 %v370, %v634
      %v643 = vmul.f32 %v371, %v635
      %v644 = vmul.f32 %v372, %v636
      %v645 = vmul.f32 %v373, %v637
      %v646 = vmul.f32 %v374, %v638
      %v647 = vmul.f32 %v375, %v639
      %v648 = vadd.f32 %v640, 1.0
      %v649 = vadd.f32 %v641, 1.0
      %v650 = vadd.f32 %v642, 1.0
      %v651 = vadd.f32 %v643, 1.0
      %v652 = vadd.f32 %v644, 1.0
      %v653 = vadd.f32 %v645, 1.0
      %v654 = vadd.f32 %v646, 1.0
      %v655 = vadd.f32 %v647, 1.0
      %v656 = vmul.f32 %v344, %v648
      %v657 = vmul.f32 %v345, %v649
      %v658 = vmul.f32 %v346, %v650
      %v659 = vmul.f32 %v347, %v651
      %v660 = vmul.f32 %v348, %v652
      %v661 = vmul.f32 %v349, %v653
      %v662 = vmul.f32 %v350, %v654
      %v663 = vmul.f32 %v351, %v655
      %664 = vst [vmem:[%s174] sm:$0xff] %v656
      %665 = vst [vmem:[%s174 + $0x8] sm:$0xff] %v657
      %666 = vst [vmem:[%s174 + $0x10] sm:$0xff] %v658
      %667 = vst [vmem:[%s174 + $0x18] sm:$0xff] %v659
      %668 = vst [vmem:[%s174 + $0x20] sm:$0xff] %v660
      %669 = vst [vmem:[%s174 + $0x28] sm:$0xff] %v661
      %670 = vst [vmem:[%s174 + $0x30] sm:$0xff] %v662
      %671 = vst [vmem:[%s174 + $0x38] sm:$0xff] %v663
      %s672 = smul.u32 2, %s14
      %p673 = scmp.lt.s32.totalorder %s672, 3
      %s674 = scalar_select %p673, %s672, 3
      %s675 = smul.addr %s674, 4
      %s676 = smul.addr %s675, 8
      %s677 = scalar_lea.vmem %s3, %s676
      // Predicated region
      $region33: #{image_encoder_forward.25} parent=31 // pred_check
        %p678 = pneg %p100
      $region34: #{image_encoder_forward.25} parent=31 // pred_check_branch
        %680 = sbr.rel (%p678) target = $region36
      $region35: #{image_encoder_forward.25} parent=31 // pred_region
        %s681 = smul.u32 2, %s14
      $region36: #{image_encoder_forward.25} parent=31 // pred_fallthru
        _
    $region32: #{image_encoder_forward.25} parent=5 // pred_fallthru
      _
    %p682 = scmp.le.s32.totalorder 2, %s9
    // Predicated region
    $region37: #{image_encoder_forward.25} parent=5 // pred_check
      %p683 = pneg %p682
    $region38: #{image_encoder_forward.25} parent=5 // pred_check_branch
      %685 = sbr.rel (%p683) target = $region40
    $region39: #{image_encoder_forward.25} parent=5 // pred_region
      %s686 = ssub.s32 %s9, 2
      // Predicated region
      $region41: #{image_encoder_forward.25} parent=39 // pred_check
        %p687 = pneg %p106
      $region42: #{image_encoder_forward.25} parent=39 // pred_check_branch
        %689 = sbr.rel (%p687) target = $region44
      $region43: #{image_encoder_forward.25} parent=39 // pred_region
        %s690 = smul.u32 2, %s15
        %p691 = scmp.lt.s32.totalorder %s690, 3
        %s692 = scalar_select %p691, %s690, 3
        %s693 = smul.addr %s692, 4
        %s694 = smul.addr %s693, 8
        %s695 = scalar_lea.vmem %s3, %s694
      $region44: #{image_encoder_forward.25} parent=39 // pred_fallthru
        _
    $region40: #{image_encoder_forward.25} parent=5 // pred_fallthru
      _
  $region6: #{image_encoder_forward.25} parent=0 // loop_footer
    %s13 = sadd.s32 1, %s9
  $region7: #{image_encoder_forward.25} parent=0 // loop_footer_branch
    %8 = sbr.rel target = $region3
  $region8: #{image_encoder_forward.25} parent=0 // loop_exit
    _

// kernel: image_encoder_forward.30
$region0: #{image_encoder_forward.30}
  #allocation0 [shape = 'u32[]', space=smem, size = 0x4, offset = 0x4, fixed_abs, tag = 'smem constant byte address 0x4 - core index']
  #allocation1 [shape = 'u32[72,128]{1,0:T(1,128)}', space=vmem, size = 0x9000, scoped, tag = 'internal scratch']
  %s0 = inlined_call_operand.vmem [shape: f32[32,128], index: 0, kind: input, shape index: {}]
  %s1 = inlined_call_operand.vmem [shape: f32[128,128], index: 1, kind: input, shape index: {}]
  %s2 = inlined_call_operand.vmem [shape: f32[1,128], index: 2, kind: input, shape index: {}]
  %s3 = inlined_call_operand.vmem [shape: f32[32,128], index: 3, kind: input, shape index: {}]
  %s4 = inlined_call_operand.vmem [shape: f32[32,128], index: 4, kind: output, shape index: {}]
  %s5 = sld [smem:[#allocation0]]
  $region49: #{image_encoder_forward.30} parent=0
    _
  %s7 = ssub.s32 1, %s5
  %s8 = scalar_select 0, %s7, %s5
  loop: start=0, step=1, limit=4
  $region2: #{image_encoder_forward.30} parent=0 // loop_pre_header
    _
  $region3: #{image_encoder_forward.30} parent=0 // loop_header
    %s10 = sphi 0, %s14
    %p11 = scmp.ge.s32.totalorder %s10, 4
    %s20 = sphi 0, %s22
    %s23 = sphi 0, %s20
    %s24 = sphi 0, %s23
    %s40 = sphi 0, %s24
    %s44 = sphi 0, %s44
    %s46 = sphi 0, %s44
    %s47 = sphi 0, %s46
    %s61 = sphi 0, %s47
    %s65 = sphi 0, %s65
    %s67 = sphi 0, %s65
    %s68 = sphi 0, %s67
    %s82 = sphi 0, %s68
    %s88 = sphi 0, %s90
    %s91 = sphi 0, %s88
    %s92 = sphi 0, %s91
    %s108 = sphi 0, %s92
    %s114 = sphi 0, %s116
    %s117 = sphi 0, %s114
    %s118 = sphi 0, %s117
    %s134 = sphi 0, %s118
  $region4: #{image_encoder_forward.30} parent=0 // loop_header_branch
    %13 = sbr.rel (%p11) target = $region8
  $region5: #{image_encoder_forward.30} parent=0 // loop_body
    %s15 = ssub.s32 %s10, 1
    %s16 = ssub.s32 %s10, 2
    %s17 = sadd.s32 %s10, 1
    %s18 = ssub.s32 %s10, %s17
    %p19 = scmp.eq.s32.totalorder %s18, 0
    %s21 = sadd.s32 %s20, 1
    %s22 = scalar_select %p19, %s20, %s21
    %p25 = pneg %p19
    %p26 = scmp.eq.s32.totalorder %s10, 1
    %p27 = por %p25, %p26
    %p28 = scmp.ne.s32.totalorder %s20, %s23
    %p29 = scmp.eq.s32.totalorder %s10, 0
    %p30 = por %p28, %p29
    %p31 = scmp.ne.s32.totalorder %s20, %s23
    %p32 = scmp.eq.s32.totalorder %s15, 1
    %p33 = por %p31, %p32
    %p34 = scmp.ne.s32.totalorder %s23, %s24
    %p35 = scmp.eq.s32.totalorder %s15, 0
    %p36 = por %p34, %p35
    %p37 = scmp.ne.s32.totalorder %s23, %s24
    %p38 = scmp.eq.s32.totalorder %s16, 1
    %p39 = por %p37, %p38
    %p41 = scmp.ne.s32.totalorder %s24, %s40
    %p42 = scmp.eq.s32.totalorder %s16, 0
    %p43 = por %p41, %p42
    %s45 = sadd.s32 %s44, 1
    %p48 = scmp.eq.s32.totalorder %s10, 1
    %p49 = scmp.ne.s32.totalorder %s44, %s46
    %p50 = scmp.eq.s32.totalorder %s10, 0
    %p51 = por %p49, %p50
    %p52 = scmp.ne.s32.totalorder %s44, %s46
    %p53 = scmp.eq.s32.totalorder %s15, 1
    %p54 = por %p52, %p53
    %p55 = scmp.ne.s32.totalorder %s46, %s47
    %p56 = scmp.eq.s32.totalorder %s15, 0
    %p57 = por %p55, %p56
    %p58 = scmp.ne.s32.totalorder %s46, %s47
    %p59 = scmp.eq.s32.totalorder %s16, 1
    %p60 = por %p58, %p59
    %p62 = scmp.ne.s32.totalorder %s47, %s61
    %p63 = scmp.eq.s32.totalorder %s16, 0
    %p64 = por %p62, %p63
    %s66 = sadd.s32 %s65, 1
    %p69 = scmp.eq.s32.totalorder %s10, 1
    %p70 = scmp.ne.s32.totalorder %s65, %s67
    %p71 = scmp.eq.s32.totalorder %s10, 0
    %p72 = por %p70, %p71
    %p73 = scmp.ne.s32.totalorder %s65, %s67
    %p74 = scmp.eq.s32.totalorder %s15, 1
    %p75 = por %p73, %p74
    %p76 = scmp.ne.s32.totalorder %s67, %s68
    %p77 = scmp.eq.s32.totalorder %s15, 0
    %p78 = por %p76, %p77
    %p79 = scmp.ne.s32.totalorder %s67, %s68
    %p80 = scmp.eq.s32.totalorder %s16, 1
    %p81 = por %p79, %p80
    %p83 = scmp.ne.s32.totalorder %s68, %s82
    %p84 = scmp.eq.s32.totalorder %s16, 0
    %p85 = por %p83, %p84
    %s86 = ssub.s32 %s10, %s17
    %p87 = scmp.eq.s32.totalorder %s86, 0
    %s89 = sadd.s32 %s88, 1
    %s90 = scalar_select %p87, %s88, %s89
    %p93 = pneg %p87
    %p94 = scmp.eq.s32.totalorder %s10, 1
    %p95 = por %p93, %p94
    %p96 = scmp.ne.s32.totalorder %s88, %s91
    %p97 = scmp.eq.s32.totalorder %s10, 0
    %p98 = por %p96, %p97
    %p99 = scmp.ne.s32.totalorder %s88, %s91
    %p100 = scmp.eq.s32.totalorder %s15, 1
    %p101 = por %p99, %p100
    %p102 = scmp.ne.s32.totalorder %s91, %s92
    %p103 = scmp.eq.s32.totalorder %s15, 0
    %p104 = por %p102, %p103
    %p105 = scmp.ne.s32.totalorder %s91, %s92
    %p106 = scmp.eq.s32.totalorder %s16, 1
    %p107 = por %p105, %p106
    %p109 = scmp.ne.s32.totalorder %s92, %s108
    %p110 = scmp.eq.s32.totalorder %s16, 0
    %p111 = por %p109, %p110
    %s112 = ssub.s32 %s10, %s17
    %p113 = scmp.eq.s32.totalorder %s112, 0
    %s115 = sadd.s32 %s114, 1
    %s116 = scalar_select %p113, %s114, %s115
    %p119 = pneg %p113
    %p120 = scmp.eq.s32.totalorder %s10, 1
    %p121 = por %p119, %p120
    %p122 = scmp.ne.s32.totalorder %s114, %s117
    %p123 = scmp.eq.s32.totalorder %s10, 0
    %p124 = por %p122, %p123
    %p125 = scmp.ne.s32.totalorder %s114, %s117
    %p126 = scmp.eq.s32.totalorder %s15, 1
    %p127 = por %p125, %p126
    %p128 = scmp.ne.s32.totalorder %s117, %s118
    %p129 = scmp.eq.s32.totalorder %s15, 0
    %p130 = por %p128, %p129
    %p131 = scmp.ne.s32.totalorder %s117, %s118
    %p132 = scmp.eq.s32.totalorder %s16, 1
    %p133 = por %p131, %p132
    %p135 = scmp.ne.s32.totalorder %s118, %s134
    %p136 = scmp.eq.s32.totalorder %s16, 0
    %p137 = por %p135, %p136
    %p138 = scmp.le.s32.totalorder 1, %s10
    %p139 = scmp.lt.s32.totalorder %s10, 3
    %p140 = pnand %p138, %p139
    %p141 = pneg %p140
    // Predicated region
    $region9: #{image_encoder_forward.30} parent=5 // pred_check
      _
    $region10: #{image_encoder_forward.30} parent=5 // pred_check_branch
      %143 = sbr.rel (%p140) target = $region12
    $region11: #{image_encoder_forward.30} parent=5 // pred_region
      %s144 = ssub.s32 %s10, 1
      // Predicated region
      $region13: #{image_encoder_forward.30} parent=11 // pred_check
        %p145 = pneg %p57
      $region14: #{image_encoder_forward.30} parent=11 // pred_check_branch
        %147 = sbr.rel (%p145) target = $region16
      $region15: #{image_encoder_forward.30} parent=11 // pred_region
        _
      $region16: #{image_encoder_forward.30} parent=11 // pred_fallthru
        _
      // Predicated region
      $region17: #{image_encoder_forward.30} parent=11 // pred_check
        %p148 = pneg %p78
      $region18: #{image_encoder_forward.30} parent=11 // pred_check_branch
        %150 = sbr.rel (%p148) target = $region20
      $region19: #{image_encoder_forward.30} parent=11 // pred_region
        _
      $region20: #{image_encoder_forward.30} parent=11 // pred_fallthru
        _
    $region12: #{image_encoder_forward.30} parent=5 // pred_fallthru
      _
    %p151 = scmp.lt.s32.totalorder %s10, 2
    // Predicated region
    $region21: #{image_encoder_forward.30} parent=5 // pred_check
      %p152 = pneg %p151
    $region22: #{image_encoder_forward.30} parent=5 // pred_check_branch
      %154 = sbr.rel (%p152) target = $region24
    $region23: #{image_encoder_forward.30} parent=5 // pred_region
      // Predicated region
      $region25: #{image_encoder_forward.30} parent=23 // pred_check
        %p155 = pneg %p30
      $region26: #{image_encoder_forward.30} parent=23 // pred_check_branch
        %157 = sbr.rel (%p155) target = $region28
      $region27: #{image_encoder_forward.30} parent=23 // pred_region
        %s158 = smul.u32 2, %s10
        %p159 = scmp.lt.s32.totalorder %s158, 3
        %s160 = scalar_select %p159, %s158, 3
        %s161 = smul.addr %s160, 8
        %s162 = scalar_lea.vmem %s0, %s161
        %s163 = smul.u32 2, %s10
      $region28: #{image_encoder_forward.30} parent=23 // pred_fallthru
        _
      // Predicated region
      $region29: #{image_encoder_forward.30} parent=23 // pred_check
        %p164 = pneg %p98
      $region30: #{image_encoder_forward.30} parent=23 // pred_check_branch
        %166 = sbr.rel (%p164) target = $region32
      $region31: #{image_encoder_forward.30} parent=23 // pred_region
        %s167 = smul.u32 2, %s10
        %p168 = scmp.lt.s32.totalorder %s167, 3
        %s169 = scalar_select %p168, %s167, 3
        %s170 = smul.addr %s169, 8
        %s171 = scalar_lea.vmem %s3, %s170
        %s172 = smul.u32 2, %s10
      $region32: #{image_encoder_forward.30} parent=23 // pred_fallthru
        _
    $region24: #{image_encoder_forward.30} parent=5 // pred_fallthru
      _
    %p173 = scmp.le.s32.totalorder 1, %s10
    %p174 = scmp.lt.s32.totalorder %s10, 3
    %p175 = pnand %p173, %p174
    %p176 = pneg %p175
    // Predicated region
    $region33: #{image_encoder_forward.30} parent=5 // pred_check
      _
    $region34: #{image_encoder_forward.30} parent=5 // pred_check_branch
      %178 = sbr.rel (%p175) target = $region36
    $region35: #{image_encoder_forward.30} parent=5 // pred_region
      %s179 = ssub.s32 %s10, 1
      %s180 = smul.u32 2, %s15
      %p181 = scmp.lt.s32.totalorder %s180, 3
      %s182 = scalar_select %p181, %s180, 3
      %s183 = smul.addr %s182, 8
      %s184 = scalar_lea.vmem %s0, %s183
      %p185 = pneg %p36
      %p186 = pneg %p33
      %p187 = pneg %p57
      %p188 = pneg %p54
      %p189 = pneg %p78
      %p190 = pneg %p75
      %s191 = smul.u32 2, %s15
      %p192 = scmp.lt.s32.totalorder %s191, 3
      %s193 = scalar_select %p192, %s191, 3
      %s194 = smul.addr %s193, 8
      %s195 = scalar_lea.vmem %s3, %s194
      %p196 = pneg %p104
      %p197 = pneg %p101
      %p198 = pneg %p130
      %p199 = pneg %p127
      %s200 = smul.u32 2, %s15
      %p201 = scmp.lt.s32.totalorder %s200, 3
      %s202 = scalar_select %p201, %s200, 3
      %s203 = smul.addr %s202, 8
      %s204 = scalar_lea.vmem %s4, %s203
      %s205 = smul.u32 2, %s15
      %p206 = scmp.lt.s32.totalorder %s205, 3
      %s207 = scalar_select %p206, %s205, 3
      %s208 = smul.addr %s207, 8
      %s209 = scalar_lea.vmem %s0, %s208
      %s210 = smul.u32 2, %s15
      %s211 = smul.u32 2, %s15
      %p212 = scmp.lt.s32.totalorder %s211, 3
      %s213 = scalar_select %p212, %s211, 3
      %s214 = smul.addr %s213, 8
      %s215 = scalar_lea.vmem %s3, %s214
      %s216 = smul.u32 2, %s15
      %s217 = smul.u32 2, %s15
      %p218 = scmp.lt.s32.totalorder %s217, 3
      %s219 = scalar_select %p218, %s217, 3
      %s220 = smul.addr %s219, 8
      %s221 = scalar_lea.vmem %s4, %s220
      %s222 = smul.u32 2, %s15
      %v223 = vld [vmem:[%s209] sm:$0xff]
      %v224 = vld [vmem:[%s209 + $0x8] sm:$0xff]
      %v225 = vld [vmem:[%s1] sm:$0xff]
      %v226 = vld [vmem:[%s1 + $0x8] sm:$0xff]
      %v227 = vld [vmem:[%s1 + $0x10] sm:$0xff]
      %v228 = vld [vmem:[%s1 + $0x18] sm:$0xff]
      %v229 = vld [vmem:[%s1 + $0x20] sm:$0xff]
      %v230 = vld [vmem:[%s1 + $0x28] sm:$0xff]
      %v231 = vld [vmem:[%s1 + $0x30] sm:$0xff]
      %v232 = vld [vmem:[%s1 + $0x38] sm:$0xff]
      %v233 = vld [vmem:[%s1 + $0x40] sm:$0xff]
      %v234 = vld [vmem:[%s1 + $0x48] sm:$0xff]
      %v235 = vld [vmem:[%s1 + $0x50] sm:$0xff]
      %v236 = vld [vmem:[%s1 + $0x58] sm:$0xff]
      %v237 = vld [vmem:[%s1 + $0x60] sm:$0xff]
      %v238 = vld [vmem:[%s1 + $0x68] sm:$0xff]
      %v239 = vld [vmem:[%s1 + $0x70] sm:$0xff]
      %v240 = vld [vmem:[%s1 + $0x78] sm:$0xff]
      %v241 = vld [vmem:[%s2] sm:$0x1]
      %v243 = vperm.slane %v241, 0
      %245 = vmatpush.msra.mxu0 %v240
      %246 = vmatpush.msra.mxu0 %v239
      %247 = vmatpush.msra.mxu0 %v238
      %248 = vmatpush.msra.mxu0 %v237
      %249 = vmatpush.msra.mxu0 %v236
      %250 = vmatpush.msra.mxu0 %v235
      %251 = vmatpush.msra.mxu0 %v234
      %252 = vmatpush.msra.mxu0 %v233
      %253 = vmatpush.msra.mxu0 %v232
      %254 = vmatpush.msra.mxu0 %v231
      %255 = vmatpush.msra.mxu0 %v230
      %256 = vmatpush.msra.mxu0 %v229
      %257 = vmatpush.msra.mxu0 %v228
      %258 = vmatpush.msra.mxu0 %v227
      %259 = vmatpush.msra.mxu0 %v226
      %260 = vmatpush.msra.mxu0 %v225
      %261 = vmatmul.f32.gmra.mxu0 %v223
      %v262 = vpop.f32.mrf.mxu0
      %v263 = vadd.f32 %v243, %v262
      %264 = vmatmul.f32.gmra.mxu0 %v224
      %v265 = vpop.f32.mrf.mxu0
      %v266 = vadd.f32 %v243, %v265
      %267 = vdwg.mxu0
      %v268 = vld [vmem:[%s215] sm:$0xff]
      %v269 = vld [vmem:[%s215 + $0x8] sm:$0xff]
      %v270 = vadd.f32 %v263, %v268
      %v271 = vadd.f32 %v266, %v269
      %272 = vst [vmem:[%s221] sm:$0xff] %v270
      %273 = vst [vmem:[%s221 + $0x8] sm:$0xff] %v271
      %s274 = smul.u32 2, %s15
      %p275 = scmp.lt.s32.totalorder %s274, 3
      %s276 = scalar_select %p275, %s274, 3
      %s277 = smul.addr %s276, 8
      %s278 = scalar_lea.vmem %s4, %s277
      // Predicated region
      $region37: #{image_encoder_forward.30} parent=35 // pred_check
        %p279 = pneg %p127
      $region38: #{image_encoder_forward.30} parent=35 // pred_check_branch
        %281 = sbr.rel (%p279) target = $region40
      $region39: #{image_encoder_forward.30} parent=35 // pred_region
        %s282 = smul.u32 2, %s15
      $region40: #{image_encoder_forward.30} parent=35 // pred_fallthru
        _
    $region36: #{image_encoder_forward.30} parent=5 // pred_fallthru
      _
    %p283 = scmp.le.s32.totalorder 2, %s10
    // Predicated region
    $region41: #{image_encoder_forward.30} parent=5 // pred_check
      %p284 = pneg %p283
    $region42: #{image_encoder_forward.30} parent=5 // pred_check_branch
      %286 = sbr.rel (%p284) target = $region44
    $region43: #{image_encoder_forward.30} parent=5 // pred_region
      %s287 = ssub.s32 %s10, 2
      // Predicated region
      $region45: #{image_encoder_forward.30} parent=43 // pred_check
        %p288 = pneg %p133
      $region46: #{image_encoder_forward.30} parent=43 // pred_check_branch
        %290 = sbr.rel (%p288) target = $region48
      $region47: #{image_encoder_forward.30} parent=43 // pred_region
        %s291 = smul.u32 2, %s16
        %p292 = scmp.lt.s32.totalorder %s291, 3
        %s293 = scalar_select %p292, %s291, 3
        %s294 = smul.addr %s293, 8
        %s295 = scalar_lea.vmem %s4, %s294
      $region48: #{image_encoder_forward.30} parent=43 // pred_fallthru
        _
    $region44: #{image_encoder_forward.30} parent=5 // pred_fallthru
      _
  $region6: #{image_encoder_forward.30} parent=0 // loop_footer
    %s14 = sadd.s32 1, %s10
  $region7: #{image_encoder_forward.30} parent=0 // loop_footer_branch
    %9 = sbr.rel target = $region3
  $region8: #{image_encoder_forward.30} parent=0 // loop_exit
    _

// kernel: image_encoder_forward.35
$region0: #{image_encoder_forward.35}
  #allocation0 [shape = 'u32[]', space=smem, size = 0x4, offset = 0x4, fixed_abs, tag = 'smem constant byte address 0x4 - core index']
  #allocation1 [shape = 'u32[72,128]{1,0:T(1,128)}', space=vmem, size = 0x9000, scoped, tag = 'internal scratch']
  %s0 = inlined_call_operand.vmem [shape: f32[32,128], index: 0, kind: input, shape index: {}]
  %s1 = inlined_call_operand.vmem [shape: f32[1,128], index: 1, kind: input, shape index: {}]
  %s2 = inlined_call_operand.vmem [shape: f32[1,128], index: 2, kind: input, shape index: {}]
  %s3 = inlined_call_operand.vmem [shape: f32[32,128], index: 3, kind: output, shape index: {}]
  %s4 = sld [smem:[#allocation0]]
  $region45: #{image_encoder_forward.35} parent=0
    _
  %s6 = ssub.s32 1, %s4
  %s7 = scalar_select 0, %s6, %s4
  loop: start=0, step=1, limit=4
  $region2: #{image_encoder_forward.35} parent=0 // loop_pre_header
    _
  $region3: #{image_encoder_forward.35} parent=0 // loop_header
    %s9 = sphi 0, %s13
    %p10 = scmp.ge.s32.totalorder %s9, 4
    %s19 = sphi 0, %s21
    %s22 = sphi 0, %s19
    %s23 = sphi 0, %s22
    %s39 = sphi 0, %s23
    %s43 = sphi 0, %s43
    %s45 = sphi 0, %s43
    %s46 = sphi 0, %s45
    %s60 = sphi 0, %s46
    %s64 = sphi 0, %s64
    %s66 = sphi 0, %s64
    %s67 = sphi 0, %s66
    %s81 = sphi 0, %s67
    %s87 = sphi 0, %s89
    %s90 = sphi 0, %s87
    %s91 = sphi 0, %s90
    %s107 = sphi 0, %s91
  $region4: #{image_encoder_forward.35} parent=0 // loop_header_branch
    %12 = sbr.rel (%p10) target = $region8
  $region5: #{image_encoder_forward.35} parent=0 // loop_body
    %s14 = ssub.s32 %s9, 1
    %s15 = ssub.s32 %s9, 2
    %s16 = sadd.s32 %s9, 1
    %s17 = ssub.s32 %s9, %s16
    %p18 = scmp.eq.s32.totalorder %s17, 0
    %s20 = sadd.s32 %s19, 1
    %s21 = scalar_select %p18, %s19, %s20
    %p24 = pneg %p18
    %p25 = scmp.eq.s32.totalorder %s9, 1
    %p26 = por %p24, %p25
    %p27 = scmp.ne.s32.totalorder %s19, %s22
    %p28 = scmp.eq.s32.totalorder %s9, 0
    %p29 = por %p27, %p28
    %p30 = scmp.ne.s32.totalorder %s19, %s22
    %p31 = scmp.eq.s32.totalorder %s14, 1
    %p32 = por %p30, %p31
    %p33 = scmp.ne.s32.totalorder %s22, %s23
    %p34 = scmp.eq.s32.totalorder %s14, 0
    %p35 = por %p33, %p34
    %p36 = scmp.ne.s32.totalorder %s22, %s23
    %p37 = scmp.eq.s32.totalorder %s15, 1
    %p38 = por %p36, %p37
    %p40 = scmp.ne.s32.totalorder %s23, %s39
    %p41 = scmp.eq.s32.totalorder %s15, 0
    %p42 = por %p40, %p41
    %s44 = sadd.s32 %s43, 1
    %p47 = scmp.eq.s32.totalorder %s9, 1
    %p48 = scmp.ne.s32.totalorder %s43, %s45
    %p49 = scmp.eq.s32.totalorder %s9, 0
    %p50 = por %p48, %p49
    %p51 = scmp.ne.s32.totalorder %s43, %s45
    %p52 = scmp.eq.s32.totalorder %s14, 1
    %p53 = por %p51, %p52
    %p54 = scmp.ne.s32.totalorder %s45, %s46
    %p55 = scmp.eq.s32.totalorder %s14, 0
    %p56 = por %p54, %p55
    %p57 = scmp.ne.s32.totalorder %s45, %s46
    %p58 = scmp.eq.s32.totalorder %s15, 1
    %p59 = por %p57, %p58
    %p61 = scmp.ne.s32.totalorder %s46, %s60
    %p62 = scmp.eq.s32.totalorder %s15, 0
    %p63 = por %p61, %p62
    %s65 = sadd.s32 %s64, 1
    %p68 = scmp.eq.s32.totalorder %s9, 1
    %p69 = scmp.ne.s32.totalorder %s64, %s66
    %p70 = scmp.eq.s32.totalorder %s9, 0
    %p71 = por %p69, %p70
    %p72 = scmp.ne.s32.totalorder %s64, %s66
    %p73 = scmp.eq.s32.totalorder %s14, 1
    %p74 = por %p72, %p73
    %p75 = scmp.ne.s32.totalorder %s66, %s67
    %p76 = scmp.eq.s32.totalorder %s14, 0
    %p77 = por %p75, %p76
    %p78 = scmp.ne.s32.totalorder %s66, %s67
    %p79 = scmp.eq.s32.totalorder %s15, 1
    %p80 = por %p78, %p79
    %p82 = scmp.ne.s32.totalorder %s67, %s81
    %p83 = scmp.eq.s32.totalorder %s15, 0
    %p84 = por %p82, %p83
    %s85 = ssub.s32 %s9, %s16
    %p86 = scmp.eq.s32.totalorder %s85, 0
    %s88 = sadd.s32 %s87, 1
    %s89 = scalar_select %p86, %s87, %s88
    %p92 = pneg %p86
    %p93 = scmp.eq.s32.totalorder %s9, 1
    %p94 = por %p92, %p93
    %p95 = scmp.ne.s32.totalorder %s87, %s90
    %p96 = scmp.eq.s32.totalorder %s9, 0
    %p97 = por %p95, %p96
    %p98 = scmp.ne.s32.totalorder %s87, %s90
    %p99 = scmp.eq.s32.totalorder %s14, 1
    %p100 = por %p98, %p99
    %p101 = scmp.ne.s32.totalorder %s90, %s91
    %p102 = scmp.eq.s32.totalorder %s14, 0
    %p103 = por %p101, %p102
    %p104 = scmp.ne.s32.totalorder %s90, %s91
    %p105 = scmp.eq.s32.totalorder %s15, 1
    %p106 = por %p104, %p105
    %p108 = scmp.ne.s32.totalorder %s91, %s107
    %p109 = scmp.eq.s32.totalorder %s15, 0
    %p110 = por %p108, %p109
    %p111 = scmp.le.s32.totalorder 1, %s9
    %p112 = scmp.lt.s32.totalorder %s9, 3
    %p113 = pnand %p111, %p112
    %p114 = pneg %p113
    // Predicated region
    $region9: #{image_encoder_forward.35} parent=5 // pred_check
      _
    $region10: #{image_encoder_forward.35} parent=5 // pred_check_branch
      %116 = sbr.rel (%p113) target = $region12
    $region11: #{image_encoder_forward.35} parent=5 // pred_region
      %s117 = ssub.s32 %s9, 1
      // Predicated region
      $region13: #{image_encoder_forward.35} parent=11 // pred_check
        %p118 = pneg %p56
      $region14: #{image_encoder_forward.35} parent=11 // pred_check_branch
        %120 = sbr.rel (%p118) target = $region16
      $region15: #{image_encoder_forward.35} parent=11 // pred_region
        _
      $region16: #{image_encoder_forward.35} parent=11 // pred_fallthru
        _
      // Predicated region
      $region17: #{image_encoder_forward.35} parent=11 // pred_check
        %p121 = pneg %p77
      $region18: #{image_encoder_forward.35} parent=11 // pred_check_branch
        %123 = sbr.rel (%p121) target = $region20
      $region19: #{image_encoder_forward.35} parent=11 // pred_region
        _
      $region20: #{image_encoder_forward.35} parent=11 // pred_fallthru
        _
    $region12: #{image_encoder_forward.35} parent=5 // pred_fallthru
      _
    %p124 = scmp.lt.s32.totalorder %s9, 2
    // Predicated region
    $region21: #{image_encoder_forward.35} parent=5 // pred_check
      %p125 = pneg %p124
    $region22: #{image_encoder_forward.35} parent=5 // pred_check_branch
      %127 = sbr.rel (%p125) target = $region24
    $region23: #{image_encoder_forward.35} parent=5 // pred_region
      // Predicated region
      $region25: #{image_encoder_forward.35} parent=23 // pred_check
        %p128 = pneg %p29
      $region26: #{image_encoder_forward.35} parent=23 // pred_check_branch
        %130 = sbr.rel (%p128) target = $region28
      $region27: #{image_encoder_forward.35} parent=23 // pred_region
        %s131 = smul.u32 2, %s9
        %p132 = scmp.lt.s32.totalorder %s131, 3
        %s133 = scalar_select %p132, %s131, 3
        %s134 = smul.addr %s133, 8
        %s135 = scalar_lea.vmem %s0, %s134
        %s136 = smul.u32 2, %s9
      $region28: #{image_encoder_forward.35} parent=23 // pred_fallthru
        _
    $region24: #{image_encoder_forward.35} parent=5 // pred_fallthru
      _
    %p137 = scmp.le.s32.totalorder 1, %s9
    %p138 = scmp.lt.s32.totalorder %s9, 3
    %p139 = pnand %p137, %p138
    %p140 = pneg %p139
    // Predicated region
    $region29: #{image_encoder_forward.35} parent=5 // pred_check
      _
    $region30: #{image_encoder_forward.35} parent=5 // pred_check_branch
      %142 = sbr.rel (%p139) target = $region32
    $region31: #{image_encoder_forward.35} parent=5 // pred_region
      %s143 = ssub.s32 %s9, 1
      %s144 = smul.u32 2, %s14
      %p145 = scmp.lt.s32.totalorder %s144, 3
      %s146 = scalar_select %p145, %s144, 3
      %s147 = smul.addr %s146, 8
      %s148 = scalar_lea.vmem %s0, %s147
      %p149 = pneg %p35
      %p150 = pneg %p32
      %p151 = pneg %p56
      %p152 = pneg %p53
      %p153 = pneg %p77
      %p154 = pneg %p74
      %p155 = pneg %p103
      %p156 = pneg %p100
      %s157 = smul.u32 2, %s14
      %p158 = scmp.lt.s32.totalorder %s157, 3
      %s159 = scalar_select %p158, %s157, 3
      %s160 = smul.addr %s159, 8
      %s161 = scalar_lea.vmem %s3, %s160
      %s162 = smul.u32 2, %s14
      %p163 = scmp.lt.s32.totalorder %s162, 3
      %s164 = scalar_select %p163, %s162, 3
      %s165 = smul.addr %s164, 8
      %s166 = scalar_lea.vmem %s0, %s165
      %s167 = smul.u32 2, %s14
      %s168 = smul.u32 2, %s14
      %p169 = scmp.lt.s32.totalorder %s168, 3
      %s170 = scalar_select %p169, %s168, 3
      %s171 = smul.addr %s170, 8
      %s172 = scalar_lea.vmem %s3, %s171
      %s173 = smul.u32 2, %s14
      %v174 = vld [vmem:[%s166] sm:$0xff]
      %v175 = vld [vmem:[%s166 + $0x8] sm:$0xff]
      %176 = vadd.xlane.f32.xlu0 %v174
      %v177 = vpop.xlane.xlu0 %176
      %178 = vadd.xlane.f32.xlu0 %v175
      %v179 = vpop.xlane.xlu0 %178
      %v180 = vrcp.pop 128.0
      %v181 = vmul.f32 128.0, %v180
      %v182 = vsub.f32 1.0, %v181
      %v183 = vmul.f32 %v180, %v182
      %v184 = vadd.f32 %v180, %v183
      %vm185 = vweird.f32 %v180
      %v186 = vsel %vm185, %v180, %v184
      %v187 = vmul.f32 %v177, %v186
      %v188 = vmul.f32 %v179, %v186
      %v189 = vsub.f32 %v174, %v187
      %v190 = vsub.f32 %v175, %v188
      %v191 = vmul.f32 %v189, %v189
      %v192 = vmul.f32 %v190, %v190
      %193 = vadd.xlane.f32.xlu0 %v191
      %v194 = vpop.xlane.xlu0 %193
      %195 = vadd.xlane.f32.xlu0 %v192
      %v196 = vpop.xlane.xlu0 %195
      %v197 = vmul.f32 %v194, %v186
      %v198 = vmul.f32 %v196, %v186
      %v199 = vadd.f32 %v197, 1e-06
      %v200 = vadd.f32 %v198, 1e-06
      %v201 = vrsqrt.pop %v199
      %v202 = vmul.f32 %v201, %v199
      %v203 = vmul.f32 %v202, %v201
      %v204 = vmul.f32 0.5, %v203
      %v205 = vsub.f32 1.5, %v204
      %v206 = vmul.f32 %v201, %v205
      %vm207 = vweird.f32 %v199
      %vm208 = vweird.f32 %v201
      %vm209 = vmor %vm207, %vm208
      %v210 = vsel %vm209, %v201, %v206
      %v211 = vrsqrt.pop %v200
      %v212 = vmul.f32 %v211, %v200
      %v213 = vmul.f32 %v212, %v211
      %v214 = vmul.f32 0.5, %v213
      %v215 = vsub.f32 1.5, %v214
      %v216 = vmul.f32 %v211, %v215
      %vm217 = vweird.f32 %v200
      %vm218 = vweird.f32 %v211
      %vm219 = vmor %vm217, %vm218
      %v220 = vsel %vm219, %v211, %v216
      %v221 = vmul.f32 %v189, %v210
      %v222 = vmul.f32 %v190, %v220
      %v223 = vld [vmem:[%s1] sm:$0x1]
      %v225 = vperm.slane %v223, 0
      %v227 = vmul.f32 %v221, %v225
      %v228 = vmul.f32 %v222, %v225
      %v229 = vld [vmem:[%s2] sm:$0x1]
      %v231 = vperm.slane %v229, 0
      %v233 = vadd.f32 %v227, %v231
      %v234 = vadd.f32 %v228, %v231
      %235 = vst [vmem:[%s172] sm:$0xff] %v233
      %236 = vst [vmem:[%s172 + $0x8] sm:$0xff] %v234
      %s237 = smul.u32 2, %s14
      %p238 = scmp.lt.s32.totalorder %s237, 3
      %s239 = scalar_select %p238, %s237, 3
      %s240 = smul.addr %s239, 8
      %s241 = scalar_lea.vmem %s3, %s240
      // Predicated region
      $region33: #{image_encoder_forward.35} parent=31 // pred_check
        %p242 = pneg %p100
      $region34: #{image_encoder_forward.35} parent=31 // pred_check_branch
        %244 = sbr.rel (%p242) target = $region36
      $region35: #{image_encoder_forward.35} parent=31 // pred_region
        %s245 = smul.u32 2, %s14
      $region36: #{image_encoder_forward.35} parent=31 // pred_fallthru
        _
    $region32: #{image_encoder_forward.35} parent=5 // pred_fallthru
      _
    %p246 = scmp.le.s32.totalorder 2, %s9
    // Predicated region
    $region37: #{image_encoder_forward.35} parent=5 // pred_check
      %p247 = pneg %p246
    $region38: #{image_encoder_forward.35} parent=5 // pred_check_branch
      %249 = sbr.rel (%p247) target = $region40
    $region39: #{image_encoder_forward.35} parent=5 // pred_region
      %s250 = ssub.s32 %s9, 2
      // Predicated region
      $region41: #{image_encoder_forward.35} parent=39 // pred_check
        %p251 = pneg %p106
      $region42: #{image_encoder_forward.35} parent=39 // pred_check_branch
        %253 = sbr.rel (%p251) target = $region44
      $region43: #{image_encoder_forward.35} parent=39 // pred_region
        %s254 = smul.u32 2, %s15
        %p255 = scmp.lt.s32.totalorder %s254, 3
        %s256 = scalar_select %p255, %s254, 3
        %s257 = smul.addr %s256, 8
        %s258 = scalar_lea.vmem %s3, %s257
      $region44: #{image_encoder_forward.35} parent=39 // pred_fallthru
        _
    $region40: #{image_encoder_forward.35} parent=5 // pred_fallthru
      _
  $region6: #{image_encoder_forward.35} parent=0 // loop_footer
    %s13 = sadd.s32 1, %s9
  $region7: #{image_encoder_forward.35} parent=0 // loop_footer_branch
    %8 = sbr.rel target = $region3
  $region8: #{image_encoder_forward.35} parent=0 // loop_exit
    _

// kernel: image_encoder_forward.29
$region0: #{image_encoder_forward.29}
  #allocation0 [shape = 'u32[]', space=smem, size = 0x4, offset = 0x4, fixed_abs, tag = 'smem constant byte address 0x4 - core index']
  #allocation1 [shape = 'u32[72,128]{1,0:T(1,128)}', space=vmem, size = 0x9000, scoped, tag = 'internal scratch']
  #allocation2 [shape = 'f32[4,16,1]{2,1,0:T(8,128)}', space=vmem, size = 0x8000, scoped, tag = 'scratch operand']
  #allocation3 [shape = 'f32[4,16,1]{2,1,0:T(8,128)}', space=vmem, size = 0x8000, scoped, tag = 'scratch operand']
  #allocation4 [shape = 'f32[4,16,32]{2,1,0:T(8,128)}', space=vmem, size = 0x8000, scoped, tag = 'scratch operand']
  %s0 = inlined_call_operand.vmem [shape: f32[2,16,384], index: 0, kind: input, shape index: {}, may-alias: {0,1,2}]
  %s1 = inlined_call_operand.vmem [shape: f32[2,16,384], index: 1, kind: input, shape index: {}, may-alias: {0,1,2}]
  %s2 = inlined_call_operand.vmem [shape: f32[2,16,384], index: 2, kind: input, shape index: {}, may-alias: {0,1,2}]
  %s3 = inlined_call_operand.vmem [shape: f32[2,16,128], index: 3, kind: output, shape index: {}]
  %s4 = sld [smem:[#allocation0]]
  $region167: #{image_encoder_forward.29} parent=0
    _
  %s6 = ssub.s32 1, %s4
  %s7 = scalar_select 0, %s6, %s4
  $region1: #{image_encoder_forward.29} parent=0
    #allocation5 [shape = 'u8[16384]{0}', space=vmem, size = 0x4000, scoped, tag = 'input window, operand 0']
    #allocation6 [shape = 'u8[16384]{0}', space=vmem, size = 0x4000, scoped, tag = 'input window, operand 1']
    #allocation7 [shape = 'u8[16384]{0}', space=vmem, size = 0x4000, scoped, tag = 'input window, operand 2']
    loop: start=0, step=1, limit=4
    $region2: #{image_encoder_forward.29} parent=1 // loop_pre_header
      _
    $region3: #{image_encoder_forward.29} parent=1 // loop_header
      %s9 = sphi 0, %s13
      %p10 = scmp.ge.s32.totalorder %s9, 4
      %s16 = sphi 0, %s42
      %s17 = sphi 0, %s38
      %s18 = sphi 0, %s34
      %s19 = sphi 0, %s30
      %s20 = sphi 0, %s16
      %s21 = sphi 0, %s17
      %s22 = sphi 0, %s18
      %s23 = sphi 0, %s19
      %s24 = sphi 0, %s20
      %s25 = sphi 0, %s21
      %s26 = sphi 0, %s22
      %s27 = sphi 0, %s23
      %s49 = sphi 0, %s51
      %s52 = sphi 0, %s49
      %s53 = sphi 0, %s52
      %s69 = sphi 0, %s53
      %s81 = sphi 0, %s83
      %s84 = sphi 0, %s81
      %s85 = sphi 0, %s84
      %s101 = sphi 0, %s85
      %s113 = sphi 0, %s115
      %s116 = sphi 0, %s113
      %s117 = sphi 0, %s116
      %s133 = sphi 0, %s117
      %s143 = sphi 0, %s145
      %s146 = sphi 0, %s143
      %s147 = sphi 0, %s146
      %s163 = sphi 0, %s147
    $region4: #{image_encoder_forward.29} parent=1 // loop_header_branch
      %12 = sbr.rel (%p10) target = $region8
    $region5: #{image_encoder_forward.29} parent=1 // loop_body
      %s14 = ssub.s32 %s9, 1
      %s15 = ssub.s32 %s9, 2
      %s28 = sadd.s32 1, %s19
      %p29 = scmp.ge.s32.totalorder %s28, 1
      %s30 = scalar_select %p29, 0, %s28
      %s31 = sadd.s32 1, %s18
      %s32 = scalar_select %p29, %s31, %s18
      %p33 = scmp.ge.s32.totalorder %s32, 1
      %s34 = scalar_select %p33, 0, %s32
      %s35 = sadd.s32 1, %s17
      %s36 = scalar_select %p33, %s35, %s17
      %p37 = scmp.ge.s32.totalorder %s36, 1
      %s38 = scalar_select %p37, 0, %s36
      %s39 = sadd.s32 1, %s16
      %s40 = scalar_select %p37, %s39, %s16
      %p41 = scmp.ge.s32.totalorder %s40, 2
      %s42 = scalar_select %p41, 0, %s40
      %s43 = ssub.s32 %s16, %s42
      %s44 = ssub.s32 %s18, %s34
      %s45 = sor.u32 %s43, %s44
      %s46 = ssub.s32 %s17, %s38
      %s47 = sor.u32 %s45, %s46
      %p48 = scmp.eq.s32.totalorder %s47, 0
      %s50 = sadd.s32 %s49, 1
      %s51 = scalar_select %p48, %s49, %s50
      %p54 = pneg %p48
      %p55 = scmp.eq.s32.totalorder %s9, 1
      %p56 = por %p54, %p55
      %p57 = scmp.ne.s32.totalorder %s49, %s52
      %p58 = scmp.eq.s32.totalorder %s9, 0
      %p59 = por %p57, %p58
      %p60 = scmp.ne.s32.totalorder %s49, %s52
      %p61 = scmp.eq.s32.totalorder %s14, 1
      %p62 = por %p60, %p61
      %p63 = scmp.ne.s32.totalorder %s52, %s53
      %p64 = scmp.eq.s32.totalorder %s14, 0
      %p65 = por %p63, %p64
      %p66 = scmp.ne.s32.totalorder %s52, %s53
      %p67 = scmp.eq.s32.totalorder %s15, 1
      %p68 = por %p66, %p67
      %p70 = scmp.ne.s32.totalorder %s53, %s69
      %p71 = scmp.eq.s32.totalorder %s15, 0
      %p72 = por %p70, %p71
      %s73 = sadd.s32 %s17, 1
      %s74 = sadd.s32 %s38, 1
      %s75 = ssub.s32 %s16, %s42
      %s76 = ssub.s32 %s19, %s30
      %s77 = sor.u32 %s75, %s76
      %s78 = ssub.s32 %s73, %s74
      %s79 = sor.u32 %s77, %s78
      %p80 = scmp.eq.s32.totalorder %s79, 0
      %s82 = sadd.s32 %s81, 1
      %s83 = scalar_select %p80, %s81, %s82
      %p86 = pneg %p80
      %p87 = scmp.eq.s32.totalorder %s9, 1
      %p88 = por %p86, %p87
      %p89 = scmp.ne.s32.totalorder %s81, %s84
      %p90 = scmp.eq.s32.totalorder %s9, 0
      %p91 = por %p89, %p90
      %p92 = scmp.ne.s32.totalorder %s81, %s84
      %p93 = scmp.eq.s32.totalorder %s14, 1
      %p94 = por %p92, %p93
      %p95 = scmp.ne.s32.totalorder %s84, %s85
      %p96 = scmp.eq.s32.totalorder %s14, 0
      %p97 = por %p95, %p96
      %p98 = scmp.ne.s32.totalorder %s84, %s85
      %p99 = scmp.eq.s32.totalorder %s15, 1
      %p100 = por %p98, %p99
      %p102 = scmp.ne.s32.totalorder %s85, %s101
      %p103 = scmp.eq.s32.totalorder %s15, 0
      %p104 = por %p102, %p103
      %s105 = sadd.s32 %s17, 2
      %s106 = sadd.s32 %s38, 2
      %s107 = ssub.s32 %s16, %s42
      %s108 = ssub.s32 %s19, %s30
      %s109 = sor.u32 %s107, %s108
      %s110 = ssub.s32 %s105, %s106
      %s111 = sor.u32 %s109, %s110
      %p112 = scmp.eq.s32.totalorder %s111, 0
      %s114 = sadd.s32 %s113, 1
      %s115 = scalar_select %p112, %s113, %s114
      %p118 = pneg %p112
      %p119 = scmp.eq.s32.totalorder %s9, 1
      %p120 = por %p118, %p119
      %p121 = scmp.ne.s32.totalorder %s113, %s116
      %p122 = scmp.eq.s32.totalorder %s9, 0
      %p123 = por %p121, %p122
      %p124 = scmp.ne.s32.totalorder %s113, %s116
      %p125 = scmp.eq.s32.totalorder %s14, 1
      %p126 = por %p124, %p125
      %p127 = scmp.ne.s32.totalorder %s116, %s117
      %p128 = scmp.eq.s32.totalorder %s14, 0
      %p129 = por %p127, %p128
      %p130 = scmp.ne.s32.totalorder %s116, %s117
      %p131 = scmp.eq.s32.totalorder %s15, 1
      %p132 = por %p130, %p131
      %p134 = scmp.ne.s32.totalorder %s117, %s133
      %p135 = scmp.eq.s32.totalorder %s15, 0
      %p136 = por %p134, %p135
      %s137 = ssub.s32 %s16, %s42
      %s138 = ssub.s32 %s18, %s34
      %s139 = sor.u32 %s137, %s138
      %s140 = ssub.s32 %s17, %s38
      %s141 = sor.u32 %s139, %s140
      %p142 = scmp.eq.s32.totalorder %s141, 0
      %s144 = sadd.s32 %s143, 1
      %s145 = scalar_select %p142, %s143, %s144
      %p148 = pneg %p142
      %p149 = scmp.eq.s32.totalorder %s9, 1
      %p150 = por %p148, %p149
      %p151 = scmp.ne.s32.totalorder %s143, %s146
      %p152 = scmp.eq.s32.totalorder %s9, 0
      %p153 = por %p151, %p152
      %p154 = scmp.ne.s32.totalorder %s143, %s146
      %p155 = scmp.eq.s32.totalorder %s14, 1
      %p156 = por %p154, %p155
      %p157 = scmp.ne.s32.totalorder %s146, %s147
      %p158 = scmp.eq.s32.totalorder %s14, 0
      %p159 = por %p157, %p158
      %p160 = scmp.ne.s32.totalorder %s146, %s147
      %p161 = scmp.eq.s32.totalorder %s15, 1
      %p162 = por %p160, %p161
      %p164 = scmp.ne.s32.totalorder %s147, %s163
      %p165 = scmp.eq.s32.totalorder %s15, 0
      %p166 = por %p164, %p165
      %p167 = scmp.le.s32.totalorder 1, %s9
      %p168 = scmp.lt.s32.totalorder %s9, 3
      %p169 = pnand %p167, %p168
      %p170 = pneg %p169
      // Predicated region
      $region9: #{image_encoder_forward.29} parent=5 // pred_check
        _
      $region10: #{image_encoder_forward.29} parent=5 // pred_check_branch
        %172 = sbr.rel (%p169) target = $region12
      $region11: #{image_encoder_forward.29} parent=5 // pred_region
        %s173 = ssub.s32 %s9, 1
      $region12: #{image_encoder_forward.29} parent=5 // pred_fallthru
        _
      %p174 = scmp.lt.s32.totalorder %s9, 2
      // Predicated region
      $region13: #{image_encoder_forward.29} parent=5 // pred_check
        %p175 = pneg %p174
      $region14: #{image_encoder_forward.29} parent=5 // pred_check_branch
        %177 = sbr.rel (%p175) target = $region16
      $region15: #{image_encoder_forward.29} parent=5 // pred_region
        // Predicated region
        $region17: #{image_encoder_forward.29} parent=15 // pred_check
          %p178 = pneg %p59
        $region18: #{image_encoder_forward.29} parent=15 // pred_check_branch
          %180 = sbr.rel (%p178) target = $region20
        $region19: #{image_encoder_forward.29} parent=15 // pred_region
          %s181 = sand.u32 %s49, 1
          %s182 = sand.u32 %s49, 1
          %s183 = smul.addr %s182, 16
          %s184 = scalar_lea.vmem [#allocation5], %s183
          %s185 = smul.u32 2, %s18
          %s186 = smul.addr %s185, 3
          %s187 = sadd.s32 %s17, %s186
          %s188 = smul.addr %s16, 6
          %s189 = sadd.s32 %s187, %s188
          %s190 = smul.addr %s189, 8
          %s191 = scalar_lea.vmem %s0, %s190
          // Predicated region
          $region21: #{image_encoder_forward.29} parent=19 // pred_check
            _
          $region22: #{image_encoder_forward.29} parent=19 // pred_check_branch
            %193 = sbr.rel (0) target = $region24
          $region23: #{image_encoder_forward.29} parent=19 // pred_region
            // Predicated region
            $region25: #{image_encoder_forward.29} parent=23 // pred_check
              _
            $region26: #{image_encoder_forward.29} parent=23 // pred_check_branch
              %195 = sbr.rel (0) target = $region28
            $region27: #{image_encoder_forward.29} parent=23 // pred_region
              // Predicated region
              $region40: #{image_encoder_forward.29} parent=27 // pred_check
                _
              $region41: #{image_encoder_forward.29} parent=27 // pred_check_branch
                %213 = sbr.rel (0) target = $region43
              $region42: #{image_encoder_forward.29} parent=27 // pred_region
                loop: start=0, step=1, limit=1
                $region44: #{image_encoder_forward.29} parent=42 // loop_pre_header
                  _
                $region45: #{image_encoder_forward.29} parent=42 // loop_header
                  %s215 = sphi 0, %s219
                  %p216 = scmp.ge.s32.totalorder %s215, 1
                  %s220 = sphi %s191, %s191
                  %s221 = sphi %s184, %s184
                $region46: #{image_encoder_forward.29} parent=42 // loop_header_branch
                  %218 = sbr.rel (%p216) target = $region50
                $region47: #{image_encoder_forward.29} parent=42 // loop_body
                  %v222 = vld [vmem:[%s220] sm:$0xff]
                  %223 = vst [vmem:[%s221] sm:$0xff] %v222
                  %v224 = vld [vmem:[%s220 + $0x18] sm:$0xff]
                  %225 = vst [vmem:[%s221 + $0x8] sm:$0xff] %v224
                $region48: #{image_encoder_forward.29} parent=42 // loop_footer
                  %s219 = sadd.s32 1, %s215
                $region49: #{image_encoder_forward.29} parent=42 // loop_footer_branch
                  %214 = sbr.rel target = $region45
                $region50: #{image_encoder_forward.29} parent=42 // loop_exit
                  _
              $region43: #{image_encoder_forward.29} parent=27 // pred_fallthru
                _
              // Predicated region
              $region51: #{image_encoder_forward.29} parent=27 // pred_check
                _
              $region52: #{image_encoder_forward.29} parent=27 // pred_check_branch
                %227 = sbr.rel target = $region54
              $region53: #{image_encoder_forward.29} parent=27 // pred_region
                _
              $region54: #{image_encoder_forward.29} parent=27 // pred_fallthru
                _
            $region28: #{image_encoder_forward.29} parent=23 // pred_fallthru
              _
            // Predicated region
            $region29: #{image_encoder_forward.29} parent=23 // pred_check
              _
            $region30: #{image_encoder_forward.29} parent=23 // pred_check_branch
              %197 = sbr.rel target = $region32
            $region31: #{image_encoder_forward.29} parent=23 // pred_region
              %s199 = ssub.s32 256, 1
              loop: start=0, step=1, limit=1
              $region33: #{image_encoder_forward.29} parent=31 // loop_pre_header
                _
              $region34: #{image_encoder_forward.29} parent=31 // loop_header
                %s201 = sphi 0, %s205
                %p202 = scmp.ge.s32.totalorder %s201, 1
                %s206 = sphi %s191, %s191
                %s207 = sphi %s184, %s184
              $region35: #{image_encoder_forward.29} parent=31 // loop_header_branch
                %204 = sbr.rel (%p202) target = $region39
              $region36: #{image_encoder_forward.29} parent=31 // loop_body
                %v208 = vld [vmem:[%s206] sm:%s199]
                %209 = vst [vmem:[%s207] sm:%s199] %v208
                %v210 = vld [vmem:[%s206 + $0x18] sm:%s199]
                %211 = vst [vmem:[%s207 + $0x8] sm:%s199] %v210
              $region37: #{image_encoder_forward.29} parent=31 // loop_footer
                %s205 = sadd.s32 1, %s201
              $region38: #{image_encoder_forward.29} parent=31 // loop_footer_branch
                %200 = sbr.rel target = $region34
              $region39: #{image_encoder_forward.29} parent=31 // loop_exit
                _
            $region32: #{image_encoder_forward.29} parent=23 // pred_fallthru
              _
          $region24: #{image_encoder_forward.29} parent=19 // pred_fallthru
            _
          %228 = vnop
        $region20: #{image_encoder_forward.29} parent=15 // pred_fallthru
          _
        // Predicated region
        $region55: #{image_encoder_forward.29} parent=15 // pred_check
          %p229 = pneg %p91
        $region56: #{image_encoder_forward.29} parent=15 // pred_check_branch
          %231 = sbr.rel (%p229) target = $region58
        $region57: #{image_encoder_forward.29} parent=15 // pred_region
          %s232 = sand.u32 %s81, 1
          %s233 = sand.u32 %s81, 1
          %s234 = smul.addr %s233, 16
          %s235 = scalar_lea.vmem [#allocation6], %s234
          %s236 = sadd.s32 %s17, 1
          %s237 = smul.u32 2, %s19
          %s238 = smul.addr %s237, 3
          %s239 = sadd.s32 %s236, %s238
          %s240 = smul.addr %s16, 6
          %s241 = sadd.s32 %s239, %s240
          %s242 = smul.addr %s241, 8
          %s243 = scalar_lea.vmem %s1, %s242
          // Predicated region
          $region59: #{image_encoder_forward.29} parent=57 // pred_check
            _
          $region60: #{image_encoder_forward.29} parent=57 // pred_check_branch
            %245 = sbr.rel (0) target = $region62
          $region61: #{image_encoder_forward.29} parent=57 // pred_region
            // Predicated region
            $region63: #{image_encoder_forward.29} parent=61 // pred_check
              _
            $region64: #{image_encoder_forward.29} parent=61 // pred_check_branch
              %247 = sbr.rel (0) target = $region66
            $region65: #{image_encoder_forward.29} parent=61 // pred_region
              // Predicated region
              $region78: #{image_encoder_forward.29} parent=65 // pred_check
                _
              $region79: #{image_encoder_forward.29} parent=65 // pred_check_branch
                %265 = sbr.rel (0) target = $region81
              $region80: #{image_encoder_forward.29} parent=65 // pred_region
                loop: start=0, step=1, limit=1
                $region82: #{image_encoder_forward.29} parent=80 // loop_pre_header
                  _
                $region83: #{image_encoder_forward.29} parent=80 // loop_header
                  %s267 = sphi 0, %s271
                  %p268 = scmp.ge.s32.totalorder %s267, 1
                  %s272 = sphi %s243, %s243
                  %s273 = sphi %s235, %s235
                $region84: #{image_encoder_forward.29} parent=80 // loop_header_branch
                  %270 = sbr.rel (%p268) target = $region88
                $region85: #{image_encoder_forward.29} parent=80 // loop_body
                  %v274 = vld [vmem:[%s272] sm:$0xff]
                  %275 = vst [vmem:[%s273] sm:$0xff] %v274
                  %v276 = vld [vmem:[%s272 + $0x18] sm:$0xff]
                  %277 = vst [vmem:[%s273 + $0x8] sm:$0xff] %v276
                $region86: #{image_encoder_forward.29} parent=80 // loop_footer
                  %s271 = sadd.s32 1, %s267
                $region87: #{image_encoder_forward.29} parent=80 // loop_footer_branch
                  %266 = sbr.rel target = $region83
                $region88: #{image_encoder_forward.29} parent=80 // loop_exit
                  _
              $region81: #{image_encoder_forward.29} parent=65 // pred_fallthru
                _
              // Predicated region
              $region89: #{image_encoder_forward.29} parent=65 // pred_check
                _
              $region90: #{image_encoder_forward.29} parent=65 // pred_check_branch
                %279 = sbr.rel target = $region92
              $region91: #{image_encoder_forward.29} parent=65 // pred_region
                _
              $region92: #{image_encoder_forward.29} parent=65 // pred_fallthru
                _
            $region66: #{image_encoder_forward.29} parent=61 // pred_fallthru
              _
            // Predicated region
            $region67: #{image_encoder_forward.29} parent=61 // pred_check
              _
            $region68: #{image_encoder_forward.29} parent=61 // pred_check_branch
              %249 = sbr.rel target = $region70
            $region69: #{image_encoder_forward.29} parent=61 // pred_region
              %s251 = ssub.s32 256, 1
              loop: start=0, step=1, limit=1
              $region71: #{image_encoder_forward.29} parent=69 // loop_pre_header
                _
              $region72: #{image_encoder_forward.29} parent=69 // loop_header
                %s253 = sphi 0, %s257
                %p254 = scmp.ge.s32.totalorder %s253, 1
                %s258 = sphi %s243, %s243
                %s259 = sphi %s235, %s235
              $region73: #{image_encoder_forward.29} parent=69 // loop_header_branch
                %256 = sbr.rel (%p254) target = $region77
              $region74: #{image_encoder_forward.29} parent=69 // loop_body
                %v260 = vld [vmem:[%s258] sm:%s251]
                %261 = vst [vmem:[%s259] sm:%s251] %v260
                %v262 = vld [vmem:[%s258 + $0x18] sm:%s251]
                %263 = vst [vmem:[%s259 + $0x8] sm:%s251] %v262
              $region75: #{image_encoder_forward.29} parent=69 // loop_footer
                %s257 = sadd.s32 1, %s253
              $region76: #{image_encoder_forward.29} parent=69 // loop_footer_branch
                %252 = sbr.rel target = $region72
              $region77: #{image_encoder_forward.29} parent=69 // loop_exit
                _
            $region70: #{image_encoder_forward.29} parent=61 // pred_fallthru
              _
          $region62: #{image_encoder_forward.29} parent=57 // pred_fallthru
            _
          %280 = vnop
        $region58: #{image_encoder_forward.29} parent=15 // pred_fallthru
          _
        // Predicated region
        $region93: #{image_encoder_forward.29} parent=15 // pred_check
          %p281 = pneg %p123
        $region94: #{image_encoder_forward.29} parent=15 // pred_check_branch
          %283 = sbr.rel (%p281) target = $region96
        $region95: #{image_encoder_forward.29} parent=15 // pred_region
          %s284 = sand.u32 %s113, 1
          %s285 = sand.u32 %s113, 1
          %s286 = smul.addr %s285, 16
          %s287 = scalar_lea.vmem [#allocation7], %s286
          %s288 = sadd.s32 %s17, 2
          %s289 = smul.u32 2, %s19
          %s290 = smul.addr %s289, 3
          %s291 = sadd.s32 %s288, %s290
          %s292 = smul.addr %s16, 6
          %s293 = sadd.s32 %s291, %s292
          %s294 = smul.addr %s293, 8
          %s295 = scalar_lea.vmem %s2, %s294
          // Predicated region
          $region97: #{image_encoder_forward.29} parent=95 // pred_check
            _
          $region98: #{image_encoder_forward.29} parent=95 // pred_check_branch
            %297 = sbr.rel (0) target = $region100
          $region99: #{image_encoder_forward.29} parent=95 // pred_region
            // Predicated region
            $region101: #{image_encoder_forward.29} parent=99 // pred_check
              _
            $region102: #{image_encoder_forward.29} parent=99 // pred_check_branch
              %299 = sbr.rel (0) target = $region104
            $region103: #{image_encoder_forward.29} parent=99 // pred_region
              // Predicated region
              $region116: #{image_encoder_forward.29} parent=103 // pred_check
                _
              $region117: #{image_encoder_forward.29} parent=103 // pred_check_branch
                %317 = sbr.rel (0) target = $region119
              $region118: #{image_encoder_forward.29} parent=103 // pred_region
                loop: start=0, step=1, limit=1
                $region120: #{image_encoder_forward.29} parent=118 // loop_pre_header
                  _
                $region121: #{image_encoder_forward.29} parent=118 // loop_header
                  %s319 = sphi 0, %s323
                  %p320 = scmp.ge.s32.totalorder %s319, 1
                  %s324 = sphi %s295, %s295
                  %s325 = sphi %s287, %s287
                $region122: #{image_encoder_forward.29} parent=118 // loop_header_branch
                  %322 = sbr.rel (%p320) target = $region126
                $region123: #{image_encoder_forward.29} parent=118 // loop_body
                  %v326 = vld [vmem:[%s324] sm:$0xff]
                  %327 = vst [vmem:[%s325] sm:$0xff] %v326
                  %v328 = vld [vmem:[%s324 + $0x18] sm:$0xff]
                  %329 = vst [vmem:[%s325 + $0x8] sm:$0xff] %v328
                $region124: #{image_encoder_forward.29} parent=118 // loop_footer
                  %s323 = sadd.s32 1, %s319
                $region125: #{image_encoder_forward.29} parent=118 // loop_footer_branch
                  %318 = sbr.rel target = $region121
                $region126: #{image_encoder_forward.29} parent=118 // loop_exit
                  _
              $region119: #{image_encoder_forward.29} parent=103 // pred_fallthru
                _
              // Predicated region
              $region127: #{image_encoder_forward.29} parent=103 // pred_check
                _
              $region128: #{image_encoder_forward.29} parent=103 // pred_check_branch
                %331 = sbr.rel target = $region130
              $region129: #{image_encoder_forward.29} parent=103 // pred_region
                _
              $region130: #{image_encoder_forward.29} parent=103 // pred_fallthru
                _
            $region104: #{image_encoder_forward.29} parent=99 // pred_fallthru
              _
            // Predicated region
            $region105: #{image_encoder_forward.29} parent=99 // pred_check
              _
            $region106: #{image_encoder_forward.29} parent=99 // pred_check_branch
              %301 = sbr.rel target = $region108
            $region107: #{image_encoder_forward.29} parent=99 // pred_region
              %s303 = ssub.s32 256, 1
              loop: start=0, step=1, limit=1
              $region109: #{image_encoder_forward.29} parent=107 // loop_pre_header
                _
              $region110: #{image_encoder_forward.29} parent=107 // loop_header
                %s305 = sphi 0, %s309
                %p306 = scmp.ge.s32.totalorder %s305, 1
                %s310 = sphi %s295, %s295
                %s311 = sphi %s287, %s287
              $region111: #{image_encoder_forward.29} parent=107 // loop_header_branch
                %308 = sbr.rel (%p306) target = $region115
              $region112: #{image_encoder_forward.29} parent=107 // loop_body
                %v312 = vld [vmem:[%s310] sm:%s303]
                %313 = vst [vmem:[%s311] sm:%s303] %v312
                %v314 = vld [vmem:[%s310 + $0x18] sm:%s303]
                %315 = vst [vmem:[%s311 + $0x8] sm:%s303] %v314
              $region113: #{image_encoder_forward.29} parent=107 // loop_footer
                %s309 = sadd.s32 1, %s305
              $region114: #{image_encoder_forward.29} parent=107 // loop_footer_branch
                %304 = sbr.rel target = $region110
              $region115: #{image_encoder_forward.29} parent=107 // loop_exit
                _
            $region108: #{image_encoder_forward.29} parent=99 // pred_fallthru
              _
          $region100: #{image_encoder_forward.29} parent=95 // pred_fallthru
            _
          %332 = vnop
        $region96: #{image_encoder_forward.29} parent=15 // pred_fallthru
          _
      $region16: #{image_encoder_forward.29} parent=5 // pred_fallthru
        _
      %p333 = scmp.le.s32.totalorder 1, %s9
      %p334 = scmp.lt.s32.totalorder %s9, 3
      %p335 = pnand %p333, %p334
      %p336 = pneg %p335
      // Predicated region
      $region131: #{image_encoder_forward.29} parent=5 // pred_check
        _
      $region132: #{image_encoder_forward.29} parent=5 // pred_check_branch
        %338 = sbr.rel (%p335) target = $region134
      $region133: #{image_encoder_forward.29} parent=5 // pred_region
        %s339 = ssub.s32 %s9, 1
        %s340 = sand.u32 %s52, 1
        %s341 = sand.u32 %s52, 1
        %s342 = smul.addr %s341, 16
        %s343 = scalar_lea.vmem [#allocation5], %s342
        // Predicated region
        $region135: #{image_encoder_forward.29} parent=133 // pred_check
          %p344 = pneg %p65
        $region136: #{image_encoder_forward.29} parent=133 // pred_check_branch
          %346 = sbr.rel (%p344) target = $region138
        $region137: #{image_encoder_forward.29} parent=133 // pred_region
          _
        $region138: #{image_encoder_forward.29} parent=133 // pred_fallthru
          _
        %s347 = sand.u32 %s84, 1
        %s348 = sand.u32 %s84, 1
        %s349 = smul.addr %s348, 16
        %s350 = scalar_lea.vmem [#allocation6], %s349
        // Predicated region
        $region139: #{image_encoder_forward.29} parent=133 // pred_check
          %p351 = pneg %p97
        $region140: #{image_encoder_forward.29} parent=133 // pred_check_branch
          %353 = sbr.rel (%p351) target = $region142
        $region141: #{image_encoder_forward.29} parent=133 // pred_region
          _
        $region142: #{image_encoder_forward.29} parent=133 // pred_fallthru
          _
        %s354 = sand.u32 %s116, 1
        %s355 = sand.u32 %s116, 1
        %s356 = smul.addr %s355, 16
        %s357 = scalar_lea.vmem [#allocation7], %s356
        // Predicated region
        $region143: #{image_encoder_forward.29} parent=133 // pred_check
          %p358 = pneg %p129
        $region144: #{image_encoder_forward.29} parent=133 // pred_check_branch
          %360 = sbr.rel (%p358) target = $region146
        $region145: #{image_encoder_forward.29} parent=133 // pred_region
          _
        $region146: #{image_encoder_forward.29} parent=133 // pred_fallthru
          _
        %s361 = sand.u32 %s52, 1
        %s362 = sand.u32 %s52, 1
        %s363 = smul.addr %s362, 16
        %s364 = scalar_lea.vmem [#allocation5], %s363
        %p365 = pneg %p65
        %p366 = pneg %p62
        %s367 = sand.u32 %s84, 1
        %s368 = sand.u32 %s84, 1
        %s369 = smul.addr %s368, 16
        %s370 = scalar_lea.vmem [#allocation6], %s369
        %p371 = pneg %p97
        %p372 = pneg %p94
        %s373 = sand.u32 %s116, 1
        %s374 = sand.u32 %s116, 1
        %s375 = smul.addr %s374, 16
        %s376 = scalar_lea.vmem [#allocation7], %s375
        %p377 = pneg %p129
        %p378 = pneg %p126
        %p379 = pneg %p159
        %p380 = pneg %p156
        %s381 = smul.u32 2, %s22
        %p382 = scmp.lt.s32.totalorder %s20, 1
        %s383 = scalar_select %p382, %s20, 1
        %p384 = scmp.lt.s32.totalorder %s381, 1
        %s385 = scalar_select %p384, %s381, 1
        %p386 = scmp.lt.s32.totalorder %s21, 0
        %s387 = scalar_select %p386, %s21, 0
        %s388 = sadd.s32 %s387, %s385
        %s389 = smul.addr %s383, 2
        %s390 = sadd.s32 %s388, %s389
        %s391 = smul.addr %s390, 8
        %s392 = scalar_lea.vmem %s3, %s391
        %s393 = smul.u32 2, %s22
        %s394 = sadd.s32 %s21, 1
        %s395 = smul.u32 2, %s23
        %s396 = sadd.s32 %s21, 2
        %s397 = smul.u32 2, %s23
        %s398 = smul.u32 2, %s22
        %p399 = scmp.lt.s32.totalorder %s20, 1
        %s400 = scalar_select %p399, %s20, 1
        %p401 = scmp.lt.s32.totalorder %s398, 1
        %s402 = scalar_select %p401, %s398, 1
        %p403 = scmp.lt.s32.totalorder %s21, 0
        %s404 = scalar_select %p403, %s21, 0
        %s405 = sadd.s32 %s404, %s402
        %s406 = smul.addr %s400, 2
        %s407 = sadd.s32 %s405, %s406
        %s408 = smul.addr %s407, 8
        %s409 = scalar_lea.vmem %s3, %s408
        %s410 = smul.u32 2, %s22
        %p411 = scmp.eq.s32.totalorder %s23, 0
        // Predicated region
        $region147: #{image_encoder_forward.29} parent=133 // pred_check
          %p412 = pneg %p411
        $region148: #{image_encoder_forward.29} parent=133 // pred_check_branch
          %414 = sbr.rel (%p412) target = $region150
        $region149: #{image_encoder_forward.29} parent=133 // pred_region
          %vm415 = vcmask 7168
          %416 = vst.msk [vmem:[#allocation2] sm:$0xff] %vm415, -inf
          %417 = vst.msk [vmem:[#allocation2 + $0x8] sm:$0xff] %vm415, -inf
          %418 = vst.msk [vmem:[#allocation2 + $0x10] sm:$0xff] %vm415, -inf
          %419 = vst.msk [vmem:[#allocation2 + $0x18] sm:$0xff] %vm415, -inf
          %420 = vst.msk [vmem:[#allocation2 + $0x20] sm:$0xff] %vm415, -inf
          %421 = vst.msk [vmem:[#allocation2 + $0x28] sm:$0xff] %vm415, -inf
          %422 = vst.msk [vmem:[#allocation2 + $0x30] sm:$0xff] %vm415, -inf
          %423 = vst.msk [vmem:[#allocation2 + $0x38] sm:$0xff] %vm415, -inf
          %424 = vst.msk [vmem:[#allocation3] sm:$0xff] %vm415, 0.0
          %425 = vst.msk [vmem:[#allocation3 + $0x8] sm:$0xff] %vm415, 0.0
          %426 = vst.msk [vmem:[#allocation3 + $0x10] sm:$0xff] %vm415, 0.0
          %427 = vst.msk [vmem:[#allocation3 + $0x18] sm:$0xff] %vm415, 0.0
          %428 = vst.msk [vmem:[#allocation3 + $0x20] sm:$0xff] %vm415, 0.0
          %429 = vst.msk [vmem:[#allocation3 + $0x28] sm:$0xff] %vm415, 0.0
          %430 = vst.msk [vmem:[#allocation3 + $0x30] sm:$0xff] %vm415, 0.0
          %431 = vst.msk [vmem:[#allocation3 + $0x38] sm:$0xff] %vm415, 0.0
          %vm432 = vcmask 261120
          %433 = vst.msk [vmem:[#allocation4] sm:$0xff] %vm432, 0.0
          %434 = vst.msk [vmem:[#allocation4 + $0x8] sm:$0xff] %vm432, 0.0
          %435 = vst.msk [vmem:[#allocation4 + $0x10] sm:$0xff] %vm432, 0.0
          %436 = vst.msk [vmem:[#allocation4 + $0x18] sm:$0xff] %vm432, 0.0
          %437 = vst.msk [vmem:[#allocation4 + $0x20] sm:$0xff] %vm432, 0.0
          %438 = vst.msk [vmem:[#allocation4 + $0x28] sm:$0xff] %vm432, 0.0
          %439 = vst.msk [vmem:[#allocation4 + $0x30] sm:$0xff] %vm432, 0.0
          %440 = vst.msk [vmem:[#allocation4 + $0x38] sm:$0xff] %vm432, 0.0
        $region150: #{image_encoder_forward.29} parent=133 // pred_fallthru
          _
        %v441 = vld [vmem:[%s343] sm:$0xff]
        %v442 = vld [vmem:[%s343 + $0x8] sm:$0xff]
        %v443 = vld [vmem:[%s350] sm:$0xff]
        %v444 = vld [vmem:[%s350 + $0x8] sm:$0xff]
        %v445 = vld [vmem:[%s357] sm:$0xff]
        %v446 = vld [vmem:[%s357 + $0x8] sm:$0xff]
        %v447 = vmul.f32 %v441, 0.17677669
        %v448 = vmul.f32 %v442, 0.17677669
        %vm449 = vcmask 261120
        %v451 = vsel %vm449, %v447, 0
        %v454 = vsel %vm449, %v448, 0
        %v457 = vsel %vm449, %v443, 0
        %v460 = vsel %vm449, %v444, 0
        %462 = vmatpush.xpose.msra.mxu0 0.0
        %463 = vmatpush.xpose.msra.mxu0 0.0
        %464 = vmatpush.xpose.msra.mxu0 0.0
        %465 = vmatpush.xpose.msra.mxu0 0.0
        %466 = vmatpush.xpose.msra.mxu0 0.0
        %467 = vmatpush.xpose.msra.mxu0 0.0
        %468 = vmatpush.xpose.msra.mxu0 0.0
        %469 = vmatpush.xpose.msra.mxu0 0.0
        %470 = vmatpush.xpose.msra.mxu0 0.0
        %471 = vmatpush.xpose.msra.mxu0 0.0
        %472 = vmatpush.xpose.msra.mxu0 0.0
        %473 = vmatpush.xpose.msra.mxu0 0.0
        %474 = vmatpush.xpose.msra.mxu0 0.0
        %475 = vmatpush.xpose.msra.mxu0 0.0
        %476 = vmatpush.xpose.msra.mxu0 %v460
        %477 = vmatpush.xpose.msra.mxu0 %v457
        %478 = vmatmul.f32.gmra.mxu0 %v451
        %v479 = vpop.f32.mrf.mxu0
        %v480 = vadd.f32 0.0, %v479
        %481 = vmatmul.f32.gmra.mxu0 %v454
        %v482 = vpop.f32.mrf.mxu0
        %v483 = vadd.f32 0.0, %v482
        %484 = vdwg.mxu0
        %v485 = vld [vmem:[#allocation2] sm:$0xff]
        %v486 = vld [vmem:[#allocation2 + $0x8] sm:$0xff]
        %vm487 = vcmask 130048
        %v488 = vsel %vm487, %v480, -inf
        %489 = vmax.xlane.f32.xlu0 %v488
        %v490 = vpop.xlane.xlu0 %489
        %v491 = vsel %vm487, %v483, -inf
        %492 = vmax.xlane.f32.xlu0 %v491
        %v493 = vpop.xlane.xlu0 %492
        %v494 = vmax.f32 %v485, %v490
        %v495 = vmax.f32 %v486, %v493
        %v496 = vsub.f32 %v485, %v494
        %v497 = vsub.f32 %v486, %v495
        %v498 = vmul.f32 %v496, 1.442695
        %v499 = vpow.pop %v498
        %v500 = vmul.f32 %v497, 1.442695
        %v501 = vpow.pop %v500
        %503 = vset.pattern.permute.xlu0 0
        %504 = vperm.xlu0 %503, %v494
        %v505 = vpop.permute.xlu0 %504
        %508 = vset.pattern.permute.xlu0 0
        %509 = vperm.xlu0 %508, %v495
        %v510 = vpop.permute.xlu0 %509
        %v512 = vsub.f32 %v480, %v505
        %v513 = vsub.f32 %v483, %v510
        %v514 = vmul.f32 %v512, 1.442695
        %v515 = vpow.pop %v514
        %v516 = vmul.f32 %v513, 1.442695
        %v517 = vpow.pop %v516
        %v518 = vld [vmem:[#allocation3] sm:$0xff]
        %v519 = vld [vmem:[#allocation3 + $0x8] sm:$0xff]
        %v520 = vmul.f32 %v499, %v518
        %v521 = vmul.f32 %v501, %v519
        %v522 = vsel %vm487, %v515, 0.0
        %523 = vadd.xlane.f32.xlu0 %v522
        %v524 = vpop.xlane.xlu0 %523
        %v525 = vsel %vm487, %v517, 0.0
        %526 = vadd.xlane.f32.xlu0 %v525
        %v527 = vpop.xlane.xlu0 %526
        %v528 = vadd.f32 %v520, %v524
        %v529 = vadd.f32 %v521, %v527
        %vm530 = vcmask 7168
        %531 = vst.msk [vmem:[#allocation3] sm:$0xff] %vm530, %v528
        %532 = vst.msk [vmem:[#allocation3 + $0x8] sm:$0xff] %vm530, %v529
        %v533 = vld [vmem:[#allocation4] sm:$0xff]
        %v534 = vld [vmem:[#allocation4 + $0x8] sm:$0xff]
        %536 = vset.pattern.permute.xlu0 0
        %537 = vperm.xlu0 %536, %v499
        %v538 = vpop.permute.xlu0 %537
        %541 = vset.pattern.permute.xlu0 0
        %542 = vperm.xlu0 %541, %v501
        %v543 = vpop.permute.xlu0 %542
        %v545 = vmul.f32 %v538, %v533
        %v546 = vmul.f32 %v543, %v534
        %v548 = vsel %vm487, %v515, 0
        %v551 = vsel %vm487, %v517, 0
        %553 = vmatpush.msra.mxu0 0.0
        %554 = vmatpush.msra.mxu0 0.0
        %555 = vmatpush.msra.mxu0 0.0
        %556 = vmatpush.msra.mxu0 0.0
        %557 = vmatpush.msra.mxu0 0.0
        %558 = vmatpush.msra.mxu0 0.0
        %559 = vmatpush.msra.mxu0 0.0
        %560 = vmatpush.msra.mxu0 0.0
        %561 = vmatpush.msra.mxu0 0.0
        %562 = vmatpush.msra.mxu0 0.0
        %563 = vmatpush.msra.mxu0 0.0
        %564 = vmatpush.msra.mxu0 0.0
        %565 = vmatpush.msra.mxu0 0.0
        %566 = vmatpush.msra.mxu0 0.0
        %567 = vmatpush.msra.mxu0 %v446
        %568 = vmatpush.msra.mxu0 %v445
        %569 = vmatmul.f32.gmra.mxu0 %v548
        %v570 = vpop.f32.mrf.mxu0
        %v571 = vadd.f32 0.0, %v570
        %572 = vmatmul.f32.gmra.mxu0 %v551
        %v573 = vpop.f32.mrf.mxu0
        %v574 = vadd.f32 0.0, %v573
        %575 = vdwg.mxu0
        %v576 = vadd.f32 %v545, %v571
        %v577 = vadd.f32 %v546, %v574
        %578 = vst.msk [vmem:[#allocation4] sm:$0xff] %vm449, %v576
        %579 = vst.msk [vmem:[#allocation4 + $0x8] sm:$0xff] %vm449, %v577
        %580 = vst.msk [vmem:[#allocation2] sm:$0xff] %vm530, %v494
        %581 = vst.msk [vmem:[#allocation2 + $0x8] sm:$0xff] %vm530, %v495
        %582 = vrot.lane.b32.xlu0 %v447, 96
        %v583 = vpop.permute.xlu0 %582
        %584 = vrot.lane.b32.xlu0 %v448, 96
        %v585 = vpop.permute.xlu0 %584
        %586 = vrot.lane.b32.xlu0 %v443, 96
        %v587 = vpop.permute.xlu0 %586
        %588 = vrot.lane.b32.xlu0 %v444, 96
        %v589 = vpop.permute.xlu0 %588
        %v590 = vsel %vm449, %v583, 0
        %v592 = vsel %vm449, %v585, 0
        %v594 = vsel %vm449, %v587, 0
        %v596 = vsel %vm449, %v589, 0
        %598 = vmatpush.xpose.msra.mxu0 0.0
        %599 = vmatpush.xpose.msra.mxu0 0.0
        %600 = vmatpush.xpose.msra.mxu0 0.0
        %601 = vmatpush.xpose.msra.mxu0 0.0
        %602 = vmatpush.xpose.msra.mxu0 0.0
        %603 = vmatpush.xpose.msra.mxu0 0.0
        %604 = vmatpush.xpose.msra.mxu0 0.0
        %605 = vmatpush.xpose.msra.mxu0 0.0
        %606 = vmatpush.xpose.msra.mxu0 0.0
        %607 = vmatpush.xpose.msra.mxu0 0.0
        %608 = vmatpush.xpose.msra.mxu0 0.0
        %609 = vmatpush.xpose.msra.mxu0 0.0
        %610 = vmatpush.xpose.msra.mxu0 0.0
        %611 = vmatpush.xpose.msra.mxu0 0.0
        %612 = vmatpush.xpose.msra.mxu0 %v596
        %613 = vmatpush.xpose.msra.mxu0 %v594
        %614 = vmatmul.f32.gmra.mxu0 %v590
        %v615 = vpop.f32.mrf.mxu0
        %v616 = vadd.f32 0.0, %v615
        %617 = vmatmul.f32.gmra.mxu0 %v592
        %v618 = vpop.f32.mrf.mxu0
        %v619 = vadd.f32 0.0, %v618
        %620 = vdwg.mxu0
        %s621 = scalar_lea.vmem [#allocation2], 16
        %v622 = vld [vmem:[%s621] sm:$0xff]
        %v623 = vld [vmem:[%s621 + $0x8] sm:$0xff]
        %v624 = vsel %vm487, %v616, -inf
        %625 = vmax.xlane.f32.xlu0 %v624
        %v626 = vpop.xlane.xlu0 %625
        %v627 = vsel %vm487, %v619, -inf
        %628 = vmax.xlane.f32.xlu0 %v627
        %v629 = vpop.xlane.xlu0 %628
        %v630 = vmax.f32 %v622, %v626
        %v631 = vmax.f32 %v623, %v629
        %v632 = vsub.f32 %v622, %v630
        %v633 = vsub.f32 %v623, %v631
        %v634 = vmul.f32 %v632, 1.442695
        %v635 = vpow.pop %v634
        %v636 = vmul.f32 %v633, 1.442695
        %v637 = vpow.pop %v636
        %639 = vset.pattern.permute.xlu0 0
        %640 = vperm.xlu0 %639, %v630
        %v641 = vpop.permute.xlu0 %640
        %644 = vset.pattern.permute.xlu0 0
        %645 = vperm.xlu0 %644, %v631
        %v646 = vpop.permute.xlu0 %645
        %v648 = vsub.f32 %v616, %v641
        %v649 = vsub.f32 %v619, %v646
        %v650 = vmul.f32 %v648, 1.442695
        %v651 = vpow.pop %v650
        %v652 = vmul.f32 %v649, 1.442695
        %v653 = vpow.pop %v652
        %s654 = scalar_lea.vmem [#allocation3], 16
        %v655 = vld [vmem:[%s654] sm:$0xff]
        %v656 = vld [vmem:[%s654 + $0x8] sm:$0xff]
        %v657 = vmul.f32 %v635, %v655
        %v658 = vmul.f32 %v637, %v656
        %v659 = vsel %vm487, %v651, 0.0
        %660 = vadd.xlane.f32.xlu0 %v659
        %v661 = vpop.xlane.xlu0 %660
        %v662 = vsel %vm487, %v653, 0.0
        %663 = vadd.xlane.f32.xlu0 %v662
        %v664 = vpop.xlane.xlu0 %663
        %v665 = vadd.f32 %v657, %v661
        %v666 = vadd.f32 %v658, %v664
        %667 = vst.msk [vmem:[%s654] sm:$0xff] %vm530, %v665
        %668 = vst.msk [vmem:[%s654 + $0x8] sm:$0xff] %vm530, %v666
        %s669 = scalar_lea.vmem [#allocation4], 16
        %v670 = vld [vmem:[%s669] sm:$0xff]
        %v671 = vld [vmem:[%s669 + $0x8] sm:$0xff]
        %673 = vset.pattern.permute.xlu0 0
        %674 = vperm.xlu0 %673, %v635
        %v675 = vpop.permute.xlu0 %674
        %678 = vset.pattern.permute.xlu0 0
        %679 = vperm.xlu0 %678, %v637
        %v680 = vpop.permute.xlu0 %679
        %v682 = vmul.f32 %v675, %v670
        %v683 = vmul.f32 %v680, %v671
        %686 = vrot.lane.b32.xlu0 %v445, 96
        %v687 = vpop.permute.xlu0 %686
        %688 = vrot.lane.b32.xlu0 %v446, 96
        %v689 = vpop.permute.xlu0 %688
        %v693 = vsel %vm487, %v651, 0
        %v696 = vsel %vm487, %v653, 0
        %698 = vmatpush.msra.mxu0 0.0
        %699 = vmatpush.msra.mxu0 0.0
        %700 = vmatpush.msra.mxu0 0.0
        %701 = vmatpush.msra.mxu0 0.0
        %702 = vmatpush.msra.mxu0 0.0
        %703 = vmatpush.msra.mxu0 0.0
        %704 = vmatpush.msra.mxu0 0.0
        %705 = vmatpush.msra.mxu0 0.0
        %706 = vmatpush.msra.mxu0 0.0
        %707 = vmatpush.msra.mxu0 0.0
        %708 = vmatpush.msra.mxu0 0.0
        %709 = vmatpush.msra.mxu0 0.0
        %710 = vmatpush.msra.mxu0 0.0
        %711 = vmatpush.msra.mxu0 0.0
        %712 = vmatpush.msra.mxu0 %v689
        %713 = vmatpush.msra.mxu0 %v687
        %714 = vmatmul.f32.gmra.mxu0 %v693
        %v715 = vpop.f32.mrf.mxu0
        %v716 = vadd.f32 0.0, %v715
        %717 = vmatmul.f32.gmra.mxu0 %v696
        %v718 = vpop.f32.mrf.mxu0
        %v719 = vadd.f32 0.0, %v718
        %720 = vdwg.mxu0
        %v721 = vadd.f32 %v682, %v716
        %v722 = vadd.f32 %v683, %v719
        %723 = vst.msk [vmem:[%s669] sm:$0xff] %vm449, %v721
        %724 = vst.msk [vmem:[%s669 + $0x8] sm:$0xff] %vm449, %v722
        %725 = vst.msk [vmem:[%s621] sm:$0xff] %vm530, %v630
        %726 = vst.msk [vmem:[%s621 + $0x8] sm:$0xff] %vm530, %v631
        %727 = vrot.lane.b32.xlu0 %v447, 64
        %v728 = vpop.permute.xlu0 %727
        %729 = vrot.lane.b32.xlu0 %v448, 64
        %v730 = vpop.permute.xlu0 %729
        %731 = vrot.lane.b32.xlu0 %v443, 64
        %v732 = vpop.permute.xlu0 %731
        %733 = vrot.lane.b32.xlu0 %v444, 64
        %v734 = vpop.permute.xlu0 %733
        %v735 = vsel %vm449, %v728, 0
        %v737 = vsel %vm449, %v730, 0
        %v739 = vsel %vm449, %v732, 0
        %v741 = vsel %vm449, %v734, 0
        %743 = vmatpush.xpose.msra.mxu0 0.0
        %744 = vmatpush.xpose.msra.mxu0 0.0
        %745 = vmatpush.xpose.msra.mxu0 0.0
        %746 = vmatpush.xpose.msra.mxu0 0.0
        %747 = vmatpush.xpose.msra.mxu0 0.0
        %748 = vmatpush.xpose.msra.mxu0 0.0
        %749 = vmatpush.xpose.msra.mxu0 0.0
        %750 = vmatpush.xpose.msra.mxu0 0.0
        %751 = vmatpush.xpose.msra.mxu0 0.0
        %752 = vmatpush.xpose.msra.mxu0 0.0
        %753 = vmatpush.xpose.msra.mxu0 0.0
        %754 = vmatpush.xpose.msra.mxu0 0.0
        %755 = vmatpush.xpose.msra.mxu0 0.0
        %756 = vmatpush.xpose.msra.mxu0 0.0
        %757 = vmatpush.xpose.msra.mxu0 %v741
        %758 = vmatpush.xpose.msra.mxu0 %v739
        %759 = vmatmul.f32.gmra.mxu0 %v735
        %v760 = vpop.f32.mrf.mxu0
        %v761 = vadd.f32 0.0, %v760
        %762 = vmatmul.f32.gmra.mxu0 %v737
        %v763 = vpop.f32.mrf.mxu0
        %v764 = vadd.f32 0.0, %v763
        %765 = vdwg.mxu0
        %s766 = scalar_lea.vmem [#allocation2], 32
        %v767 = vld [vmem:[%s766] sm:$0xff]
        %v768 = vld [vmem:[%s766 + $0x8] sm:$0xff]
        %v769 = vsel %vm487, %v761, -inf
        %770 = vmax.xlane.f32.xlu0 %v769
        %v771 = vpop.xlane.xlu0 %770
        %v772 = vsel %vm487, %v764, -inf
        %773 = vmax.xlane.f32.xlu0 %v772
        %v774 = vpop.xlane.xlu0 %773
        %v775 = vmax.f32 %v767, %v771
        %v776 = vmax.f32 %v768, %v774
        %v777 = vsub.f32 %v767, %v775
        %v778 = vsub.f32 %v768, %v776
        %v779 = vmul.f32 %v777, 1.442695
        %v780 = vpow.pop %v779
        %v781 = vmul.f32 %v778, 1.442695
        %v782 = vpow.pop %v781
        %784 = vset.pattern.permute.xlu0 0
        %785 = vperm.xlu0 %784, %v775
        %v786 = vpop.permute.xlu0 %785
        %789 = vset.pattern.permute.xlu0 0
        %790 = vperm.xlu0 %789, %v776
        %v791 = vpop.permute.xlu0 %790
        %v793 = vsub.f32 %v761, %v786
        %v794 = vsub.f32 %v764, %v791
        %v795 = vmul.f32 %v793, 1.442695
        %v796 = vpow.pop %v795
        %v797 = vmul.f32 %v794, 1.442695
        %v798 = vpow.pop %v797
        %s799 = scalar_lea.vmem [#allocation3], 32
        %v800 = vld [vmem:[%s799] sm:$0xff]
        %v801 = vld [vmem:[%s799 + $0x8] sm:$0xff]
        %v802 = vmul.f32 %v780, %v800
        %v803 = vmul.f32 %v782, %v801
        %v804 = vsel %vm487, %v796, 0.0
        %805 = vadd.xlane.f32.xlu0 %v804
        %v806 = vpop.xlane.xlu0 %805
        %v807 = vsel %vm487, %v798, 0.0
        %808 = vadd.xlane.f32.xlu0 %v807
        %v809 = vpop.xlane.xlu0 %808
        %v810 = vadd.f32 %v802, %v806
        %v811 = vadd.f32 %v803, %v809
        %812 = vst.msk [vmem:[%s799] sm:$0xff] %vm530, %v810
        %813 = vst.msk [vmem:[%s799 + $0x8] sm:$0xff] %vm530, %v811
        %s814 = scalar_lea.vmem [#allocation4], 32
        %v815 = vld [vmem:[%s814] sm:$0xff]
        %v816 = vld [vmem:[%s814 + $0x8] sm:$0xff]
        %818 = vset.pattern.permute.xlu0 0
        %819 = vperm.xlu0 %818, %v780
        %v820 = vpop.permute.xlu0 %819
        %823 = vset.pattern.permute.xlu0 0
        %824 = vperm.xlu0 %823, %v782
        %v825 = vpop.permute.xlu0 %824
        %v827 = vmul.f32 %v820, %v815
        %v828 = vmul.f32 %v825, %v816
        %829 = vrot.lane.b32.xlu0 %v445, 64
        %v830 = vpop.permute.xlu0 %829
        %831 = vrot.lane.b32.xlu0 %v446, 64
        %v832 = vpop.permute.xlu0 %831
        %v836 = vsel %vm487, %v796, 0
        %v839 = vsel %vm487, %v798, 0
        %841 = vmatpush.msra.mxu0 0.0
        %842 = vmatpush.msra.mxu0 0.0
        %843 = vmatpush.msra.mxu0 0.0
        %844 = vmatpush.msra.mxu0 0.0
        %845 = vmatpush.msra.mxu0 0.0
        %846 = vmatpush.msra.mxu0 0.0
        %847 = vmatpush.msra.mxu0 0.0
        %848 = vmatpush.msra.mxu0 0.0
        %849 = vmatpush.msra.mxu0 0.0
        %850 = vmatpush.msra.mxu0 0.0
        %851 = vmatpush.msra.mxu0 0.0
        %852 = vmatpush.msra.mxu0 0.0
        %853 = vmatpush.msra.mxu0 0.0
        %854 = vmatpush.msra.mxu0 0.0
        %855 = vmatpush.msra.mxu0 %v832
        %856 = vmatpush.msra.mxu0 %v830
        %857 = vmatmul.f32.gmra.mxu0 %v836
        %v858 = vpop.f32.mrf.mxu0
        %v859 = vadd.f32 0.0, %v858
        %860 = vmatmul.f32.gmra.mxu0 %v839
        %v861 = vpop.f32.mrf.mxu0
        %v862 = vadd.f32 0.0, %v861
        %863 = vdwg.mxu0
        %v864 = vadd.f32 %v827, %v859
        %v865 = vadd.f32 %v828, %v862
        %866 = vst.msk [vmem:[%s814] sm:$0xff] %vm449, %v864
        %867 = vst.msk [vmem:[%s814 + $0x8] sm:$0xff] %vm449, %v865
        %868 = vst.msk [vmem:[%s766] sm:$0xff] %vm530, %v775
        %869 = vst.msk [vmem:[%s766 + $0x8] sm:$0xff] %vm530, %v776
        %870 = vrot.lane.b32.xlu0 %v447, 32
        %v871 = vpop.permute.xlu0 %870
        %872 = vrot.lane.b32.xlu0 %v448, 32
        %v873 = vpop.permute.xlu0 %872
        %874 = vrot.lane.b32.xlu0 %v443, 32
        %v875 = vpop.permute.xlu0 %874
        %876 = vrot.lane.b32.xlu0 %v444, 32
        %v877 = vpop.permute.xlu0 %876
        %v878 = vsel %vm449, %v871, 0
        %v880 = vsel %vm449, %v873, 0
        %v882 = vsel %vm449, %v875, 0
        %v884 = vsel %vm449, %v877, 0
        %886 = vmatpush.xpose.msra.mxu0 0.0
        %887 = vmatpush.xpose.msra.mxu0 0.0
        %888 = vmatpush.xpose.msra.mxu0 0.0
        %889 = vmatpush.xpose.msra.mxu0 0.0
        %890 = vmatpush.xpose.msra.mxu0 0.0
        %891 = vmatpush.xpose.msra.mxu0 0.0
        %892 = vmatpush.xpose.msra.mxu0 0.0
        %893 = vmatpush.xpose.msra.mxu0 0.0
        %894 = vmatpush.xpose.msra.mxu0 0.0
        %895 = vmatpush.xpose.msra.mxu0 0.0
        %896 = vmatpush.xpose.msra.mxu0 0.0
        %897 = vmatpush.xpose.msra.mxu0 0.0
        %898 = vmatpush.xpose.msra.mxu0 0.0
        %899 = vmatpush.xpose.msra.mxu0 0.0
        %900 = vmatpush.xpose.msra.mxu0 %v884
        %901 = vmatpush.xpose.msra.mxu0 %v882
        %902 = vmatmul.f32.gmra.mxu0 %v878
        %v903 = vpop.f32.mrf.mxu0
        %v904 = vadd.f32 0.0, %v903
        %905 = vmatmul.f32.gmra.mxu0 %v880
        %v906 = vpop.f32.mrf.mxu0
        %v907 = vadd.f32 0.0, %v906
        %908 = vdwg.mxu0
        %s909 = scalar_lea.vmem [#allocation2], 48
        %v910 = vld [vmem:[%s909] sm:$0xff]
        %v911 = vld [vmem:[%s909 + $0x8] sm:$0xff]
        %v912 = vsel %vm487, %v904, -inf
        %913 = vmax.xlane.f32.xlu0 %v912
        %v914 = vpop.xlane.xlu0 %913
        %v915 = vsel %vm487, %v907, -inf
        %916 = vmax.xlane.f32.xlu0 %v915
        %v917 = vpop.xlane.xlu0 %916
        %v918 = vmax.f32 %v910, %v914
        %v919 = vmax.f32 %v911, %v917
        %v920 = vsub.f32 %v910, %v918
        %v921 = vsub.f32 %v911, %v919
        %v922 = vmul.f32 %v920, 1.442695
        %v923 = vpow.pop %v922
        %v924 = vmul.f32 %v921, 1.442695
        %v925 = vpow.pop %v924
        %927 = vset.pattern.permute.xlu0 0
        %928 = vperm.xlu0 %927, %v918
        %v929 = vpop.permute.xlu0 %928
        %932 = vset.pattern.permute.xlu0 0
        %933 = vperm.xlu0 %932, %v919
        %v934 = vpop.permute.xlu0 %933
        %v936 = vsub.f32 %v904, %v929
        %v937 = vsub.f32 %v907, %v934
        %v938 = vmul.f32 %v936, 1.442695
        %v939 = vpow.pop %v938
        %v940 = vmul.f32 %v937, 1.442695
        %v941 = vpow.pop %v940
        %s942 = scalar_lea.vmem [#allocation3], 48
        %v943 = vld [vmem:[%s942] sm:$0xff]
        %v944 = vld [vmem:[%s942 + $0x8] sm:$0xff]
        %v945 = vmul.f32 %v923, %v943
        %v946 = vmul.f32 %v925, %v944
        %v947 = vsel %vm487, %v939, 0.0
        %948 = vadd.xlane.f32.xlu0 %v947
        %v949 = vpop.xlane.xlu0 %948
        %v950 = vsel %vm487, %v941, 0.0
        %951 = vadd.xlane.f32.xlu0 %v950
        %v952 = vpop.xlane.xlu0 %951
        %v953 = vadd.f32 %v945, %v949
        %v954 = vadd.f32 %v946, %v952
        %955 = vst.msk [vmem:[%s942] sm:$0xff] %vm530, %v953
        %956 = vst.msk [vmem:[%s942 + $0x8] sm:$0xff] %vm530, %v954
        %s957 = scalar_lea.vmem [#allocation4], 48
        %v958 = vld [vmem:[%s957] sm:$0xff]
        %v959 = vld [vmem:[%s957 + $0x8] sm:$0xff]
        %961 = vset.pattern.permute.xlu0 0
        %962 = vperm.xlu0 %961, %v923
        %v963 = vpop.permute.xlu0 %962
        %966 = vset.pattern.permute.xlu0 0
        %967 = vperm.xlu0 %966, %v925
        %v968 = vpop.permute.xlu0 %967
        %v970 = vmul.f32 %v963, %v958
        %v971 = vmul.f32 %v968, %v959
        %972 = vrot.lane.b32.xlu0 %v445, 32
        %v973 = vpop.permute.xlu0 %972
        %974 = vrot.lane.b32.xlu0 %v446, 32
        %v975 = vpop.permute.xlu0 %974
        %v979 = vsel %vm487, %v939, 0
        %v982 = vsel %vm487, %v941, 0
        %984 = vmatpush.msra.mxu0 0.0
        %985 = vmatpush.msra.mxu0 0.0
        %986 = vmatpush.msra.mxu0 0.0
        %987 = vmatpush.msra.mxu0 0.0
        %988 = vmatpush.msra.mxu0 0.0
        %989 = vmatpush.msra.mxu0 0.0
        %990 = vmatpush.msra.mxu0 0.0
        %991 = vmatpush.msra.mxu0 0.0
        %992 = vmatpush.msra.mxu0 0.0
        %993 = vmatpush.msra.mxu0 0.0
        %994 = vmatpush.msra.mxu0 0.0
        %995 = vmatpush.msra.mxu0 0.0
        %996 = vmatpush.msra.mxu0 0.0
        %997 = vmatpush.msra.mxu0 0.0
        %998 = vmatpush.msra.mxu0 %v975
        %999 = vmatpush.msra.mxu0 %v973
        %1000 = vmatmul.f32.gmra.mxu0 %v979
        %v1001 = vpop.f32.mrf.mxu0
        %v1002 = vadd.f32 0.0, %v1001
        %1003 = vmatmul.f32.gmra.mxu0 %v982
        %v1004 = vpop.f32.mrf.mxu0
        %v1005 = vadd.f32 0.0, %v1004
        %1006 = vdwg.mxu0
        %v1007 = vadd.f32 %v970, %v1002
        %v1008 = vadd.f32 %v971, %v1005
        %1009 = vst.msk [vmem:[%s957] sm:$0xff] %vm449, %v1007
        %1010 = vst.msk [vmem:[%s957 + $0x8] sm:$0xff] %vm449, %v1008
        %1011 = vst.msk [vmem:[%s909] sm:$0xff] %vm530, %v918
        %1012 = vst.msk [vmem:[%s909 + $0x8] sm:$0xff] %vm530, %v919
        // Predicated region
        $region151: #{image_encoder_forward.29} parent=133 // pred_check
          %p1013 = pneg %p411
        $region152: #{image_encoder_forward.29} parent=133 // pred_check_branch
          %1015 = sbr.rel (%p1013) target = $region154
        $region153: #{image_encoder_forward.29} parent=133 // pred_region
          %v1016 = vld [vmem:[#allocation3] sm:$0xff]
          %v1017 = vld [vmem:[#allocation3 + $0x8] sm:$0xff]
          %v1018 = vrcp.pop %v1016
          %v1019 = vmul.f32 %v1016, %v1018
          %v1020 = vsub.f32 1.0, %v1019
          %v1021 = vmul.f32 %v1018, %v1020
          %v1022 = vadd.f32 %v1018, %v1021
          %vm1023 = vweird.f32 %v1016
          %vm1024 = vweird.f32 %v1018
          %vm1025 = vmor %vm1023, %vm1024
          %v1026 = vsel %vm1025, %v1018, %v1022
          %v1027 = vand.u32 2147483647, %v1016
          %vm1028 = vcmp.eq.f32.partialorder %v1027, 8.507059e+37
          %v1029 = vand.u32 %v1016, 2147483648
          %v1030 = vor.u32 1.1754944e-38, %v1029
          %v1031 = vsel %vm1028, %v1030, %v1026
          %v1032 = vmul.f32 1.0, %v1031
          %v1033 = vrcp.pop %v1017
          %v1034 = vmul.f32 %v1017, %v1033
          %v1035 = vsub.f32 1.0, %v1034
          %v1036 = vmul.f32 %v1033, %v1035
          %v1037 = vadd.f32 %v1033, %v1036
          %vm1038 = vweird.f32 %v1017
          %vm1039 = vweird.f32 %v1033
          %vm1040 = vmor %vm1038, %vm1039
          %v1041 = vsel %vm1040, %v1033, %v1037
          %v1042 = vand.u32 2147483647, %v1017
          %vm1043 = vcmp.eq.f32.partialorder %v1042, 8.507059e+37
          %v1044 = vand.u32 %v1017, 2147483648
          %v1045 = vor.u32 1.1754944e-38, %v1044
          %v1046 = vsel %vm1043, %v1045, %v1041
          %v1047 = vmul.f32 1.0, %v1046
          %v1048 = vld [vmem:[#allocation4] sm:$0xff]
          %v1049 = vld [vmem:[#allocation4 + $0x8] sm:$0xff]
          %1051 = vset.pattern.permute.xlu0 0
          %1052 = vperm.xlu0 %1051, %v1032
          %v1053 = vpop.permute.xlu0 %1052
          %1056 = vset.pattern.permute.xlu0 0
          %1057 = vperm.xlu0 %1056, %v1047
          %v1058 = vpop.permute.xlu0 %1057
          %v1060 = vmul.f32 %v1048, %v1053
          %v1061 = vmul.f32 %v1049, %v1058
          %v1062 = vld [vmem:[%s654] sm:$0xff]
          %v1063 = vld [vmem:[%s654 + $0x8] sm:$0xff]
          %v1064 = vrcp.pop %v1062
          %v1065 = vmul.f32 %v1062, %v1064
          %v1066 = vsub.f32 1.0, %v1065
          %v1067 = vmul.f32 %v1064, %v1066
          %v1068 = vadd.f32 %v1064, %v1067
          %vm1069 = vweird.f32 %v1062
          %vm1070 = vweird.f32 %v1064
          %vm1071 = vmor %vm1069, %vm1070
          %v1072 = vsel %vm1071, %v1064, %v1068
          %v1073 = vand.u32 2147483647, %v1062
          %vm1074 = vcmp.eq.f32.partialorder %v1073, 8.507059e+37
          %v1075 = vand.u32 %v1062, 2147483648
          %v1076 = vor.u32 1.1754944e-38, %v1075
          %v1077 = vsel %vm1074, %v1076, %v1072
          %v1078 = vmul.f32 1.0, %v1077
          %v1079 = vrcp.pop %v1063
          %v1080 = vmul.f32 %v1063, %v1079
          %v1081 = vsub.f32 1.0, %v1080
          %v1082 = vmul.f32 %v1079, %v1081
          %v1083 = vadd.f32 %v1079, %v1082
          %vm1084 = vweird.f32 %v1063
          %vm1085 = vweird.f32 %v1079
          %vm1086 = vmor %vm1084, %vm1085
          %v1087 = vsel %vm1086, %v1079, %v1083
          %v1088 = vand.u32 2147483647, %v1063
          %vm1089 = vcmp.eq.f32.partialorder %v1088, 8.507059e+37
          %v1090 = vand.u32 %v1063, 2147483648
          %v1091 = vor.u32 1.1754944e-38, %v1090
          %v1092 = vsel %vm1089, %v1091, %v1087
          %v1093 = vmul.f32 1.0, %v1092
          %v1094 = vld [vmem:[%s669] sm:$0xff]
          %v1095 = vld [vmem:[%s669 + $0x8] sm:$0xff]
          %1097 = vset.pattern.permute.xlu0 0
          %1098 = vperm.xlu0 %1097, %v1078
          %v1099 = vpop.permute.xlu0 %1098
          %1102 = vset.pattern.permute.xlu0 0
          %1103 = vperm.xlu0 %1102, %v1093
          %v1104 = vpop.permute.xlu0 %1103
          %v1106 = vmul.f32 %v1094, %v1099
          %v1107 = vmul.f32 %v1095, %v1104
          %v1108 = vld [vmem:[%s799] sm:$0xff]
          %v1109 = vld [vmem:[%s799 + $0x8] sm:$0xff]
          %v1110 = vrcp.pop %v1108
          %v1111 = vmul.f32 %v1108, %v1110
          %v1112 = vsub.f32 1.0, %v1111
          %v1113 = vmul.f32 %v1110, %v1112
          %v1114 = vadd.f32 %v1110, %v1113
          %vm1115 = vweird.f32 %v1108
          %vm1116 = vweird.f32 %v1110
          %vm1117 = vmor %vm1115, %vm1116
          %v1118 = vsel %vm1117, %v1110, %v1114
          %v1119 = vand.u32 2147483647, %v1108
          %vm1120 = vcmp.eq.f32.partialorder %v1119, 8.507059e+37
          %v1121 = vand.u32 %v1108, 2147483648
          %v1122 = vor.u32 1.1754944e-38, %v1121
          %v1123 = vsel %vm1120, %v1122, %v1118
          %v1124 = vmul.f32 1.0, %v1123
          %v1125 = vrcp.pop %v1109
          %v1126 = vmul.f32 %v1109, %v1125
          %v1127 = vsub.f32 1.0, %v1126
          %v1128 = vmul.f32 %v1125, %v1127
          %v1129 = vadd.f32 %v1125, %v1128
          %vm1130 = vweird.f32 %v1109
          %vm1131 = vweird.f32 %v1125
          %vm1132 = vmor %vm1130, %vm1131
          %v1133 = vsel %vm1132, %v1125, %v1129
          %v1134 = vand.u32 2147483647, %v1109
          %vm1135 = vcmp.eq.f32.partialorder %v1134, 8.507059e+37
          %v1136 = vand.u32 %v1109, 2147483648
          %v1137 = vor.u32 1.1754944e-38, %v1136
          %v1138 = vsel %vm1135, %v1137, %v1133
          %v1139 = vmul.f32 1.0, %v1138
          %v1140 = vld [vmem:[%s814] sm:$0xff]
          %v1141 = vld [vmem:[%s814 + $0x8] sm:$0xff]
          %1143 = vset.pattern.permute.xlu0 0
          %1144 = vperm.xlu0 %1143, %v1124
          %v1145 = vpop.permute.xlu0 %1144
          %1148 = vset.pattern.permute.xlu0 0
          %1149 = vperm.xlu0 %1148, %v1139
          %v1150 = vpop.permute.xlu0 %1149
          %v1152 = vmul.f32 %v1140, %v1145
          %v1153 = vmul.f32 %v1141, %v1150
          %v1154 = vld [vmem:[%s942] sm:$0xff]
          %v1155 = vld [vmem:[%s942 + $0x8] sm:$0xff]
          %v1156 = vrcp.pop %v1154
          %v1157 = vmul.f32 %v1154, %v1156
          %v1158 = vsub.f32 1.0, %v1157
          %v1159 = vmul.f32 %v1156, %v1158
          %v1160 = vadd.f32 %v1156, %v1159
          %vm1161 = vweird.f32 %v1154
          %vm1162 = vweird.f32 %v1156
          %vm1163 = vmor %vm1161, %vm1162
          %v1164 = vsel %vm1163, %v1156, %v1160
          %v1165 = vand.u32 2147483647, %v1154
          %vm1166 = vcmp.eq.f32.partialorder %v1165, 8.507059e+37
          %v1167 = vand.u32 %v1154, 2147483648
          %v1168 = vor.u32 1.1754944e-38, %v1167
          %v1169 = vsel %vm1166, %v1168, %v1164
          %v1170 = vmul.f32 1.0, %v1169
          %v1171 = vrcp.pop %v1155
          %v1172 = vmul.f32 %v1155, %v1171
          %v1173 = vsub.f32 1.0, %v1172
          %v1174 = vmul.f32 %v1171, %v1173
          %v1175 = vadd.f32 %v1171, %v1174
          %vm1176 = vweird.f32 %v1155
          %vm1177 = vweird.f32 %v1171
          %vm1178 = vmor %vm1176, %vm1177
          %v1179 = vsel %vm1178, %v1171, %v1175
          %v1180 = vand.u32 2147483647, %v1155
          %vm1181 = vcmp.eq.f32.partialorder %v1180, 8.507059e+37
          %v1182 = vand.u32 %v1155, 2147483648
          %v1183 = vor.u32 1.1754944e-38, %v1182
          %v1184 = vsel %vm1181, %v1183, %v1179
          %v1185 = vmul.f32 1.0, %v1184
          %v1186 = vld [vmem:[%s957] sm:$0xff]
          %v1187 = vld [vmem:[%s957 + $0x8] sm:$0xff]
          %1189 = vset.pattern.permute.xlu0 0
          %1190 = vperm.xlu0 %1189, %v1170
          %v1191 = vpop.permute.xlu0 %1190
          %1194 = vset.pattern.permute.xlu0 0
          %1195 = vperm.xlu0 %1194, %v1185
          %v1196 = vpop.permute.xlu0 %1195
          %v1198 = vmul.f32 %v1186, %v1191
          %v1199 = vmul.f32 %v1187, %v1196
          %1202 = vrot.lane.b32.xlu0 %v1106, 32
          %v1203 = vpop.permute.xlu0 %1202
          %1204 = vrot.lane.b32.xlu0 %v1107, 32
          %v1205 = vpop.permute.xlu0 %1204
          %1210 = vrot.lane.b32.xlu0 %v1152, 64
          %v1211 = vpop.permute.xlu0 %1210
          %1212 = vrot.lane.b32.xlu0 %v1153, 64
          %v1213 = vpop.permute.xlu0 %1212
          %1218 = vrot.lane.b32.xlu0 %v1198, 96
          %v1219 = vpop.permute.xlu0 %1218
          %1220 = vrot.lane.b32.xlu0 %v1199, 96
          %v1221 = vpop.permute.xlu0 %1220
          %v1224 = vsel %vm449, %v1060, %v1203
          %v1225 = vsel %vm449, %v1061, %v1205
          %vm1226 = vcmask 523264
          %v1227 = vsel %vm1226, %v1224, %v1211
          %v1228 = vsel %vm1226, %v1225, %v1213
          %vm1229 = vcmask 785408
          %v1230 = vsel %vm1229, %v1227, %v1219
          %v1231 = vsel %vm1229, %v1228, %v1221
          %1232 = vst [vmem:[%s409] sm:$0xff] %v1230
          %1233 = vst [vmem:[%s409 + $0x8] sm:$0xff] %v1231
        $region154: #{image_encoder_forward.29} parent=133 // pred_fallthru
          _
        %s1234 = smul.u32 2, %s22
        %p1235 = scmp.lt.s32.totalorder %s20, 1
        %s1236 = scalar_select %p1235, %s20, 1
        %p1237 = scmp.lt.s32.totalorder %s1234, 1
        %s1238 = scalar_select %p1237, %s1234, 1
        %p1239 = scmp.lt.s32.totalorder %s21, 0
        %s1240 = scalar_select %p1239, %s21, 0
        %s1241 = sadd.s32 %s1240, %s1238
        %s1242 = smul.addr %s1236, 2
        %s1243 = sadd.s32 %s1241, %s1242
        %s1244 = smul.addr %s1243, 8
        %s1245 = scalar_lea.vmem %s3, %s1244
        // Predicated region
        $region155: #{image_encoder_forward.29} parent=133 // pred_check
          %p1246 = pneg %p156
        $region156: #{image_encoder_forward.29} parent=133 // pred_check_branch
          %1248 = sbr.rel (%p1246) target = $region158
        $region157: #{image_encoder_forward.29} parent=133 // pred_region
          %s1249 = smul.u32 2, %s22
        $region158: #{image_encoder_forward.29} parent=133 // pred_fallthru
          _
      $region134: #{image_encoder_forward.29} parent=5 // pred_fallthru
        _
      %p1250 = scmp.le.s32.totalorder 2, %s9
      // Predicated region
      $region159: #{image_encoder_forward.29} parent=5 // pred_check
        %p1251 = pneg %p1250
      $region160: #{image_encoder_forward.29} parent=5 // pred_check_branch
        %1253 = sbr.rel (%p1251) target = $region162
      $region161: #{image_encoder_forward.29} parent=5 // pred_region
        %s1254 = ssub.s32 %s9, 2
        // Predicated region
        $region163: #{image_encoder_forward.29} parent=161 // pred_check
          %p1255 = pneg %p162
        $region164: #{image_encoder_forward.29} parent=161 // pred_check_branch
          %1257 = sbr.rel (%p1255) target = $region166
        $region165: #{image_encoder_forward.29} parent=161 // pred_region
          %s1258 = smul.u32 2, %s26
          %p1259 = scmp.lt.s32.totalorder %s24, 1
          %s1260 = scalar_select %p1259, %s24, 1
          %p1261 = scmp.lt.s32.totalorder %s1258, 1
          %s1262 = scalar_select %p1261, %s1258, 1
          %p1263 = scmp.lt.s32.totalorder %s25, 0
          %s1264 = scalar_select %p1263, %s25, 0
          %s1265 = sadd.s32 %s1264, %s1262
          %s1266 = smul.addr %s1260, 2
          %s1267 = sadd.s32 %s1265, %s1266
          %s1268 = smul.addr %s1267, 8
          %s1269 = scalar_lea.vmem %s3, %s1268
        $region166: #{image_encoder_forward.29} parent=161 // pred_fallthru
          _
      $region162: #{image_encoder_forward.29} parent=5 // pred_fallthru
        _
    $region6: #{image_encoder_forward.29} parent=1 // loop_footer
      %s13 = sadd.s32 1, %s9
    $region7: #{image_encoder_forward.29} parent=1 // loop_footer_branch
      %8 = sbr.rel target = $region3
    $region8: #{image_encoder_forward.29} parent=1 // loop_exit
      _

// kernel: image_encoder_forward.37
$region0: #{image_encoder_forward.37}
  #allocation0 [shape = 'u32[]', space=smem, size = 0x4, offset = 0x4, fixed_abs, tag = 'smem constant byte address 0x4 - core index']
  #allocation1 [shape = 'u32[72,128]{1,0:T(1,128)}', space=vmem, size = 0x9000, scoped, tag = 'internal scratch']
  %s0 = inlined_call_operand.vmem [shape: f32[32,128], index: 0, kind: input, shape index: {}]
  %s1 = inlined_call_operand.vmem [shape: f32[1,128], index: 1, kind: input, shape index: {}]
  %s2 = inlined_call_operand.vmem [shape: f32[1,128], index: 2, kind: input, shape index: {}]
  %s3 = inlined_call_operand.hbm [shape: f32[32,128], index: 3, kind: output, shape index: {}]
  %s4 = sld [smem:[#allocation0]]
  $region45: #{image_encoder_forward.37} parent=0
    _
  %s6 = ssub.s32 1, %s4
  %s7 = scalar_select 0, %s6, %s4
  $region1: #{image_encoder_forward.37} parent=0
    #allocation2 [shape = 'u8[16384]{0}', space=vmem, size = 0x4000, scoped, tag = 'output window, operand 0']
    #allocation3 [shape = 's32[2]{0}', space=sflag, size = 0x8, scoped, tag = 'scoped memory for image_encoder_forward.37']
    %8 = vsyncpa [#allocation3], 0
    %s9 = scalar_lea.sflag [#allocation3], 1
    %10 = vsyncpa %s9, 0
    loop: start=0, step=1, limit=4
    $region2: #{image_encoder_forward.37} parent=1 // loop_pre_header
      _
    $region3: #{image_encoder_forward.37} parent=1 // loop_header
      %s12 = sphi 0, %s16
      %p13 = scmp.ge.s32.totalorder %s12, 4
      %s22 = sphi 0, %s24
      %s25 = sphi 0, %s22
      %s26 = sphi 0, %s25
      %s42 = sphi 0, %s26
      %s46 = sphi 0, %s46
      %s48 = sphi 0, %s46
      %s49 = sphi 0, %s48
      %s63 = sphi 0, %s49
      %s67 = sphi 0, %s67
      %s69 = sphi 0, %s67
      %s70 = sphi 0, %s69
      %s84 = sphi 0, %s70
      %s90 = sphi 0, %s92
      %s93 = sphi 0, %s90
      %s94 = sphi 0, %s93
      %s110 = sphi 0, %s94
    $region4: #{image_encoder_forward.37} parent=1 // loop_header_branch
      %15 = sbr.rel (%p13) target = $region8
    $region5: #{image_encoder_forward.37} parent=1 // loop_body
      %s17 = ssub.s32 %s12, 1
      %s18 = ssub.s32 %s12, 2
      %s19 = sadd.s32 %s12, 1
      %s20 = ssub.s32 %s12, %s19
      %p21 = scmp.eq.s32.totalorder %s20, 0
      %s23 = sadd.s32 %s22, 1
      %s24 = scalar_select %p21, %s22, %s23
      %p27 = pneg %p21
      %p28 = scmp.eq.s32.totalorder %s12, 1
      %p29 = por %p27, %p28
      %p30 = scmp.ne.s32.totalorder %s22, %s25
      %p31 = scmp.eq.s32.totalorder %s12, 0
      %p32 = por %p30, %p31
      %p33 = scmp.ne.s32.totalorder %s22, %s25
      %p34 = scmp.eq.s32.totalorder %s17, 1
      %p35 = por %p33, %p34
      %p36 = scmp.ne.s32.totalorder %s25, %s26
      %p37 = scmp.eq.s32.totalorder %s17, 0
      %p38 = por %p36, %p37
      %p39 = scmp.ne.s32.totalorder %s25, %s26
      %p40 = scmp.eq.s32.totalorder %s18, 1
      %p41 = por %p39, %p40
      %p43 = scmp.ne.s32.totalorder %s26, %s42
      %p44 = scmp.eq.s32.totalorder %s18, 0
      %p45 = por %p43, %p44
      %s47 = sadd.s32 %s46, 1
      %p50 = scmp.eq.s32.totalorder %s12, 1
      %p51 = scmp.ne.s32.totalorder %s46, %s48
      %p52 = scmp.eq.s32.totalorder %s12, 0
      %p53 = por %p51, %p52
      %p54 = scmp.ne.s32.totalorder %s46, %s48
      %p55 = scmp.eq.s32.totalorder %s17, 1
      %p56 = por %p54, %p55
      %p57 = scmp.ne.s32.totalorder %s48, %s49
      %p58 = scmp.eq.s32.totalorder %s17, 0
      %p59 = por %p57, %p58
      %p60 = scmp.ne.s32.totalorder %s48, %s49
      %p61 = scmp.eq.s32.totalorder %s18, 1
      %p62 = por %p60, %p61
      %p64 = scmp.ne.s32.totalorder %s49, %s63
      %p65 = scmp.eq.s32.totalorder %s18, 0
      %p66 = por %p64, %p65
      %s68 = sadd.s32 %s67, 1
      %p71 = scmp.eq.s32.totalorder %s12, 1
      %p72 = scmp.ne.s32.totalorder %s67, %s69
      %p73 = scmp.eq.s32.totalorder %s12, 0
      %p74 = por %p72, %p73
      %p75 = scmp.ne.s32.totalorder %s67, %s69
      %p76 = scmp.eq.s32.totalorder %s17, 1
      %p77 = por %p75, %p76
      %p78 = scmp.ne.s32.totalorder %s69, %s70
      %p79 = scmp.eq.s32.totalorder %s17, 0
      %p80 = por %p78, %p79
      %p81 = scmp.ne.s32.totalorder %s69, %s70
      %p82 = scmp.eq.s32.totalorder %s18, 1
      %p83 = por %p81, %p82
      %p85 = scmp.ne.s32.totalorder %s70, %s84
      %p86 = scmp.eq.s32.totalorder %s18, 0
      %p87 = por %p85, %p86
      %s88 = ssub.s32 %s12, %s19
      %p89 = scmp.eq.s32.totalorder %s88, 0
      %s91 = sadd.s32 %s90, 1
      %s92 = scalar_select %p89, %s90, %s91
      %p95 = pneg %p89
      %p96 = scmp.eq.s32.totalorder %s12, 1
      %p97 = por %p95, %p96
      %p98 = scmp.ne.s32.totalorder %s90, %s93
      %p99 = scmp.eq.s32.totalorder %s12, 0
      %p100 = por %p98, %p99
      %p101 = scmp.ne.s32.totalorder %s90, %s93
      %p102 = scmp.eq.s32.totalorder %s17, 1
      %p103 = por %p101, %p102
      %p104 = scmp.ne.s32.totalorder %s93, %s94
      %p105 = scmp.eq.s32.totalorder %s17, 0
      %p106 = por %p104, %p105
      %p107 = scmp.ne.s32.totalorder %s93, %s94
      %p108 = scmp.eq.s32.totalorder %s18, 1
      %p109 = por %p107, %p108
      %p111 = scmp.ne.s32.totalorder %s94, %s110
      %p112 = scmp.eq.s32.totalorder %s18, 0
      %p113 = por %p111, %p112
      %p114 = scmp.le.s32.totalorder 1, %s12
      %p115 = scmp.lt.s32.totalorder %s12, 3
      %p116 = pnand %p114, %p115
      %p117 = pneg %p116
      // Predicated region
      $region9: #{image_encoder_forward.37} parent=5 // pred_check
        _
      $region10: #{image_encoder_forward.37} parent=5 // pred_check_branch
        %119 = sbr.rel (%p116) target = $region12
      $region11: #{image_encoder_forward.37} parent=5 // pred_region
        %s120 = ssub.s32 %s12, 1
        // Predicated region
        $region13: #{image_encoder_forward.37} parent=11 // pred_check
          %p121 = pneg %p59
        $region14: #{image_encoder_forward.37} parent=11 // pred_check_branch
          %123 = sbr.rel (%p121) target = $region16
        $region15: #{image_encoder_forward.37} parent=11 // pred_region
          _
        $region16: #{image_encoder_forward.37} parent=11 // pred_fallthru
          _
        // Predicated region
        $region17: #{image_encoder_forward.37} parent=11 // pred_check
          %p124 = pneg %p80
        $region18: #{image_encoder_forward.37} parent=11 // pred_check_branch
          %126 = sbr.rel (%p124) target = $region20
        $region19: #{image_encoder_forward.37} parent=11 // pred_region
          _
        $region20: #{image_encoder_forward.37} parent=11 // pred_fallthru
          _
      $region12: #{image_encoder_forward.37} parent=5 // pred_fallthru
        _
      %p127 = scmp.lt.s32.totalorder %s12, 2
      // Predicated region
      $region21: #{image_encoder_forward.37} parent=5 // pred_check
        %p128 = pneg %p127
      $region22: #{image_encoder_forward.37} parent=5 // pred_check_branch
        %130 = sbr.rel (%p128) target = $region24
      $region23: #{image_encoder_forward.37} parent=5 // pred_region
        // Predicated region
        $region25: #{image_encoder_forward.37} parent=23 // pred_check
          %p131 = pneg %p32
        $region26: #{image_encoder_forward.37} parent=23 // pred_check_branch
          %133 = sbr.rel (%p131) target = $region28
        $region27: #{image_encoder_forward.37} parent=23 // pred_region
          %s134 = smul.u32 2, %s12
          %p135 = scmp.lt.s32.totalorder %s134, 3
          %s136 = scalar_select %p135, %s134, 3
          %s137 = smul.addr %s136, 8
          %s138 = scalar_lea.vmem %s0, %s137
          %s139 = smul.u32 2, %s12
        $region28: #{image_encoder_forward.37} parent=23 // pred_fallthru
          _
      $region24: #{image_encoder_forward.37} parent=5 // pred_fallthru
        _
      %p140 = scmp.le.s32.totalorder 1, %s12
      %p141 = scmp.lt.s32.totalorder %s12, 3
      %p142 = pnand %p140, %p141
      %p143 = pneg %p142
      // Predicated region
      $region29: #{image_encoder_forward.37} parent=5 // pred_check
        _
      $region30: #{image_encoder_forward.37} parent=5 // pred_check_branch
        %145 = sbr.rel (%p142) target = $region32
      $region31: #{image_encoder_forward.37} parent=5 // pred_region
        %s146 = ssub.s32 %s12, 1
        %s147 = smul.u32 2, %s17
        %p148 = scmp.lt.s32.totalorder %s147, 3
        %s149 = scalar_select %p148, %s147, 3
        %s150 = smul.addr %s149, 8
        %s151 = scalar_lea.vmem %s0, %s150
        %p152 = pneg %p38
        %p153 = pneg %p35
        %p154 = pneg %p59
        %p155 = pneg %p56
        %p156 = pneg %p80
        %p157 = pneg %p77
        %p158 = pneg %p106
        %p159 = pneg %p103
        %s160 = sand.u32 %s93, 1
        %s161 = scalar_lea.sflag [#allocation3], %s160
        %s162 = sand.u32 %s93, 1
        %s163 = smul.addr %s162, 16
        %s164 = scalar_lea.vmem [#allocation2], %s163
        %s165 = smul.u32 2, %s17
        %p166 = scmp.lt.s32.totalorder %s165, 3
        %s167 = scalar_select %p166, %s165, 3
        %s168 = smul.addr %s167, 8
        %s169 = scalar_lea.vmem %s0, %s168
        %s170 = smul.u32 2, %s17
        %s171 = smul.u32 2, %s17
        %v172 = vld [vmem:[%s169] sm:$0xff]
        %v173 = vld [vmem:[%s169 + $0x8] sm:$0xff]
        %174 = vadd.xlane.f32.xlu0 %v172
        %v175 = vpop.xlane.xlu0 %174
        %176 = vadd.xlane.f32.xlu0 %v173
        %v177 = vpop.xlane.xlu0 %176
        %v178 = vrcp.pop 128.0
        %v179 = vmul.f32 128.0, %v178
        %v180 = vsub.f32 1.0, %v179
        %v181 = vmul.f32 %v178, %v180
        %v182 = vadd.f32 %v178, %v181
        %vm183 = vweird.f32 %v178
        %v184 = vsel %vm183, %v178, %v182
        %v185 = vmul.f32 %v175, %v184
        %v186 = vmul.f32 %v177, %v184
        %v187 = vsub.f32 %v172, %v185
        %v188 = vsub.f32 %v173, %v186
        %v189 = vmul.f32 %v187, %v187
        %v190 = vmul.f32 %v188, %v188
        %191 = vadd.xlane.f32.xlu0 %v189
        %v192 = vpop.xlane.xlu0 %191
        %193 = vadd.xlane.f32.xlu0 %v190
        %v194 = vpop.xlane.xlu0 %193
        %v195 = vmul.f32 %v192, %v184
        %v196 = vmul.f32 %v194, %v184
        %v197 = vadd.f32 %v195, 1e-06
        %v198 = vadd.f32 %v196, 1e-06
        %v199 = vrsqrt.pop %v197
        %v200 = vmul.f32 %v199, %v197
        %v201 = vmul.f32 %v200, %v199
        %v202 = vmul.f32 0.5, %v201
        %v203 = vsub.f32 1.5, %v202
        %v204 = vmul.f32 %v199, %v203
        %vm205 = vweird.f32 %v197
        %vm206 = vweird.f32 %v199
        %vm207 = vmor %vm205, %vm206
        %v208 = vsel %vm207, %v199, %v204
        %v209 = vrsqrt.pop %v198
        %v210 = vmul.f32 %v209, %v198
        %v211 = vmul.f32 %v210, %v209
        %v212 = vmul.f32 0.5, %v211
        %v213 = vsub.f32 1.5, %v212
        %v214 = vmul.f32 %v209, %v213
        %vm215 = vweird.f32 %v198
        %vm216 = vweird.f32 %v209
        %vm217 = vmor %vm215, %vm216
        %v218 = vsel %vm217, %v209, %v214
        %v219 = vmul.f32 %v187, %v208
        %v220 = vmul.f32 %v188, %v218
        %v221 = vld [vmem:[%s1] sm:$0x1]
        %v223 = vperm.slane %v221, 0
        %v225 = vmul.f32 %v219, %v223
        %v226 = vmul.f32 %v220, %v223
        %v227 = vld [vmem:[%s2] sm:$0x1]
        %v229 = vperm.slane %v227, 0
        %v231 = vadd.f32 %v225, %v229
        %v232 = vadd.f32 %v226, %v229
        %233 = vst [vmem:[%s164] sm:$0xff] %v231
        %234 = vst [vmem:[%s164 + $0x8] sm:$0xff] %v232
        %s235 = sand.u32 %s93, 1
        %s236 = scalar_lea.sflag [#allocation3], %s235
        %s237 = sand.u32 %s93, 1
        %s238 = smul.addr %s237, 16
        %s239 = scalar_lea.vmem [#allocation2], %s238
        // Predicated region
        $region33: #{image_encoder_forward.37} parent=31 // pred_check
          %p240 = pneg %p103
        $region34: #{image_encoder_forward.37} parent=31 // pred_check_branch
          %242 = sbr.rel (%p240) target = $region36
        $region35: #{image_encoder_forward.37} parent=31 // pred_region
          %s243 = smul.u32 2, %s17
          %245 = vsyncadd %s236, 0
          %s246 = smul.addr %s243, 8
          %s247 = scalar_lea.hbm %s3, %s246
          %s248 = sshll.u32 %s239, 4
          %s249 = int_to_ptr.vmem [resolvable:$true] %s248
          %s250 = sshll.u32 %s247, 4
          %s251 = int_to_ptr.hbm [resolvable:$true] %s250
          %256 = dma.vmem_to_hbm [thread:$0]  %s249, 256, %s251, %s236, 128, 128, 8
        $region36: #{image_encoder_forward.37} parent=31 // pred_fallthru
          _
      $region32: #{image_encoder_forward.37} parent=5 // pred_fallthru
        _
      %p257 = scmp.le.s32.totalorder 2, %s12
      // Predicated region
      $region37: #{image_encoder_forward.37} parent=5 // pred_check
        %p258 = pneg %p257
      $region38: #{image_encoder_forward.37} parent=5 // pred_check_branch
        %260 = sbr.rel (%p258) target = $region40
      $region39: #{image_encoder_forward.37} parent=5 // pred_region
        %s261 = ssub.s32 %s12, 2
        // Predicated region
        $region41: #{image_encoder_forward.37} parent=39 // pred_check
          %p262 = pneg %p109
        $region42: #{image_encoder_forward.37} parent=39 // pred_check_branch
          %264 = sbr.rel (%p262) target = $region44
        $region43: #{image_encoder_forward.37} parent=39 // pred_region
          %s265 = sand.u32 %s94, 1
          %s266 = scalar_lea.sflag [#allocation3], %s265
          %s267 = sand.u32 %s94, 1
          %s268 = smul.addr %s267, 16
          %s269 = scalar_lea.vmem [#allocation2], %s268
          %271 = dma.done %s266, 256
        $region44: #{image_encoder_forward.37} parent=39 // pred_fallthru
          _
      $region40: #{image_encoder_forward.37} parent=5 // pred_fallthru
        _
    $region6: #{image_encoder_forward.37} parent=1 // loop_footer
      %s16 = sadd.s32 1, %s12
    $region7: #{image_encoder_forward.37} parent=1 // loop_footer_branch
      %11 = sbr.rel target = $region3
    $region8: #{image_encoder_forward.37} parent=1 // loop_exit
      _
    %272 = vsyncpa [#allocation3], 1
    %s273 = scalar_lea.sflag [#allocation3], 1
    %274 = vsyncpa %s273, 1

// kernel: image_encoder_forward.36
$region0: #{image_encoder_forward.36}
  #allocation0 [shape = 'u32[]', space=smem, size = 0x4, offset = 0x4, fixed_abs, tag = 'smem constant byte address 0x4 - core index']
  #allocation1 [shape = 'u32[72,128]{1,0:T(1,128)}', space=vmem, size = 0x9000, scoped, tag = 'internal scratch']
  %s0 = inlined_call_operand.vmem [shape: f32[2,6,6,128], index: 0, kind: input, shape index: {}]
  %s1 = inlined_call_operand.vmem [shape: f32[9,128,128], index: 1, kind: input, shape index: {}]
  %s2 = inlined_call_operand.vmem [shape: f32[2,4,4,128], index: 2, kind: output, shape index: {}]
  %s3 = sld [smem:[#allocation0]]
  $region41: #{image_encoder_forward.36} parent=0
    _
  %s5 = ssub.s32 1, %s3
  %s6 = scalar_select 0, %s5, %s3
  loop: start=0, step=1, limit=4
  $region2: #{image_encoder_forward.36} parent=0 // loop_pre_header
    _
  $region3: #{image_encoder_forward.36} parent=0 // loop_header
    %s8 = sphi 0, %s12
    %p9 = scmp.ge.s32.totalorder %s8, 4
    %s18 = sphi 0, %s20
    %s21 = sphi 0, %s18
    %s22 = sphi 0, %s21
    %s38 = sphi 0, %s22
    %s42 = sphi 0, %s42
    %s44 = sphi 0, %s42
    %s45 = sphi 0, %s44
    %s59 = sphi 0, %s45
    %s65 = sphi 0, %s67
    %s68 = sphi 0, %s65
    %s69 = sphi 0, %s68
    %s85 = sphi 0, %s69
  $region4: #{image_encoder_forward.36} parent=0 // loop_header_branch
    %11 = sbr.rel (%p9) target = $region8
  $region5: #{image_encoder_forward.36} parent=0 // loop_body
    %s13 = ssub.s32 %s8, 1
    %s14 = ssub.s32 %s8, 2
    %s15 = sadd.s32 %s8, 1
    %s16 = ssub.s32 %s8, %s15
    %p17 = scmp.eq.s32.totalorder %s16, 0
    %s19 = sadd.s32 %s18, 1
    %s20 = scalar_select %p17, %s18, %s19
    %p23 = pneg %p17
    %p24 = scmp.eq.s32.totalorder %s8, 1
    %p25 = por %p23, %p24
    %p26 = scmp.ne.s32.totalorder %s18, %s21
    %p27 = scmp.eq.s32.totalorder %s8, 0
    %p28 = por %p26, %p27
    %p29 = scmp.ne.s32.totalorder %s18, %s21
    %p30 = scmp.eq.s32.totalorder %s13, 1
    %p31 = por %p29, %p30
    %p32 = scmp.ne.s32.totalorder %s21, %s22
    %p33 = scmp.eq.s32.totalorder %s13, 0
    %p34 = por %p32, %p33
    %p35 = scmp.ne.s32.totalorder %s21, %s22
    %p36 = scmp.eq.s32.totalorder %s14, 1
    %p37 = por %p35, %p36
    %p39 = scmp.ne.s32.totalorder %s22, %s38
    %p40 = scmp.eq.s32.totalorder %s14, 0
    %p41 = por %p39, %p40
    %s43 = sadd.s32 %s42, 1
    %p46 = scmp.eq.s32.totalorder %s8, 1
    %p47 = scmp.ne.s32.totalorder %s42, %s44
    %p48 = scmp.eq.s32.totalorder %s8, 0
    %p49 = por %p47, %p48
    %p50 = scmp.ne.s32.totalorder %s42, %s44
    %p51 = scmp.eq.s32.totalorder %s13, 1
    %p52 = por %p50, %p51
    %p53 = scmp.ne.s32.totalorder %s44, %s45
    %p54 = scmp.eq.s32.totalorder %s13, 0
    %p55 = por %p53, %p54
    %p56 = scmp.ne.s32.totalorder %s44, %s45
    %p57 = scmp.eq.s32.totalorder %s14, 1
    %p58 = por %p56, %p57
    %p60 = scmp.ne.s32.totalorder %s45, %s59
    %p61 = scmp.eq.s32.totalorder %s14, 0
    %p62 = por %p60, %p61
    %s63 = ssub.s32 %s8, %s15
    %p64 = scmp.eq.s32.totalorder %s63, 0
    %s66 = sadd.s32 %s65, 1
    %s67 = scalar_select %p64, %s65, %s66
    %p70 = pneg %p64
    %p71 = scmp.eq.s32.totalorder %s8, 1
    %p72 = por %p70, %p71
    %p73 = scmp.ne.s32.totalorder %s65, %s68
    %p74 = scmp.eq.s32.totalorder %s8, 0
    %p75 = por %p73, %p74
    %p76 = scmp.ne.s32.totalorder %s65, %s68
    %p77 = scmp.eq.s32.totalorder %s13, 1
    %p78 = por %p76, %p77
    %p79 = scmp.ne.s32.totalorder %s68, %s69
    %p80 = scmp.eq.s32.totalorder %s13, 0
    %p81 = por %p79, %p80
    %p82 = scmp.ne.s32.totalorder %s68, %s69
    %p83 = scmp.eq.s32.totalorder %s14, 1
    %p84 = por %p82, %p83
    %p86 = scmp.ne.s32.totalorder %s69, %s85
    %p87 = scmp.eq.s32.totalorder %s14, 0
    %p88 = por %p86, %p87
    %p89 = scmp.le.s32.totalorder 1, %s8
    %p90 = scmp.lt.s32.totalorder %s8, 3
    %p91 = pnand %p89, %p90
    %p92 = pneg %p91
    // Predicated region
    $region9: #{image_encoder_forward.36} parent=5 // pred_check
      _
    $region10: #{image_encoder_forward.36} parent=5 // pred_check_branch
      %94 = sbr.rel (%p91) target = $region12
    $region11: #{image_encoder_forward.36} parent=5 // pred_region
      %s95 = ssub.s32 %s8, 1
      // Predicated region
      $region13: #{image_encoder_forward.36} parent=11 // pred_check
        %p96 = pneg %p55
      $region14: #{image_encoder_forward.36} parent=11 // pred_check_branch
        %98 = sbr.rel (%p96) target = $region16
      $region15: #{image_encoder_forward.36} parent=11 // pred_region
        _
      $region16: #{image_encoder_forward.36} parent=11 // pred_fallthru
        _
    $region12: #{image_encoder_forward.36} parent=5 // pred_fallthru
      _
    %p99 = scmp.lt.s32.totalorder %s8, 2
    // Predicated region
    $region17: #{image_encoder_forward.36} parent=5 // pred_check
      %p100 = pneg %p99
    $region18: #{image_encoder_forward.36} parent=5 // pred_check_branch
      %102 = sbr.rel (%p100) target = $region20
    $region19: #{image_encoder_forward.36} parent=5 // pred_region
      // Predicated region
      $region21: #{image_encoder_forward.36} parent=19 // pred_check
        %p103 = pneg %p28
      $region22: #{image_encoder_forward.36} parent=19 // pred_check_branch
        %105 = sbr.rel (%p103) target = $region24
      $region23: #{image_encoder_forward.36} parent=19 // pred_region
        %p106 = scmp.lt.s32.totalorder %s8, 1
        %s107 = scalar_select %p106, %s8, 1
        %s108 = smul.addr %s107, 6
        %s109 = smul.addr %s108, 8
        %s110 = scalar_lea.vmem %s0, %s109
      $region24: #{image_encoder_forward.36} parent=19 // pred_fallthru
        _
    $region20: #{image_encoder_forward.36} parent=5 // pred_fallthru
      _
    %p111 = scmp.le.s32.totalorder 1, %s8
    %p112 = scmp.lt.s32.totalorder %s8, 3
    %p113 = pnand %p111, %p112
    %p114 = pneg %p113
    // Predicated region
    $region25: #{image_encoder_forward.36} parent=5 // pred_check
      _
    $region26: #{image_encoder_forward.36} parent=5 // pred_check_branch
      %116 = sbr.rel (%p113) target = $region28
    $region27: #{image_encoder_forward.36} parent=5 // pred_region
      %s117 = ssub.s32 %s8, 1
      %p118 = scmp.lt.s32.totalorder %s13, 1
      %s119 = scalar_select %p118, %s13, 1
      %s120 = smul.addr %s119, 6
      %s121 = smul.addr %s120, 8
      %s122 = scalar_lea.vmem %s0, %s121
      %p123 = pneg %p34
      %p124 = pneg %p31
      %p125 = pneg %p55
      %p126 = pneg %p52
      %p127 = pneg %p81
      %p128 = pneg %p78
      %p129 = scmp.lt.s32.totalorder %s13, 1
      %s130 = scalar_select %p129, %s13, 1
      %s131 = smul.addr %s130, 4
      %s132 = smul.addr %s131, 4
      %s133 = scalar_lea.vmem %s2, %s132
      %p134 = scmp.lt.s32.totalorder %s13, 1
      %s135 = scalar_select %p134, %s13, 1
      %s136 = smul.addr %s135, 6
      %s137 = smul.addr %s136, 8
      %s138 = scalar_lea.vmem %s0, %s137
      %p139 = scmp.lt.s32.totalorder %s13, 1
      %s140 = scalar_select %p139, %s13, 1
      %s141 = smul.addr %s140, 4
      %s142 = smul.addr %s141, 4
      %s143 = scalar_lea.vmem %s2, %s142
      %v144 = vld [vmem:[%s138] sm:$0xf]
      %v145 = vld [vmem:[%s138 + $0x8] sm:$0xf]
      %v146 = vld [vmem:[%s138 + $0x10] sm:$0xf]
      %v147 = vld [vmem:[%s138 + $0x18] sm:$0xf]
      %v148 = vld [vmem:[%s1] sm:$0xff]
      %v149 = vld [vmem:[%s1 + $0x8] sm:$0xff]
      %v150 = vld [vmem:[%s1 + $0x10] sm:$0xff]
      %v151 = vld [vmem:[%s1 + $0x18] sm:$0xff]
      %v152 = vld [vmem:[%s1 + $0x20] sm:$0xff]
      %v153 = vld [vmem:[%s1 + $0x28] sm:$0xff]
      %v154 = vld [vmem:[%s1 + $0x30] sm:$0xff]
      %v155 = vld [vmem:[%s1 + $0x38] sm:$0xff]
      %v156 = vld [vmem:[%s1 + $0x40] sm:$0xff]
      %v157 = vld [vmem:[%s1 + $0x48] sm:$0xff]
      %v158 = vld [vmem:[%s1 + $0x50] sm:$0xff]
      %v159 = vld [vmem:[%s1 + $0x58] sm:$0xff]
      %v160 = vld [vmem:[%s1 + $0x60] sm:$0xff]
      %v161 = vld [vmem:[%s1 + $0x68] sm:$0xff]
      %v162 = vld [vmem:[%s1 + $0x70] sm:$0xff]
      %v163 = vld [vmem:[%s1 + $0x78] sm:$0xff]
      %v164 = vld [vmem:[%s138 + $0x1] sm:$0xf]
      %v165 = vld [vmem:[%s138 + $0x9] sm:$0xf]
      %v166 = vld [vmem:[%s138 + $0x11] sm:$0xf]
      %v167 = vld [vmem:[%s138 + $0x19] sm:$0xf]
      %s168 = scalar_lea.vmem %s1, 128
      %v169 = vld [vmem:[%s168] sm:$0xff]
      %v170 = vld [vmem:[%s168 + $0x8] sm:$0xff]
      %v171 = vld [vmem:[%s168 + $0x10] sm:$0xff]
      %v172 = vld [vmem:[%s168 + $0x18] sm:$0xff]
      %v173 = vld [vmem:[%s168 + $0x20] sm:$0xff]
      %v174 = vld [vmem:[%s168 + $0x28] sm:$0xff]
      %v175 = vld [vmem:[%s168 + $0x30] sm:$0xff]
      %v176 = vld [vmem:[%s168 + $0x38] sm:$0xff]
      %v177 = vld [vmem:[%s168 + $0x40] sm:$0xff]
      %v178 = vld [vmem:[%s168 + $0x48] sm:$0xff]
      %v179 = vld [vmem:[%s168 + $0x50] sm:$0xff]
      %v180 = vld [vmem:[%s168 + $0x58] sm:$0xff]
      %v181 = vld [vmem:[%s168 + $0x60] sm:$0xff]
      %v182 = vld [vmem:[%s168 + $0x68] sm:$0xff]
      %v183 = vld [vmem:[%s168 + $0x70] sm:$0xff]
      %v184 = vld [vmem:[%s168 + $0x78] sm:$0xff]
      %189 = vst [vmem:[#allocation1] ss:$2 sm:$0xff] %v164
      %s190 = scalar_lea.vmem [#allocation1], 1
      %191 = vst [vmem:[%s190] ss:$2 sm:$0xff] %v165
      %s192 = scalar_lea.vmem [#allocation1], 16
      %193 = vst [vmem:[%s192] ss:$2 sm:$0xff] %v166
      %s194 = scalar_lea.vmem [#allocation1], 17
      %195 = vst [vmem:[%s194] ss:$2 sm:$0xff] %v167
      %v196 = vld.sshfl [vmem:[#allocation1] sm:$0xff pattern:$0x75316420]
      %v197 = vld.sshfl [vmem:[#allocation1 + $0x10] sm:$0xff pattern:$0x75316420]
      %200 = vmatpush.msra.mxu0 %v184
      %201 = vmatpush.msra.mxu0 %v183
      %202 = vmatpush.msra.mxu0 %v182
      %203 = vmatpush.msra.mxu0 %v181
      %204 = vmatpush.msra.mxu0 %v180
      %205 = vmatpush.msra.mxu0 %v179
      %206 = vmatpush.msra.mxu0 %v178
      %207 = vmatpush.msra.mxu0 %v177
      %208 = vmatpush.msra.mxu0 %v176
      %209 = vmatpush.msra.mxu0 %v175
      %210 = vmatpush.msra.mxu0 %v174
      %211 = vmatpush.msra.mxu0 %v173
      %212 = vmatpush.msra.mxu0 %v172
      %213 = vmatpush.msra.mxu0 %v171
      %214 = vmatpush.msra.mxu0 %v170
      %215 = vmatpush.msra.mxu0 %v169
      %216 = vmatmul.f32.gmra.mxu0 %v196
      %v217 = vpop.f32.mrf.mxu0
      %v218 = vadd.f32 0.0, %v217
      %219 = vmatmul.f32.gmra.mxu0 %v197
      %v220 = vpop.f32.mrf.mxu0
      %v221 = vadd.f32 0.0, %v220
      %222 = vdwg.mxu0
      %227 = vst [vmem:[#allocation1] ss:$2 sm:$0xff] %v144
      %s228 = scalar_lea.vmem [#allocation1], 1
      %229 = vst [vmem:[%s228] ss:$2 sm:$0xff] %v145
      %s230 = scalar_lea.vmem [#allocation1], 16
      %231 = vst [vmem:[%s230] ss:$2 sm:$0xff] %v146
      %s232 = scalar_lea.vmem [#allocation1], 17
      %233 = vst [vmem:[%s232] ss:$2 sm:$0xff] %v147
      %v234 = vld.sshfl [vmem:[#allocation1] sm:$0xff pattern:$0x75316420]
      %v235 = vld.sshfl [vmem:[#allocation1 + $0x10] sm:$0xff pattern:$0x75316420]
      %238 = vmatpush.msra.mxu0 %v163
      %239 = vmatpush.msra.mxu0 %v162
      %240 = vmatpush.msra.mxu0 %v161
      %241 = vmatpush.msra.mxu0 %v160
      %242 = vmatpush.msra.mxu0 %v159
      %243 = vmatpush.msra.mxu0 %v158
      %244 = vmatpush.msra.mxu0 %v157
      %245 = vmatpush.msra.mxu0 %v156
      %246 = vmatpush.msra.mxu0 %v155
      %247 = vmatpush.msra.mxu0 %v154
      %248 = vmatpush.msra.mxu0 %v153
      %249 = vmatpush.msra.mxu0 %v152
      %250 = vmatpush.msra.mxu0 %v151
      %251 = vmatpush.msra.mxu0 %v150
      %252 = vmatpush.msra.mxu0 %v149
      %253 = vmatpush.msra.mxu0 %v148
      %254 = vmatmul.f32.gmra.mxu0 %v234
      %v255 = vpop.f32.mrf.mxu0
      %v256 = vadd.f32 %v218, %v255
      %257 = vmatmul.f32.gmra.mxu0 %v235
      %v258 = vpop.f32.mrf.mxu0
      %v259 = vadd.f32 %v221, %v258
      %260 = vdwg.mxu0
      %v261 = vld [vmem:[%s138 + $0x2] sm:$0xf]
      %v262 = vld [vmem:[%s138 + $0xa] sm:$0xf]
      %v263 = vld [vmem:[%s138 + $0x12] sm:$0xf]
      %v264 = vld [vmem:[%s138 + $0x1a] sm:$0xf]
      %s265 = scalar_lea.vmem %s1, 256
      %v266 = vld [vmem:[%s265] sm:$0xff]
      %v267 = vld [vmem:[%s265 + $0x8] sm:$0xff]
      %v268 = vld [vmem:[%s265 + $0x10] sm:$0xff]
      %v269 = vld [vmem:[%s265 + $0x18] sm:$0xff]
      %v270 = vld [vmem:[%s265 + $0x20] sm:$0xff]
      %v271 = vld [vmem:[%s265 + $0x28] sm:$0xff]
      %v272 = vld [vmem:[%s265 + $0x30] sm:$0xff]
      %v273 = vld [vmem:[%s265 + $0x38] sm:$0xff]
      %v274 = vld [vmem:[%s265 + $0x40] sm:$0xff]
      %v275 = vld [vmem:[%s265 + $0x48] sm:$0xff]
      %v276 = vld [vmem:[%s265 + $0x50] sm:$0xff]
      %v277 = vld [vmem:[%s265 + $0x58] sm:$0xff]
      %v278 = vld [vmem:[%s265 + $0x60] sm:$0xff]
      %v279 = vld [vmem:[%s265 + $0x68] sm:$0xff]
      %v280 = vld [vmem:[%s265 + $0x70] sm:$0xff]
      %v281 = vld [vmem:[%s265 + $0x78] sm:$0xff]
      %286 = vst [vmem:[#allocation1] ss:$2 sm:$0xff] %v261
      %s287 = scalar_lea.vmem [#allocation1], 1
      %288 = vst [vmem:[%s287] ss:$2 sm:$0xff] %v262
      %s289 = scalar_lea.vmem [#allocation1], 16
      %290 = vst [vmem:[%s289] ss:$2 sm:$0xff] %v263
      %s291 = scalar_lea.vmem [#allocation1], 17
      %292 = vst [vmem:[%s291] ss:$2 sm:$0xff] %v264
      %v293 = vld.sshfl [vmem:[#allocation1] sm:$0xff pattern:$0x75316420]
      %v294 = vld.sshfl [vmem:[#allocation1 + $0x10] sm:$0xff pattern:$0x75316420]
      %297 = vmatpush.msra.mxu0 %v281
      %298 = vmatpush.msra.mxu0 %v280
      %299 = vmatpush.msra.mxu0 %v279
      %300 = vmatpush.msra.mxu0 %v278
      %301 = vmatpush.msra.mxu0 %v277
      %302 = vmatpush.msra.mxu0 %v276
      %303 = vmatpush.msra.mxu0 %v275
      %304 = vmatpush.msra.mxu0 %v274
      %305 = vmatpush.msra.mxu0 %v273
      %306 = vmatpush.msra.mxu0 %v272
      %307 = vmatpush.msra.mxu0 %v271
      %308 = vmatpush.msra.mxu0 %v270
      %309 = vmatpush.msra.mxu0 %v269
      %310 = vmatpush.msra.mxu0 %v268
      %311 = vmatpush.msra.mxu0 %v267
      %312 = vmatpush.msra.mxu0 %v266
      %313 = vmatmul.f32.gmra.mxu0 %v293
      %v314 = vpop.f32.mrf.mxu0
      %v315 = vadd.f32 0.0, %v314
      %316 = vmatmul.f32.gmra.mxu0 %v294
      %v317 = vpop.f32.mrf.mxu0
      %v318 = vadd.f32 0.0, %v317
      %319 = vdwg.mxu0
      %v320 = vadd.f32 %v256, %v315
      %v321 = vadd.f32 %v259, %v318
      %s322 = scalar_lea.vmem %s138, 8
      %v323 = vld [vmem:[%s322] sm:$0xf]
      %v324 = vld [vmem:[%s322 + $0x8] sm:$0xf]
      %v325 = vld [vmem:[%s322 + $0x10] sm:$0xf]
      %v326 = vld [vmem:[%s322 + $0x18] sm:$0xf]
      %s327 = scalar_lea.vmem %s1, 384
      %v328 = vld [vmem:[%s327] sm:$0xff]
      %v329 = vld [vmem:[%s327 + $0x8] sm:$0xff]
      %v330 = vld [vmem:[%s327 + $0x10] sm:$0xff]
      %v331 = vld [vmem:[%s327 + $0x18] sm:$0xff]
      %v332 = vld [vmem:[%s327 + $0x20] sm:$0xff]
      %v333 = vld [vmem:[%s327 + $0x28] sm:$0xff]
      %v334 = vld [vmem:[%s327 + $0x30] sm:$0xff]
      %v335 = vld [vmem:[%s327 + $0x38] sm:$0xff]
      %v336 = vld [vmem:[%s327 + $0x40] sm:$0xff]
      %v337 = vld [vmem:[%s327 + $0x48] sm:$0xff]
      %v338 = vld [vmem:[%s327 + $0x50] sm:$0xff]
      %v339 = vld [vmem:[%s327 + $0x58] sm:$0xff]
      %v340 = vld [vmem:[%s327 + $0x60] sm:$0xff]
      %v341 = vld [vmem:[%s327 + $0x68] sm:$0xff]
      %v342 = vld [vmem:[%s327 + $0x70] sm:$0xff]
      %v343 = vld [vmem:[%s327 + $0x78] sm:$0xff]
      %348 = vst [vmem:[#allocation1] ss:$2 sm:$0xff] %v323
      %s349 = scalar_lea.vmem [#allocation1], 1
      %350 = vst [vmem:[%s349] ss:$2 sm:$0xff] %v324
      %s351 = scalar_lea.vmem [#allocation1], 16
      %352 = vst [vmem:[%s351] ss:$2 sm:$0xff] %v325
      %s353 = scalar_lea.vmem [#allocation1], 17
      %354 = vst [vmem:[%s353] ss:$2 sm:$0xff] %v326
      %v355 = vld.sshfl [vmem:[#allocation1] sm:$0xff pattern:$0x75316420]
      %v356 = vld.sshfl [vmem:[#allocation1 + $0x10] sm:$0xff pattern:$0x75316420]
      %359 = vmatpush.msra.mxu0 %v343
      %360 = vmatpush.msra.mxu0 %v342
      %361 = vmatpush.msra.mxu0 %v341
      %362 = vmatpush.msra.mxu0 %v340
      %363 = vmatpush.msra.mxu0 %v339
      %364 = vmatpush.msra.mxu0 %v338
      %365 = vmatpush.msra.mxu0 %v337
      %366 = vmatpush.msra.mxu0 %v336
      %367 = vmatpush.msra.mxu0 %v335
      %368 = vmatpush.msra.mxu0 %v334
      %369 = vmatpush.msra.mxu0 %v333
      %370 = vmatpush.msra.mxu0 %v332
      %371 = vmatpush.msra.mxu0 %v331
      %372 = vmatpush.msra.mxu0 %v330
      %373 = vmatpush.msra.mxu0 %v329
      %374 = vmatpush.msra.mxu0 %v328
      %375 = vmatmul.f32.gmra.mxu0 %v355
      %v376 = vpop.f32.mrf.mxu0
      %v377 = vadd.f32 0.0, %v376
      %378 = vmatmul.f32.gmra.mxu0 %v356
      %v379 = vpop.f32.mrf.mxu0
      %v380 = vadd.f32 0.0, %v379
      %381 = vdwg.mxu0
      %v382 = vadd.f32 %v320, %v377
      %v383 = vadd.f32 %v321, %v380
      %v384 = vld [vmem:[%s322 + $0x1] sm:$0xf]
      %v385 = vld [vmem:[%s322 + $0x9] sm:$0xf]
      %v386 = vld [vmem:[%s322 + $0x11] sm:$0xf]
      %v387 = vld [vmem:[%s322 + $0x19] sm:$0xf]
      %s388 = scalar_lea.vmem %s1, 512
      %v389 = vld [vmem:[%s388] sm:$0xff]
      %v390 = vld [vmem:[%s388 + $0x8] sm:$0xff]
      %v391 = vld [vmem:[%s388 + $0x10] sm:$0xff]
      %v392 = vld [vmem:[%s388 + $0x18] sm:$0xff]
      %v393 = vld [vmem:[%s388 + $0x20] sm:$0xff]
      %v394 = vld [vmem:[%s388 + $0x28] sm:$0xff]
      %v395 = vld [vmem:[%s388 + $0x30] sm:$0xff]
      %v396 = vld [vmem:[%s388 + $0x38] sm:$0xff]
      %v397 = vld [vmem:[%s388 + $0x40] sm:$0xff]
      %v398 = vld [vmem:[%s388 + $0x48] sm:$0xff]
      %v399 = vld [vmem:[%s388 + $0x50] sm:$0xff]
      %v400 = vld [vmem:[%s388 + $0x58] sm:$0xff]
      %v401 = vld [vmem:[%s388 + $0x60] sm:$0xff]
      %v402 = vld [vmem:[%s388 + $0x68] sm:$0xff]
      %v403 = vld [vmem:[%s388 + $0x70] sm:$0xff]
      %v404 = vld [vmem:[%s388 + $0x78] sm:$0xff]
      %409 = vst [vmem:[#allocation1] ss:$2 sm:$0xff] %v384
      %s410 = scalar_lea.vmem [#allocation1], 1
      %411 = vst [vmem:[%s410] ss:$2 sm:$0xff] %v385
      %s412 = scalar_lea.vmem [#allocation1], 16
      %413 = vst [vmem:[%s412] ss:$2 sm:$0xff] %v386
      %s414 = scalar_lea.vmem [#allocation1], 17
      %415 = vst [vmem:[%s414] ss:$2 sm:$0xff] %v387
      %v416 = vld.sshfl [vmem:[#allocation1] sm:$0xff pattern:$0x75316420]
      %v417 = vld.sshfl [vmem:[#allocation1 + $0x10] sm:$0xff pattern:$0x75316420]
      %420 = vmatpush.msra.mxu0 %v404
      %421 = vmatpush.msra.mxu0 %v403
      %422 = vmatpush.msra.mxu0 %v402
      %423 = vmatpush.msra.mxu0 %v401
      %424 = vmatpush.msra.mxu0 %v400
      %425 = vmatpush.msra.mxu0 %v399
      %426 = vmatpush.msra.mxu0 %v398
      %427 = vmatpush.msra.mxu0 %v397
      %428 = vmatpush.msra.mxu0 %v396
      %429 = vmatpush.msra.mxu0 %v395
      %430 = vmatpush.msra.mxu0 %v394
      %431 = vmatpush.msra.mxu0 %v393
      %432 = vmatpush.msra.mxu0 %v392
      %433 = vmatpush.msra.mxu0 %v391
      %434 = vmatpush.msra.mxu0 %v390
      %435 = vmatpush.msra.mxu0 %v389
      %436 = vmatmul.f32.gmra.mxu0 %v416
      %v437 = vpop.f32.mrf.mxu0
      %v438 = vadd.f32 0.0, %v437
      %439 = vmatmul.f32.gmra.mxu0 %v417
      %v440 = vpop.f32.mrf.mxu0
      %v441 = vadd.f32 0.0, %v440
      %442 = vdwg.mxu0
      %v443 = vadd.f32 %v382, %v438
      %v444 = vadd.f32 %v383, %v441
      %v445 = vld [vmem:[%s322 + $0x2] sm:$0xf]
      %v446 = vld [vmem:[%s322 + $0xa] sm:$0xf]
      %v447 = vld [vmem:[%s322 + $0x12] sm:$0xf]
      %v448 = vld [vmem:[%s322 + $0x1a] sm:$0xf]
      %s449 = scalar_lea.vmem %s1, 640
      %v450 = vld [vmem:[%s449] sm:$0xff]
      %v451 = vld [vmem:[%s449 + $0x8] sm:$0xff]
      %v452 = vld [vmem:[%s449 + $0x10] sm:$0xff]
      %v453 = vld [vmem:[%s449 + $0x18] sm:$0xff]
      %v454 = vld [vmem:[%s449 + $0x20] sm:$0xff]
      %v455 = vld [vmem:[%s449 + $0x28] sm:$0xff]
      %v456 = vld [vmem:[%s449 + $0x30] sm:$0xff]
      %v457 = vld [vmem:[%s449 + $0x38] sm:$0xff]
      %v458 = vld [vmem:[%s449 + $0x40] sm:$0xff]
      %v459 = vld [vmem:[%s449 + $0x48] sm:$0xff]
      %v460 = vld [vmem:[%s449 + $0x50] sm:$0xff]
      %v461 = vld [vmem:[%s449 + $0x58] sm:$0xff]
      %v462 = vld [vmem:[%s449 + $0x60] sm:$0xff]
      %v463 = vld [vmem:[%s449 + $0x68] sm:$0xff]
      %v464 = vld [vmem:[%s449 + $0x70] sm:$0xff]
      %v465 = vld [vmem:[%s449 + $0x78] sm:$0xff]
      %470 = vst [vmem:[#allocation1] ss:$2 sm:$0xff] %v445
      %s471 = scalar_lea.vmem [#allocation1], 1
      %472 = vst [vmem:[%s471] ss:$2 sm:$0xff] %v446
      %s473 = scalar_lea.vmem [#allocation1], 16
      %474 = vst [vmem:[%s473] ss:$2 sm:$0xff] %v447
      %s475 = scalar_lea.vmem [#allocation1], 17
      %476 = vst [vmem:[%s475] ss:$2 sm:$0xff] %v448
      %v477 = vld.sshfl [vmem:[#allocation1] sm:$0xff pattern:$0x75316420]
      %v478 = vld.sshfl [vmem:[#allocation1 + $0x10] sm:$0xff pattern:$0x75316420]
      %481 = vmatpush.msra.mxu0 %v465
      %482 = vmatpush.msra.mxu0 %v464
      %483 = vmatpush.msra.mxu0 %v463
      %484 = vmatpush.msra.mxu0 %v462
      %485 = vmatpush.msra.mxu0 %v461
      %486 = vmatpush.msra.mxu0 %v460
      %487 = vmatpush.msra.mxu0 %v459
      %488 = vmatpush.msra.mxu0 %v458
      %489 = vmatpush.msra.mxu0 %v457
      %490 = vmatpush.msra.mxu0 %v456
      %491 = vmatpush.msra.mxu0 %v455
      %492 = vmatpush.msra.mxu0 %v454
      %493 = vmatpush.msra.mxu0 %v453
      %494 = vmatpush.msra.mxu0 %v452
      %495 = vmatpush.msra.mxu0 %v451
      %496 = vmatpush.msra.mxu0 %v450
      %497 = vmatmul.f32.gmra.mxu0 %v477
      %v498 = vpop.f32.mrf.mxu0
      %v499 = vadd.f32 0.0, %v498
      %500 = vmatmul.f32.gmra.mxu0 %v478
      %v501 = vpop.f32.mrf.mxu0
      %v502 = vadd.f32 0.0, %v501
      %503 = vdwg.mxu0
      %v504 = vadd.f32 %v443, %v499
      %v505 = vadd.f32 %v444, %v502
      %s506 = scalar_lea.vmem %s138, 16
      %v507 = vld [vmem:[%s506] sm:$0xf]
      %v508 = vld [vmem:[%s506 + $0x8] sm:$0xf]
      %v509 = vld [vmem:[%s506 + $0x10] sm:$0xf]
      %v510 = vld [vmem:[%s506 + $0x18] sm:$0xf]
      %s511 = scalar_lea.vmem %s1, 768
      %v512 = vld [vmem:[%s511] sm:$0xff]
      %v513 = vld [vmem:[%s511 + $0x8] sm:$0xff]
      %v514 = vld [vmem:[%s511 + $0x10] sm:$0xff]
      %v515 = vld [vmem:[%s511 + $0x18] sm:$0xff]
      %v516 = vld [vmem:[%s511 + $0x20] sm:$0xff]
      %v517 = vld [vmem:[%s511 + $0x28] sm:$0xff]
      %v518 = vld [vmem:[%s511 + $0x30] sm:$0xff]
      %v519 = vld [vmem:[%s511 + $0x38] sm:$0xff]
      %v520 = vld [vmem:[%s511 + $0x40] sm:$0xff]
      %v521 = vld [vmem:[%s511 + $0x48] sm:$0xff]
      %v522 = vld [vmem:[%s511 + $0x50] sm:$0xff]
      %v523 = vld [vmem:[%s511 + $0x58] sm:$0xff]
      %v524 = vld [vmem:[%s511 + $0x60] sm:$0xff]
      %v525 = vld [vmem:[%s511 + $0x68] sm:$0xff]
      %v526 = vld [vmem:[%s511 + $0x70] sm:$0xff]
      %v527 = vld [vmem:[%s511 + $0x78] sm:$0xff]
      %532 = vst [vmem:[#allocation1] ss:$2 sm:$0xff] %v507
      %s533 = scalar_lea.vmem [#allocation1], 1
      %534 = vst [vmem:[%s533] ss:$2 sm:$0xff] %v508
      %s535 = scalar_lea.vmem [#allocation1], 16
      %536 = vst [vmem:[%s535] ss:$2 sm:$0xff] %v509
      %s537 = scalar_lea.vmem [#allocation1], 17
      %538 = vst [vmem:[%s537] ss:$2 sm:$0xff] %v510
      %v539 = vld.sshfl [vmem:[#allocation1] sm:$0xff pattern:$0x75316420]
      %v540 = vld.sshfl [vmem:[#allocation1 + $0x10] sm:$0xff pattern:$0x75316420]
      %543 = vmatpush.msra.mxu0 %v527
      %544 = vmatpush.msra.mxu0 %v526
      %545 = vmatpush.msra.mxu0 %v525
      %546 = vmatpush.msra.mxu0 %v524
      %547 = vmatpush.msra.mxu0 %v523
      %548 = vmatpush.msra.mxu0 %v522
      %549 = vmatpush.msra.mxu0 %v521
      %550 = vmatpush.msra.mxu0 %v520
      %551 = vmatpush.msra.mxu0 %v519
      %552 = vmatpush.msra.mxu0 %v518
      %553 = vmatpush.msra.mxu0 %v517
      %554 = vmatpush.msra.mxu0 %v516
      %555 = vmatpush.msra.mxu0 %v515
      %556 = vmatpush.msra.mxu0 %v514
      %557 = vmatpush.msra.mxu0 %v513
      %558 = vmatpush.msra.mxu0 %v512
      %559 = vmatmul.f32.gmra.mxu0 %v539
      %v560 = vpop.f32.mrf.mxu0
      %v561 = vadd.f32 0.0, %v560
      %562 = vmatmul.f32.gmra.mxu0 %v540
      %v563 = vpop.f32.mrf.mxu0
      %v564 = vadd.f32 0.0, %v563
      %565 = vdwg.mxu0
      %v566 = vadd.f32 %v504, %v561
      %v567 = vadd.f32 %v505, %v564
      %v568 = vld [vmem:[%s506 + $0x1] sm:$0xf]
      %v569 = vld [vmem:[%s506 + $0x9] sm:$0xf]
      %v570 = vld [vmem:[%s506 + $0x11] sm:$0xf]
      %v571 = vld [vmem:[%s506 + $0x19] sm:$0xf]
      %s572 = scalar_lea.vmem %s1, 896
      %v573 = vld [vmem:[%s572] sm:$0xff]
      %v574 = vld [vmem:[%s572 + $0x8] sm:$0xff]
      %v575 = vld [vmem:[%s572 + $0x10] sm:$0xff]
      %v576 = vld [vmem:[%s572 + $0x18] sm:$0xff]
      %v577 = vld [vmem:[%s572 + $0x20] sm:$0xff]
      %v578 = vld [vmem:[%s572 + $0x28] sm:$0xff]
      %v579 = vld [vmem:[%s572 + $0x30] sm:$0xff]
      %v580 = vld [vmem:[%s572 + $0x38] sm:$0xff]
      %v581 = vld [vmem:[%s572 + $0x40] sm:$0xff]
      %v582 = vld [vmem:[%s572 + $0x48] sm:$0xff]
      %v583 = vld [vmem:[%s572 + $0x50] sm:$0xff]
      %v584 = vld [vmem:[%s572 + $0x58] sm:$0xff]
      %v585 = vld [vmem:[%s572 + $0x60] sm:$0xff]
      %v586 = vld [vmem:[%s572 + $0x68] sm:$0xff]
      %v587 = vld [vmem:[%s572 + $0x70] sm:$0xff]
      %v588 = vld [vmem:[%s572 + $0x78] sm:$0xff]
      %593 = vst [vmem:[#allocation1] ss:$2 sm:$0xff] %v568
      %s594 = scalar_lea.vmem [#allocation1], 1
      %595 = vst [vmem:[%s594] ss:$2 sm:$0xff] %v569
      %s596 = scalar_lea.vmem [#allocation1], 16
      %597 = vst [vmem:[%s596] ss:$2 sm:$0xff] %v570
      %s598 = scalar_lea.vmem [#allocation1], 17
      %599 = vst [vmem:[%s598] ss:$2 sm:$0xff] %v571
      %v600 = vld.sshfl [vmem:[#allocation1] sm:$0xff pattern:$0x75316420]
      %v601 = vld.sshfl [vmem:[#allocation1 + $0x10] sm:$0xff pattern:$0x75316420]
      %604 = vmatpush.msra.mxu0 %v588
      %605 = vmatpush.msra.mxu0 %v587
      %606 = vmatpush.msra.mxu0 %v586
      %607 = vmatpush.msra.mxu0 %v585
      %608 = vmatpush.msra.mxu0 %v584
      %609 = vmatpush.msra.mxu0 %v583
      %610 = vmatpush.msra.mxu0 %v582
      %611 = vmatpush.msra.mxu0 %v581
      %612 = vmatpush.msra.mxu0 %v580
      %613 = vmatpush.msra.mxu0 %v579
      %614 = vmatpush.msra.mxu0 %v578
      %615 = vmatpush.msra.mxu0 %v577
      %616 = vmatpush.msra.mxu0 %v576
      %617 = vmatpush.msra.mxu0 %v575
      %618 = vmatpush.msra.mxu0 %v574
      %619 = vmatpush.msra.mxu0 %v573
      %620 = vmatmul.f32.gmra.mxu0 %v600
      %v621 = vpop.f32.mrf.mxu0
      %v622 = vadd.f32 0.0, %v621
      %623 = vmatmul.f32.gmra.mxu0 %v601
      %v624 = vpop.f32.mrf.mxu0
      %v625 = vadd.f32 0.0, %v624
      %626 = vdwg.mxu0
      %v627 = vadd.f32 %v566, %v622
      %v628 = vadd.f32 %v567, %v625
      %v629 = vld [vmem:[%s506 + $0x2] sm:$0xf]
      %v630 = vld [vmem:[%s506 + $0xa] sm:$0xf]
      %v631 = vld [vmem:[%s506 + $0x12] sm:$0xf]
      %v632 = vld [vmem:[%s506 + $0x1a] sm:$0xf]
      %s633 = scalar_lea.vmem %s1, 1024
      %v634 = vld [vmem:[%s633] sm:$0xff]
      %v635 = vld [vmem:[%s633 + $0x8] sm:$0xff]
      %v636 = vld [vmem:[%s633 + $0x10] sm:$0xff]
      %v637 = vld [vmem:[%s633 + $0x18] sm:$0xff]
      %v638 = vld [vmem:[%s633 + $0x20] sm:$0xff]
      %v639 = vld [vmem:[%s633 + $0x28] sm:$0xff]
      %v640 = vld [vmem:[%s633 + $0x30] sm:$0xff]
      %v641 = vld [vmem:[%s633 + $0x38] sm:$0xff]
      %v642 = vld [vmem:[%s633 + $0x40] sm:$0xff]
      %v643 = vld [vmem:[%s633 + $0x48] sm:$0xff]
      %v644 = vld [vmem:[%s633 + $0x50] sm:$0xff]
      %v645 = vld [vmem:[%s633 + $0x58] sm:$0xff]
      %v646 = vld [vmem:[%s633 + $0x60] sm:$0xff]
      %v647 = vld [vmem:[%s633 + $0x68] sm:$0xff]
      %v648 = vld [vmem:[%s633 + $0x70] sm:$0xff]
      %v649 = vld [vmem:[%s633 + $0x78] sm:$0xff]
      %654 = vst [vmem:[#allocation1] ss:$2 sm:$0xff] %v629
      %s655 = scalar_lea.vmem [#allocation1], 1
      %656 = vst [vmem:[%s655] ss:$2 sm:$0xff] %v630
      %s657 = scalar_lea.vmem [#allocation1], 16
      %658 = vst [vmem:[%s657] ss:$2 sm:$0xff] %v631
      %s659 = scalar_lea.vmem [#allocation1], 17
      %660 = vst [vmem:[%s659] ss:$2 sm:$0xff] %v632
      %v661 = vld.sshfl [vmem:[#allocation1] sm:$0xff pattern:$0x75316420]
      %v662 = vld.sshfl [vmem:[#allocation1 + $0x10] sm:$0xff pattern:$0x75316420]
      %665 = vmatpush.msra.mxu0 %v649
      %666 = vmatpush.msra.mxu0 %v648
      %667 = vmatpush.msra.mxu0 %v647
      %668 = vmatpush.msra.mxu0 %v646
      %669 = vmatpush.msra.mxu0 %v645
      %670 = vmatpush.msra.mxu0 %v644
      %671 = vmatpush.msra.mxu0 %v643
      %672 = vmatpush.msra.mxu0 %v642
      %673 = vmatpush.msra.mxu0 %v641
      %674 = vmatpush.msra.mxu0 %v640
      %675 = vmatpush.msra.mxu0 %v639
      %676 = vmatpush.msra.mxu0 %v638
      %677 = vmatpush.msra.mxu0 %v637
      %678 = vmatpush.msra.mxu0 %v636
      %679 = vmatpush.msra.mxu0 %v635
      %680 = vmatpush.msra.mxu0 %v634
      %681 = vmatmul.f32.gmra.mxu0 %v661
      %v682 = vpop.f32.mrf.mxu0
      %v683 = vadd.f32 0.0, %v682
      %684 = vmatmul.f32.gmra.mxu0 %v662
      %v685 = vpop.f32.mrf.mxu0
      %v686 = vadd.f32 0.0, %v685
      %687 = vdwg.mxu0
      %v688 = vadd.f32 %v627, %v683
      %v689 = vadd.f32 %v628, %v686
      %v692 = vrot.slane %v688, 4
      %v693 = vrot.slane %v689, 4
      %696 = vst [vmem:[%s143] sm:$0xf] %v688
      %697 = vst [vmem:[%s143 + $0x4] sm:$0xf] %v692
      %698 = vst [vmem:[%s143 + $0x8] sm:$0xf] %v689
      %699 = vst [vmem:[%s143 + $0xc] sm:$0xf] %v693
      %p700 = scmp.lt.s32.totalorder %s13, 1
      %s701 = scalar_select %p700, %s13, 1
      %s702 = smul.addr %s701, 4
      %s703 = smul.addr %s702, 4
      %s704 = scalar_lea.vmem %s2, %s703
      // Predicated region
      $region29: #{image_encoder_forward.36} parent=27 // pred_check
        %p705 = pneg %p78
      $region30: #{image_encoder_forward.36} parent=27 // pred_check_branch
        %707 = sbr.rel (%p705) target = $region32
      $region31: #{image_encoder_forward.36} parent=27 // pred_region
        _
      $region32: #{image_encoder_forward.36} parent=27 // pred_fallthru
        _
    $region28: #{image_encoder_forward.36} parent=5 // pred_fallthru
      _
    %p708 = scmp.le.s32.totalorder 2, %s8
    // Predicated region
    $region33: #{image_encoder_forward.36} parent=5 // pred_check
      %p709 = pneg %p708
    $region34: #{image_encoder_forward.36} parent=5 // pred_check_branch
      %711 = sbr.rel (%p709) target = $region36
    $region35: #{image_encoder_forward.36} parent=5 // pred_region
      %s712 = ssub.s32 %s8, 2
      // Predicated region
      $region37: #{image_encoder_forward.36} parent=35 // pred_check
        %p713 = pneg %p84
      $region38: #{image_encoder_forward.36} parent=35 // pred_check_branch
        %715 = sbr.rel (%p713) target = $region40
      $region39: #{image_encoder_forward.36} parent=35 // pred_region
        %p716 = scmp.lt.s32.totalorder %s14, 1
        %s717 = scalar_select %p716, %s14, 1
        %s718 = smul.addr %s717, 4
        %s719 = smul.addr %s718, 4
        %s720 = scalar_lea.vmem %s2, %s719
      $region40: #{image_encoder_forward.36} parent=35 // pred_fallthru
        _
    $region36: #{image_encoder_forward.36} parent=5 // pred_fallthru
      _
  $region6: #{image_encoder_forward.36} parent=0 // loop_footer
    %s12 = sadd.s32 1, %s8
  $region7: #{image_encoder_forward.36} parent=0 // loop_footer_branch
    %7 = sbr.rel target = $region3
  $region8: #{image_encoder_forward.36} parent=0 // loop_exit
    _

</llo_original>
